<compile_context>
chip_gen: v5e
topology: v5e:2x2
jax: 0.10.0
libtpu: 0.0.40
codegen_flags: <defaults>
</compile_context>

<pallas_src>
from functools import partial

import jax
import jax.numpy as jnp
from jax.experimental import pallas as pl
from jax.experimental.pallas import tpu as pltpu


def _round_up(x, m):
    return (x + m - 1) // m * m


# ----------------------------- Pallas kernels ------------------------------ #
def _matmul_bn_relu_kernel(x_ref, w_ref, scale_ref, shift_ref, o_ref):
    # out = relu((x @ w) * scale + shift); matmul in bf16, epilogue in f32.
    acc = jnp.dot(x_ref[...].astype(jnp.bfloat16), w_ref[...],
                  preferred_element_type=jnp.float32)
    y = acc * scale_ref[...] + shift_ref[...]
    o_ref[...] = jnp.maximum(y, 0.0).astype(o_ref.dtype)


def _fc_head_kernel(x_ref, w1_ref, b1_ref, w2_ref, b2_ref, o_ref):
    # q = relu(x @ w1 + b1) @ w2 + b2   (h stays on-chip; fc1+fc2 fused)
    h = jnp.dot(x_ref[...].astype(jnp.bfloat16), w1_ref[...],
                preferred_element_type=jnp.float32)
    h = jnp.maximum(h + b1_ref[...], 0.0)
    q = jnp.dot(h.astype(jnp.bfloat16), w2_ref[...],
                preferred_element_type=jnp.float32)
    o_ref[...] = (q + b2_ref[...]).astype(o_ref.dtype)


def fused_matmul_bn_relu(x, w, scale, shift, out_dtype, tm_max=1024):
    """relu((x @ w) * scale + shift); single grid step unless M > tm_max."""
    M, K = x.shape
    N = w.shape[1]
    if M <= tm_max:
        # Full-extent blocks: no M padding, no post-slice needed.
        tm, Mp, xp = M, M, x
    else:
        tm = tm_max
        Mp = _round_up(M, tm)
        xp = jnp.pad(x, ((0, Mp - M), (0, 0)))

    out = pl.pallas_call(
        _matmul_bn_relu_kernel,
        out_shape=jax.ShapeDtypeStruct((Mp, N), out_dtype),
        grid_spec=pltpu.PrefetchScalarGridSpec(
            num_scalar_prefetch=0,
            grid=(Mp // tm,),
            in_specs=[
                pl.BlockSpec((tm, K), lambda i: (i, 0)),   # activation tile
                pl.BlockSpec((K, N), lambda i: (0, 0)),    # weight (resident)
                pl.BlockSpec((1, N), lambda i: (0, 0)),    # folded BN scale
                pl.BlockSpec((1, N), lambda i: (0, 0)),    # folded BN shift+bias
            ],
            out_specs=pl.BlockSpec((tm, N), lambda i: (i, 0)),
        ),
        compiler_params=pltpu.CompilerParams(
            dimension_semantics=("parallel",)),
    )(xp, w, scale, shift)
    return out if Mp == M else out[:M]


def fc_head(flat, w1, b1, w2, b2):
    """q = relu(flat @ w1 + b1) @ w2 + b2 in a single pallas_call."""
    M, K1 = flat.shape
    N1 = w1.shape[1]
    N2 = w2.shape[1]
    return pl.pallas_call(
        _fc_head_kernel,
        out_shape=jax.ShapeDtypeStruct((M, N2), jnp.float32),
        grid_spec=pltpu.PrefetchScalarGridSpec(
            num_scalar_prefetch=0,
            grid=(1,),
            in_specs=[
                pl.BlockSpec((M, K1), lambda i: (0, 0)),
                pl.BlockSpec((K1, N1), lambda i: (0, 0)),
                pl.BlockSpec((1, N1), lambda i: (0, 0)),
                pl.BlockSpec((N1, N2), lambda i: (0, 0)),
                pl.BlockSpec((1, N2), lambda i: (0, 0)),
            ],
            out_specs=pl.BlockSpec((M, N2), lambda i: (0, 0)),
        ),
        compiler_params=pltpu.CompilerParams(
            dimension_semantics=("arbitrary",)),
    )(flat, w1, b1, w2, b2)


# ------------------------------ JAX glue ----------------------------------- #
def extract_patches_nhwc(x, k, stride):
    """x: (B, H, W, C) NHWC -> ((B*OH*OW, k*k*C), OH, OW).

    Feature order is (kh, kw, C); implemented as k*k static strided slices plus
    one concat — no gather and no 6-D transpose."""
    B, H, W, C = x.shape
    OH = (H - k) // stride + 1
    OW = (W - k) // stride + 1
    cols = []
    for di in range(k):
        for dj in range(k):
            cols.append(x[:, di:di + (OH - 1) * stride + 1:stride,
                          dj:dj + (OW - 1) * stride + 1:stride, :])
    p = jnp.concatenate(cols, axis=-1)                 # (B, OH, OW, k*k*C)
    return p.reshape(B * OH * OW, k * k * C), OH, OW


def dqn_forward(x, P, *, n_actions):
    """x: (B, frame_stack, 84, 84) NCHW (PyTorch layout) -> (B, n_actions)."""
    B = x.shape[0]
    # Single layout change + bf16 cast at entry; NHWC (+bf16) thereafter.
    x = jnp.transpose(x, (0, 2, 3, 1)).astype(jnp.bfloat16)

    # conv1 (k=8, s=4) + bn1 + relu
    p, oh, ow = extract_patches_nhwc(x, 8, 4)
    x = fused_matmul_bn_relu(p, P["w1"], P["s1"], P["t1"], jnp.bfloat16)
    x = x.reshape(B, oh, ow, -1)                       # cheap leading-dim reshape

    # conv2 (k=4, s=2) + bn2 + relu
    p, oh, ow = extract_patches_nhwc(x, 4, 2)
    x = fused_matmul_bn_relu(p, P["w2"], P["s2"], P["t2"], jnp.bfloat16)
    x = x.reshape(B, oh, ow, -1)

    # conv3 (k=3, s=1) + bn3 + relu
    p, oh, ow = extract_patches_nhwc(x, 3, 1)
    x = fused_matmul_bn_relu(p, P["w3"], P["s3"], P["t3"], jnp.bfloat16)

    # Flatten in NHWC order; fc1_w rows were permuted in make_params so this
    # matches PyTorch's NCHW x.view(B, -1) semantics exactly.
    flat = x.reshape(B, -1)

    # fc1 + relu + fc2 fused in one kernel; n_actions columns were padded to a
    # full 128-lane tile once at param-setup time — slice them back out here.
    q = fc_head(flat, P["fc1_w"], P["fc1_b"], P["fc2_w"], P["fc2_b"])
    return q[:, :n_actions]


# --------------------------- Parameter setup -------------------------------- #
def kaiming_normal_fan_out(key, shape, fan_out):
    std = (2.0 / fan_out) ** 0.5
    return std * jax.random.normal(key, shape, dtype=jnp.float32)


def make_params(key, n_actions, frame_stack=4):
    """All layout permutation / BN folding / padding is done ONCE here."""
    ks = jax.random.split(key, 5)
    eps = 1e-5

    def conv_params(k, oc, ic, ksz):
        # PyTorch layout (C_out, C_in, kh, kw); kaiming_normal_(mode='fan_out').
        w = kaiming_normal_fan_out(k, (oc, ic, ksz, ksz), fan_out=oc * ksz * ksz)
        # Rows ordered (kh, kw, C_in) to match extract_patches_nhwc.
        w_mat = w.transpose(2, 3, 1, 0).reshape(ksz * ksz * ic, oc)
        conv_b = jnp.zeros((oc,), jnp.float32)
        # BatchNorm2d eval-mode defaults: gamma=1, beta=0, mean=0, var=1.
        gamma = jnp.ones((oc,), jnp.float32)
        beta = jnp.zeros((oc,), jnp.float32)
        mean = jnp.zeros((oc,), jnp.float32)
        var = jnp.ones((oc,), jnp.float32)
        scale = gamma / jnp.sqrt(var + eps)
        shift = beta + (conv_b - mean) * scale
        return (w_mat.astype(jnp.bfloat16),
                scale.reshape(1, oc),
                shift.reshape(1, oc))

    w1, s1, t1 = conv_params(ks[0], 32, frame_stack, 8)
    w2, s2, t2 = conv_params(ks[1], 64, 32, 4)
    w3, s3, t3 = conv_params(ks[2], 64, 64, 3)

    cw = 7                       # conv output width for 84x84 inputs
    linear_in = cw * cw * 64

    # fc1: PyTorch weight (512, C*H*W) indexed in NCHW flatten order; permute
    # its input dimension to the NHWC flatten order (H, W, C) used here.
    fc1_w = kaiming_normal_fan_out(ks[3], (512, linear_in), fan_out=512)
    fc1_w = fc1_w.reshape(512, 64, cw, cw).transpose(0, 2, 3, 1).reshape(512, linear_in)
    fc1_w = fc1_w.T                                    # (linear_in, 512)
    fc1_b = jnp.zeros((1, 512), jnp.float32)

    # fc2: pad n_actions output columns to one full 128-lane tile, once.
    n_pad = _round_up(n_actions, 128)
    fc2_w = kaiming_normal_fan_out(ks[4], (n_actions, 512), fan_out=n_actions).T
    fc2_w = jnp.pad(fc2_w, ((0, 0), (0, n_pad - n_actions)))
    fc2_b = jnp.zeros((1, n_pad), jnp.float32)

    return dict(
        w1=w1, s1=s1, t1=t1,
        w2=w2, s2=s2, t2=t2,
        w3=w3, s3=s3, t3=t3,
        fc1_w=fc1_w.astype(jnp.bfloat16), fc1_b=fc1_b,
        fc2_w=fc2_w.astype(jnp.bfloat16), fc2_b=fc2_b,
    )


# --------------------------------- Main ------------------------------------- #
if __name__ == "__main__":
    n_actions = 4
    frame_stack = 4
    batch = 2

    key = jax.random.PRNGKey(0)
    k_x, k_p = jax.random.split(key)
    # The DQN architecture implies 84x84 inputs (fc1 size depends on it).
    x = jax.random.uniform(k_x, (batch, frame_stack, 84, 84), dtype=jnp.float32)
    params = make_params(k_p, n_actions, frame_stack)

    fwd = jax.jit(partial(dqn_forward, n_actions=n_actions))
    q = fwd(x, params)
    q = jax.block_until_ready(q)

    assert q.shape == (batch, n_actions), q.shape
    assert bool(jnp.all(jnp.isfinite(q)))
    print("KERNEL_OK")
</pallas_src>

<mosaic_0001>
module attributes {stable_mosaic.version = 11 : i64} {
  func.func @_matmul_bn_relu_kernel(%arg0: i32, %arg1: memref<800x256xbf16, #tpu.memory_space<vmem>>, %arg2: memref<256x32xbf16, #tpu.memory_space<vmem>>, %arg3: memref<1x32xf32, #tpu.memory_space<vmem>>, %arg4: memref<1x32xf32, #tpu.memory_space<vmem>>, %arg5: memref<800x32xbf16, #tpu.memory_space<vmem>>) attributes {dimension_semantics = [#tpu.dimension_semantics<parallel>], iteration_bounds = array<i64: 1>, scalar_prefetch = 0 : i64, scratch_operands = 0 : i64, tpu.core_type = #tpu.core_type<tc>, window_params = [{transform_indices = @transform_0, window_bounds = array<i64: 800, 256>}, {pipeline_mode = #tpu.pipeline_mode<synchronous>, transform_indices = @transform_1, window_bounds = array<i64: 256, 32>}, {pipeline_mode = #tpu.pipeline_mode<synchronous>, transform_indices = @transform_2, window_bounds = array<i64: 1, 32>}, {pipeline_mode = #tpu.pipeline_mode<synchronous>, transform_indices = @transform_3, window_bounds = array<i64: 1, 32>}, {transform_indices = @transform_4, window_bounds = array<i64: 800, 32>}]} {
    %c0 = arith.constant 0 : index
    %c0_0 = arith.constant 0 : index
    %0 = vector.load %arg1[%c0, %c0_0] : memref<800x256xbf16, #tpu.memory_space<vmem>>, vector<800x256xbf16>
    %c0_1 = arith.constant 0 : index
    %c0_2 = arith.constant 0 : index
    %1 = vector.load %arg2[%c0_1, %c0_2] : memref<256x32xbf16, #tpu.memory_space<vmem>>, vector<256x32xbf16>
    %cst = arith.constant dense<0.000000e+00> : vector<800x32xf32>
    %2 = tpu.matmul %0, %1, %cst {dimension_numbers = #tpu.dot_dimension_numbers<[1], [0], [0], [1], [0, 0, 1, 1], [], []>} : vector<800x256xbf16>, vector<256x32xbf16>, vector<800x32xf32> -> vector<800x32xf32>
    %c0_3 = arith.constant 0 : index
    %c0_4 = arith.constant 0 : index
    %3 = vector.load %arg3[%c0_3, %c0_4] : memref<1x32xf32, #tpu.memory_space<vmem>>, vector<1x32xf32>
    %4 = vector.broadcast %3 : vector<1x32xf32> to vector<800x32xf32>
    %5 = arith.mulf %2, %4 : vector<800x32xf32>
    %c0_5 = arith.constant 0 : index
    %c0_6 = arith.constant 0 : index
    %6 = vector.load %arg4[%c0_5, %c0_6] : memref<1x32xf32, #tpu.memory_space<vmem>>, vector<1x32xf32>
    %7 = vector.broadcast %6 : vector<1x32xf32> to vector<800x32xf32>
    %8 = arith.addf %5, %7 : vector<800x32xf32>
    %cst_7 = arith.constant 0.000000e+00 : f32
    %9 = vector.broadcast %cst_7 : f32 to vector<800x32xf32>
    %10 = arith.maximumf %8, %9 : vector<800x32xf32>
    %11 = arith.truncf %10 : vector<800x32xf32> to vector<800x32xbf16>
    %c0_8 = arith.constant 0 : index
    %c0_9 = arith.constant 0 : index
    %12 = vector.load %arg5[%c0_8, %c0_9] : memref<800x32xbf16, #tpu.memory_space<vmem>>, vector<800x32xbf16>
    tpu.vector_store %arg5[%c0_8, %c0_9], %11 {strides = array<i32>} : memref<800x32xbf16, #tpu.memory_space<vmem>>, vector<800x32xbf16>,
    return
  }
  func.func @transform_0(%arg0: i32) -> (i32, i32) {
    %c0_i32 = arith.constant 0 : i32
    %c0_i32_0 = arith.constant 0 : i32
    return %arg0, %c0_i32 : i32, i32
  }
  func.func @transform_1(%arg0: i32) -> (i32, i32) {
    %c0_i32 = arith.constant 0 : i32
    %c0_i32_0 = arith.constant 0 : i32
    %c0_i32_1 = arith.constant 0 : i32
    return %c0_i32, %c0_i32_0 : i32, i32
  }
  func.func @transform_2(%arg0: i32) -> (i32, i32) {
    %c0_i32 = arith.constant 0 : i32
    %c0_i32_0 = arith.constant 0 : i32
    %c0_i32_1 = arith.constant 0 : i32
    return %c0_i32, %c0_i32_0 : i32, i32
  }
  func.func @transform_3(%arg0: i32) -> (i32, i32) {
    %c0_i32 = arith.constant 0 : i32
    %c0_i32_0 = arith.constant 0 : i32
    %c0_i32_1 = arith.constant 0 : i32
    return %c0_i32, %c0_i32_0 : i32, i32
  }
  func.func @transform_4(%arg0: i32) -> (i32, i32) {
    %c0_i32 = arith.constant 0 : i32
    %c0_i32_0 = arith.constant 0 : i32
    return %arg0, %c0_i32 : i32, i32
  }
}

module attributes {stable_mosaic.version = 11 : i64} {
  func.func @_matmul_bn_relu_kernel(%arg0: i32, %arg1: memref<162x512xbf16, #tpu.memory_space<vmem>>, %arg2: memref<512x64xbf16, #tpu.memory_space<vmem>>, %arg3: memref<1x64xf32, #tpu.memory_space<vmem>>, %arg4: memref<1x64xf32, #tpu.memory_space<vmem>>, %arg5: memref<162x64xbf16, #tpu.memory_space<vmem>>) attributes {dimension_semantics = [#tpu.dimension_semantics<parallel>], iteration_bounds = array<i64: 1>, scalar_prefetch = 0 : i64, scratch_operands = 0 : i64, tpu.core_type = #tpu.core_type<tc>, window_params = [{transform_indices = @transform_0, window_bounds = array<i64: 162, 512>}, {pipeline_mode = #tpu.pipeline_mode<synchronous>, transform_indices = @transform_1, window_bounds = array<i64: 512, 64>}, {pipeline_mode = #tpu.pipeline_mode<synchronous>, transform_indices = @transform_2, window_bounds = array<i64: 1, 64>}, {pipeline_mode = #tpu.pipeline_mode<synchronous>, transform_indices = @transform_3, window_bounds = array<i64: 1, 64>}, {transform_indices = @transform_4, window_bounds = array<i64: 162, 64>}]} {
    %c0 = arith.constant 0 : index
    %c0_0 = arith.constant 0 : index
    %0 = vector.load %arg1[%c0, %c0_0] : memref<162x512xbf16, #tpu.memory_space<vmem>>, vector<162x512xbf16>
    %c0_1 = arith.constant 0 : index
    %c0_2 = arith.constant 0 : index
    %1 = vector.load %arg2[%c0_1, %c0_2] : memref<512x64xbf16, #tpu.memory_space<vmem>>, vector<512x64xbf16>
    %cst = arith.constant dense<0.000000e+00> : vector<162x64xf32>
    %2 = tpu.matmul %0, %1, %cst {dimension_numbers = #tpu.dot_dimension_numbers<[1], [0], [0], [1], [0, 0, 1, 1], [], []>} : vector<162x512xbf16>, vector<512x64xbf16>, vector<162x64xf32> -> vector<162x64xf32>
    %c0_3 = arith.constant 0 : index
    %c0_4 = arith.constant 0 : index
    %3 = vector.load %arg3[%c0_3, %c0_4] : memref<1x64xf32, #tpu.memory_space<vmem>>, vector<1x64xf32>
    %4 = vector.broadcast %3 : vector<1x64xf32> to vector<162x64xf32>
    %5 = arith.mulf %2, %4 : vector<162x64xf32>
    %c0_5 = arith.constant 0 : index
    %c0_6 = arith.constant 0 : index
    %6 = vector.load %arg4[%c0_5, %c0_6] : memref<1x64xf32, #tpu.memory_space<vmem>>, vector<1x64xf32>
    %7 = vector.broadcast %6 : vector<1x64xf32> to vector<162x64xf32>
    %8 = arith.addf %5, %7 : vector<162x64xf32>
    %cst_7 = arith.constant 0.000000e+00 : f32
    %9 = vector.broadcast %cst_7 : f32 to vector<162x64xf32>
    %10 = arith.maximumf %8, %9 : vector<162x64xf32>
    %11 = arith.truncf %10 : vector<162x64xf32> to vector<162x64xbf16>
    %c0_8 = arith.constant 0 : index
    %c0_9 = arith.constant 0 : index
    %12 = vector.load %arg5[%c0_8, %c0_9] : memref<162x64xbf16, #tpu.memory_space<vmem>>, vector<162x64xbf16>
    tpu.vector_store %arg5[%c0_8, %c0_9], %11 {strides = array<i32>} : memref<162x64xbf16, #tpu.memory_space<vmem>>, vector<162x64xbf16>,
    return
  }
  func.func @transform_0(%arg0: i32) -> (i32, i32) {
    %c0_i32 = arith.constant 0 : i32
    %c0_i32_0 = arith.constant 0 : i32
    return %arg0, %c0_i32 : i32, i32
  }
  func.func @transform_1(%arg0: i32) -> (i32, i32) {
    %c0_i32 = arith.constant 0 : i32
    %c0_i32_0 = arith.constant 0 : i32
    %c0_i32_1 = arith.constant 0 : i32
    return %c0_i32, %c0_i32_0 : i32, i32
  }
  func.func @transform_2(%arg0: i32) -> (i32, i32) {
    %c0_i32 = arith.constant 0 : i32
    %c0_i32_0 = arith.constant 0 : i32
    %c0_i32_1 = arith.constant 0 : i32
    return %c0_i32, %c0_i32_0 : i32, i32
  }
  func.func @transform_3(%arg0: i32) -> (i32, i32) {
    %c0_i32 = arith.constant 0 : i32
    %c0_i32_0 = arith.constant 0 : i32
    %c0_i32_1 = arith.constant 0 : i32
    return %c0_i32, %c0_i32_0 : i32, i32
  }
  func.func @transform_4(%arg0: i32) -> (i32, i32) {
    %c0_i32 = arith.constant 0 : i32
    %c0_i32_0 = arith.constant 0 : i32
    return %arg0, %c0_i32 : i32, i32
  }
}

module attributes {stable_mosaic.version = 11 : i64} {
  func.func @_matmul_bn_relu_kernel(%arg0: i32, %arg1: memref<98x576xbf16, #tpu.memory_space<vmem>>, %arg2: memref<576x64xbf16, #tpu.memory_space<vmem>>, %arg3: memref<1x64xf32, #tpu.memory_space<vmem>>, %arg4: memref<1x64xf32, #tpu.memory_space<vmem>>, %arg5: memref<98x64xbf16, #tpu.memory_space<vmem>>) attributes {dimension_semantics = [#tpu.dimension_semantics<parallel>], iteration_bounds = array<i64: 1>, scalar_prefetch = 0 : i64, scratch_operands = 0 : i64, tpu.core_type = #tpu.core_type<tc>, window_params = [{transform_indices = @transform_0, window_bounds = array<i64: 98, 576>}, {pipeline_mode = #tpu.pipeline_mode<synchronous>, transform_indices = @transform_1, window_bounds = array<i64: 576, 64>}, {pipeline_mode = #tpu.pipeline_mode<synchronous>, transform_indices = @transform_2, window_bounds = array<i64: 1, 64>}, {pipeline_mode = #tpu.pipeline_mode<synchronous>, transform_indices = @transform_3, window_bounds = array<i64: 1, 64>}, {transform_indices = @transform_4, window_bounds = array<i64: 98, 64>}]} {
    %c0 = arith.constant 0 : index
    %c0_0 = arith.constant 0 : index
    %0 = vector.load %arg1[%c0, %c0_0] : memref<98x576xbf16, #tpu.memory_space<vmem>>, vector<98x576xbf16>
    %c0_1 = arith.constant 0 : index
    %c0_2 = arith.constant 0 : index
    %1 = vector.load %arg2[%c0_1, %c0_2] : memref<576x64xbf16, #tpu.memory_space<vmem>>, vector<576x64xbf16>
    %cst = arith.constant dense<0.000000e+00> : vector<98x64xf32>
    %2 = tpu.matmul %0, %1, %cst {dimension_numbers = #tpu.dot_dimension_numbers<[1], [0], [0], [1], [0, 0, 1, 1], [], []>} : vector<98x576xbf16>, vector<576x64xbf16>, vector<98x64xf32> -> vector<98x64xf32>
    %c0_3 = arith.constant 0 : index
    %c0_4 = arith.constant 0 : index
    %3 = vector.load %arg3[%c0_3, %c0_4] : memref<1x64xf32, #tpu.memory_space<vmem>>, vector<1x64xf32>
    %4 = vector.broadcast %3 : vector<1x64xf32> to vector<98x64xf32>
    %5 = arith.mulf %2, %4 : vector<98x64xf32>
    %c0_5 = arith.constant 0 : index
    %c0_6 = arith.constant 0 : index
    %6 = vector.load %arg4[%c0_5, %c0_6] : memref<1x64xf32, #tpu.memory_space<vmem>>, vector<1x64xf32>
    %7 = vector.broadcast %6 : vector<1x64xf32> to vector<98x64xf32>
    %8 = arith.addf %5, %7 : vector<98x64xf32>
    %cst_7 = arith.constant 0.000000e+00 : f32
    %9 = vector.broadcast %cst_7 : f32 to vector<98x64xf32>
    %10 = arith.maximumf %8, %9 : vector<98x64xf32>
    %11 = arith.truncf %10 : vector<98x64xf32> to vector<98x64xbf16>
    %c0_8 = arith.constant 0 : index
    %c0_9 = arith.constant 0 : index
    %12 = vector.load %arg5[%c0_8, %c0_9] : memref<98x64xbf16, #tpu.memory_space<vmem>>, vector<98x64xbf16>
    tpu.vector_store %arg5[%c0_8, %c0_9], %11 {strides = array<i32>} : memref<98x64xbf16, #tpu.memory_space<vmem>>, vector<98x64xbf16>,
    return
  }
  func.func @transform_0(%arg0: i32) -> (i32, i32) {
    %c0_i32 = arith.constant 0 : i32
    %c0_i32_0 = arith.constant 0 : i32
    return %arg0, %c0_i32 : i32, i32
  }
  func.func @transform_1(%arg0: i32) -> (i32, i32) {
    %c0_i32 = arith.constant 0 : i32
    %c0_i32_0 = arith.constant 0 : i32
    %c0_i32_1 = arith.constant 0 : i32
    return %c0_i32, %c0_i32_0 : i32, i32
  }
  func.func @transform_2(%arg0: i32) -> (i32, i32) {
    %c0_i32 = arith.constant 0 : i32
    %c0_i32_0 = arith.constant 0 : i32
    %c0_i32_1 = arith.constant 0 : i32
    return %c0_i32, %c0_i32_0 : i32, i32
  }
  func.func @transform_3(%arg0: i32) -> (i32, i32) {
    %c0_i32 = arith.constant 0 : i32
    %c0_i32_0 = arith.constant 0 : i32
    %c0_i32_1 = arith.constant 0 : i32
    return %c0_i32, %c0_i32_0 : i32, i32
  }
  func.func @transform_4(%arg0: i32) -> (i32, i32) {
    %c0_i32 = arith.constant 0 : i32
    %c0_i32_0 = arith.constant 0 : i32
    return %arg0, %c0_i32 : i32, i32
  }
}

module attributes {stable_mosaic.version = 11 : i64} {
  func.func @_fc_head_kernel(%arg0: i32, %arg1: memref<2x3136xbf16, #tpu.memory_space<vmem>>, %arg2: memref<3136x512xbf16, #tpu.memory_space<vmem>>, %arg3: memref<1x512xf32, #tpu.memory_space<vmem>>, %arg4: memref<512x128xbf16, #tpu.memory_space<vmem>>, %arg5: memref<1x128xf32, #tpu.memory_space<vmem>>, %arg6: memref<2x128xf32, #tpu.memory_space<vmem>>) attributes {dimension_semantics = [#tpu.dimension_semantics<arbitrary>], iteration_bounds = array<i64: 1>, scalar_prefetch = 0 : i64, scratch_operands = 0 : i64, tpu.core_type = #tpu.core_type<tc>, window_params = [{pipeline_mode = #tpu.pipeline_mode<synchronous>, transform_indices = @transform_0, window_bounds = array<i64: 2, 3136>}, {pipeline_mode = #tpu.pipeline_mode<synchronous>, transform_indices = @transform_1, window_bounds = array<i64: 3136, 512>}, {pipeline_mode = #tpu.pipeline_mode<synchronous>, transform_indices = @transform_2, window_bounds = array<i64: 1, 512>}, {pipeline_mode = #tpu.pipeline_mode<synchronous>, transform_indices = @transform_3, window_bounds = array<i64: 512, 128>}, {pipeline_mode = #tpu.pipeline_mode<synchronous>, transform_indices = @transform_4, window_bounds = array<i64: 1, 128>}, {pipeline_mode = #tpu.pipeline_mode<synchronous>, transform_indices = @transform_5, window_bounds = array<i64: 2, 128>}]} {
    %c0 = arith.constant 0 : index
    %c0_0 = arith.constant 0 : index
    %0 = vector.load %arg1[%c0, %c0_0] : memref<2x3136xbf16, #tpu.memory_space<vmem>>, vector<2x3136xbf16>
    %c0_1 = arith.constant 0 : index
    %c0_2 = arith.constant 0 : index
    %1 = vector.load %arg2[%c0_1, %c0_2] : memref<3136x512xbf16, #tpu.memory_space<vmem>>, vector<3136x512xbf16>
    %cst = arith.constant dense<0.000000e+00> : vector<2x512xf32>
    %2 = tpu.matmul %0, %1, %cst {dimension_numbers = #tpu.dot_dimension_numbers<[1], [0], [0], [1], [0, 0, 1, 1], [], []>} : vector<2x3136xbf16>, vector<3136x512xbf16>, vector<2x512xf32> -> vector<2x512xf32>
    %c0_3 = arith.constant 0 : index
    %c0_4 = arith.constant 0 : index
    %3 = vector.load %arg3[%c0_3, %c0_4] : memref<1x512xf32, #tpu.memory_space<vmem>>, vector<1x512xf32>
    %4 = vector.broadcast %3 : vector<1x512xf32> to vector<2x512xf32>
    %5 = arith.addf %2, %4 : vector<2x512xf32>
    %cst_5 = arith.constant 0.000000e+00 : f32
    %6 = vector.broadcast %cst_5 : f32 to vector<2x512xf32>
    %7 = arith.maximumf %5, %6 : vector<2x512xf32>
    %8 = arith.truncf %7 : vector<2x512xf32> to vector<2x512xbf16>
    %c0_6 = arith.constant 0 : index
    %c0_7 = arith.constant 0 : index
    %9 = vector.load %arg4[%c0_6, %c0_7] : memref<512x128xbf16, #tpu.memory_space<vmem>>, vector<512x128xbf16>
    %cst_8 = arith.constant dense<0.000000e+00> : vector<2x128xf32>
    %10 = tpu.matmul %8, %9, %cst_8 {dimension_numbers = #tpu.dot_dimension_numbers<[1], [0], [0], [1], [0, 0, 1, 1], [], []>} : vector<2x512xbf16>, vector<512x128xbf16>, vector<2x128xf32> -> vector<2x128xf32>
    %c0_9 = arith.constant 0 : index
    %c0_10 = arith.constant 0 : index
    %11 = vector.load %arg5[%c0_9, %c0_10] : memref<1x128xf32, #tpu.memory_space<vmem>>, vector<1x128xf32>
    %12 = vector.broadcast %11 : vector<1x128xf32> to vector<2x128xf32>
    %13 = arith.addf %10, %12 : vector<2x128xf32>
    %c0_11 = arith.constant 0 : index
    %c0_12 = arith.constant 0 : index
    %14 = vector.load %arg6[%c0_11, %c0_12] : memref<2x128xf32, #tpu.memory_space<vmem>>, vector<2x128xf32>
    tpu.vector_store %arg6[%c0_11, %c0_12], %13 {strides = array<i32>} : memref<2x128xf32, #tpu.memory_space<vmem>>, vector<2x128xf32>,
    return
  }
  func.func @transform_0(%arg0: i32) -> (i32, i32) {
    %c0_i32 = arith.constant 0 : i32
    %c0_i32_0 = arith.constant 0 : i32
    %c0_i32_1 = arith.constant 0 : i32
    return %c0_i32, %c0_i32_0 : i32, i32
  }
  func.func @transform_1(%arg0: i32) -> (i32, i32) {
    %c0_i32 = arith.constant 0 : i32
    %c0_i32_0 = arith.constant 0 : i32
    %c0_i32_1 = arith.constant 0 : i32
    return %c0_i32, %c0_i32_0 : i32, i32
  }
  func.func @transform_2(%arg0: i32) -> (i32, i32) {
    %c0_i32 = arith.constant 0 : i32
    %c0_i32_0 = arith.constant 0 : i32
    %c0_i32_1 = arith.constant 0 : i32
    return %c0_i32, %c0_i32_0 : i32, i32
  }
  func.func @transform_3(%arg0: i32) -> (i32, i32) {
    %c0_i32 = arith.constant 0 : i32
    %c0_i32_0 = arith.constant 0 : i32
    %c0_i32_1 = arith.constant 0 : i32
    return %c0_i32, %c0_i32_0 : i32, i32
  }
  func.func @transform_4(%arg0: i32) -> (i32, i32) {
    %c0_i32 = arith.constant 0 : i32
    %c0_i32_0 = arith.constant 0 : i32
    %c0_i32_1 = arith.constant 0 : i32
    return %c0_i32, %c0_i32_0 : i32, i32
  }
  func.func @transform_5(%arg0: i32) -> (i32, i32) {
    %c0_i32 = arith.constant 0 : i32
    %c0_i32_0 = arith.constant 0 : i32
    %c0_i32_1 = arith.constant 0 : i32
    return %c0_i32, %c0_i32_0 : i32, i32
  }
}

</mosaic_0001>

<llo_original>
// kernel: dqn_forward.4
$region0: #{dqn_forward.4}
  #allocation0 [shape = 'u32[]', space=smem, size = 0x4, offset = 0x4, fixed_abs, tag = 'smem constant byte address 0x4 - core index']
  #allocation1 [shape = 'u32[72,128]{1,0:T(1,128)}', space=vmem, size = 0x9000, scoped, tag = 'internal scratch']
  %s0 = inlined_call_operand.vmem [shape: bf16[800,256], index: 0, kind: input, shape index: {}]
  %s1 = inlined_call_operand.vmem [shape: bf16[256,32], index: 1, kind: input, shape index: {}]
  %s2 = inlined_call_operand.vmem [shape: f32[1,32], index: 2, kind: input, shape index: {}]
  %s3 = inlined_call_operand.vmem [shape: f32[1,32], index: 3, kind: input, shape index: {}]
  %s4 = inlined_call_operand.vmem [shape: bf16[800,32], index: 4, kind: output, shape index: {}]
  %s5 = sld [smem:[#allocation0]]
  $region26: #{dqn_forward.4} parent=0
    _
  %s7 = ssub.s32 1, %s5
  %s8 = scalar_select 0, %s7, %s5
  // Predicated region
  $region2: #{dqn_forward.4} parent=0 // pred_check
    _
  $region3: #{dqn_forward.4} parent=0 // pred_check_branch
    %10 = sbr.rel (0) target = $region5
  $region4: #{dqn_forward.4} parent=0 // pred_region
    _
  $region5: #{dqn_forward.4} parent=0 // pred_fallthru
    _
  // Predicated region
  $region6: #{dqn_forward.4} parent=0 // pred_check
    _
  $region7: #{dqn_forward.4} parent=0 // pred_check_branch
    %12 = sbr.rel (0) target = $region9
  $region8: #{dqn_forward.4} parent=0 // pred_region
    _
  $region9: #{dqn_forward.4} parent=0 // pred_fallthru
    _
  // Predicated region
  $region10: #{dqn_forward.4} parent=0 // pred_check
    _
  $region11: #{dqn_forward.4} parent=0 // pred_check_branch
    %14 = sbr.rel (0) target = $region13
  $region12: #{dqn_forward.4} parent=0 // pred_region
    _
  $region13: #{dqn_forward.4} parent=0 // pred_fallthru
    _
  // Predicated region
  $region14: #{dqn_forward.4} parent=0 // pred_check
    _
  $region15: #{dqn_forward.4} parent=0 // pred_check_branch
    %16 = sbr.rel (0) target = $region17
  $region16: #{dqn_forward.4} parent=0 // pred_region
    _
  $region17: #{dqn_forward.4} parent=0 // pred_fallthru
    _
  %v17 = vld [vmem:[%s0] sm:$0xff]
  %v18 = vld [vmem:[%s0 + $0x8] sm:$0xff]
  %v19 = vld [vmem:[%s0 + $0x10] sm:$0xff]
  %v20 = vld [vmem:[%s0 + $0x18] sm:$0xff]
  %v21 = vld [vmem:[%s0 + $0x20] sm:$0xff]
  %v22 = vld [vmem:[%s0 + $0x28] sm:$0xff]
  %v23 = vld [vmem:[%s0 + $0x30] sm:$0xff]
  %v24 = vld [vmem:[%s0 + $0x38] sm:$0xff]
  %v25 = vld [vmem:[%s0 + $0x40] sm:$0xff]
  %v26 = vld [vmem:[%s0 + $0x48] sm:$0xff]
  %v27 = vld [vmem:[%s0 + $0x50] sm:$0xff]
  %v28 = vld [vmem:[%s0 + $0x58] sm:$0xff]
  %v29 = vld [vmem:[%s0 + $0x60] sm:$0xff]
  %v30 = vld [vmem:[%s0 + $0x68] sm:$0xff]
  %v31 = vld [vmem:[%s0 + $0x70] sm:$0xff]
  %v32 = vld [vmem:[%s0 + $0x78] sm:$0xff]
  %v33 = vld [vmem:[%s0 + $0x80] sm:$0xff]
  %v34 = vld [vmem:[%s0 + $0x88] sm:$0xff]
  %v35 = vld [vmem:[%s0 + $0x90] sm:$0xff]
  %v36 = vld [vmem:[%s0 + $0x98] sm:$0xff]
  %v37 = vld [vmem:[%s0 + $0xa0] sm:$0xff]
  %v38 = vld [vmem:[%s0 + $0xa8] sm:$0xff]
  %v39 = vld [vmem:[%s0 + $0xb0] sm:$0xff]
  %v40 = vld [vmem:[%s0 + $0xb8] sm:$0xff]
  %v41 = vld [vmem:[%s0 + $0xc0] sm:$0xff]
  %v42 = vld [vmem:[%s0 + $0xc8] sm:$0xff]
  %v43 = vld [vmem:[%s0 + $0xd0] sm:$0xff]
  %v44 = vld [vmem:[%s0 + $0xd8] sm:$0xff]
  %v45 = vld [vmem:[%s0 + $0xe0] sm:$0xff]
  %v46 = vld [vmem:[%s0 + $0xe8] sm:$0xff]
  %v47 = vld [vmem:[%s0 + $0xf0] sm:$0xff]
  %v48 = vld [vmem:[%s0 + $0xf8] sm:$0xff]
  %v49 = vld [vmem:[%s0 + $0x100] sm:$0xff]
  %v50 = vld [vmem:[%s0 + $0x108] sm:$0xff]
  %v51 = vld [vmem:[%s0 + $0x110] sm:$0xff]
  %v52 = vld [vmem:[%s0 + $0x118] sm:$0xff]
  %v53 = vld [vmem:[%s0 + $0x120] sm:$0xff]
  %v54 = vld [vmem:[%s0 + $0x128] sm:$0xff]
  %v55 = vld [vmem:[%s0 + $0x130] sm:$0xff]
  %v56 = vld [vmem:[%s0 + $0x138] sm:$0xff]
  %v57 = vld [vmem:[%s0 + $0x140] sm:$0xff]
  %v58 = vld [vmem:[%s0 + $0x148] sm:$0xff]
  %v59 = vld [vmem:[%s0 + $0x150] sm:$0xff]
  %v60 = vld [vmem:[%s0 + $0x158] sm:$0xff]
  %v61 = vld [vmem:[%s0 + $0x160] sm:$0xff]
  %v62 = vld [vmem:[%s0 + $0x168] sm:$0xff]
  %v63 = vld [vmem:[%s0 + $0x170] sm:$0xff]
  %v64 = vld [vmem:[%s0 + $0x178] sm:$0xff]
  %v65 = vld [vmem:[%s0 + $0x180] sm:$0xff]
  %v66 = vld [vmem:[%s0 + $0x188] sm:$0xff]
  %v67 = vld [vmem:[%s0 + $0x190] sm:$0xff]
  %v68 = vld [vmem:[%s0 + $0x198] sm:$0xff]
  %v69 = vld [vmem:[%s0 + $0x1a0] sm:$0xff]
  %v70 = vld [vmem:[%s0 + $0x1a8] sm:$0xff]
  %v71 = vld [vmem:[%s0 + $0x1b0] sm:$0xff]
  %v72 = vld [vmem:[%s0 + $0x1b8] sm:$0xff]
  %v73 = vld [vmem:[%s0 + $0x1c0] sm:$0xff]
  %v74 = vld [vmem:[%s0 + $0x1c8] sm:$0xff]
  %v75 = vld [vmem:[%s0 + $0x1d0] sm:$0xff]
  %v76 = vld [vmem:[%s0 + $0x1d8] sm:$0xff]
  %v77 = vld [vmem:[%s0 + $0x1e0] sm:$0xff]
  %v78 = vld [vmem:[%s0 + $0x1e8] sm:$0xff]
  %v79 = vld [vmem:[%s0 + $0x1f0] sm:$0xff]
  %v80 = vld [vmem:[%s0 + $0x1f8] sm:$0xff]
  %v81 = vld [vmem:[%s0 + $0x200] sm:$0xff]
  %v82 = vld [vmem:[%s0 + $0x208] sm:$0xff]
  %v83 = vld [vmem:[%s0 + $0x210] sm:$0xff]
  %v84 = vld [vmem:[%s0 + $0x218] sm:$0xff]
  %v85 = vld [vmem:[%s0 + $0x220] sm:$0xff]
  %v86 = vld [vmem:[%s0 + $0x228] sm:$0xff]
  %v87 = vld [vmem:[%s0 + $0x230] sm:$0xff]
  %v88 = vld [vmem:[%s0 + $0x238] sm:$0xff]
  %v89 = vld [vmem:[%s0 + $0x240] sm:$0xff]
  %v90 = vld [vmem:[%s0 + $0x248] sm:$0xff]
  %v91 = vld [vmem:[%s0 + $0x250] sm:$0xff]
  %v92 = vld [vmem:[%s0 + $0x258] sm:$0xff]
  %v93 = vld [vmem:[%s0 + $0x260] sm:$0xff]
  %v94 = vld [vmem:[%s0 + $0x268] sm:$0xff]
  %v95 = vld [vmem:[%s0 + $0x270] sm:$0xff]
  %v96 = vld [vmem:[%s0 + $0x278] sm:$0xff]
  %v97 = vld [vmem:[%s0 + $0x280] sm:$0xff]
  %v98 = vld [vmem:[%s0 + $0x288] sm:$0xff]
  %v99 = vld [vmem:[%s0 + $0x290] sm:$0xff]
  %v100 = vld [vmem:[%s0 + $0x298] sm:$0xff]
  %v101 = vld [vmem:[%s0 + $0x2a0] sm:$0xff]
  %v102 = vld [vmem:[%s0 + $0x2a8] sm:$0xff]
  %v103 = vld [vmem:[%s0 + $0x2b0] sm:$0xff]
  %v104 = vld [vmem:[%s0 + $0x2b8] sm:$0xff]
  %v105 = vld [vmem:[%s0 + $0x2c0] sm:$0xff]
  %v106 = vld [vmem:[%s0 + $0x2c8] sm:$0xff]
  %v107 = vld [vmem:[%s0 + $0x2d0] sm:$0xff]
  %v108 = vld [vmem:[%s0 + $0x2d8] sm:$0xff]
  %v109 = vld [vmem:[%s0 + $0x2e0] sm:$0xff]
  %v110 = vld [vmem:[%s0 + $0x2e8] sm:$0xff]
  %v111 = vld [vmem:[%s0 + $0x2f0] sm:$0xff]
  %v112 = vld [vmem:[%s0 + $0x2f8] sm:$0xff]
  %v113 = vld [vmem:[%s0 + $0x300] sm:$0xff]
  %v114 = vld [vmem:[%s0 + $0x308] sm:$0xff]
  %v115 = vld [vmem:[%s0 + $0x310] sm:$0xff]
  %v116 = vld [vmem:[%s0 + $0x318] sm:$0xff]
  %v117 = vld [vmem:[%s1] sm:$0xf]
  %v118 = vld [vmem:[%s1 + $0x4] sm:$0xf]
  %v119 = vld [vmem:[%s1 + $0x8] sm:$0xf]
  %v120 = vld [vmem:[%s1 + $0xc] sm:$0xf]
  %v121 = vld [vmem:[%s1 + $0x10] sm:$0xf]
  %v122 = vld [vmem:[%s1 + $0x14] sm:$0xf]
  %v123 = vld [vmem:[%s1 + $0x18] sm:$0xf]
  %v124 = vld [vmem:[%s1 + $0x1c] sm:$0xf]
  %v125 = vld [vmem:[%s1 + $0x20] sm:$0xf]
  %v126 = vld [vmem:[%s1 + $0x24] sm:$0xf]
  %v127 = vld [vmem:[%s1 + $0x28] sm:$0xf]
  %v128 = vld [vmem:[%s1 + $0x2c] sm:$0xf]
  %v129 = vld [vmem:[%s1 + $0x30] sm:$0xf]
  %v130 = vld [vmem:[%s1 + $0x34] sm:$0xf]
  %v131 = vld [vmem:[%s1 + $0x38] sm:$0xf]
  %v132 = vld [vmem:[%s1 + $0x3c] sm:$0xf]
  %v133 = vld [vmem:[%s1 + $0x40] sm:$0xf]
  %v134 = vld [vmem:[%s1 + $0x44] sm:$0xf]
  %v135 = vld [vmem:[%s1 + $0x48] sm:$0xf]
  %v136 = vld [vmem:[%s1 + $0x4c] sm:$0xf]
  %v137 = vld [vmem:[%s1 + $0x50] sm:$0xf]
  %v138 = vld [vmem:[%s1 + $0x54] sm:$0xf]
  %v139 = vld [vmem:[%s1 + $0x58] sm:$0xf]
  %v140 = vld [vmem:[%s1 + $0x5c] sm:$0xf]
  %v141 = vld [vmem:[%s1 + $0x60] sm:$0xf]
  %v142 = vld [vmem:[%s1 + $0x64] sm:$0xf]
  %v143 = vld [vmem:[%s1 + $0x68] sm:$0xf]
  %v144 = vld [vmem:[%s1 + $0x6c] sm:$0xf]
  %v145 = vld [vmem:[%s1 + $0x70] sm:$0xf]
  %v146 = vld [vmem:[%s1 + $0x74] sm:$0xf]
  %v147 = vld [vmem:[%s1 + $0x78] sm:$0xf]
  %v148 = vld [vmem:[%s1 + $0x7c] sm:$0xf]
  %v249 = vunpack.c.l.b16 %v17
  %v250 = vunpack.c.h.b16 %v17
  %v251 = vunpack.c.l.b16 %v18
  %v252 = vunpack.c.h.b16 %v18
  %v253 = vunpack.c.l.b16 %v19
  %v254 = vunpack.c.h.b16 %v19
  %v255 = vunpack.c.l.b16 %v20
  %v256 = vunpack.c.h.b16 %v20
  %v257 = vunpack.c.l.b16 %v21
  %v258 = vunpack.c.h.b16 %v21
  %v259 = vunpack.c.l.b16 %v22
  %v260 = vunpack.c.h.b16 %v22
  %v261 = vunpack.c.l.b16 %v23
  %v262 = vunpack.c.h.b16 %v23
  %v263 = vunpack.c.l.b16 %v24
  %v264 = vunpack.c.h.b16 %v24
  %v265 = vunpack.c.l.b16 %v25
  %v266 = vunpack.c.h.b16 %v25
  %v267 = vunpack.c.l.b16 %v26
  %v268 = vunpack.c.h.b16 %v26
  %v269 = vunpack.c.l.b16 %v27
  %v270 = vunpack.c.h.b16 %v27
  %v271 = vunpack.c.l.b16 %v28
  %v272 = vunpack.c.h.b16 %v28
  %v273 = vunpack.c.l.b16 %v29
  %v274 = vunpack.c.h.b16 %v29
  %v275 = vunpack.c.l.b16 %v30
  %v276 = vunpack.c.h.b16 %v30
  %v277 = vunpack.c.l.b16 %v31
  %v278 = vunpack.c.h.b16 %v31
  %v279 = vunpack.c.l.b16 %v32
  %v280 = vunpack.c.h.b16 %v32
  %v281 = vunpack.c.l.b16 %v33
  %v282 = vunpack.c.h.b16 %v33
  %v283 = vunpack.c.l.b16 %v34
  %v284 = vunpack.c.h.b16 %v34
  %v285 = vunpack.c.l.b16 %v35
  %v286 = vunpack.c.h.b16 %v35
  %v287 = vunpack.c.l.b16 %v36
  %v288 = vunpack.c.h.b16 %v36
  %v289 = vunpack.c.l.b16 %v37
  %v290 = vunpack.c.h.b16 %v37
  %v291 = vunpack.c.l.b16 %v38
  %v292 = vunpack.c.h.b16 %v38
  %v293 = vunpack.c.l.b16 %v39
  %v294 = vunpack.c.h.b16 %v39
  %v295 = vunpack.c.l.b16 %v40
  %v296 = vunpack.c.h.b16 %v40
  %v297 = vunpack.c.l.b16 %v41
  %v298 = vunpack.c.h.b16 %v41
  %v299 = vunpack.c.l.b16 %v42
  %v300 = vunpack.c.h.b16 %v42
  %v301 = vunpack.c.l.b16 %v43
  %v302 = vunpack.c.h.b16 %v43
  %v303 = vunpack.c.l.b16 %v44
  %v304 = vunpack.c.h.b16 %v44
  %v305 = vunpack.c.l.b16 %v45
  %v306 = vunpack.c.h.b16 %v45
  %v307 = vunpack.c.l.b16 %v46
  %v308 = vunpack.c.h.b16 %v46
  %v309 = vunpack.c.l.b16 %v47
  %v310 = vunpack.c.h.b16 %v47
  %v311 = vunpack.c.l.b16 %v48
  %v312 = vunpack.c.h.b16 %v48
  %v313 = vunpack.c.l.b16 %v49
  %v314 = vunpack.c.h.b16 %v49
  %v315 = vunpack.c.l.b16 %v50
  %v316 = vunpack.c.h.b16 %v50
  %v317 = vunpack.c.l.b16 %v51
  %v318 = vunpack.c.h.b16 %v51
  %v319 = vunpack.c.l.b16 %v52
  %v320 = vunpack.c.h.b16 %v52
  %v321 = vunpack.c.l.b16 %v53
  %v322 = vunpack.c.h.b16 %v53
  %v323 = vunpack.c.l.b16 %v54
  %v324 = vunpack.c.h.b16 %v54
  %v325 = vunpack.c.l.b16 %v55
  %v326 = vunpack.c.h.b16 %v55
  %v327 = vunpack.c.l.b16 %v56
  %v328 = vunpack.c.h.b16 %v56
  %v329 = vunpack.c.l.b16 %v57
  %v330 = vunpack.c.h.b16 %v57
  %v331 = vunpack.c.l.b16 %v58
  %v332 = vunpack.c.h.b16 %v58
  %v333 = vunpack.c.l.b16 %v59
  %v334 = vunpack.c.h.b16 %v59
  %v335 = vunpack.c.l.b16 %v60
  %v336 = vunpack.c.h.b16 %v60
  %v337 = vunpack.c.l.b16 %v61
  %v338 = vunpack.c.h.b16 %v61
  %v339 = vunpack.c.l.b16 %v62
  %v340 = vunpack.c.h.b16 %v62
  %v341 = vunpack.c.l.b16 %v63
  %v342 = vunpack.c.h.b16 %v63
  %v343 = vunpack.c.l.b16 %v64
  %v344 = vunpack.c.h.b16 %v64
  %v345 = vunpack.c.l.b16 %v65
  %v346 = vunpack.c.h.b16 %v65
  %v347 = vunpack.c.l.b16 %v66
  %v348 = vunpack.c.h.b16 %v66
  %v349 = vunpack.c.l.b16 %v67
  %v350 = vunpack.c.h.b16 %v67
  %v351 = vunpack.c.l.b16 %v68
  %v352 = vunpack.c.h.b16 %v68
  %v353 = vunpack.c.l.b16 %v69
  %v354 = vunpack.c.h.b16 %v69
  %v355 = vunpack.c.l.b16 %v70
  %v356 = vunpack.c.h.b16 %v70
  %v357 = vunpack.c.l.b16 %v71
  %v358 = vunpack.c.h.b16 %v71
  %v359 = vunpack.c.l.b16 %v72
  %v360 = vunpack.c.h.b16 %v72
  %v361 = vunpack.c.l.b16 %v73
  %v362 = vunpack.c.h.b16 %v73
  %v363 = vunpack.c.l.b16 %v74
  %v364 = vunpack.c.h.b16 %v74
  %v365 = vunpack.c.l.b16 %v75
  %v366 = vunpack.c.h.b16 %v75
  %v367 = vunpack.c.l.b16 %v76
  %v368 = vunpack.c.h.b16 %v76
  %v369 = vunpack.c.l.b16 %v77
  %v370 = vunpack.c.h.b16 %v77
  %v371 = vunpack.c.l.b16 %v78
  %v372 = vunpack.c.h.b16 %v78
  %v373 = vunpack.c.l.b16 %v79
  %v374 = vunpack.c.h.b16 %v79
  %v375 = vunpack.c.l.b16 %v80
  %v376 = vunpack.c.h.b16 %v80
  %v377 = vunpack.c.l.b16 %v81
  %v378 = vunpack.c.h.b16 %v81
  %v379 = vunpack.c.l.b16 %v82
  %v380 = vunpack.c.h.b16 %v82
  %v381 = vunpack.c.l.b16 %v83
  %v382 = vunpack.c.h.b16 %v83
  %v383 = vunpack.c.l.b16 %v84
  %v384 = vunpack.c.h.b16 %v84
  %v385 = vunpack.c.l.b16 %v85
  %v386 = vunpack.c.h.b16 %v85
  %v387 = vunpack.c.l.b16 %v86
  %v388 = vunpack.c.h.b16 %v86
  %v389 = vunpack.c.l.b16 %v87
  %v390 = vunpack.c.h.b16 %v87
  %v391 = vunpack.c.l.b16 %v88
  %v392 = vunpack.c.h.b16 %v88
  %v393 = vunpack.c.l.b16 %v89
  %v394 = vunpack.c.h.b16 %v89
  %v395 = vunpack.c.l.b16 %v90
  %v396 = vunpack.c.h.b16 %v90
  %v397 = vunpack.c.l.b16 %v91
  %v398 = vunpack.c.h.b16 %v91
  %v399 = vunpack.c.l.b16 %v92
  %v400 = vunpack.c.h.b16 %v92
  %v401 = vunpack.c.l.b16 %v93
  %v402 = vunpack.c.h.b16 %v93
  %v403 = vunpack.c.l.b16 %v94
  %v404 = vunpack.c.h.b16 %v94
  %v405 = vunpack.c.l.b16 %v95
  %v406 = vunpack.c.h.b16 %v95
  %v407 = vunpack.c.l.b16 %v96
  %v408 = vunpack.c.h.b16 %v96
  %v409 = vunpack.c.l.b16 %v97
  %v410 = vunpack.c.h.b16 %v97
  %v411 = vunpack.c.l.b16 %v98
  %v412 = vunpack.c.h.b16 %v98
  %v413 = vunpack.c.l.b16 %v99
  %v414 = vunpack.c.h.b16 %v99
  %v415 = vunpack.c.l.b16 %v100
  %v416 = vunpack.c.h.b16 %v100
  %v417 = vunpack.c.l.b16 %v101
  %v418 = vunpack.c.h.b16 %v101
  %v419 = vunpack.c.l.b16 %v102
  %v420 = vunpack.c.h.b16 %v102
  %v421 = vunpack.c.l.b16 %v103
  %v422 = vunpack.c.h.b16 %v103
  %v423 = vunpack.c.l.b16 %v104
  %v424 = vunpack.c.h.b16 %v104
  %v425 = vunpack.c.l.b16 %v105
  %v426 = vunpack.c.h.b16 %v105
  %v427 = vunpack.c.l.b16 %v106
  %v428 = vunpack.c.h.b16 %v106
  %v429 = vunpack.c.l.b16 %v107
  %v430 = vunpack.c.h.b16 %v107
  %v431 = vunpack.c.l.b16 %v108
  %v432 = vunpack.c.h.b16 %v108
  %v433 = vunpack.c.l.b16 %v109
  %v434 = vunpack.c.h.b16 %v109
  %v435 = vunpack.c.l.b16 %v110
  %v436 = vunpack.c.h.b16 %v110
  %v437 = vunpack.c.l.b16 %v111
  %v438 = vunpack.c.h.b16 %v111
  %v439 = vunpack.c.l.b16 %v112
  %v440 = vunpack.c.h.b16 %v112
  %v441 = vunpack.c.l.b16 %v113
  %v442 = vunpack.c.h.b16 %v113
  %v443 = vunpack.c.l.b16 %v114
  %v444 = vunpack.c.h.b16 %v114
  %v445 = vunpack.c.l.b16 %v115
  %v446 = vunpack.c.h.b16 %v115
  %v447 = vunpack.c.l.b16 %v116
  %v448 = vunpack.c.h.b16 %v116
  %v449 = vpack.c.b16 %v251, %v249
  %v450 = vpack.c.b16 %v252, %v250
  %v451 = vpack.c.b16 %v255, %v253
  %v452 = vpack.c.b16 %v256, %v254
  %v453 = vpack.c.b16 %v259, %v257
  %v454 = vpack.c.b16 %v260, %v258
  %v455 = vpack.c.b16 %v263, %v261
  %v456 = vpack.c.b16 %v264, %v262
  %v457 = vpack.c.b16 %v267, %v265
  %v458 = vpack.c.b16 %v268, %v266
  %v459 = vpack.c.b16 %v271, %v269
  %v460 = vpack.c.b16 %v272, %v270
  %v461 = vpack.c.b16 %v275, %v273
  %v462 = vpack.c.b16 %v276, %v274
  %v463 = vpack.c.b16 %v279, %v277
  %v464 = vpack.c.b16 %v280, %v278
  %v465 = vpack.c.b16 %v283, %v281
  %v466 = vpack.c.b16 %v284, %v282
  %v467 = vpack.c.b16 %v287, %v285
  %v468 = vpack.c.b16 %v288, %v286
  %v469 = vpack.c.b16 %v291, %v289
  %v470 = vpack.c.b16 %v292, %v290
  %v471 = vpack.c.b16 %v295, %v293
  %v472 = vpack.c.b16 %v296, %v294
  %v473 = vpack.c.b16 %v299, %v297
  %v474 = vpack.c.b16 %v300, %v298
  %v475 = vpack.c.b16 %v303, %v301
  %v476 = vpack.c.b16 %v304, %v302
  %v477 = vpack.c.b16 %v307, %v305
  %v478 = vpack.c.b16 %v308, %v306
  %v479 = vpack.c.b16 %v311, %v309
  %v480 = vpack.c.b16 %v312, %v310
  %v481 = vpack.c.b16 %v315, %v313
  %v482 = vpack.c.b16 %v316, %v314
  %v483 = vpack.c.b16 %v319, %v317
  %v484 = vpack.c.b16 %v320, %v318
  %v485 = vpack.c.b16 %v323, %v321
  %v486 = vpack.c.b16 %v324, %v322
  %v487 = vpack.c.b16 %v327, %v325
  %v488 = vpack.c.b16 %v328, %v326
  %v489 = vpack.c.b16 %v331, %v329
  %v490 = vpack.c.b16 %v332, %v330
  %v491 = vpack.c.b16 %v335, %v333
  %v492 = vpack.c.b16 %v336, %v334
  %v493 = vpack.c.b16 %v339, %v337
  %v494 = vpack.c.b16 %v340, %v338
  %v495 = vpack.c.b16 %v343, %v341
  %v496 = vpack.c.b16 %v344, %v342
  %v497 = vpack.c.b16 %v347, %v345
  %v498 = vpack.c.b16 %v348, %v346
  %v499 = vpack.c.b16 %v351, %v349
  %v500 = vpack.c.b16 %v352, %v350
  %v501 = vpack.c.b16 %v355, %v353
  %v502 = vpack.c.b16 %v356, %v354
  %v503 = vpack.c.b16 %v359, %v357
  %v504 = vpack.c.b16 %v360, %v358
  %v505 = vpack.c.b16 %v363, %v361
  %v506 = vpack.c.b16 %v364, %v362
  %v507 = vpack.c.b16 %v367, %v365
  %v508 = vpack.c.b16 %v368, %v366
  %v509 = vpack.c.b16 %v371, %v369
  %v510 = vpack.c.b16 %v372, %v370
  %v511 = vpack.c.b16 %v375, %v373
  %v512 = vpack.c.b16 %v376, %v374
  %v513 = vpack.c.b16 %v379, %v377
  %v514 = vpack.c.b16 %v380, %v378
  %v515 = vpack.c.b16 %v383, %v381
  %v516 = vpack.c.b16 %v384, %v382
  %v517 = vpack.c.b16 %v387, %v385
  %v518 = vpack.c.b16 %v388, %v386
  %v519 = vpack.c.b16 %v391, %v389
  %v520 = vpack.c.b16 %v392, %v390
  %v521 = vpack.c.b16 %v395, %v393
  %v522 = vpack.c.b16 %v396, %v394
  %v523 = vpack.c.b16 %v399, %v397
  %v524 = vpack.c.b16 %v400, %v398
  %v525 = vpack.c.b16 %v403, %v401
  %v526 = vpack.c.b16 %v404, %v402
  %v527 = vpack.c.b16 %v407, %v405
  %v528 = vpack.c.b16 %v408, %v406
  %v529 = vpack.c.b16 %v411, %v409
  %v530 = vpack.c.b16 %v412, %v410
  %v531 = vpack.c.b16 %v415, %v413
  %v532 = vpack.c.b16 %v416, %v414
  %v533 = vpack.c.b16 %v419, %v417
  %v534 = vpack.c.b16 %v420, %v418
  %v535 = vpack.c.b16 %v423, %v421
  %v536 = vpack.c.b16 %v424, %v422
  %v537 = vpack.c.b16 %v427, %v425
  %v538 = vpack.c.b16 %v428, %v426
  %v539 = vpack.c.b16 %v431, %v429
  %v540 = vpack.c.b16 %v432, %v430
  %v541 = vpack.c.b16 %v435, %v433
  %v542 = vpack.c.b16 %v436, %v434
  %v543 = vpack.c.b16 %v439, %v437
  %v544 = vpack.c.b16 %v440, %v438
  %v545 = vpack.c.b16 %v443, %v441
  %v546 = vpack.c.b16 %v444, %v442
  %v547 = vpack.c.b16 %v447, %v445
  %v548 = vpack.c.b16 %v448, %v446
  %v681 = vunpack.c.l.b16 %v117
  %v682 = vunpack.c.l.b16 %v118
  %v683 = vunpack.c.l.b16 %v119
  %v684 = vunpack.c.l.b16 %v120
  %v685 = vunpack.c.l.b16 %v121
  %v686 = vunpack.c.l.b16 %v122
  %v687 = vunpack.c.l.b16 %v123
  %v688 = vunpack.c.l.b16 %v124
  %v689 = vunpack.c.l.b16 %v125
  %v690 = vunpack.c.l.b16 %v126
  %v691 = vunpack.c.l.b16 %v127
  %v692 = vunpack.c.l.b16 %v128
  %v693 = vunpack.c.l.b16 %v129
  %v694 = vunpack.c.l.b16 %v130
  %v695 = vunpack.c.l.b16 %v131
  %v696 = vunpack.c.l.b16 %v132
  %v697 = vunpack.c.l.b16 %v133
  %v698 = vunpack.c.l.b16 %v134
  %v699 = vunpack.c.l.b16 %v135
  %v700 = vunpack.c.l.b16 %v136
  %v701 = vunpack.c.l.b16 %v137
  %v702 = vunpack.c.l.b16 %v138
  %v703 = vunpack.c.l.b16 %v139
  %v704 = vunpack.c.l.b16 %v140
  %v705 = vunpack.c.l.b16 %v141
  %v706 = vunpack.c.l.b16 %v142
  %v707 = vunpack.c.l.b16 %v143
  %v708 = vunpack.c.l.b16 %v144
  %v709 = vunpack.c.l.b16 %v145
  %v710 = vunpack.c.l.b16 %v146
  %v711 = vunpack.c.l.b16 %v147
  %v712 = vunpack.c.l.b16 %v148
  %v713 = vpack.c.b16 %v682, %v681
  %v714 = vpack.c.b16 %v684, %v683
  %v715 = vpack.c.b16 %v686, %v685
  %v716 = vpack.c.b16 %v688, %v687
  %v717 = vpack.c.b16 %v690, %v689
  %v718 = vpack.c.b16 %v692, %v691
  %v719 = vpack.c.b16 %v694, %v693
  %v720 = vpack.c.b16 %v696, %v695
  %v721 = vpack.c.b16 %v698, %v697
  %v722 = vpack.c.b16 %v700, %v699
  %v723 = vpack.c.b16 %v702, %v701
  %v724 = vpack.c.b16 %v704, %v703
  %v725 = vpack.c.b16 %v706, %v705
  %v726 = vpack.c.b16 %v708, %v707
  %v727 = vpack.c.b16 %v710, %v709
  %v728 = vpack.c.b16 %v712, %v711
  %745 = vmatpush.bf16.msra.mxu0 %v720
  %746 = vmatpush.bf16.msra.mxu0 %v719
  %747 = vmatpush.bf16.msra.mxu0 %v718
  %748 = vmatpush.bf16.msra.mxu0 %v717
  %749 = vmatpush.bf16.msra.mxu0 %v716
  %750 = vmatpush.bf16.msra.mxu0 %v715
  %751 = vmatpush.bf16.msra.mxu0 %v714
  %752 = vmatpush.bf16.msra.mxu0 %v713
  %753 = vmatmul.bf16.gmra.mxu0 %v449
  %v754 = vpop.f32.mrf.mxu0
  %v755 = vadd.f32 0.0, %v754
  %v756 = vpop.f32.mrf.mxu0
  %v757 = vadd.f32 0.0, %v756
  %758 = vmatmul.bf16.gmra.mxu0 %v451
  %v759 = vpop.f32.mrf.mxu0
  %v760 = vadd.f32 0.0, %v759
  %v761 = vpop.f32.mrf.mxu0
  %v762 = vadd.f32 0.0, %v761
  %763 = vmatmul.bf16.gmra.mxu0 %v453
  %v764 = vpop.f32.mrf.mxu0
  %v765 = vadd.f32 0.0, %v764
  %v766 = vpop.f32.mrf.mxu0
  %v767 = vadd.f32 0.0, %v766
  %768 = vmatmul.bf16.gmra.mxu0 %v455
  %v769 = vpop.f32.mrf.mxu0
  %v770 = vadd.f32 0.0, %v769
  %v771 = vpop.f32.mrf.mxu0
  %v772 = vadd.f32 0.0, %v771
  %773 = vmatmul.bf16.gmra.mxu0 %v457
  %v774 = vpop.f32.mrf.mxu0
  %v775 = vadd.f32 0.0, %v774
  %v776 = vpop.f32.mrf.mxu0
  %v777 = vadd.f32 0.0, %v776
  %778 = vmatmul.bf16.gmra.mxu0 %v459
  %v779 = vpop.f32.mrf.mxu0
  %v780 = vadd.f32 0.0, %v779
  %v781 = vpop.f32.mrf.mxu0
  %v782 = vadd.f32 0.0, %v781
  %783 = vmatmul.bf16.gmra.mxu0 %v461
  %v784 = vpop.f32.mrf.mxu0
  %v785 = vadd.f32 0.0, %v784
  %v786 = vpop.f32.mrf.mxu0
  %v787 = vadd.f32 0.0, %v786
  %788 = vmatmul.bf16.gmra.mxu0 %v463
  %v789 = vpop.f32.mrf.mxu0
  %v790 = vadd.f32 0.0, %v789
  %v791 = vpop.f32.mrf.mxu0
  %v792 = vadd.f32 0.0, %v791
  %793 = vmatmul.bf16.gmra.mxu0 %v465
  %v794 = vpop.f32.mrf.mxu0
  %v795 = vadd.f32 0.0, %v794
  %v796 = vpop.f32.mrf.mxu0
  %v797 = vadd.f32 0.0, %v796
  %798 = vmatmul.bf16.gmra.mxu0 %v467
  %v799 = vpop.f32.mrf.mxu0
  %v800 = vadd.f32 0.0, %v799
  %v801 = vpop.f32.mrf.mxu0
  %v802 = vadd.f32 0.0, %v801
  %803 = vmatmul.bf16.gmra.mxu0 %v469
  %v804 = vpop.f32.mrf.mxu0
  %v805 = vadd.f32 0.0, %v804
  %v806 = vpop.f32.mrf.mxu0
  %v807 = vadd.f32 0.0, %v806
  %808 = vmatmul.bf16.gmra.mxu0 %v471
  %v809 = vpop.f32.mrf.mxu0
  %v810 = vadd.f32 0.0, %v809
  %v811 = vpop.f32.mrf.mxu0
  %v812 = vadd.f32 0.0, %v811
  %813 = vmatmul.bf16.gmra.mxu0 %v473
  %v814 = vpop.f32.mrf.mxu0
  %v815 = vadd.f32 0.0, %v814
  %v816 = vpop.f32.mrf.mxu0
  %v817 = vadd.f32 0.0, %v816
  %818 = vmatmul.bf16.gmra.mxu0 %v475
  %v819 = vpop.f32.mrf.mxu0
  %v820 = vadd.f32 0.0, %v819
  %v821 = vpop.f32.mrf.mxu0
  %v822 = vadd.f32 0.0, %v821
  %823 = vmatmul.bf16.gmra.mxu0 %v477
  %v824 = vpop.f32.mrf.mxu0
  %v825 = vadd.f32 0.0, %v824
  %v826 = vpop.f32.mrf.mxu0
  %v827 = vadd.f32 0.0, %v826
  %828 = vmatmul.bf16.gmra.mxu0 %v479
  %v829 = vpop.f32.mrf.mxu0
  %v830 = vadd.f32 0.0, %v829
  %v831 = vpop.f32.mrf.mxu0
  %v832 = vadd.f32 0.0, %v831
  %833 = vmatmul.bf16.gmra.mxu0 %v481
  %v834 = vpop.f32.mrf.mxu0
  %v835 = vadd.f32 0.0, %v834
  %v836 = vpop.f32.mrf.mxu0
  %v837 = vadd.f32 0.0, %v836
  %838 = vmatmul.bf16.gmra.mxu0 %v483
  %v839 = vpop.f32.mrf.mxu0
  %v840 = vadd.f32 0.0, %v839
  %v841 = vpop.f32.mrf.mxu0
  %v842 = vadd.f32 0.0, %v841
  %843 = vmatmul.bf16.gmra.mxu0 %v485
  %v844 = vpop.f32.mrf.mxu0
  %v845 = vadd.f32 0.0, %v844
  %v846 = vpop.f32.mrf.mxu0
  %v847 = vadd.f32 0.0, %v846
  %848 = vmatmul.bf16.gmra.mxu0 %v487
  %v849 = vpop.f32.mrf.mxu0
  %v850 = vadd.f32 0.0, %v849
  %v851 = vpop.f32.mrf.mxu0
  %v852 = vadd.f32 0.0, %v851
  %853 = vmatmul.bf16.gmra.mxu0 %v489
  %v854 = vpop.f32.mrf.mxu0
  %v855 = vadd.f32 0.0, %v854
  %v856 = vpop.f32.mrf.mxu0
  %v857 = vadd.f32 0.0, %v856
  %858 = vmatmul.bf16.gmra.mxu0 %v491
  %v859 = vpop.f32.mrf.mxu0
  %v860 = vadd.f32 0.0, %v859
  %v861 = vpop.f32.mrf.mxu0
  %v862 = vadd.f32 0.0, %v861
  %863 = vmatmul.bf16.gmra.mxu0 %v493
  %v864 = vpop.f32.mrf.mxu0
  %v865 = vadd.f32 0.0, %v864
  %v866 = vpop.f32.mrf.mxu0
  %v867 = vadd.f32 0.0, %v866
  %868 = vmatmul.bf16.gmra.mxu0 %v495
  %v869 = vpop.f32.mrf.mxu0
  %v870 = vadd.f32 0.0, %v869
  %v871 = vpop.f32.mrf.mxu0
  %v872 = vadd.f32 0.0, %v871
  %873 = vmatmul.bf16.gmra.mxu0 %v497
  %v874 = vpop.f32.mrf.mxu0
  %v875 = vadd.f32 0.0, %v874
  %v876 = vpop.f32.mrf.mxu0
  %v877 = vadd.f32 0.0, %v876
  %878 = vmatmul.bf16.gmra.mxu0 %v499
  %v879 = vpop.f32.mrf.mxu0
  %v880 = vadd.f32 0.0, %v879
  %v881 = vpop.f32.mrf.mxu0
  %v882 = vadd.f32 0.0, %v881
  %883 = vmatmul.bf16.gmra.mxu0 %v501
  %v884 = vpop.f32.mrf.mxu0
  %v885 = vadd.f32 0.0, %v884
  %v886 = vpop.f32.mrf.mxu0
  %v887 = vadd.f32 0.0, %v886
  %888 = vmatmul.bf16.gmra.mxu0 %v503
  %v889 = vpop.f32.mrf.mxu0
  %v890 = vadd.f32 0.0, %v889
  %v891 = vpop.f32.mrf.mxu0
  %v892 = vadd.f32 0.0, %v891
  %893 = vmatmul.bf16.gmra.mxu0 %v505
  %v894 = vpop.f32.mrf.mxu0
  %v895 = vadd.f32 0.0, %v894
  %v896 = vpop.f32.mrf.mxu0
  %v897 = vadd.f32 0.0, %v896
  %898 = vmatmul.bf16.gmra.mxu0 %v507
  %v899 = vpop.f32.mrf.mxu0
  %v900 = vadd.f32 0.0, %v899
  %v901 = vpop.f32.mrf.mxu0
  %v902 = vadd.f32 0.0, %v901
  %903 = vmatmul.bf16.gmra.mxu0 %v509
  %v904 = vpop.f32.mrf.mxu0
  %v905 = vadd.f32 0.0, %v904
  %v906 = vpop.f32.mrf.mxu0
  %v907 = vadd.f32 0.0, %v906
  %908 = vmatmul.bf16.gmra.mxu0 %v511
  %v909 = vpop.f32.mrf.mxu0
  %v910 = vadd.f32 0.0, %v909
  %v911 = vpop.f32.mrf.mxu0
  %v912 = vadd.f32 0.0, %v911
  %913 = vmatmul.bf16.gmra.mxu0 %v513
  %v914 = vpop.f32.mrf.mxu0
  %v915 = vadd.f32 0.0, %v914
  %v916 = vpop.f32.mrf.mxu0
  %v917 = vadd.f32 0.0, %v916
  %918 = vmatmul.bf16.gmra.mxu0 %v515
  %v919 = vpop.f32.mrf.mxu0
  %v920 = vadd.f32 0.0, %v919
  %v921 = vpop.f32.mrf.mxu0
  %v922 = vadd.f32 0.0, %v921
  %923 = vmatmul.bf16.gmra.mxu0 %v517
  %v924 = vpop.f32.mrf.mxu0
  %v925 = vadd.f32 0.0, %v924
  %v926 = vpop.f32.mrf.mxu0
  %v927 = vadd.f32 0.0, %v926
  %928 = vmatmul.bf16.gmra.mxu0 %v519
  %v929 = vpop.f32.mrf.mxu0
  %v930 = vadd.f32 0.0, %v929
  %v931 = vpop.f32.mrf.mxu0
  %v932 = vadd.f32 0.0, %v931
  %933 = vmatmul.bf16.gmra.mxu0 %v521
  %v934 = vpop.f32.mrf.mxu0
  %v935 = vadd.f32 0.0, %v934
  %v936 = vpop.f32.mrf.mxu0
  %v937 = vadd.f32 0.0, %v936
  %938 = vmatmul.bf16.gmra.mxu0 %v523
  %v939 = vpop.f32.mrf.mxu0
  %v940 = vadd.f32 0.0, %v939
  %v941 = vpop.f32.mrf.mxu0
  %v942 = vadd.f32 0.0, %v941
  %943 = vmatmul.bf16.gmra.mxu0 %v525
  %v944 = vpop.f32.mrf.mxu0
  %v945 = vadd.f32 0.0, %v944
  %v946 = vpop.f32.mrf.mxu0
  %v947 = vadd.f32 0.0, %v946
  %948 = vmatmul.bf16.gmra.mxu0 %v527
  %v949 = vpop.f32.mrf.mxu0
  %v950 = vadd.f32 0.0, %v949
  %v951 = vpop.f32.mrf.mxu0
  %v952 = vadd.f32 0.0, %v951
  %953 = vmatmul.bf16.gmra.mxu0 %v529
  %v954 = vpop.f32.mrf.mxu0
  %v955 = vadd.f32 0.0, %v954
  %v956 = vpop.f32.mrf.mxu0
  %v957 = vadd.f32 0.0, %v956
  %958 = vmatmul.bf16.gmra.mxu0 %v531
  %v959 = vpop.f32.mrf.mxu0
  %v960 = vadd.f32 0.0, %v959
  %v961 = vpop.f32.mrf.mxu0
  %v962 = vadd.f32 0.0, %v961
  %963 = vmatmul.bf16.gmra.mxu0 %v533
  %v964 = vpop.f32.mrf.mxu0
  %v965 = vadd.f32 0.0, %v964
  %v966 = vpop.f32.mrf.mxu0
  %v967 = vadd.f32 0.0, %v966
  %968 = vmatmul.bf16.gmra.mxu0 %v535
  %v969 = vpop.f32.mrf.mxu0
  %v970 = vadd.f32 0.0, %v969
  %v971 = vpop.f32.mrf.mxu0
  %v972 = vadd.f32 0.0, %v971
  %973 = vmatmul.bf16.gmra.mxu0 %v537
  %v974 = vpop.f32.mrf.mxu0
  %v975 = vadd.f32 0.0, %v974
  %v976 = vpop.f32.mrf.mxu0
  %v977 = vadd.f32 0.0, %v976
  %978 = vmatmul.bf16.gmra.mxu0 %v539
  %v979 = vpop.f32.mrf.mxu0
  %v980 = vadd.f32 0.0, %v979
  %v981 = vpop.f32.mrf.mxu0
  %v982 = vadd.f32 0.0, %v981
  %983 = vmatmul.bf16.gmra.mxu0 %v541
  %v984 = vpop.f32.mrf.mxu0
  %v985 = vadd.f32 0.0, %v984
  %v986 = vpop.f32.mrf.mxu0
  %v987 = vadd.f32 0.0, %v986
  %988 = vmatmul.bf16.gmra.mxu0 %v543
  %v989 = vpop.f32.mrf.mxu0
  %v990 = vadd.f32 0.0, %v989
  %v991 = vpop.f32.mrf.mxu0
  %v992 = vadd.f32 0.0, %v991
  %993 = vmatmul.bf16.gmra.mxu0 %v545
  %v994 = vpop.f32.mrf.mxu0
  %v995 = vadd.f32 0.0, %v994
  %v996 = vpop.f32.mrf.mxu0
  %v997 = vadd.f32 0.0, %v996
  %998 = vmatmul.bf16.gmra.mxu0 %v547
  %v999 = vpop.f32.mrf.mxu0
  %v1000 = vadd.f32 0.0, %v999
  %v1001 = vpop.f32.mrf.mxu0
  %v1002 = vadd.f32 0.0, %v1001
  %1003 = vdwg.mxu0
  %1004 = vmatpush.bf16.msra.mxu0 %v728
  %1005 = vmatpush.bf16.msra.mxu0 %v727
  %1006 = vmatpush.bf16.msra.mxu0 %v726
  %1007 = vmatpush.bf16.msra.mxu0 %v725
  %1008 = vmatpush.bf16.msra.mxu0 %v724
  %1009 = vmatpush.bf16.msra.mxu0 %v723
  %1010 = vmatpush.bf16.msra.mxu0 %v722
  %1011 = vmatpush.bf16.msra.mxu0 %v721
  %1012 = vmatmul.bf16.gmra.mxu0 %v450
  %v1013 = vpop.f32.mrf.mxu0
  %v1014 = vadd.f32 %v755, %v1013
  %v1015 = vpop.f32.mrf.mxu0
  %v1016 = vadd.f32 %v757, %v1015
  %1017 = vmatmul.bf16.gmra.mxu0 %v452
  %v1018 = vpop.f32.mrf.mxu0
  %v1019 = vadd.f32 %v760, %v1018
  %v1020 = vpop.f32.mrf.mxu0
  %v1021 = vadd.f32 %v762, %v1020
  %1022 = vmatmul.bf16.gmra.mxu0 %v454
  %v1023 = vpop.f32.mrf.mxu0
  %v1024 = vadd.f32 %v765, %v1023
  %v1025 = vpop.f32.mrf.mxu0
  %v1026 = vadd.f32 %v767, %v1025
  %1027 = vmatmul.bf16.gmra.mxu0 %v456
  %v1028 = vpop.f32.mrf.mxu0
  %v1029 = vadd.f32 %v770, %v1028
  %v1030 = vpop.f32.mrf.mxu0
  %v1031 = vadd.f32 %v772, %v1030
  %1032 = vmatmul.bf16.gmra.mxu0 %v458
  %v1033 = vpop.f32.mrf.mxu0
  %v1034 = vadd.f32 %v775, %v1033
  %v1035 = vpop.f32.mrf.mxu0
  %v1036 = vadd.f32 %v777, %v1035
  %1037 = vmatmul.bf16.gmra.mxu0 %v460
  %v1038 = vpop.f32.mrf.mxu0
  %v1039 = vadd.f32 %v780, %v1038
  %v1040 = vpop.f32.mrf.mxu0
  %v1041 = vadd.f32 %v782, %v1040
  %1042 = vmatmul.bf16.gmra.mxu0 %v462
  %v1043 = vpop.f32.mrf.mxu0
  %v1044 = vadd.f32 %v785, %v1043
  %v1045 = vpop.f32.mrf.mxu0
  %v1046 = vadd.f32 %v787, %v1045
  %1047 = vmatmul.bf16.gmra.mxu0 %v464
  %v1048 = vpop.f32.mrf.mxu0
  %v1049 = vadd.f32 %v790, %v1048
  %v1050 = vpop.f32.mrf.mxu0
  %v1051 = vadd.f32 %v792, %v1050
  %1052 = vmatmul.bf16.gmra.mxu0 %v466
  %v1053 = vpop.f32.mrf.mxu0
  %v1054 = vadd.f32 %v795, %v1053
  %v1055 = vpop.f32.mrf.mxu0
  %v1056 = vadd.f32 %v797, %v1055
  %1057 = vmatmul.bf16.gmra.mxu0 %v468
  %v1058 = vpop.f32.mrf.mxu0
  %v1059 = vadd.f32 %v800, %v1058
  %v1060 = vpop.f32.mrf.mxu0
  %v1061 = vadd.f32 %v802, %v1060
  %1062 = vmatmul.bf16.gmra.mxu0 %v470
  %v1063 = vpop.f32.mrf.mxu0
  %v1064 = vadd.f32 %v805, %v1063
  %v1065 = vpop.f32.mrf.mxu0
  %v1066 = vadd.f32 %v807, %v1065
  %1067 = vmatmul.bf16.gmra.mxu0 %v472
  %v1068 = vpop.f32.mrf.mxu0
  %v1069 = vadd.f32 %v810, %v1068
  %v1070 = vpop.f32.mrf.mxu0
  %v1071 = vadd.f32 %v812, %v1070
  %1072 = vmatmul.bf16.gmra.mxu0 %v474
  %v1073 = vpop.f32.mrf.mxu0
  %v1074 = vadd.f32 %v815, %v1073
  %v1075 = vpop.f32.mrf.mxu0
  %v1076 = vadd.f32 %v817, %v1075
  %1077 = vmatmul.bf16.gmra.mxu0 %v476
  %v1078 = vpop.f32.mrf.mxu0
  %v1079 = vadd.f32 %v820, %v1078
  %v1080 = vpop.f32.mrf.mxu0
  %v1081 = vadd.f32 %v822, %v1080
  %1082 = vmatmul.bf16.gmra.mxu0 %v478
  %v1083 = vpop.f32.mrf.mxu0
  %v1084 = vadd.f32 %v825, %v1083
  %v1085 = vpop.f32.mrf.mxu0
  %v1086 = vadd.f32 %v827, %v1085
  %1087 = vmatmul.bf16.gmra.mxu0 %v480
  %v1088 = vpop.f32.mrf.mxu0
  %v1089 = vadd.f32 %v830, %v1088
  %v1090 = vpop.f32.mrf.mxu0
  %v1091 = vadd.f32 %v832, %v1090
  %1092 = vmatmul.bf16.gmra.mxu0 %v482
  %v1093 = vpop.f32.mrf.mxu0
  %v1094 = vadd.f32 %v835, %v1093
  %v1095 = vpop.f32.mrf.mxu0
  %v1096 = vadd.f32 %v837, %v1095
  %1097 = vmatmul.bf16.gmra.mxu0 %v484
  %v1098 = vpop.f32.mrf.mxu0
  %v1099 = vadd.f32 %v840, %v1098
  %v1100 = vpop.f32.mrf.mxu0
  %v1101 = vadd.f32 %v842, %v1100
  %1102 = vmatmul.bf16.gmra.mxu0 %v486
  %v1103 = vpop.f32.mrf.mxu0
  %v1104 = vadd.f32 %v845, %v1103
  %v1105 = vpop.f32.mrf.mxu0
  %v1106 = vadd.f32 %v847, %v1105
  %1107 = vmatmul.bf16.gmra.mxu0 %v488
  %v1108 = vpop.f32.mrf.mxu0
  %v1109 = vadd.f32 %v850, %v1108
  %v1110 = vpop.f32.mrf.mxu0
  %v1111 = vadd.f32 %v852, %v1110
  %1112 = vmatmul.bf16.gmra.mxu0 %v490
  %v1113 = vpop.f32.mrf.mxu0
  %v1114 = vadd.f32 %v855, %v1113
  %v1115 = vpop.f32.mrf.mxu0
  %v1116 = vadd.f32 %v857, %v1115
  %1117 = vmatmul.bf16.gmra.mxu0 %v492
  %v1118 = vpop.f32.mrf.mxu0
  %v1119 = vadd.f32 %v860, %v1118
  %v1120 = vpop.f32.mrf.mxu0
  %v1121 = vadd.f32 %v862, %v1120
  %1122 = vmatmul.bf16.gmra.mxu0 %v494
  %v1123 = vpop.f32.mrf.mxu0
  %v1124 = vadd.f32 %v865, %v1123
  %v1125 = vpop.f32.mrf.mxu0
  %v1126 = vadd.f32 %v867, %v1125
  %1127 = vmatmul.bf16.gmra.mxu0 %v496
  %v1128 = vpop.f32.mrf.mxu0
  %v1129 = vadd.f32 %v870, %v1128
  %v1130 = vpop.f32.mrf.mxu0
  %v1131 = vadd.f32 %v872, %v1130
  %1132 = vmatmul.bf16.gmra.mxu0 %v498
  %v1133 = vpop.f32.mrf.mxu0
  %v1134 = vadd.f32 %v875, %v1133
  %v1135 = vpop.f32.mrf.mxu0
  %v1136 = vadd.f32 %v877, %v1135
  %1137 = vmatmul.bf16.gmra.mxu0 %v500
  %v1138 = vpop.f32.mrf.mxu0
  %v1139 = vadd.f32 %v880, %v1138
  %v1140 = vpop.f32.mrf.mxu0
  %v1141 = vadd.f32 %v882, %v1140
  %1142 = vmatmul.bf16.gmra.mxu0 %v502
  %v1143 = vpop.f32.mrf.mxu0
  %v1144 = vadd.f32 %v885, %v1143
  %v1145 = vpop.f32.mrf.mxu0
  %v1146 = vadd.f32 %v887, %v1145
  %1147 = vmatmul.bf16.gmra.mxu0 %v504
  %v1148 = vpop.f32.mrf.mxu0
  %v1149 = vadd.f32 %v890, %v1148
  %v1150 = vpop.f32.mrf.mxu0
  %v1151 = vadd.f32 %v892, %v1150
  %1152 = vmatmul.bf16.gmra.mxu0 %v506
  %v1153 = vpop.f32.mrf.mxu0
  %v1154 = vadd.f32 %v895, %v1153
  %v1155 = vpop.f32.mrf.mxu0
  %v1156 = vadd.f32 %v897, %v1155
  %1157 = vmatmul.bf16.gmra.mxu0 %v508
  %v1158 = vpop.f32.mrf.mxu0
  %v1159 = vadd.f32 %v900, %v1158
  %v1160 = vpop.f32.mrf.mxu0
  %v1161 = vadd.f32 %v902, %v1160
  %1162 = vmatmul.bf16.gmra.mxu0 %v510
  %v1163 = vpop.f32.mrf.mxu0
  %v1164 = vadd.f32 %v905, %v1163
  %v1165 = vpop.f32.mrf.mxu0
  %v1166 = vadd.f32 %v907, %v1165
  %1167 = vmatmul.bf16.gmra.mxu0 %v512
  %v1168 = vpop.f32.mrf.mxu0
  %v1169 = vadd.f32 %v910, %v1168
  %v1170 = vpop.f32.mrf.mxu0
  %v1171 = vadd.f32 %v912, %v1170
  %1172 = vmatmul.bf16.gmra.mxu0 %v514
  %v1173 = vpop.f32.mrf.mxu0
  %v1174 = vadd.f32 %v915, %v1173
  %v1175 = vpop.f32.mrf.mxu0
  %v1176 = vadd.f32 %v917, %v1175
  %1177 = vmatmul.bf16.gmra.mxu0 %v516
  %v1178 = vpop.f32.mrf.mxu0
  %v1179 = vadd.f32 %v920, %v1178
  %v1180 = vpop.f32.mrf.mxu0
  %v1181 = vadd.f32 %v922, %v1180
  %1182 = vmatmul.bf16.gmra.mxu0 %v518
  %v1183 = vpop.f32.mrf.mxu0
  %v1184 = vadd.f32 %v925, %v1183
  %v1185 = vpop.f32.mrf.mxu0
  %v1186 = vadd.f32 %v927, %v1185
  %1187 = vmatmul.bf16.gmra.mxu0 %v520
  %v1188 = vpop.f32.mrf.mxu0
  %v1189 = vadd.f32 %v930, %v1188
  %v1190 = vpop.f32.mrf.mxu0
  %v1191 = vadd.f32 %v932, %v1190
  %1192 = vmatmul.bf16.gmra.mxu0 %v522
  %v1193 = vpop.f32.mrf.mxu0
  %v1194 = vadd.f32 %v935, %v1193
  %v1195 = vpop.f32.mrf.mxu0
  %v1196 = vadd.f32 %v937, %v1195
  %1197 = vmatmul.bf16.gmra.mxu0 %v524
  %v1198 = vpop.f32.mrf.mxu0
  %v1199 = vadd.f32 %v940, %v1198
  %v1200 = vpop.f32.mrf.mxu0
  %v1201 = vadd.f32 %v942, %v1200
  %1202 = vmatmul.bf16.gmra.mxu0 %v526
  %v1203 = vpop.f32.mrf.mxu0
  %v1204 = vadd.f32 %v945, %v1203
  %v1205 = vpop.f32.mrf.mxu0
  %v1206 = vadd.f32 %v947, %v1205
  %1207 = vmatmul.bf16.gmra.mxu0 %v528
  %v1208 = vpop.f32.mrf.mxu0
  %v1209 = vadd.f32 %v950, %v1208
  %v1210 = vpop.f32.mrf.mxu0
  %v1211 = vadd.f32 %v952, %v1210
  %1212 = vmatmul.bf16.gmra.mxu0 %v530
  %v1213 = vpop.f32.mrf.mxu0
  %v1214 = vadd.f32 %v955, %v1213
  %v1215 = vpop.f32.mrf.mxu0
  %v1216 = vadd.f32 %v957, %v1215
  %1217 = vmatmul.bf16.gmra.mxu0 %v532
  %v1218 = vpop.f32.mrf.mxu0
  %v1219 = vadd.f32 %v960, %v1218
  %v1220 = vpop.f32.mrf.mxu0
  %v1221 = vadd.f32 %v962, %v1220
  %1222 = vmatmul.bf16.gmra.mxu0 %v534
  %v1223 = vpop.f32.mrf.mxu0
  %v1224 = vadd.f32 %v965, %v1223
  %v1225 = vpop.f32.mrf.mxu0
  %v1226 = vadd.f32 %v967, %v1225
  %1227 = vmatmul.bf16.gmra.mxu0 %v536
  %v1228 = vpop.f32.mrf.mxu0
  %v1229 = vadd.f32 %v970, %v1228
  %v1230 = vpop.f32.mrf.mxu0
  %v1231 = vadd.f32 %v972, %v1230
  %1232 = vmatmul.bf16.gmra.mxu0 %v538
  %v1233 = vpop.f32.mrf.mxu0
  %v1234 = vadd.f32 %v975, %v1233
  %v1235 = vpop.f32.mrf.mxu0
  %v1236 = vadd.f32 %v977, %v1235
  %1237 = vmatmul.bf16.gmra.mxu0 %v540
  %v1238 = vpop.f32.mrf.mxu0
  %v1239 = vadd.f32 %v980, %v1238
  %v1240 = vpop.f32.mrf.mxu0
  %v1241 = vadd.f32 %v982, %v1240
  %1242 = vmatmul.bf16.gmra.mxu0 %v542
  %v1243 = vpop.f32.mrf.mxu0
  %v1244 = vadd.f32 %v985, %v1243
  %v1245 = vpop.f32.mrf.mxu0
  %v1246 = vadd.f32 %v987, %v1245
  %1247 = vmatmul.bf16.gmra.mxu0 %v544
  %v1248 = vpop.f32.mrf.mxu0
  %v1249 = vadd.f32 %v990, %v1248
  %v1250 = vpop.f32.mrf.mxu0
  %v1251 = vadd.f32 %v992, %v1250
  %1252 = vmatmul.bf16.gmra.mxu0 %v546
  %v1253 = vpop.f32.mrf.mxu0
  %v1254 = vadd.f32 %v995, %v1253
  %v1255 = vpop.f32.mrf.mxu0
  %v1256 = vadd.f32 %v997, %v1255
  %1257 = vmatmul.bf16.gmra.mxu0 %v548
  %v1258 = vpop.f32.mrf.mxu0
  %v1259 = vadd.f32 %v1000, %v1258
  %v1260 = vpop.f32.mrf.mxu0
  %v1261 = vadd.f32 %v1002, %v1260
  %1262 = vdwg.mxu0
  %v1263 = vld [vmem:[%s2] sm:$0x1]
  %v1265 = vperm.slane %v1263, 0
  %v1267 = vmul.f32 %v1014, %v1265
  %v1268 = vmul.f32 %v1016, %v1265
  %v1269 = vmul.f32 %v1019, %v1265
  %v1270 = vmul.f32 %v1021, %v1265
  %v1271 = vmul.f32 %v1024, %v1265
  %v1272 = vmul.f32 %v1026, %v1265
  %v1273 = vmul.f32 %v1029, %v1265
  %v1274 = vmul.f32 %v1031, %v1265
  %v1275 = vmul.f32 %v1034, %v1265
  %v1276 = vmul.f32 %v1036, %v1265
  %v1277 = vmul.f32 %v1039, %v1265
  %v1278 = vmul.f32 %v1041, %v1265
  %v1279 = vmul.f32 %v1044, %v1265
  %v1280 = vmul.f32 %v1046, %v1265
  %v1281 = vmul.f32 %v1049, %v1265
  %v1282 = vmul.f32 %v1051, %v1265
  %v1283 = vmul.f32 %v1054, %v1265
  %v1284 = vmul.f32 %v1056, %v1265
  %v1285 = vmul.f32 %v1059, %v1265
  %v1286 = vmul.f32 %v1061, %v1265
  %v1287 = vmul.f32 %v1064, %v1265
  %v1288 = vmul.f32 %v1066, %v1265
  %v1289 = vmul.f32 %v1069, %v1265
  %v1290 = vmul.f32 %v1071, %v1265
  %v1291 = vmul.f32 %v1074, %v1265
  %v1292 = vmul.f32 %v1076, %v1265
  %v1293 = vmul.f32 %v1079, %v1265
  %v1294 = vmul.f32 %v1081, %v1265
  %v1295 = vmul.f32 %v1084, %v1265
  %v1296 = vmul.f32 %v1086, %v1265
  %v1297 = vmul.f32 %v1089, %v1265
  %v1298 = vmul.f32 %v1091, %v1265
  %v1299 = vmul.f32 %v1094, %v1265
  %v1300 = vmul.f32 %v1096, %v1265
  %v1301 = vmul.f32 %v1099, %v1265
  %v1302 = vmul.f32 %v1101, %v1265
  %v1303 = vmul.f32 %v1104, %v1265
  %v1304 = vmul.f32 %v1106, %v1265
  %v1305 = vmul.f32 %v1109, %v1265
  %v1306 = vmul.f32 %v1111, %v1265
  %v1307 = vmul.f32 %v1114, %v1265
  %v1308 = vmul.f32 %v1116, %v1265
  %v1309 = vmul.f32 %v1119, %v1265
  %v1310 = vmul.f32 %v1121, %v1265
  %v1311 = vmul.f32 %v1124, %v1265
  %v1312 = vmul.f32 %v1126, %v1265
  %v1313 = vmul.f32 %v1129, %v1265
  %v1314 = vmul.f32 %v1131, %v1265
  %v1315 = vmul.f32 %v1134, %v1265
  %v1316 = vmul.f32 %v1136, %v1265
  %v1317 = vmul.f32 %v1139, %v1265
  %v1318 = vmul.f32 %v1141, %v1265
  %v1319 = vmul.f32 %v1144, %v1265
  %v1320 = vmul.f32 %v1146, %v1265
  %v1321 = vmul.f32 %v1149, %v1265
  %v1322 = vmul.f32 %v1151, %v1265
  %v1323 = vmul.f32 %v1154, %v1265
  %v1324 = vmul.f32 %v1156, %v1265
  %v1325 = vmul.f32 %v1159, %v1265
  %v1326 = vmul.f32 %v1161, %v1265
  %v1327 = vmul.f32 %v1164, %v1265
  %v1328 = vmul.f32 %v1166, %v1265
  %v1329 = vmul.f32 %v1169, %v1265
  %v1330 = vmul.f32 %v1171, %v1265
  %v1331 = vmul.f32 %v1174, %v1265
  %v1332 = vmul.f32 %v1176, %v1265
  %v1333 = vmul.f32 %v1179, %v1265
  %v1334 = vmul.f32 %v1181, %v1265
  %v1335 = vmul.f32 %v1184, %v1265
  %v1336 = vmul.f32 %v1186, %v1265
  %v1337 = vmul.f32 %v1189, %v1265
  %v1338 = vmul.f32 %v1191, %v1265
  %v1339 = vmul.f32 %v1194, %v1265
  %v1340 = vmul.f32 %v1196, %v1265
  %v1341 = vmul.f32 %v1199, %v1265
  %v1342 = vmul.f32 %v1201, %v1265
  %v1343 = vmul.f32 %v1204, %v1265
  %v1344 = vmul.f32 %v1206, %v1265
  %v1345 = vmul.f32 %v1209, %v1265
  %v1346 = vmul.f32 %v1211, %v1265
  %v1347 = vmul.f32 %v1214, %v1265
  %v1348 = vmul.f32 %v1216, %v1265
  %v1349 = vmul.f32 %v1219, %v1265
  %v1350 = vmul.f32 %v1221, %v1265
  %v1351 = vmul.f32 %v1224, %v1265
  %v1352 = vmul.f32 %v1226, %v1265
  %v1353 = vmul.f32 %v1229, %v1265
  %v1354 = vmul.f32 %v1231, %v1265
  %v1355 = vmul.f32 %v1234, %v1265
  %v1356 = vmul.f32 %v1236, %v1265
  %v1357 = vmul.f32 %v1239, %v1265
  %v1358 = vmul.f32 %v1241, %v1265
  %v1359 = vmul.f32 %v1244, %v1265
  %v1360 = vmul.f32 %v1246, %v1265
  %v1361 = vmul.f32 %v1249, %v1265
  %v1362 = vmul.f32 %v1251, %v1265
  %v1363 = vmul.f32 %v1254, %v1265
  %v1364 = vmul.f32 %v1256, %v1265
  %v1365 = vmul.f32 %v1259, %v1265
  %v1366 = vmul.f32 %v1261, %v1265
  %v1367 = vld [vmem:[%s3] sm:$0x1]
  %v1369 = vperm.slane %v1367, 0
  %v1371 = vadd.f32 %v1267, %v1369
  %v1372 = vadd.f32 %v1268, %v1369
  %v1373 = vadd.f32 %v1269, %v1369
  %v1374 = vadd.f32 %v1270, %v1369
  %v1375 = vadd.f32 %v1271, %v1369
  %v1376 = vadd.f32 %v1272, %v1369
  %v1377 = vadd.f32 %v1273, %v1369
  %v1378 = vadd.f32 %v1274, %v1369
  %v1379 = vadd.f32 %v1275, %v1369
  %v1380 = vadd.f32 %v1276, %v1369
  %v1381 = vadd.f32 %v1277, %v1369
  %v1382 = vadd.f32 %v1278, %v1369
  %v1383 = vadd.f32 %v1279, %v1369
  %v1384 = vadd.f32 %v1280, %v1369
  %v1385 = vadd.f32 %v1281, %v1369
  %v1386 = vadd.f32 %v1282, %v1369
  %v1387 = vadd.f32 %v1283, %v1369
  %v1388 = vadd.f32 %v1284, %v1369
  %v1389 = vadd.f32 %v1285, %v1369
  %v1390 = vadd.f32 %v1286, %v1369
  %v1391 = vadd.f32 %v1287, %v1369
  %v1392 = vadd.f32 %v1288, %v1369
  %v1393 = vadd.f32 %v1289, %v1369
  %v1394 = vadd.f32 %v1290, %v1369
  %v1395 = vadd.f32 %v1291, %v1369
  %v1396 = vadd.f32 %v1292, %v1369
  %v1397 = vadd.f32 %v1293, %v1369
  %v1398 = vadd.f32 %v1294, %v1369
  %v1399 = vadd.f32 %v1295, %v1369
  %v1400 = vadd.f32 %v1296, %v1369
  %v1401 = vadd.f32 %v1297, %v1369
  %v1402 = vadd.f32 %v1298, %v1369
  %v1403 = vadd.f32 %v1299, %v1369
  %v1404 = vadd.f32 %v1300, %v1369
  %v1405 = vadd.f32 %v1301, %v1369
  %v1406 = vadd.f32 %v1302, %v1369
  %v1407 = vadd.f32 %v1303, %v1369
  %v1408 = vadd.f32 %v1304, %v1369
  %v1409 = vadd.f32 %v1305, %v1369
  %v1410 = vadd.f32 %v1306, %v1369
  %v1411 = vadd.f32 %v1307, %v1369
  %v1412 = vadd.f32 %v1308, %v1369
  %v1413 = vadd.f32 %v1309, %v1369
  %v1414 = vadd.f32 %v1310, %v1369
  %v1415 = vadd.f32 %v1311, %v1369
  %v1416 = vadd.f32 %v1312, %v1369
  %v1417 = vadd.f32 %v1313, %v1369
  %v1418 = vadd.f32 %v1314, %v1369
  %v1419 = vadd.f32 %v1315, %v1369
  %v1420 = vadd.f32 %v1316, %v1369
  %v1421 = vadd.f32 %v1317, %v1369
  %v1422 = vadd.f32 %v1318, %v1369
  %v1423 = vadd.f32 %v1319, %v1369
  %v1424 = vadd.f32 %v1320, %v1369
  %v1425 = vadd.f32 %v1321, %v1369
  %v1426 = vadd.f32 %v1322, %v1369
  %v1427 = vadd.f32 %v1323, %v1369
  %v1428 = vadd.f32 %v1324, %v1369
  %v1429 = vadd.f32 %v1325, %v1369
  %v1430 = vadd.f32 %v1326, %v1369
  %v1431 = vadd.f32 %v1327, %v1369
  %v1432 = vadd.f32 %v1328, %v1369
  %v1433 = vadd.f32 %v1329, %v1369
  %v1434 = vadd.f32 %v1330, %v1369
  %v1435 = vadd.f32 %v1331, %v1369
  %v1436 = vadd.f32 %v1332, %v1369
  %v1437 = vadd.f32 %v1333, %v1369
  %v1438 = vadd.f32 %v1334, %v1369
  %v1439 = vadd.f32 %v1335, %v1369
  %v1440 = vadd.f32 %v1336, %v1369
  %v1441 = vadd.f32 %v1337, %v1369
  %v1442 = vadd.f32 %v1338, %v1369
  %v1443 = vadd.f32 %v1339, %v1369
  %v1444 = vadd.f32 %v1340, %v1369
  %v1445 = vadd.f32 %v1341, %v1369
  %v1446 = vadd.f32 %v1342, %v1369
  %v1447 = vadd.f32 %v1343, %v1369
  %v1448 = vadd.f32 %v1344, %v1369
  %v1449 = vadd.f32 %v1345, %v1369
  %v1450 = vadd.f32 %v1346, %v1369
  %v1451 = vadd.f32 %v1347, %v1369
  %v1452 = vadd.f32 %v1348, %v1369
  %v1453 = vadd.f32 %v1349, %v1369
  %v1454 = vadd.f32 %v1350, %v1369
  %v1455 = vadd.f32 %v1351, %v1369
  %v1456 = vadd.f32 %v1352, %v1369
  %v1457 = vadd.f32 %v1353, %v1369
  %v1458 = vadd.f32 %v1354, %v1369
  %v1459 = vadd.f32 %v1355, %v1369
  %v1460 = vadd.f32 %v1356, %v1369
  %v1461 = vadd.f32 %v1357, %v1369
  %v1462 = vadd.f32 %v1358, %v1369
  %v1463 = vadd.f32 %v1359, %v1369
  %v1464 = vadd.f32 %v1360, %v1369
  %v1465 = vadd.f32 %v1361, %v1369
  %v1466 = vadd.f32 %v1362, %v1369
  %v1467 = vadd.f32 %v1363, %v1369
  %v1468 = vadd.f32 %v1364, %v1369
  %v1469 = vadd.f32 %v1365, %v1369
  %v1470 = vadd.f32 %v1366, %v1369
  %v1471 = vmax.f32 %v1371, 0.0
  %v1472 = vmax.f32 %v1372, 0.0
  %v1473 = vmax.f32 %v1373, 0.0
  %v1474 = vmax.f32 %v1374, 0.0
  %v1475 = vmax.f32 %v1375, 0.0
  %v1476 = vmax.f32 %v1376, 0.0
  %v1477 = vmax.f32 %v1377, 0.0
  %v1478 = vmax.f32 %v1378, 0.0
  %v1479 = vmax.f32 %v1379, 0.0
  %v1480 = vmax.f32 %v1380, 0.0
  %v1481 = vmax.f32 %v1381, 0.0
  %v1482 = vmax.f32 %v1382, 0.0
  %v1483 = vmax.f32 %v1383, 0.0
  %v1484 = vmax.f32 %v1384, 0.0
  %v1485 = vmax.f32 %v1385, 0.0
  %v1486 = vmax.f32 %v1386, 0.0
  %v1487 = vmax.f32 %v1387, 0.0
  %v1488 = vmax.f32 %v1388, 0.0
  %v1489 = vmax.f32 %v1389, 0.0
  %v1490 = vmax.f32 %v1390, 0.0
  %v1491 = vmax.f32 %v1391, 0.0
  %v1492 = vmax.f32 %v1392, 0.0
  %v1493 = vmax.f32 %v1393, 0.0
  %v1494 = vmax.f32 %v1394, 0.0
  %v1495 = vmax.f32 %v1395, 0.0
  %v1496 = vmax.f32 %v1396, 0.0
  %v1497 = vmax.f32 %v1397, 0.0
  %v1498 = vmax.f32 %v1398, 0.0
  %v1499 = vmax.f32 %v1399, 0.0
  %v1500 = vmax.f32 %v1400, 0.0
  %v1501 = vmax.f32 %v1401, 0.0
  %v1502 = vmax.f32 %v1402, 0.0
  %v1503 = vmax.f32 %v1403, 0.0
  %v1504 = vmax.f32 %v1404, 0.0
  %v1505 = vmax.f32 %v1405, 0.0
  %v1506 = vmax.f32 %v1406, 0.0
  %v1507 = vmax.f32 %v1407, 0.0
  %v1508 = vmax.f32 %v1408, 0.0
  %v1509 = vmax.f32 %v1409, 0.0
  %v1510 = vmax.f32 %v1410, 0.0
  %v1511 = vmax.f32 %v1411, 0.0
  %v1512 = vmax.f32 %v1412, 0.0
  %v1513 = vmax.f32 %v1413, 0.0
  %v1514 = vmax.f32 %v1414, 0.0
  %v1515 = vmax.f32 %v1415, 0.0
  %v1516 = vmax.f32 %v1416, 0.0
  %v1517 = vmax.f32 %v1417, 0.0
  %v1518 = vmax.f32 %v1418, 0.0
  %v1519 = vmax.f32 %v1419, 0.0
  %v1520 = vmax.f32 %v1420, 0.0
  %v1521 = vmax.f32 %v1421, 0.0
  %v1522 = vmax.f32 %v1422, 0.0
  %v1523 = vmax.f32 %v1423, 0.0
  %v1524 = vmax.f32 %v1424, 0.0
  %v1525 = vmax.f32 %v1425, 0.0
  %v1526 = vmax.f32 %v1426, 0.0
  %v1527 = vmax.f32 %v1427, 0.0
  %v1528 = vmax.f32 %v1428, 0.0
  %v1529 = vmax.f32 %v1429, 0.0
  %v1530 = vmax.f32 %v1430, 0.0
  %v1531 = vmax.f32 %v1431, 0.0
  %v1532 = vmax.f32 %v1432, 0.0
  %v1533 = vmax.f32 %v1433, 0.0
  %v1534 = vmax.f32 %v1434, 0.0
  %v1535 = vmax.f32 %v1435, 0.0
  %v1536 = vmax.f32 %v1436, 0.0
  %v1537 = vmax.f32 %v1437, 0.0
  %v1538 = vmax.f32 %v1438, 0.0
  %v1539 = vmax.f32 %v1439, 0.0
  %v1540 = vmax.f32 %v1440, 0.0
  %v1541 = vmax.f32 %v1441, 0.0
  %v1542 = vmax.f32 %v1442, 0.0
  %v1543 = vmax.f32 %v1443, 0.0
  %v1544 = vmax.f32 %v1444, 0.0
  %v1545 = vmax.f32 %v1445, 0.0
  %v1546 = vmax.f32 %v1446, 0.0
  %v1547 = vmax.f32 %v1447, 0.0
  %v1548 = vmax.f32 %v1448, 0.0
  %v1549 = vmax.f32 %v1449, 0.0
  %v1550 = vmax.f32 %v1450, 0.0
  %v1551 = vmax.f32 %v1451, 0.0
  %v1552 = vmax.f32 %v1452, 0.0
  %v1553 = vmax.f32 %v1453, 0.0
  %v1554 = vmax.f32 %v1454, 0.0
  %v1555 = vmax.f32 %v1455, 0.0
  %v1556 = vmax.f32 %v1456, 0.0
  %v1557 = vmax.f32 %v1457, 0.0
  %v1558 = vmax.f32 %v1458, 0.0
  %v1559 = vmax.f32 %v1459, 0.0
  %v1560 = vmax.f32 %v1460, 0.0
  %v1561 = vmax.f32 %v1461, 0.0
  %v1562 = vmax.f32 %v1462, 0.0
  %v1563 = vmax.f32 %v1463, 0.0
  %v1564 = vmax.f32 %v1464, 0.0
  %v1565 = vmax.f32 %v1465, 0.0
  %v1566 = vmax.f32 %v1466, 0.0
  %v1567 = vmax.f32 %v1467, 0.0
  %v1568 = vmax.f32 %v1468, 0.0
  %v1569 = vmax.f32 %v1469, 0.0
  %v1570 = vmax.f32 %v1470, 0.0
  %v1571 = vpack.c.bf16 %v1471, %v1471
  %v1572 = vpack.c.bf16 %v1472, %v1472
  %v1573 = vpack.c.bf16 %v1473, %v1473
  %v1574 = vpack.c.bf16 %v1474, %v1474
  %v1575 = vpack.c.bf16 %v1475, %v1475
  %v1576 = vpack.c.bf16 %v1476, %v1476
  %v1577 = vpack.c.bf16 %v1477, %v1477
  %v1578 = vpack.c.bf16 %v1478, %v1478
  %v1579 = vpack.c.bf16 %v1479, %v1479
  %v1580 = vpack.c.bf16 %v1480, %v1480
  %v1581 = vpack.c.bf16 %v1481, %v1481
  %v1582 = vpack.c.bf16 %v1482, %v1482
  %v1583 = vpack.c.bf16 %v1483, %v1483
  %v1584 = vpack.c.bf16 %v1484, %v1484
  %v1585 = vpack.c.bf16 %v1485, %v1485
  %v1586 = vpack.c.bf16 %v1486, %v1486
  %v1587 = vpack.c.bf16 %v1487, %v1487
  %v1588 = vpack.c.bf16 %v1488, %v1488
  %v1589 = vpack.c.bf16 %v1489, %v1489
  %v1590 = vpack.c.bf16 %v1490, %v1490
  %v1591 = vpack.c.bf16 %v1491, %v1491
  %v1592 = vpack.c.bf16 %v1492, %v1492
  %v1593 = vpack.c.bf16 %v1493, %v1493
  %v1594 = vpack.c.bf16 %v1494, %v1494
  %v1595 = vpack.c.bf16 %v1495, %v1495
  %v1596 = vpack.c.bf16 %v1496, %v1496
  %v1597 = vpack.c.bf16 %v1497, %v1497
  %v1598 = vpack.c.bf16 %v1498, %v1498
  %v1599 = vpack.c.bf16 %v1499, %v1499
  %v1600 = vpack.c.bf16 %v1500, %v1500
  %v1601 = vpack.c.bf16 %v1501, %v1501
  %v1602 = vpack.c.bf16 %v1502, %v1502
  %v1603 = vpack.c.bf16 %v1503, %v1503
  %v1604 = vpack.c.bf16 %v1504, %v1504
  %v1605 = vpack.c.bf16 %v1505, %v1505
  %v1606 = vpack.c.bf16 %v1506, %v1506
  %v1607 = vpack.c.bf16 %v1507, %v1507
  %v1608 = vpack.c.bf16 %v1508, %v1508
  %v1609 = vpack.c.bf16 %v1509, %v1509
  %v1610 = vpack.c.bf16 %v1510, %v1510
  %v1611 = vpack.c.bf16 %v1511, %v1511
  %v1612 = vpack.c.bf16 %v1512, %v1512
  %v1613 = vpack.c.bf16 %v1513, %v1513
  %v1614 = vpack.c.bf16 %v1514, %v1514
  %v1615 = vpack.c.bf16 %v1515, %v1515
  %v1616 = vpack.c.bf16 %v1516, %v1516
  %v1617 = vpack.c.bf16 %v1517, %v1517
  %v1618 = vpack.c.bf16 %v1518, %v1518
  %v1619 = vpack.c.bf16 %v1519, %v1519
  %v1620 = vpack.c.bf16 %v1520, %v1520
  %v1621 = vpack.c.bf16 %v1521, %v1521
  %v1622 = vpack.c.bf16 %v1522, %v1522
  %v1623 = vpack.c.bf16 %v1523, %v1523
  %v1624 = vpack.c.bf16 %v1524, %v1524
  %v1625 = vpack.c.bf16 %v1525, %v1525
  %v1626 = vpack.c.bf16 %v1526, %v1526
  %v1627 = vpack.c.bf16 %v1527, %v1527
  %v1628 = vpack.c.bf16 %v1528, %v1528
  %v1629 = vpack.c.bf16 %v1529, %v1529
  %v1630 = vpack.c.bf16 %v1530, %v1530
  %v1631 = vpack.c.bf16 %v1531, %v1531
  %v1632 = vpack.c.bf16 %v1532, %v1532
  %v1633 = vpack.c.bf16 %v1533, %v1533
  %v1634 = vpack.c.bf16 %v1534, %v1534
  %v1635 = vpack.c.bf16 %v1535, %v1535
  %v1636 = vpack.c.bf16 %v1536, %v1536
  %v1637 = vpack.c.bf16 %v1537, %v1537
  %v1638 = vpack.c.bf16 %v1538, %v1538
  %v1639 = vpack.c.bf16 %v1539, %v1539
  %v1640 = vpack.c.bf16 %v1540, %v1540
  %v1641 = vpack.c.bf16 %v1541, %v1541
  %v1642 = vpack.c.bf16 %v1542, %v1542
  %v1643 = vpack.c.bf16 %v1543, %v1543
  %v1644 = vpack.c.bf16 %v1544, %v1544
  %v1645 = vpack.c.bf16 %v1545, %v1545
  %v1646 = vpack.c.bf16 %v1546, %v1546
  %v1647 = vpack.c.bf16 %v1547, %v1547
  %v1648 = vpack.c.bf16 %v1548, %v1548
  %v1649 = vpack.c.bf16 %v1549, %v1549
  %v1650 = vpack.c.bf16 %v1550, %v1550
  %v1651 = vpack.c.bf16 %v1551, %v1551
  %v1652 = vpack.c.bf16 %v1552, %v1552
  %v1653 = vpack.c.bf16 %v1553, %v1553
  %v1654 = vpack.c.bf16 %v1554, %v1554
  %v1655 = vpack.c.bf16 %v1555, %v1555
  %v1656 = vpack.c.bf16 %v1556, %v1556
  %v1657 = vpack.c.bf16 %v1557, %v1557
  %v1658 = vpack.c.bf16 %v1558, %v1558
  %v1659 = vpack.c.bf16 %v1559, %v1559
  %v1660 = vpack.c.bf16 %v1560, %v1560
  %v1661 = vpack.c.bf16 %v1561, %v1561
  %v1662 = vpack.c.bf16 %v1562, %v1562
  %v1663 = vpack.c.bf16 %v1563, %v1563
  %v1664 = vpack.c.bf16 %v1564, %v1564
  %v1665 = vpack.c.bf16 %v1565, %v1565
  %v1666 = vpack.c.bf16 %v1566, %v1566
  %v1667 = vpack.c.bf16 %v1567, %v1567
  %v1668 = vpack.c.bf16 %v1568, %v1568
  %v1669 = vpack.c.bf16 %v1569, %v1569
  %v1670 = vpack.c.bf16 %v1570, %v1570
  %vm1671 = vcmask 257024
  %1672 = vst.msk [vmem:[%s4] sm:$0xf] %vm1671, %v1571
  %1673 = vst.msk [vmem:[%s4 + $0x4] sm:$0xf] %vm1671, %v1572
  %1674 = vst.msk [vmem:[%s4 + $0x8] sm:$0xf] %vm1671, %v1573
  %1675 = vst.msk [vmem:[%s4 + $0xc] sm:$0xf] %vm1671, %v1574
  %1676 = vst.msk [vmem:[%s4 + $0x10] sm:$0xf] %vm1671, %v1575
  %1677 = vst.msk [vmem:[%s4 + $0x14] sm:$0xf] %vm1671, %v1576
  %1678 = vst.msk [vmem:[%s4 + $0x18] sm:$0xf] %vm1671, %v1577
  %1679 = vst.msk [vmem:[%s4 + $0x1c] sm:$0xf] %vm1671, %v1578
  %1680 = vst.msk [vmem:[%s4 + $0x20] sm:$0xf] %vm1671, %v1579
  %1681 = vst.msk [vmem:[%s4 + $0x24] sm:$0xf] %vm1671, %v1580
  %1682 = vst.msk [vmem:[%s4 + $0x28] sm:$0xf] %vm1671, %v1581
  %1683 = vst.msk [vmem:[%s4 + $0x2c] sm:$0xf] %vm1671, %v1582
  %1684 = vst.msk [vmem:[%s4 + $0x30] sm:$0xf] %vm1671, %v1583
  %1685 = vst.msk [vmem:[%s4 + $0x34] sm:$0xf] %vm1671, %v1584
  %1686 = vst.msk [vmem:[%s4 + $0x38] sm:$0xf] %vm1671, %v1585
  %1687 = vst.msk [vmem:[%s4 + $0x3c] sm:$0xf] %vm1671, %v1586
  %1688 = vst.msk [vmem:[%s4 + $0x40] sm:$0xf] %vm1671, %v1587
  %1689 = vst.msk [vmem:[%s4 + $0x44] sm:$0xf] %vm1671, %v1588
  %1690 = vst.msk [vmem:[%s4 + $0x48] sm:$0xf] %vm1671, %v1589
  %1691 = vst.msk [vmem:[%s4 + $0x4c] sm:$0xf] %vm1671, %v1590
  %1692 = vst.msk [vmem:[%s4 + $0x50] sm:$0xf] %vm1671, %v1591
  %1693 = vst.msk [vmem:[%s4 + $0x54] sm:$0xf] %vm1671, %v1592
  %1694 = vst.msk [vmem:[%s4 + $0x58] sm:$0xf] %vm1671, %v1593
  %1695 = vst.msk [vmem:[%s4 + $0x5c] sm:$0xf] %vm1671, %v1594
  %1696 = vst.msk [vmem:[%s4 + $0x60] sm:$0xf] %vm1671, %v1595
  %1697 = vst.msk [vmem:[%s4 + $0x64] sm:$0xf] %vm1671, %v1596
  %1698 = vst.msk [vmem:[%s4 + $0x68] sm:$0xf] %vm1671, %v1597
  %1699 = vst.msk [vmem:[%s4 + $0x6c] sm:$0xf] %vm1671, %v1598
  %1700 = vst.msk [vmem:[%s4 + $0x70] sm:$0xf] %vm1671, %v1599
  %1701 = vst.msk [vmem:[%s4 + $0x74] sm:$0xf] %vm1671, %v1600
  %1702 = vst.msk [vmem:[%s4 + $0x78] sm:$0xf] %vm1671, %v1601
  %1703 = vst.msk [vmem:[%s4 + $0x7c] sm:$0xf] %vm1671, %v1602
  %1704 = vst.msk [vmem:[%s4 + $0x80] sm:$0xf] %vm1671, %v1603
  %1705 = vst.msk [vmem:[%s4 + $0x84] sm:$0xf] %vm1671, %v1604
  %1706 = vst.msk [vmem:[%s4 + $0x88] sm:$0xf] %vm1671, %v1605
  %1707 = vst.msk [vmem:[%s4 + $0x8c] sm:$0xf] %vm1671, %v1606
  %1708 = vst.msk [vmem:[%s4 + $0x90] sm:$0xf] %vm1671, %v1607
  %1709 = vst.msk [vmem:[%s4 + $0x94] sm:$0xf] %vm1671, %v1608
  %1710 = vst.msk [vmem:[%s4 + $0x98] sm:$0xf] %vm1671, %v1609
  %1711 = vst.msk [vmem:[%s4 + $0x9c] sm:$0xf] %vm1671, %v1610
  %1712 = vst.msk [vmem:[%s4 + $0xa0] sm:$0xf] %vm1671, %v1611
  %1713 = vst.msk [vmem:[%s4 + $0xa4] sm:$0xf] %vm1671, %v1612
  %1714 = vst.msk [vmem:[%s4 + $0xa8] sm:$0xf] %vm1671, %v1613
  %1715 = vst.msk [vmem:[%s4 + $0xac] sm:$0xf] %vm1671, %v1614
  %1716 = vst.msk [vmem:[%s4 + $0xb0] sm:$0xf] %vm1671, %v1615
  %1717 = vst.msk [vmem:[%s4 + $0xb4] sm:$0xf] %vm1671, %v1616
  %1718 = vst.msk [vmem:[%s4 + $0xb8] sm:$0xf] %vm1671, %v1617
  %1719 = vst.msk [vmem:[%s4 + $0xbc] sm:$0xf] %vm1671, %v1618
  %1720 = vst.msk [vmem:[%s4 + $0xc0] sm:$0xf] %vm1671, %v1619
  %1721 = vst.msk [vmem:[%s4 + $0xc4] sm:$0xf] %vm1671, %v1620
  %1722 = vst.msk [vmem:[%s4 + $0xc8] sm:$0xf] %vm1671, %v1621
  %1723 = vst.msk [vmem:[%s4 + $0xcc] sm:$0xf] %vm1671, %v1622
  %1724 = vst.msk [vmem:[%s4 + $0xd0] sm:$0xf] %vm1671, %v1623
  %1725 = vst.msk [vmem:[%s4 + $0xd4] sm:$0xf] %vm1671, %v1624
  %1726 = vst.msk [vmem:[%s4 + $0xd8] sm:$0xf] %vm1671, %v1625
  %1727 = vst.msk [vmem:[%s4 + $0xdc] sm:$0xf] %vm1671, %v1626
  %1728 = vst.msk [vmem:[%s4 + $0xe0] sm:$0xf] %vm1671, %v1627
  %1729 = vst.msk [vmem:[%s4 + $0xe4] sm:$0xf] %vm1671, %v1628
  %1730 = vst.msk [vmem:[%s4 + $0xe8] sm:$0xf] %vm1671, %v1629
  %1731 = vst.msk [vmem:[%s4 + $0xec] sm:$0xf] %vm1671, %v1630
  %1732 = vst.msk [vmem:[%s4 + $0xf0] sm:$0xf] %vm1671, %v1631
  %1733 = vst.msk [vmem:[%s4 + $0xf4] sm:$0xf] %vm1671, %v1632
  %1734 = vst.msk [vmem:[%s4 + $0xf8] sm:$0xf] %vm1671, %v1633
  %1735 = vst.msk [vmem:[%s4 + $0xfc] sm:$0xf] %vm1671, %v1634
  %1736 = vst.msk [vmem:[%s4 + $0x100] sm:$0xf] %vm1671, %v1635
  %1737 = vst.msk [vmem:[%s4 + $0x104] sm:$0xf] %vm1671, %v1636
  %1738 = vst.msk [vmem:[%s4 + $0x108] sm:$0xf] %vm1671, %v1637
  %1739 = vst.msk [vmem:[%s4 + $0x10c] sm:$0xf] %vm1671, %v1638
  %1740 = vst.msk [vmem:[%s4 + $0x110] sm:$0xf] %vm1671, %v1639
  %1741 = vst.msk [vmem:[%s4 + $0x114] sm:$0xf] %vm1671, %v1640
  %1742 = vst.msk [vmem:[%s4 + $0x118] sm:$0xf] %vm1671, %v1641
  %1743 = vst.msk [vmem:[%s4 + $0x11c] sm:$0xf] %vm1671, %v1642
  %1744 = vst.msk [vmem:[%s4 + $0x120] sm:$0xf] %vm1671, %v1643
  %1745 = vst.msk [vmem:[%s4 + $0x124] sm:$0xf] %vm1671, %v1644
  %1746 = vst.msk [vmem:[%s4 + $0x128] sm:$0xf] %vm1671, %v1645
  %1747 = vst.msk [vmem:[%s4 + $0x12c] sm:$0xf] %vm1671, %v1646
  %1748 = vst.msk [vmem:[%s4 + $0x130] sm:$0xf] %vm1671, %v1647
  %1749 = vst.msk [vmem:[%s4 + $0x134] sm:$0xf] %vm1671, %v1648
  %1750 = vst.msk [vmem:[%s4 + $0x138] sm:$0xf] %vm1671, %v1649
  %1751 = vst.msk [vmem:[%s4 + $0x13c] sm:$0xf] %vm1671, %v1650
  %1752 = vst.msk [vmem:[%s4 + $0x140] sm:$0xf] %vm1671, %v1651
  %1753 = vst.msk [vmem:[%s4 + $0x144] sm:$0xf] %vm1671, %v1652
  %1754 = vst.msk [vmem:[%s4 + $0x148] sm:$0xf] %vm1671, %v1653
  %1755 = vst.msk [vmem:[%s4 + $0x14c] sm:$0xf] %vm1671, %v1654
  %1756 = vst.msk [vmem:[%s4 + $0x150] sm:$0xf] %vm1671, %v1655
  %1757 = vst.msk [vmem:[%s4 + $0x154] sm:$0xf] %vm1671, %v1656
  %1758 = vst.msk [vmem:[%s4 + $0x158] sm:$0xf] %vm1671, %v1657
  %1759 = vst.msk [vmem:[%s4 + $0x15c] sm:$0xf] %vm1671, %v1658
  %1760 = vst.msk [vmem:[%s4 + $0x160] sm:$0xf] %vm1671, %v1659
  %1761 = vst.msk [vmem:[%s4 + $0x164] sm:$0xf] %vm1671, %v1660
  %1762 = vst.msk [vmem:[%s4 + $0x168] sm:$0xf] %vm1671, %v1661
  %1763 = vst.msk [vmem:[%s4 + $0x16c] sm:$0xf] %vm1671, %v1662
  %1764 = vst.msk [vmem:[%s4 + $0x170] sm:$0xf] %vm1671, %v1663
  %1765 = vst.msk [vmem:[%s4 + $0x174] sm:$0xf] %vm1671, %v1664
  %1766 = vst.msk [vmem:[%s4 + $0x178] sm:$0xf] %vm1671, %v1665
  %1767 = vst.msk [vmem:[%s4 + $0x17c] sm:$0xf] %vm1671, %v1666
  %1768 = vst.msk [vmem:[%s4 + $0x180] sm:$0xf] %vm1671, %v1667
  %1769 = vst.msk [vmem:[%s4 + $0x184] sm:$0xf] %vm1671, %v1668
  %1770 = vst.msk [vmem:[%s4 + $0x188] sm:$0xf] %vm1671, %v1669
  %1771 = vst.msk [vmem:[%s4 + $0x18c] sm:$0xf] %vm1671, %v1670
  // Predicated region
  $region18: #{dqn_forward.4} parent=0 // pred_check
    _
  $region19: #{dqn_forward.4} parent=0 // pred_check_branch
    %1773 = sbr.rel (0) target = $region21
  $region20: #{dqn_forward.4} parent=0 // pred_region
    _
  $region21: #{dqn_forward.4} parent=0 // pred_fallthru
    _
  // Predicated region
  $region22: #{dqn_forward.4} parent=0 // pred_check
    _
  $region23: #{dqn_forward.4} parent=0 // pred_check_branch
    %1775 = sbr.rel (0) target = $region25
  $region24: #{dqn_forward.4} parent=0 // pred_region
    _
  $region25: #{dqn_forward.4} parent=0 // pred_fallthru
    _

// kernel: dqn_forward.5
$region0: #{dqn_forward.5}
  #allocation0 [shape = 'u32[]', space=smem, size = 0x4, offset = 0x4, fixed_abs, tag = 'smem constant byte address 0x4 - core index']
  #allocation1 [shape = 'u32[72,128]{1,0:T(1,128)}', space=vmem, size = 0x9000, scoped, tag = 'internal scratch']
  %s0 = inlined_call_operand.vmem [shape: bf16[162,512], index: 0, kind: input, shape index: {}]
  %s1 = inlined_call_operand.vmem [shape: bf16[512,64], index: 1, kind: input, shape index: {}]
  %s2 = inlined_call_operand.vmem [shape: f32[1,64], index: 2, kind: input, shape index: {}]
  %s3 = inlined_call_operand.vmem [shape: f32[1,64], index: 3, kind: input, shape index: {}]
  %s4 = inlined_call_operand.vmem [shape: bf16[162,64], index: 4, kind: output, shape index: {}]
  %s5 = sld [smem:[#allocation0]]
  $region26: #{dqn_forward.5} parent=0
    _
  %s7 = ssub.s32 1, %s5
  %s8 = scalar_select 0, %s7, %s5
  // Predicated region
  $region2: #{dqn_forward.5} parent=0 // pred_check
    _
  $region3: #{dqn_forward.5} parent=0 // pred_check_branch
    %10 = sbr.rel (0) target = $region5
  $region4: #{dqn_forward.5} parent=0 // pred_region
    _
  $region5: #{dqn_forward.5} parent=0 // pred_fallthru
    _
  // Predicated region
  $region6: #{dqn_forward.5} parent=0 // pred_check
    _
  $region7: #{dqn_forward.5} parent=0 // pred_check_branch
    %12 = sbr.rel (0) target = $region9
  $region8: #{dqn_forward.5} parent=0 // pred_region
    _
  $region9: #{dqn_forward.5} parent=0 // pred_fallthru
    _
  // Predicated region
  $region10: #{dqn_forward.5} parent=0 // pred_check
    _
  $region11: #{dqn_forward.5} parent=0 // pred_check_branch
    %14 = sbr.rel (0) target = $region13
  $region12: #{dqn_forward.5} parent=0 // pred_region
    _
  $region13: #{dqn_forward.5} parent=0 // pred_fallthru
    _
  // Predicated region
  $region14: #{dqn_forward.5} parent=0 // pred_check
    _
  $region15: #{dqn_forward.5} parent=0 // pred_check_branch
    %16 = sbr.rel (0) target = $region17
  $region16: #{dqn_forward.5} parent=0 // pred_region
    _
  $region17: #{dqn_forward.5} parent=0 // pred_fallthru
    _
  %v17 = vld [vmem:[%s0] sm:$0xff]
  %v18 = vld [vmem:[%s0 + $0x8] sm:$0xff]
  %v19 = vld [vmem:[%s0 + $0x10] sm:$0xff]
  %v20 = vld [vmem:[%s0 + $0x18] sm:$0xff]
  %v21 = vld [vmem:[%s0 + $0x20] sm:$0xff]
  %v22 = vld [vmem:[%s0 + $0x28] sm:$0xff]
  %v23 = vld [vmem:[%s0 + $0x30] sm:$0xff]
  %v24 = vld [vmem:[%s0 + $0x38] sm:$0xff]
  %v25 = vld [vmem:[%s0 + $0x40] sm:$0xff]
  %v26 = vld [vmem:[%s0 + $0x48] sm:$0xff]
  %v27 = vld [vmem:[%s0 + $0x50] sm:$0xff]
  %v28 = vld [vmem:[%s0 + $0x58] sm:$0xff]
  %v29 = vld [vmem:[%s0 + $0x60] sm:$0xff]
  %v30 = vld [vmem:[%s0 + $0x68] sm:$0xff]
  %v31 = vld [vmem:[%s0 + $0x70] sm:$0xff]
  %v32 = vld [vmem:[%s0 + $0x78] sm:$0xff]
  %v33 = vld [vmem:[%s0 + $0x80] sm:$0xff]
  %v34 = vld [vmem:[%s0 + $0x88] sm:$0xff]
  %v35 = vld [vmem:[%s0 + $0x90] sm:$0xff]
  %v36 = vld [vmem:[%s0 + $0x98] sm:$0xff]
  %v37 = vld [vmem:[%s0 + $0xa0] sm:$0xff]
  %v38 = vld [vmem:[%s0 + $0xa8] sm:$0xff]
  %v39 = vld [vmem:[%s0 + $0xb0] sm:$0xff]
  %v40 = vld [vmem:[%s0 + $0xb8] sm:$0xff]
  %v41 = vld [vmem:[%s0 + $0xc0] sm:$0xff]
  %v42 = vld [vmem:[%s0 + $0xc8] sm:$0xff]
  %v43 = vld [vmem:[%s0 + $0xd0] sm:$0xff]
  %v44 = vld [vmem:[%s0 + $0xd8] sm:$0xff]
  %v45 = vld [vmem:[%s0 + $0xe0] sm:$0xff]
  %v46 = vld [vmem:[%s0 + $0xe8] sm:$0xff]
  %v47 = vld [vmem:[%s0 + $0xf0] sm:$0xff]
  %v48 = vld [vmem:[%s0 + $0xf8] sm:$0xff]
  %v49 = vld [vmem:[%s0 + $0x100] sm:$0xff]
  %v50 = vld [vmem:[%s0 + $0x108] sm:$0xff]
  %v51 = vld [vmem:[%s0 + $0x110] sm:$0xff]
  %v52 = vld [vmem:[%s0 + $0x118] sm:$0xff]
  %v53 = vld [vmem:[%s0 + $0x120] sm:$0xff]
  %v54 = vld [vmem:[%s0 + $0x128] sm:$0xff]
  %v55 = vld [vmem:[%s0 + $0x130] sm:$0xff]
  %v56 = vld [vmem:[%s0 + $0x138] sm:$0xff]
  %v57 = vld [vmem:[%s0 + $0x140] sm:$0x11]
  %v58 = vld [vmem:[%s0 + $0x148] sm:$0x11]
  %v59 = vld [vmem:[%s1] sm:$0xf]
  %v60 = vld [vmem:[%s1 + $0x4] sm:$0xf]
  %v61 = vld [vmem:[%s1 + $0x8] sm:$0xf]
  %v62 = vld [vmem:[%s1 + $0xc] sm:$0xf]
  %v63 = vld [vmem:[%s1 + $0x10] sm:$0xf]
  %v64 = vld [vmem:[%s1 + $0x14] sm:$0xf]
  %v65 = vld [vmem:[%s1 + $0x18] sm:$0xf]
  %v66 = vld [vmem:[%s1 + $0x1c] sm:$0xf]
  %v67 = vld [vmem:[%s1 + $0x20] sm:$0xf]
  %v68 = vld [vmem:[%s1 + $0x24] sm:$0xf]
  %v69 = vld [vmem:[%s1 + $0x28] sm:$0xf]
  %v70 = vld [vmem:[%s1 + $0x2c] sm:$0xf]
  %v71 = vld [vmem:[%s1 + $0x30] sm:$0xf]
  %v72 = vld [vmem:[%s1 + $0x34] sm:$0xf]
  %v73 = vld [vmem:[%s1 + $0x38] sm:$0xf]
  %v74 = vld [vmem:[%s1 + $0x3c] sm:$0xf]
  %v75 = vld [vmem:[%s1 + $0x40] sm:$0xf]
  %v76 = vld [vmem:[%s1 + $0x44] sm:$0xf]
  %v77 = vld [vmem:[%s1 + $0x48] sm:$0xf]
  %v78 = vld [vmem:[%s1 + $0x4c] sm:$0xf]
  %v79 = vld [vmem:[%s1 + $0x50] sm:$0xf]
  %v80 = vld [vmem:[%s1 + $0x54] sm:$0xf]
  %v81 = vld [vmem:[%s1 + $0x58] sm:$0xf]
  %v82 = vld [vmem:[%s1 + $0x5c] sm:$0xf]
  %v83 = vld [vmem:[%s1 + $0x60] sm:$0xf]
  %v84 = vld [vmem:[%s1 + $0x64] sm:$0xf]
  %v85 = vld [vmem:[%s1 + $0x68] sm:$0xf]
  %v86 = vld [vmem:[%s1 + $0x6c] sm:$0xf]
  %v87 = vld [vmem:[%s1 + $0x70] sm:$0xf]
  %v88 = vld [vmem:[%s1 + $0x74] sm:$0xf]
  %v89 = vld [vmem:[%s1 + $0x78] sm:$0xf]
  %v90 = vld [vmem:[%s1 + $0x7c] sm:$0xf]
  %v91 = vld [vmem:[%s1 + $0x80] sm:$0xf]
  %v92 = vld [vmem:[%s1 + $0x84] sm:$0xf]
  %v93 = vld [vmem:[%s1 + $0x88] sm:$0xf]
  %v94 = vld [vmem:[%s1 + $0x8c] sm:$0xf]
  %v95 = vld [vmem:[%s1 + $0x90] sm:$0xf]
  %v96 = vld [vmem:[%s1 + $0x94] sm:$0xf]
  %v97 = vld [vmem:[%s1 + $0x98] sm:$0xf]
  %v98 = vld [vmem:[%s1 + $0x9c] sm:$0xf]
  %v99 = vld [vmem:[%s1 + $0xa0] sm:$0xf]
  %v100 = vld [vmem:[%s1 + $0xa4] sm:$0xf]
  %v101 = vld [vmem:[%s1 + $0xa8] sm:$0xf]
  %v102 = vld [vmem:[%s1 + $0xac] sm:$0xf]
  %v103 = vld [vmem:[%s1 + $0xb0] sm:$0xf]
  %v104 = vld [vmem:[%s1 + $0xb4] sm:$0xf]
  %v105 = vld [vmem:[%s1 + $0xb8] sm:$0xf]
  %v106 = vld [vmem:[%s1 + $0xbc] sm:$0xf]
  %v107 = vld [vmem:[%s1 + $0xc0] sm:$0xf]
  %v108 = vld [vmem:[%s1 + $0xc4] sm:$0xf]
  %v109 = vld [vmem:[%s1 + $0xc8] sm:$0xf]
  %v110 = vld [vmem:[%s1 + $0xcc] sm:$0xf]
  %v111 = vld [vmem:[%s1 + $0xd0] sm:$0xf]
  %v112 = vld [vmem:[%s1 + $0xd4] sm:$0xf]
  %v113 = vld [vmem:[%s1 + $0xd8] sm:$0xf]
  %v114 = vld [vmem:[%s1 + $0xdc] sm:$0xf]
  %v115 = vld [vmem:[%s1 + $0xe0] sm:$0xf]
  %v116 = vld [vmem:[%s1 + $0xe4] sm:$0xf]
  %v117 = vld [vmem:[%s1 + $0xe8] sm:$0xf]
  %v118 = vld [vmem:[%s1 + $0xec] sm:$0xf]
  %v119 = vld [vmem:[%s1 + $0xf0] sm:$0xf]
  %v120 = vld [vmem:[%s1 + $0xf4] sm:$0xf]
  %v121 = vld [vmem:[%s1 + $0xf8] sm:$0xf]
  %v122 = vld [vmem:[%s1 + $0xfc] sm:$0xf]
  %v165 = vunpack.c.l.b16 %v17
  %v166 = vunpack.c.h.b16 %v17
  %v167 = vunpack.c.l.b16 %v18
  %v168 = vunpack.c.h.b16 %v18
  %v169 = vunpack.c.l.b16 %v19
  %v170 = vunpack.c.h.b16 %v19
  %v171 = vunpack.c.l.b16 %v20
  %v172 = vunpack.c.h.b16 %v20
  %v173 = vunpack.c.l.b16 %v21
  %v174 = vunpack.c.h.b16 %v21
  %v175 = vunpack.c.l.b16 %v22
  %v176 = vunpack.c.h.b16 %v22
  %v177 = vunpack.c.l.b16 %v23
  %v178 = vunpack.c.h.b16 %v23
  %v179 = vunpack.c.l.b16 %v24
  %v180 = vunpack.c.h.b16 %v24
  %v181 = vunpack.c.l.b16 %v25
  %v182 = vunpack.c.h.b16 %v25
  %v183 = vunpack.c.l.b16 %v26
  %v184 = vunpack.c.h.b16 %v26
  %v185 = vunpack.c.l.b16 %v27
  %v186 = vunpack.c.h.b16 %v27
  %v187 = vunpack.c.l.b16 %v28
  %v188 = vunpack.c.h.b16 %v28
  %v189 = vunpack.c.l.b16 %v29
  %v190 = vunpack.c.h.b16 %v29
  %v191 = vunpack.c.l.b16 %v30
  %v192 = vunpack.c.h.b16 %v30
  %v193 = vunpack.c.l.b16 %v31
  %v194 = vunpack.c.h.b16 %v31
  %v195 = vunpack.c.l.b16 %v32
  %v196 = vunpack.c.h.b16 %v32
  %v197 = vunpack.c.l.b16 %v33
  %v198 = vunpack.c.h.b16 %v33
  %v199 = vunpack.c.l.b16 %v34
  %v200 = vunpack.c.h.b16 %v34
  %v201 = vunpack.c.l.b16 %v35
  %v202 = vunpack.c.h.b16 %v35
  %v203 = vunpack.c.l.b16 %v36
  %v204 = vunpack.c.h.b16 %v36
  %v205 = vunpack.c.l.b16 %v37
  %v206 = vunpack.c.h.b16 %v37
  %v207 = vunpack.c.l.b16 %v38
  %v208 = vunpack.c.h.b16 %v38
  %v209 = vunpack.c.l.b16 %v39
  %v210 = vunpack.c.h.b16 %v39
  %v211 = vunpack.c.l.b16 %v40
  %v212 = vunpack.c.h.b16 %v40
  %v213 = vunpack.c.l.b16 %v41
  %v214 = vunpack.c.h.b16 %v41
  %v215 = vunpack.c.l.b16 %v42
  %v216 = vunpack.c.h.b16 %v42
  %v217 = vunpack.c.l.b16 %v43
  %v218 = vunpack.c.h.b16 %v43
  %v219 = vunpack.c.l.b16 %v44
  %v220 = vunpack.c.h.b16 %v44
  %v221 = vunpack.c.l.b16 %v45
  %v222 = vunpack.c.h.b16 %v45
  %v223 = vunpack.c.l.b16 %v46
  %v224 = vunpack.c.h.b16 %v46
  %v225 = vunpack.c.l.b16 %v47
  %v226 = vunpack.c.h.b16 %v47
  %v227 = vunpack.c.l.b16 %v48
  %v228 = vunpack.c.h.b16 %v48
  %v229 = vunpack.c.l.b16 %v49
  %v230 = vunpack.c.h.b16 %v49
  %v231 = vunpack.c.l.b16 %v50
  %v232 = vunpack.c.h.b16 %v50
  %v233 = vunpack.c.l.b16 %v51
  %v234 = vunpack.c.h.b16 %v51
  %v235 = vunpack.c.l.b16 %v52
  %v236 = vunpack.c.h.b16 %v52
  %v237 = vunpack.c.l.b16 %v53
  %v238 = vunpack.c.h.b16 %v53
  %v239 = vunpack.c.l.b16 %v54
  %v240 = vunpack.c.h.b16 %v54
  %v241 = vunpack.c.l.b16 %v55
  %v242 = vunpack.c.h.b16 %v55
  %v243 = vunpack.c.l.b16 %v56
  %v244 = vunpack.c.h.b16 %v56
  %v245 = vunpack.c.l.b16 %v57
  %v246 = vunpack.c.h.b16 %v57
  %v247 = vunpack.c.l.b16 %v58
  %v248 = vunpack.c.h.b16 %v58
  %v249 = vpack.c.b16 %v169, %v165
  %v250 = vpack.c.b16 %v170, %v166
  %v251 = vpack.c.b16 %v171, %v167
  %v252 = vpack.c.b16 %v172, %v168
  %v253 = vpack.c.b16 %v177, %v173
  %v254 = vpack.c.b16 %v178, %v174
  %v255 = vpack.c.b16 %v179, %v175
  %v256 = vpack.c.b16 %v180, %v176
  %v257 = vpack.c.b16 %v185, %v181
  %v258 = vpack.c.b16 %v186, %v182
  %v259 = vpack.c.b16 %v187, %v183
  %v260 = vpack.c.b16 %v188, %v184
  %v261 = vpack.c.b16 %v193, %v189
  %v262 = vpack.c.b16 %v194, %v190
  %v263 = vpack.c.b16 %v195, %v191
  %v264 = vpack.c.b16 %v196, %v192
  %v265 = vpack.c.b16 %v201, %v197
  %v266 = vpack.c.b16 %v202, %v198
  %v267 = vpack.c.b16 %v203, %v199
  %v268 = vpack.c.b16 %v204, %v200
  %v269 = vpack.c.b16 %v209, %v205
  %v270 = vpack.c.b16 %v210, %v206
  %v271 = vpack.c.b16 %v211, %v207
  %v272 = vpack.c.b16 %v212, %v208
  %v273 = vpack.c.b16 %v217, %v213
  %v274 = vpack.c.b16 %v218, %v214
  %v275 = vpack.c.b16 %v219, %v215
  %v276 = vpack.c.b16 %v220, %v216
  %v277 = vpack.c.b16 %v225, %v221
  %v278 = vpack.c.b16 %v226, %v222
  %v279 = vpack.c.b16 %v227, %v223
  %v280 = vpack.c.b16 %v228, %v224
  %v281 = vpack.c.b16 %v233, %v229
  %v282 = vpack.c.b16 %v234, %v230
  %v283 = vpack.c.b16 %v235, %v231
  %v284 = vpack.c.b16 %v236, %v232
  %v285 = vpack.c.b16 %v241, %v237
  %v286 = vpack.c.b16 %v242, %v238
  %v287 = vpack.c.b16 %v243, %v239
  %v288 = vpack.c.b16 %v244, %v240
  %v289 = vpack.c.b16 %v245, %v245
  %v290 = vpack.c.b16 %v246, %v246
  %v291 = vpack.c.b16 %v247, %v247
  %v292 = vpack.c.b16 %v248, %v248
  %v401 = vunpack.c.l.b16 %v59
  %v402 = vunpack.c.l.b16 %v60
  %v403 = vunpack.c.l.b16 %v61
  %v404 = vunpack.c.l.b16 %v62
  %v405 = vunpack.c.l.b16 %v63
  %v406 = vunpack.c.l.b16 %v64
  %v407 = vunpack.c.l.b16 %v65
  %v408 = vunpack.c.l.b16 %v66
  %v409 = vunpack.c.l.b16 %v67
  %v410 = vunpack.c.l.b16 %v68
  %v411 = vunpack.c.l.b16 %v69
  %v412 = vunpack.c.l.b16 %v70
  %v413 = vunpack.c.l.b16 %v71
  %v414 = vunpack.c.l.b16 %v72
  %v415 = vunpack.c.l.b16 %v73
  %v416 = vunpack.c.l.b16 %v74
  %v417 = vunpack.c.l.b16 %v75
  %v418 = vunpack.c.l.b16 %v76
  %v419 = vunpack.c.l.b16 %v77
  %v420 = vunpack.c.l.b16 %v78
  %v421 = vunpack.c.l.b16 %v79
  %v422 = vunpack.c.l.b16 %v80
  %v423 = vunpack.c.l.b16 %v81
  %v424 = vunpack.c.l.b16 %v82
  %v425 = vunpack.c.l.b16 %v83
  %v426 = vunpack.c.l.b16 %v84
  %v427 = vunpack.c.l.b16 %v85
  %v428 = vunpack.c.l.b16 %v86
  %v429 = vunpack.c.l.b16 %v87
  %v430 = vunpack.c.l.b16 %v88
  %v431 = vunpack.c.l.b16 %v89
  %v432 = vunpack.c.l.b16 %v90
  %v433 = vunpack.c.l.b16 %v91
  %v434 = vunpack.c.l.b16 %v92
  %v435 = vunpack.c.l.b16 %v93
  %v436 = vunpack.c.l.b16 %v94
  %v437 = vunpack.c.l.b16 %v95
  %v438 = vunpack.c.l.b16 %v96
  %v439 = vunpack.c.l.b16 %v97
  %v440 = vunpack.c.l.b16 %v98
  %v441 = vunpack.c.l.b16 %v99
  %v442 = vunpack.c.l.b16 %v100
  %v443 = vunpack.c.l.b16 %v101
  %v444 = vunpack.c.l.b16 %v102
  %v445 = vunpack.c.l.b16 %v103
  %v446 = vunpack.c.l.b16 %v104
  %v447 = vunpack.c.l.b16 %v105
  %v448 = vunpack.c.l.b16 %v106
  %v449 = vunpack.c.l.b16 %v107
  %v450 = vunpack.c.l.b16 %v108
  %v451 = vunpack.c.l.b16 %v109
  %v452 = vunpack.c.l.b16 %v110
  %v453 = vunpack.c.l.b16 %v111
  %v454 = vunpack.c.l.b16 %v112
  %v455 = vunpack.c.l.b16 %v113
  %v456 = vunpack.c.l.b16 %v114
  %v457 = vunpack.c.l.b16 %v115
  %v458 = vunpack.c.l.b16 %v116
  %v459 = vunpack.c.l.b16 %v117
  %v460 = vunpack.c.l.b16 %v118
  %v461 = vunpack.c.l.b16 %v119
  %v462 = vunpack.c.l.b16 %v120
  %v463 = vunpack.c.l.b16 %v121
  %v464 = vunpack.c.l.b16 %v122
  %v465 = vpack.c.b16 %v402, %v401
  %v466 = vpack.c.b16 %v404, %v403
  %v467 = vpack.c.b16 %v406, %v405
  %v468 = vpack.c.b16 %v408, %v407
  %v469 = vpack.c.b16 %v410, %v409
  %v470 = vpack.c.b16 %v412, %v411
  %v471 = vpack.c.b16 %v414, %v413
  %v472 = vpack.c.b16 %v416, %v415
  %v473 = vpack.c.b16 %v418, %v417
  %v474 = vpack.c.b16 %v420, %v419
  %v475 = vpack.c.b16 %v422, %v421
  %v476 = vpack.c.b16 %v424, %v423
  %v477 = vpack.c.b16 %v426, %v425
  %v478 = vpack.c.b16 %v428, %v427
  %v479 = vpack.c.b16 %v430, %v429
  %v480 = vpack.c.b16 %v432, %v431
  %v481 = vpack.c.b16 %v434, %v433
  %v482 = vpack.c.b16 %v436, %v435
  %v483 = vpack.c.b16 %v438, %v437
  %v484 = vpack.c.b16 %v440, %v439
  %v485 = vpack.c.b16 %v442, %v441
  %v486 = vpack.c.b16 %v444, %v443
  %v487 = vpack.c.b16 %v446, %v445
  %v488 = vpack.c.b16 %v448, %v447
  %v489 = vpack.c.b16 %v450, %v449
  %v490 = vpack.c.b16 %v452, %v451
  %v491 = vpack.c.b16 %v454, %v453
  %v492 = vpack.c.b16 %v456, %v455
  %v493 = vpack.c.b16 %v458, %v457
  %v494 = vpack.c.b16 %v460, %v459
  %v495 = vpack.c.b16 %v462, %v461
  %v496 = vpack.c.b16 %v464, %v463
  %529 = vmatpush.bf16.msra.mxu0 %v472
  %530 = vmatpush.bf16.msra.mxu0 %v471
  %531 = vmatpush.bf16.msra.mxu0 %v470
  %532 = vmatpush.bf16.msra.mxu0 %v469
  %533 = vmatpush.bf16.msra.mxu0 %v468
  %534 = vmatpush.bf16.msra.mxu0 %v467
  %535 = vmatpush.bf16.msra.mxu0 %v466
  %536 = vmatpush.bf16.msra.mxu0 %v465
  %537 = vmatmul.bf16.gmra.mxu0 %v249
  %v538 = vpop.f32.mrf.mxu0
  %v539 = vadd.f32 0.0, %v538
  %v540 = vpop.f32.mrf.mxu0
  %v541 = vadd.f32 0.0, %v540
  %542 = vmatmul.bf16.gmra.mxu0 %v253
  %v543 = vpop.f32.mrf.mxu0
  %v544 = vadd.f32 0.0, %v543
  %v545 = vpop.f32.mrf.mxu0
  %v546 = vadd.f32 0.0, %v545
  %547 = vmatmul.bf16.gmra.mxu0 %v257
  %v548 = vpop.f32.mrf.mxu0
  %v549 = vadd.f32 0.0, %v548
  %v550 = vpop.f32.mrf.mxu0
  %v551 = vadd.f32 0.0, %v550
  %552 = vmatmul.bf16.gmra.mxu0 %v261
  %v553 = vpop.f32.mrf.mxu0
  %v554 = vadd.f32 0.0, %v553
  %v555 = vpop.f32.mrf.mxu0
  %v556 = vadd.f32 0.0, %v555
  %557 = vmatmul.bf16.gmra.mxu0 %v265
  %v558 = vpop.f32.mrf.mxu0
  %v559 = vadd.f32 0.0, %v558
  %v560 = vpop.f32.mrf.mxu0
  %v561 = vadd.f32 0.0, %v560
  %562 = vmatmul.bf16.gmra.mxu0 %v269
  %v563 = vpop.f32.mrf.mxu0
  %v564 = vadd.f32 0.0, %v563
  %v565 = vpop.f32.mrf.mxu0
  %v566 = vadd.f32 0.0, %v565
  %567 = vmatmul.bf16.gmra.mxu0 %v273
  %v568 = vpop.f32.mrf.mxu0
  %v569 = vadd.f32 0.0, %v568
  %v570 = vpop.f32.mrf.mxu0
  %v571 = vadd.f32 0.0, %v570
  %572 = vmatmul.bf16.gmra.mxu0 %v277
  %v573 = vpop.f32.mrf.mxu0
  %v574 = vadd.f32 0.0, %v573
  %v575 = vpop.f32.mrf.mxu0
  %v576 = vadd.f32 0.0, %v575
  %577 = vmatmul.bf16.gmra.mxu0 %v281
  %v578 = vpop.f32.mrf.mxu0
  %v579 = vadd.f32 0.0, %v578
  %v580 = vpop.f32.mrf.mxu0
  %v581 = vadd.f32 0.0, %v580
  %582 = vmatmul.bf16.gmra.mxu0 %v285
  %v583 = vpop.f32.mrf.mxu0
  %v584 = vadd.f32 0.0, %v583
  %v585 = vpop.f32.mrf.mxu0
  %v586 = vadd.f32 0.0, %v585
  %587 = vmatmul.bf16.gmra.mxu0 %v289
  %v588 = vpop.f32.mrf.mxu0
  %v589 = vadd.f32 0.0, %v588
  %v590 = vpop.f32.mrf.mxu0
  %591 = vdwg.mxu0
  %592 = vmatpush.bf16.msra.mxu0 %v480
  %593 = vmatpush.bf16.msra.mxu0 %v479
  %594 = vmatpush.bf16.msra.mxu0 %v478
  %595 = vmatpush.bf16.msra.mxu0 %v477
  %596 = vmatpush.bf16.msra.mxu0 %v476
  %597 = vmatpush.bf16.msra.mxu0 %v475
  %598 = vmatpush.bf16.msra.mxu0 %v474
  %599 = vmatpush.bf16.msra.mxu0 %v473
  %600 = vmatmul.bf16.gmra.mxu0 %v250
  %v601 = vpop.f32.mrf.mxu0
  %v602 = vadd.f32 %v539, %v601
  %v603 = vpop.f32.mrf.mxu0
  %v604 = vadd.f32 %v541, %v603
  %605 = vmatmul.bf16.gmra.mxu0 %v254
  %v606 = vpop.f32.mrf.mxu0
  %v607 = vadd.f32 %v544, %v606
  %v608 = vpop.f32.mrf.mxu0
  %v609 = vadd.f32 %v546, %v608
  %610 = vmatmul.bf16.gmra.mxu0 %v258
  %v611 = vpop.f32.mrf.mxu0
  %v612 = vadd.f32 %v549, %v611
  %v613 = vpop.f32.mrf.mxu0
  %v614 = vadd.f32 %v551, %v613
  %615 = vmatmul.bf16.gmra.mxu0 %v262
  %v616 = vpop.f32.mrf.mxu0
  %v617 = vadd.f32 %v554, %v616
  %v618 = vpop.f32.mrf.mxu0
  %v619 = vadd.f32 %v556, %v618
  %620 = vmatmul.bf16.gmra.mxu0 %v266
  %v621 = vpop.f32.mrf.mxu0
  %v622 = vadd.f32 %v559, %v621
  %v623 = vpop.f32.mrf.mxu0
  %v624 = vadd.f32 %v561, %v623
  %625 = vmatmul.bf16.gmra.mxu0 %v270
  %v626 = vpop.f32.mrf.mxu0
  %v627 = vadd.f32 %v564, %v626
  %v628 = vpop.f32.mrf.mxu0
  %v629 = vadd.f32 %v566, %v628
  %630 = vmatmul.bf16.gmra.mxu0 %v274
  %v631 = vpop.f32.mrf.mxu0
  %v632 = vadd.f32 %v569, %v631
  %v633 = vpop.f32.mrf.mxu0
  %v634 = vadd.f32 %v571, %v633
  %635 = vmatmul.bf16.gmra.mxu0 %v278
  %v636 = vpop.f32.mrf.mxu0
  %v637 = vadd.f32 %v574, %v636
  %v638 = vpop.f32.mrf.mxu0
  %v639 = vadd.f32 %v576, %v638
  %640 = vmatmul.bf16.gmra.mxu0 %v282
  %v641 = vpop.f32.mrf.mxu0
  %v642 = vadd.f32 %v579, %v641
  %v643 = vpop.f32.mrf.mxu0
  %v644 = vadd.f32 %v581, %v643
  %645 = vmatmul.bf16.gmra.mxu0 %v286
  %v646 = vpop.f32.mrf.mxu0
  %v647 = vadd.f32 %v584, %v646
  %v648 = vpop.f32.mrf.mxu0
  %v649 = vadd.f32 %v586, %v648
  %650 = vmatmul.bf16.gmra.mxu0 %v290
  %v651 = vpop.f32.mrf.mxu0
  %v652 = vadd.f32 %v589, %v651
  %v653 = vpop.f32.mrf.mxu0
  %654 = vdwg.mxu0
  %655 = vmatpush.bf16.msra.mxu0 %v488
  %656 = vmatpush.bf16.msra.mxu0 %v487
  %657 = vmatpush.bf16.msra.mxu0 %v486
  %658 = vmatpush.bf16.msra.mxu0 %v485
  %659 = vmatpush.bf16.msra.mxu0 %v484
  %660 = vmatpush.bf16.msra.mxu0 %v483
  %661 = vmatpush.bf16.msra.mxu0 %v482
  %662 = vmatpush.bf16.msra.mxu0 %v481
  %663 = vmatmul.bf16.gmra.mxu0 %v251
  %v664 = vpop.f32.mrf.mxu0
  %v665 = vadd.f32 %v602, %v664
  %v666 = vpop.f32.mrf.mxu0
  %v667 = vadd.f32 %v604, %v666
  %668 = vmatmul.bf16.gmra.mxu0 %v255
  %v669 = vpop.f32.mrf.mxu0
  %v670 = vadd.f32 %v607, %v669
  %v671 = vpop.f32.mrf.mxu0
  %v672 = vadd.f32 %v609, %v671
  %673 = vmatmul.bf16.gmra.mxu0 %v259
  %v674 = vpop.f32.mrf.mxu0
  %v675 = vadd.f32 %v612, %v674
  %v676 = vpop.f32.mrf.mxu0
  %v677 = vadd.f32 %v614, %v676
  %678 = vmatmul.bf16.gmra.mxu0 %v263
  %v679 = vpop.f32.mrf.mxu0
  %v680 = vadd.f32 %v617, %v679
  %v681 = vpop.f32.mrf.mxu0
  %v682 = vadd.f32 %v619, %v681
  %683 = vmatmul.bf16.gmra.mxu0 %v267
  %v684 = vpop.f32.mrf.mxu0
  %v685 = vadd.f32 %v622, %v684
  %v686 = vpop.f32.mrf.mxu0
  %v687 = vadd.f32 %v624, %v686
  %688 = vmatmul.bf16.gmra.mxu0 %v271
  %v689 = vpop.f32.mrf.mxu0
  %v690 = vadd.f32 %v627, %v689
  %v691 = vpop.f32.mrf.mxu0
  %v692 = vadd.f32 %v629, %v691
  %693 = vmatmul.bf16.gmra.mxu0 %v275
  %v694 = vpop.f32.mrf.mxu0
  %v695 = vadd.f32 %v632, %v694
  %v696 = vpop.f32.mrf.mxu0
  %v697 = vadd.f32 %v634, %v696
  %698 = vmatmul.bf16.gmra.mxu0 %v279
  %v699 = vpop.f32.mrf.mxu0
  %v700 = vadd.f32 %v637, %v699
  %v701 = vpop.f32.mrf.mxu0
  %v702 = vadd.f32 %v639, %v701
  %703 = vmatmul.bf16.gmra.mxu0 %v283
  %v704 = vpop.f32.mrf.mxu0
  %v705 = vadd.f32 %v642, %v704
  %v706 = vpop.f32.mrf.mxu0
  %v707 = vadd.f32 %v644, %v706
  %708 = vmatmul.bf16.gmra.mxu0 %v287
  %v709 = vpop.f32.mrf.mxu0
  %v710 = vadd.f32 %v647, %v709
  %v711 = vpop.f32.mrf.mxu0
  %v712 = vadd.f32 %v649, %v711
  %713 = vmatmul.bf16.gmra.mxu0 %v291
  %v714 = vpop.f32.mrf.mxu0
  %v715 = vadd.f32 %v652, %v714
  %v716 = vpop.f32.mrf.mxu0
  %717 = vdwg.mxu0
  %718 = vmatpush.bf16.msra.mxu0 %v496
  %719 = vmatpush.bf16.msra.mxu0 %v495
  %720 = vmatpush.bf16.msra.mxu0 %v494
  %721 = vmatpush.bf16.msra.mxu0 %v493
  %722 = vmatpush.bf16.msra.mxu0 %v492
  %723 = vmatpush.bf16.msra.mxu0 %v491
  %724 = vmatpush.bf16.msra.mxu0 %v490
  %725 = vmatpush.bf16.msra.mxu0 %v489
  %726 = vmatmul.bf16.gmra.mxu0 %v252
  %v727 = vpop.f32.mrf.mxu0
  %v728 = vadd.f32 %v665, %v727
  %v729 = vpop.f32.mrf.mxu0
  %v730 = vadd.f32 %v667, %v729
  %731 = vmatmul.bf16.gmra.mxu0 %v256
  %v732 = vpop.f32.mrf.mxu0
  %v733 = vadd.f32 %v670, %v732
  %v734 = vpop.f32.mrf.mxu0
  %v735 = vadd.f32 %v672, %v734
  %736 = vmatmul.bf16.gmra.mxu0 %v260
  %v737 = vpop.f32.mrf.mxu0
  %v738 = vadd.f32 %v675, %v737
  %v739 = vpop.f32.mrf.mxu0
  %v740 = vadd.f32 %v677, %v739
  %741 = vmatmul.bf16.gmra.mxu0 %v264
  %v742 = vpop.f32.mrf.mxu0
  %v743 = vadd.f32 %v680, %v742
  %v744 = vpop.f32.mrf.mxu0
  %v745 = vadd.f32 %v682, %v744
  %746 = vmatmul.bf16.gmra.mxu0 %v268
  %v747 = vpop.f32.mrf.mxu0
  %v748 = vadd.f32 %v685, %v747
  %v749 = vpop.f32.mrf.mxu0
  %v750 = vadd.f32 %v687, %v749
  %751 = vmatmul.bf16.gmra.mxu0 %v272
  %v752 = vpop.f32.mrf.mxu0
  %v753 = vadd.f32 %v690, %v752
  %v754 = vpop.f32.mrf.mxu0
  %v755 = vadd.f32 %v692, %v754
  %756 = vmatmul.bf16.gmra.mxu0 %v276
  %v757 = vpop.f32.mrf.mxu0
  %v758 = vadd.f32 %v695, %v757
  %v759 = vpop.f32.mrf.mxu0
  %v760 = vadd.f32 %v697, %v759
  %761 = vmatmul.bf16.gmra.mxu0 %v280
  %v762 = vpop.f32.mrf.mxu0
  %v763 = vadd.f32 %v700, %v762
  %v764 = vpop.f32.mrf.mxu0
  %v765 = vadd.f32 %v702, %v764
  %766 = vmatmul.bf16.gmra.mxu0 %v284
  %v767 = vpop.f32.mrf.mxu0
  %v768 = vadd.f32 %v705, %v767
  %v769 = vpop.f32.mrf.mxu0
  %v770 = vadd.f32 %v707, %v769
  %771 = vmatmul.bf16.gmra.mxu0 %v288
  %v772 = vpop.f32.mrf.mxu0
  %v773 = vadd.f32 %v710, %v772
  %v774 = vpop.f32.mrf.mxu0
  %v775 = vadd.f32 %v712, %v774
  %776 = vmatmul.bf16.gmra.mxu0 %v292
  %v777 = vpop.f32.mrf.mxu0
  %v778 = vadd.f32 %v715, %v777
  %v779 = vpop.f32.mrf.mxu0
  %780 = vdwg.mxu0
  %v781 = vld [vmem:[%s2] sm:$0x1]
  %v783 = vperm.slane %v781, 0
  %v785 = vmul.f32 %v728, %v783
  %v786 = vmul.f32 %v730, %v783
  %v787 = vmul.f32 %v733, %v783
  %v788 = vmul.f32 %v735, %v783
  %v789 = vmul.f32 %v738, %v783
  %v790 = vmul.f32 %v740, %v783
  %v791 = vmul.f32 %v743, %v783
  %v792 = vmul.f32 %v745, %v783
  %v793 = vmul.f32 %v748, %v783
  %v794 = vmul.f32 %v750, %v783
  %v795 = vmul.f32 %v753, %v783
  %v796 = vmul.f32 %v755, %v783
  %v797 = vmul.f32 %v758, %v783
  %v798 = vmul.f32 %v760, %v783
  %v799 = vmul.f32 %v763, %v783
  %v800 = vmul.f32 %v765, %v783
  %v801 = vmul.f32 %v768, %v783
  %v802 = vmul.f32 %v770, %v783
  %v803 = vmul.f32 %v773, %v783
  %v804 = vmul.f32 %v775, %v783
  %v805 = vmul.f32 %v778, %v783
  %v806 = vld [vmem:[%s3] sm:$0x1]
  %v808 = vperm.slane %v806, 0
  %v810 = vadd.f32 %v785, %v808
  %v811 = vadd.f32 %v786, %v808
  %v812 = vadd.f32 %v787, %v808
  %v813 = vadd.f32 %v788, %v808
  %v814 = vadd.f32 %v789, %v808
  %v815 = vadd.f32 %v790, %v808
  %v816 = vadd.f32 %v791, %v808
  %v817 = vadd.f32 %v792, %v808
  %v818 = vadd.f32 %v793, %v808
  %v819 = vadd.f32 %v794, %v808
  %v820 = vadd.f32 %v795, %v808
  %v821 = vadd.f32 %v796, %v808
  %v822 = vadd.f32 %v797, %v808
  %v823 = vadd.f32 %v798, %v808
  %v824 = vadd.f32 %v799, %v808
  %v825 = vadd.f32 %v800, %v808
  %v826 = vadd.f32 %v801, %v808
  %v827 = vadd.f32 %v802, %v808
  %v828 = vadd.f32 %v803, %v808
  %v829 = vadd.f32 %v804, %v808
  %v830 = vadd.f32 %v805, %v808
  %v831 = vmax.f32 %v810, 0.0
  %v832 = vmax.f32 %v811, 0.0
  %v833 = vmax.f32 %v812, 0.0
  %v834 = vmax.f32 %v813, 0.0
  %v835 = vmax.f32 %v814, 0.0
  %v836 = vmax.f32 %v815, 0.0
  %v837 = vmax.f32 %v816, 0.0
  %v838 = vmax.f32 %v817, 0.0
  %v839 = vmax.f32 %v818, 0.0
  %v840 = vmax.f32 %v819, 0.0
  %v841 = vmax.f32 %v820, 0.0
  %v842 = vmax.f32 %v821, 0.0
  %v843 = vmax.f32 %v822, 0.0
  %v844 = vmax.f32 %v823, 0.0
  %v845 = vmax.f32 %v824, 0.0
  %v846 = vmax.f32 %v825, 0.0
  %v847 = vmax.f32 %v826, 0.0
  %v848 = vmax.f32 %v827, 0.0
  %v849 = vmax.f32 %v828, 0.0
  %v850 = vmax.f32 %v829, 0.0
  %v851 = vmax.f32 %v830, 0.0
  %v852 = vpack.c.bf16 %v831, %v831
  %v853 = vpack.c.bf16 %v832, %v832
  %v854 = vpack.c.bf16 %v833, %v833
  %v855 = vpack.c.bf16 %v834, %v834
  %v856 = vpack.c.bf16 %v835, %v835
  %v857 = vpack.c.bf16 %v836, %v836
  %v858 = vpack.c.bf16 %v837, %v837
  %v859 = vpack.c.bf16 %v838, %v838
  %v860 = vpack.c.bf16 %v839, %v839
  %v861 = vpack.c.bf16 %v840, %v840
  %v862 = vpack.c.bf16 %v841, %v841
  %v863 = vpack.c.bf16 %v842, %v842
  %v864 = vpack.c.bf16 %v843, %v843
  %v865 = vpack.c.bf16 %v844, %v844
  %v866 = vpack.c.bf16 %v845, %v845
  %v867 = vpack.c.bf16 %v846, %v846
  %v868 = vpack.c.bf16 %v847, %v847
  %v869 = vpack.c.bf16 %v848, %v848
  %v870 = vpack.c.bf16 %v849, %v849
  %v871 = vpack.c.bf16 %v850, %v850
  %v872 = vpack.c.bf16 %v851, %v851
  %vm873 = vcmask 519168
  %874 = vst.msk [vmem:[%s4] sm:$0xf] %vm873, %v852
  %875 = vst.msk [vmem:[%s4 + $0x4] sm:$0xf] %vm873, %v853
  %876 = vst.msk [vmem:[%s4 + $0x8] sm:$0xf] %vm873, %v854
  %877 = vst.msk [vmem:[%s4 + $0xc] sm:$0xf] %vm873, %v855
  %878 = vst.msk [vmem:[%s4 + $0x10] sm:$0xf] %vm873, %v856
  %879 = vst.msk [vmem:[%s4 + $0x14] sm:$0xf] %vm873, %v857
  %880 = vst.msk [vmem:[%s4 + $0x18] sm:$0xf] %vm873, %v858
  %881 = vst.msk [vmem:[%s4 + $0x1c] sm:$0xf] %vm873, %v859
  %882 = vst.msk [vmem:[%s4 + $0x20] sm:$0xf] %vm873, %v860
  %883 = vst.msk [vmem:[%s4 + $0x24] sm:$0xf] %vm873, %v861
  %884 = vst.msk [vmem:[%s4 + $0x28] sm:$0xf] %vm873, %v862
  %885 = vst.msk [vmem:[%s4 + $0x2c] sm:$0xf] %vm873, %v863
  %886 = vst.msk [vmem:[%s4 + $0x30] sm:$0xf] %vm873, %v864
  %887 = vst.msk [vmem:[%s4 + $0x34] sm:$0xf] %vm873, %v865
  %888 = vst.msk [vmem:[%s4 + $0x38] sm:$0xf] %vm873, %v866
  %889 = vst.msk [vmem:[%s4 + $0x3c] sm:$0xf] %vm873, %v867
  %890 = vst.msk [vmem:[%s4 + $0x40] sm:$0xf] %vm873, %v868
  %891 = vst.msk [vmem:[%s4 + $0x44] sm:$0xf] %vm873, %v869
  %892 = vst.msk [vmem:[%s4 + $0x48] sm:$0xf] %vm873, %v870
  %893 = vst.msk [vmem:[%s4 + $0x4c] sm:$0xf] %vm873, %v871
  %vm894 = vcmask 516096
  %895 = vst.msk [vmem:[%s4 + $0x50] sm:$0x1] %vm894, %v872
  // Predicated region
  $region18: #{dqn_forward.5} parent=0 // pred_check
    _
  $region19: #{dqn_forward.5} parent=0 // pred_check_branch
    %897 = sbr.rel (0) target = $region21
  $region20: #{dqn_forward.5} parent=0 // pred_region
    _
  $region21: #{dqn_forward.5} parent=0 // pred_fallthru
    _
  // Predicated region
  $region22: #{dqn_forward.5} parent=0 // pred_check
    _
  $region23: #{dqn_forward.5} parent=0 // pred_check_branch
    %899 = sbr.rel (0) target = $region25
  $region24: #{dqn_forward.5} parent=0 // pred_region
    _
  $region25: #{dqn_forward.5} parent=0 // pred_fallthru
    _

// kernel: dqn_forward.6
$region0: #{dqn_forward.6}
  #allocation0 [shape = 'u32[]', space=smem, size = 0x4, offset = 0x4, fixed_abs, tag = 'smem constant byte address 0x4 - core index']
  #allocation1 [shape = 'u32[72,128]{1,0:T(1,128)}', space=vmem, size = 0x9000, scoped, tag = 'internal scratch']
  %s0 = inlined_call_operand.vmem [shape: bf16[98,576], index: 0, kind: input, shape index: {}]
  %s1 = inlined_call_operand.vmem [shape: bf16[576,64], index: 1, kind: input, shape index: {}]
  %s2 = inlined_call_operand.vmem [shape: f32[1,64], index: 2, kind: input, shape index: {}]
  %s3 = inlined_call_operand.vmem [shape: f32[1,64], index: 3, kind: input, shape index: {}]
  %s4 = inlined_call_operand.vmem [shape: bf16[98,64], index: 4, kind: output, shape index: {}]
  %s5 = sld [smem:[#allocation0]]
  $region26: #{dqn_forward.6} parent=0
    _
  %s7 = ssub.s32 1, %s5
  %s8 = scalar_select 0, %s7, %s5
  // Predicated region
  $region2: #{dqn_forward.6} parent=0 // pred_check
    _
  $region3: #{dqn_forward.6} parent=0 // pred_check_branch
    %10 = sbr.rel (0) target = $region5
  $region4: #{dqn_forward.6} parent=0 // pred_region
    _
  $region5: #{dqn_forward.6} parent=0 // pred_fallthru
    _
  // Predicated region
  $region6: #{dqn_forward.6} parent=0 // pred_check
    _
  $region7: #{dqn_forward.6} parent=0 // pred_check_branch
    %12 = sbr.rel (0) target = $region9
  $region8: #{dqn_forward.6} parent=0 // pred_region
    _
  $region9: #{dqn_forward.6} parent=0 // pred_fallthru
    _
  // Predicated region
  $region10: #{dqn_forward.6} parent=0 // pred_check
    _
  $region11: #{dqn_forward.6} parent=0 // pred_check_branch
    %14 = sbr.rel (0) target = $region13
  $region12: #{dqn_forward.6} parent=0 // pred_region
    _
  $region13: #{dqn_forward.6} parent=0 // pred_fallthru
    _
  // Predicated region
  $region14: #{dqn_forward.6} parent=0 // pred_check
    _
  $region15: #{dqn_forward.6} parent=0 // pred_check_branch
    %16 = sbr.rel (0) target = $region17
  $region16: #{dqn_forward.6} parent=0 // pred_region
    _
  $region17: #{dqn_forward.6} parent=0 // pred_fallthru
    _
  %v18 = vld [vmem:[%s0] sm:$0xff]
  %v19 = vld [vmem:[%s0 + $0x8] sm:$0xff]
  %v20 = vld [vmem:[%s0 + $0x10] sm:$0xf]
  %v21 = vld [vmem:[%s0 + $0x14] sm:$0xff]
  %v22 = vld [vmem:[%s0 + $0x1c] sm:$0xff]
  %v23 = vld [vmem:[%s0 + $0x24] sm:$0xf]
  %v24 = vld [vmem:[%s0 + $0x28] sm:$0xff]
  %v25 = vld [vmem:[%s0 + $0x30] sm:$0xff]
  %v26 = vld [vmem:[%s0 + $0x38] sm:$0xf]
  %v27 = vld [vmem:[%s0 + $0x3c] sm:$0xff]
  %v28 = vld [vmem:[%s0 + $0x44] sm:$0xff]
  %v29 = vld [vmem:[%s0 + $0x4c] sm:$0xf]
  %v30 = vld [vmem:[%s0 + $0x50] sm:$0xff]
  %v31 = vld [vmem:[%s0 + $0x58] sm:$0xff]
  %v32 = vld [vmem:[%s0 + $0x60] sm:$0xf]
  %v33 = vld [vmem:[%s0 + $0x64] sm:$0xff]
  %v34 = vld [vmem:[%s0 + $0x6c] sm:$0xff]
  %v35 = vld [vmem:[%s0 + $0x74] sm:$0xf]
  %v36 = vld [vmem:[%s0 + $0x78] sm:$0xff]
  %v37 = vld [vmem:[%s0 + $0x80] sm:$0xff]
  %v38 = vld [vmem:[%s0 + $0x88] sm:$0xf]
  %v39 = vld [vmem:[%s0 + $0x8c] sm:$0xff]
  %v40 = vld [vmem:[%s0 + $0x94] sm:$0xff]
  %v41 = vld [vmem:[%s0 + $0x9c] sm:$0xf]
  %v42 = vld [vmem:[%s0 + $0xa0] sm:$0xff]
  %v43 = vld [vmem:[%s0 + $0xa8] sm:$0xff]
  %v44 = vld [vmem:[%s0 + $0xb0] sm:$0xf]
  %v45 = vld [vmem:[%s0 + $0xb4] sm:$0xff]
  %v46 = vld [vmem:[%s0 + $0xbc] sm:$0xff]
  %v47 = vld [vmem:[%s0 + $0xc4] sm:$0xf]
  %v48 = vld [vmem:[%s0 + $0xc8] sm:$0xff]
  %v49 = vld [vmem:[%s0 + $0xd0] sm:$0xff]
  %v50 = vld [vmem:[%s0 + $0xd8] sm:$0xf]
  %v51 = vld [vmem:[%s0 + $0xdc] sm:$0xff]
  %v52 = vld [vmem:[%s0 + $0xe4] sm:$0xff]
  %v53 = vld [vmem:[%s0 + $0xec] sm:$0xf]
  %v54 = vld [vmem:[%s0 + $0xf0] sm:$0x11]
  %v55 = vld [vmem:[%s0 + $0xf8] sm:$0x11]
  %v56 = vld [vmem:[%s0 + $0x100] sm:$0x1]
  %v57 = vld [vmem:[%s1] sm:$0xf]
  %v58 = vld [vmem:[%s1 + $0x4] sm:$0xf]
  %v59 = vld [vmem:[%s1 + $0x8] sm:$0xf]
  %v60 = vld [vmem:[%s1 + $0xc] sm:$0xf]
  %v61 = vld [vmem:[%s1 + $0x10] sm:$0xf]
  %v62 = vld [vmem:[%s1 + $0x14] sm:$0xf]
  %v63 = vld [vmem:[%s1 + $0x18] sm:$0xf]
  %v64 = vld [vmem:[%s1 + $0x1c] sm:$0xf]
  %v65 = vld [vmem:[%s1 + $0x20] sm:$0xf]
  %v66 = vld [vmem:[%s1 + $0x24] sm:$0xf]
  %v67 = vld [vmem:[%s1 + $0x28] sm:$0xf]
  %v68 = vld [vmem:[%s1 + $0x2c] sm:$0xf]
  %v69 = vld [vmem:[%s1 + $0x30] sm:$0xf]
  %v70 = vld [vmem:[%s1 + $0x34] sm:$0xf]
  %v71 = vld [vmem:[%s1 + $0x38] sm:$0xf]
  %v72 = vld [vmem:[%s1 + $0x3c] sm:$0xf]
  %v73 = vld [vmem:[%s1 + $0x40] sm:$0xf]
  %v74 = vld [vmem:[%s1 + $0x44] sm:$0xf]
  %v75 = vld [vmem:[%s1 + $0x48] sm:$0xf]
  %v76 = vld [vmem:[%s1 + $0x4c] sm:$0xf]
  %v77 = vld [vmem:[%s1 + $0x50] sm:$0xf]
  %v78 = vld [vmem:[%s1 + $0x54] sm:$0xf]
  %v79 = vld [vmem:[%s1 + $0x58] sm:$0xf]
  %v80 = vld [vmem:[%s1 + $0x5c] sm:$0xf]
  %v81 = vld [vmem:[%s1 + $0x60] sm:$0xf]
  %v82 = vld [vmem:[%s1 + $0x64] sm:$0xf]
  %v83 = vld [vmem:[%s1 + $0x68] sm:$0xf]
  %v84 = vld [vmem:[%s1 + $0x6c] sm:$0xf]
  %v85 = vld [vmem:[%s1 + $0x70] sm:$0xf]
  %v86 = vld [vmem:[%s1 + $0x74] sm:$0xf]
  %v87 = vld [vmem:[%s1 + $0x78] sm:$0xf]
  %v88 = vld [vmem:[%s1 + $0x7c] sm:$0xf]
  %v89 = vld [vmem:[%s1 + $0x80] sm:$0xf]
  %v90 = vld [vmem:[%s1 + $0x84] sm:$0xf]
  %v91 = vld [vmem:[%s1 + $0x88] sm:$0xf]
  %v92 = vld [vmem:[%s1 + $0x8c] sm:$0xf]
  %v93 = vld [vmem:[%s1 + $0x90] sm:$0xf]
  %v94 = vld [vmem:[%s1 + $0x94] sm:$0xf]
  %v95 = vld [vmem:[%s1 + $0x98] sm:$0xf]
  %v96 = vld [vmem:[%s1 + $0x9c] sm:$0xf]
  %v97 = vld [vmem:[%s1 + $0xa0] sm:$0xf]
  %v98 = vld [vmem:[%s1 + $0xa4] sm:$0xf]
  %v99 = vld [vmem:[%s1 + $0xa8] sm:$0xf]
  %v100 = vld [vmem:[%s1 + $0xac] sm:$0xf]
  %v101 = vld [vmem:[%s1 + $0xb0] sm:$0xf]
  %v102 = vld [vmem:[%s1 + $0xb4] sm:$0xf]
  %v103 = vld [vmem:[%s1 + $0xb8] sm:$0xf]
  %v104 = vld [vmem:[%s1 + $0xbc] sm:$0xf]
  %v105 = vld [vmem:[%s1 + $0xc0] sm:$0xf]
  %v106 = vld [vmem:[%s1 + $0xc4] sm:$0xf]
  %v107 = vld [vmem:[%s1 + $0xc8] sm:$0xf]
  %v108 = vld [vmem:[%s1 + $0xcc] sm:$0xf]
  %v109 = vld [vmem:[%s1 + $0xd0] sm:$0xf]
  %v110 = vld [vmem:[%s1 + $0xd4] sm:$0xf]
  %v111 = vld [vmem:[%s1 + $0xd8] sm:$0xf]
  %v112 = vld [vmem:[%s1 + $0xdc] sm:$0xf]
  %v113 = vld [vmem:[%s1 + $0xe0] sm:$0xf]
  %v114 = vld [vmem:[%s1 + $0xe4] sm:$0xf]
  %v115 = vld [vmem:[%s1 + $0xe8] sm:$0xf]
  %v116 = vld [vmem:[%s1 + $0xec] sm:$0xf]
  %v117 = vld [vmem:[%s1 + $0xf0] sm:$0xf]
  %v118 = vld [vmem:[%s1 + $0xf4] sm:$0xf]
  %v119 = vld [vmem:[%s1 + $0xf8] sm:$0xf]
  %v120 = vld [vmem:[%s1 + $0xfc] sm:$0xf]
  %v121 = vld [vmem:[%s1 + $0x100] sm:$0xf]
  %v122 = vld [vmem:[%s1 + $0x104] sm:$0xf]
  %v123 = vld [vmem:[%s1 + $0x108] sm:$0xf]
  %v124 = vld [vmem:[%s1 + $0x10c] sm:$0xf]
  %v125 = vld [vmem:[%s1 + $0x110] sm:$0xf]
  %v126 = vld [vmem:[%s1 + $0x114] sm:$0xf]
  %v127 = vld [vmem:[%s1 + $0x118] sm:$0xf]
  %v128 = vld [vmem:[%s1 + $0x11c] sm:$0xf]
  %v168 = vunpack.c.l.b16 %v18
  %v169 = vunpack.c.h.b16 %v18
  %v170 = vunpack.c.l.b16 %v19
  %v171 = vunpack.c.h.b16 %v19
  %v172 = vunpack.c.l.b16 %v20
  %v173 = vunpack.c.l.b16 %v21
  %v174 = vunpack.c.h.b16 %v21
  %v175 = vunpack.c.l.b16 %v22
  %v176 = vunpack.c.h.b16 %v22
  %v177 = vunpack.c.l.b16 %v23
  %v178 = vunpack.c.l.b16 %v24
  %v179 = vunpack.c.h.b16 %v24
  %v180 = vunpack.c.l.b16 %v25
  %v181 = vunpack.c.h.b16 %v25
  %v182 = vunpack.c.l.b16 %v26
  %v183 = vunpack.c.l.b16 %v27
  %v184 = vunpack.c.h.b16 %v27
  %v185 = vunpack.c.l.b16 %v28
  %v186 = vunpack.c.h.b16 %v28
  %v187 = vunpack.c.l.b16 %v29
  %v188 = vunpack.c.l.b16 %v30
  %v189 = vunpack.c.h.b16 %v30
  %v190 = vunpack.c.l.b16 %v31
  %v191 = vunpack.c.h.b16 %v31
  %v192 = vunpack.c.l.b16 %v32
  %v193 = vunpack.c.l.b16 %v33
  %v194 = vunpack.c.h.b16 %v33
  %v195 = vunpack.c.l.b16 %v34
  %v196 = vunpack.c.h.b16 %v34
  %v197 = vunpack.c.l.b16 %v35
  %v198 = vunpack.c.l.b16 %v36
  %v199 = vunpack.c.h.b16 %v36
  %v200 = vunpack.c.l.b16 %v37
  %v201 = vunpack.c.h.b16 %v37
  %v202 = vunpack.c.l.b16 %v38
  %v203 = vunpack.c.l.b16 %v39
  %v204 = vunpack.c.h.b16 %v39
  %v205 = vunpack.c.l.b16 %v40
  %v206 = vunpack.c.h.b16 %v40
  %v207 = vunpack.c.l.b16 %v41
  %v208 = vunpack.c.l.b16 %v42
  %v209 = vunpack.c.h.b16 %v42
  %v210 = vunpack.c.l.b16 %v43
  %v211 = vunpack.c.h.b16 %v43
  %v212 = vunpack.c.l.b16 %v44
  %v213 = vunpack.c.l.b16 %v45
  %v214 = vunpack.c.h.b16 %v45
  %v215 = vunpack.c.l.b16 %v46
  %v216 = vunpack.c.h.b16 %v46
  %v217 = vunpack.c.l.b16 %v47
  %v218 = vunpack.c.l.b16 %v48
  %v219 = vunpack.c.h.b16 %v48
  %v220 = vunpack.c.l.b16 %v49
  %v221 = vunpack.c.h.b16 %v49
  %v222 = vunpack.c.l.b16 %v50
  %v223 = vunpack.c.l.b16 %v51
  %v224 = vunpack.c.h.b16 %v51
  %v225 = vunpack.c.l.b16 %v52
  %v226 = vunpack.c.h.b16 %v52
  %v227 = vunpack.c.l.b16 %v53
  %v228 = vunpack.c.l.b16 %v54
  %v229 = vunpack.c.h.b16 %v54
  %v230 = vunpack.c.l.b16 %v55
  %v231 = vunpack.c.h.b16 %v55
  %v232 = vunpack.c.l.b16 %v56
  %v233 = vpack.c.b16 %v173, %v168
  %v234 = vpack.c.b16 %v174, %v169
  %v235 = vpack.c.b16 %v175, %v170
  %v236 = vpack.c.b16 %v176, %v171
  %v237 = vpack.c.b16 %v177, %v172
  %v238 = vpack.c.b16 %v183, %v178
  %v239 = vpack.c.b16 %v184, %v179
  %v240 = vpack.c.b16 %v185, %v180
  %v241 = vpack.c.b16 %v186, %v181
  %v242 = vpack.c.b16 %v187, %v182
  %v243 = vpack.c.b16 %v193, %v188
  %v244 = vpack.c.b16 %v194, %v189
  %v245 = vpack.c.b16 %v195, %v190
  %v246 = vpack.c.b16 %v196, %v191
  %v247 = vpack.c.b16 %v197, %v192
  %v248 = vpack.c.b16 %v203, %v198
  %v249 = vpack.c.b16 %v204, %v199
  %v250 = vpack.c.b16 %v205, %v200
  %v251 = vpack.c.b16 %v206, %v201
  %v252 = vpack.c.b16 %v207, %v202
  %v253 = vpack.c.b16 %v213, %v208
  %v254 = vpack.c.b16 %v214, %v209
  %v255 = vpack.c.b16 %v215, %v210
  %v256 = vpack.c.b16 %v216, %v211
  %v257 = vpack.c.b16 %v217, %v212
  %v258 = vpack.c.b16 %v223, %v218
  %v259 = vpack.c.b16 %v224, %v219
  %v260 = vpack.c.b16 %v225, %v220
  %v261 = vpack.c.b16 %v226, %v221
  %v262 = vpack.c.b16 %v227, %v222
  %v263 = vpack.c.b16 %v228, %v228
  %v264 = vpack.c.b16 %v229, %v229
  %v265 = vpack.c.b16 %v230, %v230
  %v266 = vpack.c.b16 %v231, %v231
  %v267 = vpack.c.b16 %v232, %v232
  %v368 = vunpack.c.l.b16 %v57
  %v369 = vunpack.c.l.b16 %v58
  %v370 = vunpack.c.l.b16 %v59
  %v371 = vunpack.c.l.b16 %v60
  %v372 = vunpack.c.l.b16 %v61
  %v373 = vunpack.c.l.b16 %v62
  %v374 = vunpack.c.l.b16 %v63
  %v375 = vunpack.c.l.b16 %v64
  %v376 = vunpack.c.l.b16 %v65
  %v377 = vunpack.c.l.b16 %v66
  %v378 = vunpack.c.l.b16 %v67
  %v379 = vunpack.c.l.b16 %v68
  %v380 = vunpack.c.l.b16 %v69
  %v381 = vunpack.c.l.b16 %v70
  %v382 = vunpack.c.l.b16 %v71
  %v383 = vunpack.c.l.b16 %v72
  %v384 = vunpack.c.l.b16 %v73
  %v385 = vunpack.c.l.b16 %v74
  %v386 = vunpack.c.l.b16 %v75
  %v387 = vunpack.c.l.b16 %v76
  %v388 = vunpack.c.l.b16 %v77
  %v389 = vunpack.c.l.b16 %v78
  %v390 = vunpack.c.l.b16 %v79
  %v391 = vunpack.c.l.b16 %v80
  %v392 = vunpack.c.l.b16 %v81
  %v393 = vunpack.c.l.b16 %v82
  %v394 = vunpack.c.l.b16 %v83
  %v395 = vunpack.c.l.b16 %v84
  %v396 = vunpack.c.l.b16 %v85
  %v397 = vunpack.c.l.b16 %v86
  %v398 = vunpack.c.l.b16 %v87
  %v399 = vunpack.c.l.b16 %v88
  %v400 = vunpack.c.l.b16 %v89
  %v401 = vunpack.c.l.b16 %v90
  %v402 = vunpack.c.l.b16 %v91
  %v403 = vunpack.c.l.b16 %v92
  %v404 = vunpack.c.l.b16 %v93
  %v405 = vunpack.c.l.b16 %v94
  %v406 = vunpack.c.l.b16 %v95
  %v407 = vunpack.c.l.b16 %v96
  %v408 = vunpack.c.l.b16 %v97
  %v409 = vunpack.c.l.b16 %v98
  %v410 = vunpack.c.l.b16 %v99
  %v411 = vunpack.c.l.b16 %v100
  %v412 = vunpack.c.l.b16 %v101
  %v413 = vunpack.c.l.b16 %v102
  %v414 = vunpack.c.l.b16 %v103
  %v415 = vunpack.c.l.b16 %v104
  %v416 = vunpack.c.l.b16 %v105
  %v417 = vunpack.c.l.b16 %v106
  %v418 = vunpack.c.l.b16 %v107
  %v419 = vunpack.c.l.b16 %v108
  %v420 = vunpack.c.l.b16 %v109
  %v421 = vunpack.c.l.b16 %v110
  %v422 = vunpack.c.l.b16 %v111
  %v423 = vunpack.c.l.b16 %v112
  %v424 = vunpack.c.l.b16 %v113
  %v425 = vunpack.c.l.b16 %v114
  %v426 = vunpack.c.l.b16 %v115
  %v427 = vunpack.c.l.b16 %v116
  %v428 = vunpack.c.l.b16 %v117
  %v429 = vunpack.c.l.b16 %v118
  %v430 = vunpack.c.l.b16 %v119
  %v431 = vunpack.c.l.b16 %v120
  %v432 = vunpack.c.l.b16 %v121
  %v433 = vunpack.c.l.b16 %v122
  %v434 = vunpack.c.l.b16 %v123
  %v435 = vunpack.c.l.b16 %v124
  %v436 = vunpack.c.l.b16 %v125
  %v437 = vunpack.c.l.b16 %v126
  %v438 = vunpack.c.l.b16 %v127
  %v439 = vunpack.c.l.b16 %v128
  %v440 = vpack.c.b16 %v369, %v368
  %v441 = vpack.c.b16 %v371, %v370
  %v442 = vpack.c.b16 %v373, %v372
  %v443 = vpack.c.b16 %v375, %v374
  %v444 = vpack.c.b16 %v377, %v376
  %v445 = vpack.c.b16 %v379, %v378
  %v446 = vpack.c.b16 %v381, %v380
  %v447 = vpack.c.b16 %v383, %v382
  %v448 = vpack.c.b16 %v385, %v384
  %v449 = vpack.c.b16 %v387, %v386
  %v450 = vpack.c.b16 %v389, %v388
  %v451 = vpack.c.b16 %v391, %v390
  %v452 = vpack.c.b16 %v393, %v392
  %v453 = vpack.c.b16 %v395, %v394
  %v454 = vpack.c.b16 %v397, %v396
  %v455 = vpack.c.b16 %v399, %v398
  %v456 = vpack.c.b16 %v401, %v400
  %v457 = vpack.c.b16 %v403, %v402
  %v458 = vpack.c.b16 %v405, %v404
  %v459 = vpack.c.b16 %v407, %v406
  %v460 = vpack.c.b16 %v409, %v408
  %v461 = vpack.c.b16 %v411, %v410
  %v462 = vpack.c.b16 %v413, %v412
  %v463 = vpack.c.b16 %v415, %v414
  %v464 = vpack.c.b16 %v417, %v416
  %v465 = vpack.c.b16 %v419, %v418
  %v466 = vpack.c.b16 %v421, %v420
  %v467 = vpack.c.b16 %v423, %v422
  %v468 = vpack.c.b16 %v425, %v424
  %v469 = vpack.c.b16 %v427, %v426
  %v470 = vpack.c.b16 %v429, %v428
  %v471 = vpack.c.b16 %v431, %v430
  %v472 = vpack.c.b16 %v433, %v432
  %v473 = vpack.c.b16 %v435, %v434
  %v474 = vpack.c.b16 %v437, %v436
  %v475 = vpack.c.b16 %v439, %v438
  %vm512 = vcmask 523264
  %v514 = vsel %vm512, %v237, 0
  %v517 = vsel %vm512, %v242, 0
  %v520 = vsel %vm512, %v247, 0
  %v523 = vsel %vm512, %v252, 0
  %v526 = vsel %vm512, %v257, 0
  %v529 = vsel %vm512, %v262, 0
  %v532 = vsel %vm512, %v267, 0
  %534 = vmatpush.bf16.msra.mxu0 %v447
  %535 = vmatpush.bf16.msra.mxu0 %v446
  %536 = vmatpush.bf16.msra.mxu0 %v445
  %537 = vmatpush.bf16.msra.mxu0 %v444
  %538 = vmatpush.bf16.msra.mxu0 %v443
  %539 = vmatpush.bf16.msra.mxu0 %v442
  %540 = vmatpush.bf16.msra.mxu0 %v441
  %541 = vmatpush.bf16.msra.mxu0 %v440
  %542 = vmatmul.bf16.gmra.mxu0 %v233
  %v543 = vpop.f32.mrf.mxu0
  %v544 = vadd.f32 0.0, %v543
  %v545 = vpop.f32.mrf.mxu0
  %v546 = vadd.f32 0.0, %v545
  %547 = vmatmul.bf16.gmra.mxu0 %v238
  %v548 = vpop.f32.mrf.mxu0
  %v549 = vadd.f32 0.0, %v548
  %v550 = vpop.f32.mrf.mxu0
  %v551 = vadd.f32 0.0, %v550
  %552 = vmatmul.bf16.gmra.mxu0 %v243
  %v553 = vpop.f32.mrf.mxu0
  %v554 = vadd.f32 0.0, %v553
  %v555 = vpop.f32.mrf.mxu0
  %v556 = vadd.f32 0.0, %v555
  %557 = vmatmul.bf16.gmra.mxu0 %v248
  %v558 = vpop.f32.mrf.mxu0
  %v559 = vadd.f32 0.0, %v558
  %v560 = vpop.f32.mrf.mxu0
  %v561 = vadd.f32 0.0, %v560
  %562 = vmatmul.bf16.gmra.mxu0 %v253
  %v563 = vpop.f32.mrf.mxu0
  %v564 = vadd.f32 0.0, %v563
  %v565 = vpop.f32.mrf.mxu0
  %v566 = vadd.f32 0.0, %v565
  %567 = vmatmul.bf16.gmra.mxu0 %v258
  %v568 = vpop.f32.mrf.mxu0
  %v569 = vadd.f32 0.0, %v568
  %v570 = vpop.f32.mrf.mxu0
  %v571 = vadd.f32 0.0, %v570
  %572 = vmatmul.bf16.gmra.mxu0 %v263
  %v573 = vpop.f32.mrf.mxu0
  %v574 = vadd.f32 0.0, %v573
  %v575 = vpop.f32.mrf.mxu0
  %576 = vdwg.mxu0
  %577 = vmatpush.bf16.msra.mxu0 %v455
  %578 = vmatpush.bf16.msra.mxu0 %v454
  %579 = vmatpush.bf16.msra.mxu0 %v453
  %580 = vmatpush.bf16.msra.mxu0 %v452
  %581 = vmatpush.bf16.msra.mxu0 %v451
  %582 = vmatpush.bf16.msra.mxu0 %v450
  %583 = vmatpush.bf16.msra.mxu0 %v449
  %584 = vmatpush.bf16.msra.mxu0 %v448
  %585 = vmatmul.bf16.gmra.mxu0 %v234
  %v586 = vpop.f32.mrf.mxu0
  %v587 = vadd.f32 %v544, %v586
  %v588 = vpop.f32.mrf.mxu0
  %v589 = vadd.f32 %v546, %v588
  %590 = vmatmul.bf16.gmra.mxu0 %v239
  %v591 = vpop.f32.mrf.mxu0
  %v592 = vadd.f32 %v549, %v591
  %v593 = vpop.f32.mrf.mxu0
  %v594 = vadd.f32 %v551, %v593
  %595 = vmatmul.bf16.gmra.mxu0 %v244
  %v596 = vpop.f32.mrf.mxu0
  %v597 = vadd.f32 %v554, %v596
  %v598 = vpop.f32.mrf.mxu0
  %v599 = vadd.f32 %v556, %v598
  %600 = vmatmul.bf16.gmra.mxu0 %v249
  %v601 = vpop.f32.mrf.mxu0
  %v602 = vadd.f32 %v559, %v601
  %v603 = vpop.f32.mrf.mxu0
  %v604 = vadd.f32 %v561, %v603
  %605 = vmatmul.bf16.gmra.mxu0 %v254
  %v606 = vpop.f32.mrf.mxu0
  %v607 = vadd.f32 %v564, %v606
  %v608 = vpop.f32.mrf.mxu0
  %v609 = vadd.f32 %v566, %v608
  %610 = vmatmul.bf16.gmra.mxu0 %v259
  %v611 = vpop.f32.mrf.mxu0
  %v612 = vadd.f32 %v569, %v611
  %v613 = vpop.f32.mrf.mxu0
  %v614 = vadd.f32 %v571, %v613
  %615 = vmatmul.bf16.gmra.mxu0 %v264
  %v616 = vpop.f32.mrf.mxu0
  %v617 = vadd.f32 %v574, %v616
  %v618 = vpop.f32.mrf.mxu0
  %619 = vdwg.mxu0
  %620 = vmatpush.bf16.msra.mxu0 %v463
  %621 = vmatpush.bf16.msra.mxu0 %v462
  %622 = vmatpush.bf16.msra.mxu0 %v461
  %623 = vmatpush.bf16.msra.mxu0 %v460
  %624 = vmatpush.bf16.msra.mxu0 %v459
  %625 = vmatpush.bf16.msra.mxu0 %v458
  %626 = vmatpush.bf16.msra.mxu0 %v457
  %627 = vmatpush.bf16.msra.mxu0 %v456
  %628 = vmatmul.bf16.gmra.mxu0 %v235
  %v629 = vpop.f32.mrf.mxu0
  %v630 = vadd.f32 %v587, %v629
  %v631 = vpop.f32.mrf.mxu0
  %v632 = vadd.f32 %v589, %v631
  %633 = vmatmul.bf16.gmra.mxu0 %v240
  %v634 = vpop.f32.mrf.mxu0
  %v635 = vadd.f32 %v592, %v634
  %v636 = vpop.f32.mrf.mxu0
  %v637 = vadd.f32 %v594, %v636
  %638 = vmatmul.bf16.gmra.mxu0 %v245
  %v639 = vpop.f32.mrf.mxu0
  %v640 = vadd.f32 %v597, %v639
  %v641 = vpop.f32.mrf.mxu0
  %v642 = vadd.f32 %v599, %v641
  %643 = vmatmul.bf16.gmra.mxu0 %v250
  %v644 = vpop.f32.mrf.mxu0
  %v645 = vadd.f32 %v602, %v644
  %v646 = vpop.f32.mrf.mxu0
  %v647 = vadd.f32 %v604, %v646
  %648 = vmatmul.bf16.gmra.mxu0 %v255
  %v649 = vpop.f32.mrf.mxu0
  %v650 = vadd.f32 %v607, %v649
  %v651 = vpop.f32.mrf.mxu0
  %v652 = vadd.f32 %v609, %v651
  %653 = vmatmul.bf16.gmra.mxu0 %v260
  %v654 = vpop.f32.mrf.mxu0
  %v655 = vadd.f32 %v612, %v654
  %v656 = vpop.f32.mrf.mxu0
  %v657 = vadd.f32 %v614, %v656
  %658 = vmatmul.bf16.gmra.mxu0 %v265
  %v659 = vpop.f32.mrf.mxu0
  %v660 = vadd.f32 %v617, %v659
  %v661 = vpop.f32.mrf.mxu0
  %662 = vdwg.mxu0
  %663 = vmatpush.bf16.msra.mxu0 %v471
  %664 = vmatpush.bf16.msra.mxu0 %v470
  %665 = vmatpush.bf16.msra.mxu0 %v469
  %666 = vmatpush.bf16.msra.mxu0 %v468
  %667 = vmatpush.bf16.msra.mxu0 %v467
  %668 = vmatpush.bf16.msra.mxu0 %v466
  %669 = vmatpush.bf16.msra.mxu0 %v465
  %670 = vmatpush.bf16.msra.mxu0 %v464
  %671 = vmatmul.bf16.gmra.mxu0 %v236
  %v672 = vpop.f32.mrf.mxu0
  %v673 = vadd.f32 %v630, %v672
  %v674 = vpop.f32.mrf.mxu0
  %v675 = vadd.f32 %v632, %v674
  %676 = vmatmul.bf16.gmra.mxu0 %v241
  %v677 = vpop.f32.mrf.mxu0
  %v678 = vadd.f32 %v635, %v677
  %v679 = vpop.f32.mrf.mxu0
  %v680 = vadd.f32 %v637, %v679
  %681 = vmatmul.bf16.gmra.mxu0 %v246
  %v682 = vpop.f32.mrf.mxu0
  %v683 = vadd.f32 %v640, %v682
  %v684 = vpop.f32.mrf.mxu0
  %v685 = vadd.f32 %v642, %v684
  %686 = vmatmul.bf16.gmra.mxu0 %v251
  %v687 = vpop.f32.mrf.mxu0
  %v688 = vadd.f32 %v645, %v687
  %v689 = vpop.f32.mrf.mxu0
  %v690 = vadd.f32 %v647, %v689
  %691 = vmatmul.bf16.gmra.mxu0 %v256
  %v692 = vpop.f32.mrf.mxu0
  %v693 = vadd.f32 %v650, %v692
  %v694 = vpop.f32.mrf.mxu0
  %v695 = vadd.f32 %v652, %v694
  %696 = vmatmul.bf16.gmra.mxu0 %v261
  %v697 = vpop.f32.mrf.mxu0
  %v698 = vadd.f32 %v655, %v697
  %v699 = vpop.f32.mrf.mxu0
  %v700 = vadd.f32 %v657, %v699
  %701 = vmatmul.bf16.gmra.mxu0 %v266
  %v702 = vpop.f32.mrf.mxu0
  %v703 = vadd.f32 %v660, %v702
  %v704 = vpop.f32.mrf.mxu0
  %705 = vdwg.mxu0
  %706 = vmatpush.bf16.msra.mxu0 0
  %707 = vmatpush.bf16.msra.mxu0 0
  %708 = vmatpush.bf16.msra.mxu0 0
  %709 = vmatpush.bf16.msra.mxu0 0
  %710 = vmatpush.bf16.msra.mxu0 %v475
  %711 = vmatpush.bf16.msra.mxu0 %v474
  %712 = vmatpush.bf16.msra.mxu0 %v473
  %713 = vmatpush.bf16.msra.mxu0 %v472
  %714 = vmatmul.bf16.gmra.mxu0 %v514
  %v715 = vpop.f32.mrf.mxu0
  %v716 = vadd.f32 %v673, %v715
  %v717 = vpop.f32.mrf.mxu0
  %v718 = vadd.f32 %v675, %v717
  %719 = vmatmul.bf16.gmra.mxu0 %v517
  %v720 = vpop.f32.mrf.mxu0
  %v721 = vadd.f32 %v678, %v720
  %v722 = vpop.f32.mrf.mxu0
  %v723 = vadd.f32 %v680, %v722
  %724 = vmatmul.bf16.gmra.mxu0 %v520
  %v725 = vpop.f32.mrf.mxu0
  %v726 = vadd.f32 %v683, %v725
  %v727 = vpop.f32.mrf.mxu0
  %v728 = vadd.f32 %v685, %v727
  %729 = vmatmul.bf16.gmra.mxu0 %v523
  %v730 = vpop.f32.mrf.mxu0
  %v731 = vadd.f32 %v688, %v730
  %v732 = vpop.f32.mrf.mxu0
  %v733 = vadd.f32 %v690, %v732
  %734 = vmatmul.bf16.gmra.mxu0 %v526
  %v735 = vpop.f32.mrf.mxu0
  %v736 = vadd.f32 %v693, %v735
  %v737 = vpop.f32.mrf.mxu0
  %v738 = vadd.f32 %v695, %v737
  %739 = vmatmul.bf16.gmra.mxu0 %v529
  %v740 = vpop.f32.mrf.mxu0
  %v741 = vadd.f32 %v698, %v740
  %v742 = vpop.f32.mrf.mxu0
  %v743 = vadd.f32 %v700, %v742
  %744 = vmatmul.bf16.gmra.mxu0 %v532
  %v745 = vpop.f32.mrf.mxu0
  %v746 = vadd.f32 %v703, %v745
  %v747 = vpop.f32.mrf.mxu0
  %748 = vdwg.mxu0
  %v749 = vld [vmem:[%s2] sm:$0x1]
  %v751 = vperm.slane %v749, 0
  %v753 = vmul.f32 %v716, %v751
  %v754 = vmul.f32 %v718, %v751
  %v755 = vmul.f32 %v721, %v751
  %v756 = vmul.f32 %v723, %v751
  %v757 = vmul.f32 %v726, %v751
  %v758 = vmul.f32 %v728, %v751
  %v759 = vmul.f32 %v731, %v751
  %v760 = vmul.f32 %v733, %v751
  %v761 = vmul.f32 %v736, %v751
  %v762 = vmul.f32 %v738, %v751
  %v763 = vmul.f32 %v741, %v751
  %v764 = vmul.f32 %v743, %v751
  %v765 = vmul.f32 %v746, %v751
  %v766 = vld [vmem:[%s3] sm:$0x1]
  %v768 = vperm.slane %v766, 0
  %v770 = vadd.f32 %v753, %v768
  %v771 = vadd.f32 %v754, %v768
  %v772 = vadd.f32 %v755, %v768
  %v773 = vadd.f32 %v756, %v768
  %v774 = vadd.f32 %v757, %v768
  %v775 = vadd.f32 %v758, %v768
  %v776 = vadd.f32 %v759, %v768
  %v777 = vadd.f32 %v760, %v768
  %v778 = vadd.f32 %v761, %v768
  %v779 = vadd.f32 %v762, %v768
  %v780 = vadd.f32 %v763, %v768
  %v781 = vadd.f32 %v764, %v768
  %v782 = vadd.f32 %v765, %v768
  %v783 = vmax.f32 %v770, 0.0
  %v784 = vmax.f32 %v771, 0.0
  %v785 = vmax.f32 %v772, 0.0
  %v786 = vmax.f32 %v773, 0.0
  %v787 = vmax.f32 %v774, 0.0
  %v788 = vmax.f32 %v775, 0.0
  %v789 = vmax.f32 %v776, 0.0
  %v790 = vmax.f32 %v777, 0.0
  %v791 = vmax.f32 %v778, 0.0
  %v792 = vmax.f32 %v779, 0.0
  %v793 = vmax.f32 %v780, 0.0
  %v794 = vmax.f32 %v781, 0.0
  %v795 = vmax.f32 %v782, 0.0
  %v796 = vpack.c.bf16 %v783, %v783
  %v797 = vpack.c.bf16 %v784, %v784
  %v798 = vpack.c.bf16 %v785, %v785
  %v799 = vpack.c.bf16 %v786, %v786
  %v800 = vpack.c.bf16 %v787, %v787
  %v801 = vpack.c.bf16 %v788, %v788
  %v802 = vpack.c.bf16 %v789, %v789
  %v803 = vpack.c.bf16 %v790, %v790
  %v804 = vpack.c.bf16 %v791, %v791
  %v805 = vpack.c.bf16 %v792, %v792
  %v806 = vpack.c.bf16 %v793, %v793
  %v807 = vpack.c.bf16 %v794, %v794
  %v808 = vpack.c.bf16 %v795, %v795
  %vm809 = vcmask 519168
  %810 = vst.msk [vmem:[%s4] sm:$0xf] %vm809, %v796
  %811 = vst.msk [vmem:[%s4 + $0x4] sm:$0xf] %vm809, %v797
  %812 = vst.msk [vmem:[%s4 + $0x8] sm:$0xf] %vm809, %v798
  %813 = vst.msk [vmem:[%s4 + $0xc] sm:$0xf] %vm809, %v799
  %814 = vst.msk [vmem:[%s4 + $0x10] sm:$0xf] %vm809, %v800
  %815 = vst.msk [vmem:[%s4 + $0x14] sm:$0xf] %vm809, %v801
  %816 = vst.msk [vmem:[%s4 + $0x18] sm:$0xf] %vm809, %v802
  %817 = vst.msk [vmem:[%s4 + $0x1c] sm:$0xf] %vm809, %v803
  %818 = vst.msk [vmem:[%s4 + $0x20] sm:$0xf] %vm809, %v804
  %819 = vst.msk [vmem:[%s4 + $0x24] sm:$0xf] %vm809, %v805
  %820 = vst.msk [vmem:[%s4 + $0x28] sm:$0xf] %vm809, %v806
  %821 = vst.msk [vmem:[%s4 + $0x2c] sm:$0xf] %vm809, %v807
  %vm822 = vcmask 516096
  %823 = vst.msk [vmem:[%s4 + $0x30] sm:$0x1] %vm822, %v808
  // Predicated region
  $region18: #{dqn_forward.6} parent=0 // pred_check
    _
  $region19: #{dqn_forward.6} parent=0 // pred_check_branch
    %825 = sbr.rel (0) target = $region21
  $region20: #{dqn_forward.6} parent=0 // pred_region
    _
  $region21: #{dqn_forward.6} parent=0 // pred_fallthru
    _
  // Predicated region
  $region22: #{dqn_forward.6} parent=0 // pred_check
    _
  $region23: #{dqn_forward.6} parent=0 // pred_check_branch
    %827 = sbr.rel (0) target = $region25
  $region24: #{dqn_forward.6} parent=0 // pred_region
    _
  $region25: #{dqn_forward.6} parent=0 // pred_fallthru
    _

// kernel: dqn_forward.7
$region0: #{dqn_forward.7}
  #allocation0 [shape = 'u32[]', space=smem, size = 0x4, offset = 0x4, fixed_abs, tag = 'smem constant byte address 0x4 - core index']
  #allocation1 [shape = 'u32[72,128]{1,0:T(1,128)}', space=vmem, size = 0x9000, scoped, tag = 'internal scratch']
  %s0 = inlined_call_operand.vmem [shape: bf16[2,3136], index: 0, kind: input, shape index: {}]
  %s1 = inlined_call_operand.vmem [shape: bf16[3136,512], index: 1, kind: input, shape index: {}]
  %s2 = inlined_call_operand.vmem [shape: f32[1,512], index: 2, kind: input, shape index: {}]
  %s3 = inlined_call_operand.vmem [shape: bf16[512,128], index: 3, kind: input, shape index: {}]
  %s4 = inlined_call_operand.vmem [shape: f32[1,128], index: 4, kind: input, shape index: {}]
  %s5 = inlined_call_operand.hbm [shape: f32[2,128], index: 5, kind: output, shape index: {}]
  %s6 = sld [smem:[#allocation0]]
  $region30: #{dqn_forward.7} parent=0
    _
  %s8 = ssub.s32 1, %s6
  %s9 = scalar_select 0, %s8, %s6
  $region1: #{dqn_forward.7} parent=0
    #allocation2 [shape = 'u8[1024]{0}', space=vmem, size = 0x400, scoped, tag = 'output window, operand 0, single buffered']
    #allocation3 [shape = 's32[1]{0}', space=sflag, size = 0x4, scoped, tag = 'scoped memory for dqn_forward.7']
    %10 = vsyncpa [#allocation3], 0
    // Predicated region
    $region2: #{dqn_forward.7} parent=1 // pred_check
      _
    $region3: #{dqn_forward.7} parent=1 // pred_check_branch
      %12 = sbr.rel (0) target = $region5
    $region4: #{dqn_forward.7} parent=1 // pred_region
      _
    $region5: #{dqn_forward.7} parent=1 // pred_fallthru
      _
    // Predicated region
    $region6: #{dqn_forward.7} parent=1 // pred_check
      _
    $region7: #{dqn_forward.7} parent=1 // pred_check_branch
      %14 = sbr.rel (0) target = $region9
    $region8: #{dqn_forward.7} parent=1 // pred_region
      _
    $region9: #{dqn_forward.7} parent=1 // pred_fallthru
      _
    // Predicated region
    $region10: #{dqn_forward.7} parent=1 // pred_check
      _
    $region11: #{dqn_forward.7} parent=1 // pred_check_branch
      %16 = sbr.rel (0) target = $region13
    $region12: #{dqn_forward.7} parent=1 // pred_region
      _
    $region13: #{dqn_forward.7} parent=1 // pred_fallthru
      _
    // Predicated region
    $region14: #{dqn_forward.7} parent=1 // pred_check
      _
    $region15: #{dqn_forward.7} parent=1 // pred_check_branch
      %18 = sbr.rel (0) target = $region17
    $region16: #{dqn_forward.7} parent=1 // pred_region
      _
    $region17: #{dqn_forward.7} parent=1 // pred_fallthru
      _
    // Predicated region
    $region18: #{dqn_forward.7} parent=1 // pred_check
      _
    $region19: #{dqn_forward.7} parent=1 // pred_check_branch
      %20 = sbr.rel (0) target = $region21
    $region20: #{dqn_forward.7} parent=1 // pred_region
      _
    $region21: #{dqn_forward.7} parent=1 // pred_fallthru
      _
    %v22 = vld [vmem:[%s0] sm:$0xff]
    %v23 = vld [vmem:[%s0 + $0x8] sm:$0xff]
    %v24 = vld [vmem:[%s0 + $0x10] sm:$0xff]
    %v25 = vld [vmem:[%s0 + $0x18] sm:$0x1]
    %v26 = vld [vmem:[%s1] sm:$0xff]
    %v27 = vld [vmem:[%s1 + $0x8] sm:$0xff]
    %v28 = vld [vmem:[%s1 + $0x10] sm:$0xff]
    %v29 = vld [vmem:[%s1 + $0x18] sm:$0xff]
    %v30 = vld [vmem:[%s1 + $0x20] sm:$0xff]
    %v31 = vld [vmem:[%s1 + $0x28] sm:$0xff]
    %v32 = vld [vmem:[%s1 + $0x30] sm:$0xff]
    %v33 = vld [vmem:[%s1 + $0x38] sm:$0xff]
    %v34 = vld [vmem:[%s1 + $0x40] sm:$0xff]
    %v35 = vld [vmem:[%s1 + $0x48] sm:$0xff]
    %v36 = vld [vmem:[%s1 + $0x50] sm:$0xff]
    %v37 = vld [vmem:[%s1 + $0x58] sm:$0xff]
    %v38 = vld [vmem:[%s1 + $0x60] sm:$0xff]
    %v39 = vld [vmem:[%s1 + $0x68] sm:$0xff]
    %v40 = vld [vmem:[%s1 + $0x70] sm:$0xff]
    %v41 = vld [vmem:[%s1 + $0x78] sm:$0xff]
    %v42 = vld [vmem:[%s1 + $0x80] sm:$0xff]
    %v43 = vld [vmem:[%s1 + $0x88] sm:$0xff]
    %v44 = vld [vmem:[%s1 + $0x90] sm:$0xff]
    %v45 = vld [vmem:[%s1 + $0x98] sm:$0xff]
    %v46 = vld [vmem:[%s1 + $0xa0] sm:$0xff]
    %v47 = vld [vmem:[%s1 + $0xa8] sm:$0xff]
    %v48 = vld [vmem:[%s1 + $0xb0] sm:$0xff]
    %v49 = vld [vmem:[%s1 + $0xb8] sm:$0xff]
    %v50 = vld [vmem:[%s1 + $0xc0] sm:$0xff]
    %v51 = vld [vmem:[%s1 + $0xc8] sm:$0xff]
    %v52 = vld [vmem:[%s1 + $0xd0] sm:$0xff]
    %v53 = vld [vmem:[%s1 + $0xd8] sm:$0xff]
    %v54 = vld [vmem:[%s1 + $0xe0] sm:$0xff]
    %v55 = vld [vmem:[%s1 + $0xe8] sm:$0xff]
    %v56 = vld [vmem:[%s1 + $0xf0] sm:$0xff]
    %v57 = vld [vmem:[%s1 + $0xf8] sm:$0xff]
    %v58 = vld [vmem:[%s1 + $0x100] sm:$0xff]
    %v59 = vld [vmem:[%s1 + $0x108] sm:$0xff]
    %v60 = vld [vmem:[%s1 + $0x110] sm:$0xff]
    %v61 = vld [vmem:[%s1 + $0x118] sm:$0xff]
    %v62 = vld [vmem:[%s1 + $0x120] sm:$0xff]
    %v63 = vld [vmem:[%s1 + $0x128] sm:$0xff]
    %v64 = vld [vmem:[%s1 + $0x130] sm:$0xff]
    %v65 = vld [vmem:[%s1 + $0x138] sm:$0xff]
    %v66 = vld [vmem:[%s1 + $0x140] sm:$0xff]
    %v67 = vld [vmem:[%s1 + $0x148] sm:$0xff]
    %v68 = vld [vmem:[%s1 + $0x150] sm:$0xff]
    %v69 = vld [vmem:[%s1 + $0x158] sm:$0xff]
    %v70 = vld [vmem:[%s1 + $0x160] sm:$0xff]
    %v71 = vld [vmem:[%s1 + $0x168] sm:$0xff]
    %v72 = vld [vmem:[%s1 + $0x170] sm:$0xff]
    %v73 = vld [vmem:[%s1 + $0x178] sm:$0xff]
    %v74 = vld [vmem:[%s1 + $0x180] sm:$0xff]
    %v75 = vld [vmem:[%s1 + $0x188] sm:$0xff]
    %v76 = vld [vmem:[%s1 + $0x190] sm:$0xff]
    %v77 = vld [vmem:[%s1 + $0x198] sm:$0xff]
    %v78 = vld [vmem:[%s1 + $0x1a0] sm:$0xff]
    %v79 = vld [vmem:[%s1 + $0x1a8] sm:$0xff]
    %v80 = vld [vmem:[%s1 + $0x1b0] sm:$0xff]
    %v81 = vld [vmem:[%s1 + $0x1b8] sm:$0xff]
    %v82 = vld [vmem:[%s1 + $0x1c0] sm:$0xff]
    %v83 = vld [vmem:[%s1 + $0x1c8] sm:$0xff]
    %v84 = vld [vmem:[%s1 + $0x1d0] sm:$0xff]
    %v85 = vld [vmem:[%s1 + $0x1d8] sm:$0xff]
    %v86 = vld [vmem:[%s1 + $0x1e0] sm:$0xff]
    %v87 = vld [vmem:[%s1 + $0x1e8] sm:$0xff]
    %v88 = vld [vmem:[%s1 + $0x1f0] sm:$0xff]
    %v89 = vld [vmem:[%s1 + $0x1f8] sm:$0xff]
    %v90 = vld [vmem:[%s1 + $0x200] sm:$0xff]
    %v91 = vld [vmem:[%s1 + $0x208] sm:$0xff]
    %v92 = vld [vmem:[%s1 + $0x210] sm:$0xff]
    %v93 = vld [vmem:[%s1 + $0x218] sm:$0xff]
    %v94 = vld [vmem:[%s1 + $0x220] sm:$0xff]
    %v95 = vld [vmem:[%s1 + $0x228] sm:$0xff]
    %v96 = vld [vmem:[%s1 + $0x230] sm:$0xff]
    %v97 = vld [vmem:[%s1 + $0x238] sm:$0xff]
    %v98 = vld [vmem:[%s1 + $0x240] sm:$0xff]
    %v99 = vld [vmem:[%s1 + $0x248] sm:$0xff]
    %v100 = vld [vmem:[%s1 + $0x250] sm:$0xff]
    %v101 = vld [vmem:[%s1 + $0x258] sm:$0xff]
    %v102 = vld [vmem:[%s1 + $0x260] sm:$0xff]
    %v103 = vld [vmem:[%s1 + $0x268] sm:$0xff]
    %v104 = vld [vmem:[%s1 + $0x270] sm:$0xff]
    %v105 = vld [vmem:[%s1 + $0x278] sm:$0xff]
    %v106 = vld [vmem:[%s1 + $0x280] sm:$0xff]
    %v107 = vld [vmem:[%s1 + $0x288] sm:$0xff]
    %v108 = vld [vmem:[%s1 + $0x290] sm:$0xff]
    %v109 = vld [vmem:[%s1 + $0x298] sm:$0xff]
    %v110 = vld [vmem:[%s1 + $0x2a0] sm:$0xff]
    %v111 = vld [vmem:[%s1 + $0x2a8] sm:$0xff]
    %v112 = vld [vmem:[%s1 + $0x2b0] sm:$0xff]
    %v113 = vld [vmem:[%s1 + $0x2b8] sm:$0xff]
    %v114 = vld [vmem:[%s1 + $0x2c0] sm:$0xff]
    %v115 = vld [vmem:[%s1 + $0x2c8] sm:$0xff]
    %v116 = vld [vmem:[%s1 + $0x2d0] sm:$0xff]
    %v117 = vld [vmem:[%s1 + $0x2d8] sm:$0xff]
    %v118 = vld [vmem:[%s1 + $0x2e0] sm:$0xff]
    %v119 = vld [vmem:[%s1 + $0x2e8] sm:$0xff]
    %v120 = vld [vmem:[%s1 + $0x2f0] sm:$0xff]
    %v121 = vld [vmem:[%s1 + $0x2f8] sm:$0xff]
    %v122 = vld [vmem:[%s1 + $0x300] sm:$0xff]
    %v123 = vld [vmem:[%s1 + $0x308] sm:$0xff]
    %v124 = vld [vmem:[%s1 + $0x310] sm:$0xff]
    %v125 = vld [vmem:[%s1 + $0x318] sm:$0xff]
    %v126 = vld [vmem:[%s1 + $0x320] sm:$0xff]
    %v127 = vld [vmem:[%s1 + $0x328] sm:$0xff]
    %v128 = vld [vmem:[%s1 + $0x330] sm:$0xff]
    %v129 = vld [vmem:[%s1 + $0x338] sm:$0xff]
    %v130 = vld [vmem:[%s1 + $0x340] sm:$0xff]
    %v131 = vld [vmem:[%s1 + $0x348] sm:$0xff]
    %v132 = vld [vmem:[%s1 + $0x350] sm:$0xff]
    %v133 = vld [vmem:[%s1 + $0x358] sm:$0xff]
    %v134 = vld [vmem:[%s1 + $0x360] sm:$0xff]
    %v135 = vld [vmem:[%s1 + $0x368] sm:$0xff]
    %v136 = vld [vmem:[%s1 + $0x370] sm:$0xff]
    %v137 = vld [vmem:[%s1 + $0x378] sm:$0xff]
    %v138 = vld [vmem:[%s1 + $0x380] sm:$0xff]
    %v139 = vld [vmem:[%s1 + $0x388] sm:$0xff]
    %v140 = vld [vmem:[%s1 + $0x390] sm:$0xff]
    %v141 = vld [vmem:[%s1 + $0x398] sm:$0xff]
    %v142 = vld [vmem:[%s1 + $0x3a0] sm:$0xff]
    %v143 = vld [vmem:[%s1 + $0x3a8] sm:$0xff]
    %v144 = vld [vmem:[%s1 + $0x3b0] sm:$0xff]
    %v145 = vld [vmem:[%s1 + $0x3b8] sm:$0xff]
    %v146 = vld [vmem:[%s1 + $0x3c0] sm:$0xff]
    %v147 = vld [vmem:[%s1 + $0x3c8] sm:$0xff]
    %v148 = vld [vmem:[%s1 + $0x3d0] sm:$0xff]
    %v149 = vld [vmem:[%s1 + $0x3d8] sm:$0xff]
    %v150 = vld [vmem:[%s1 + $0x3e0] sm:$0xff]
    %v151 = vld [vmem:[%s1 + $0x3e8] sm:$0xff]
    %v152 = vld [vmem:[%s1 + $0x3f0] sm:$0xff]
    %v153 = vld [vmem:[%s1 + $0x3f8] sm:$0xff]
    %v154 = vld [vmem:[%s1 + $0x400] sm:$0xff]
    %v155 = vld [vmem:[%s1 + $0x408] sm:$0xff]
    %v156 = vld [vmem:[%s1 + $0x410] sm:$0xff]
    %v157 = vld [vmem:[%s1 + $0x418] sm:$0xff]
    %v158 = vld [vmem:[%s1 + $0x420] sm:$0xff]
    %v159 = vld [vmem:[%s1 + $0x428] sm:$0xff]
    %v160 = vld [vmem:[%s1 + $0x430] sm:$0xff]
    %v161 = vld [vmem:[%s1 + $0x438] sm:$0xff]
    %v162 = vld [vmem:[%s1 + $0x440] sm:$0xff]
    %v163 = vld [vmem:[%s1 + $0x448] sm:$0xff]
    %v164 = vld [vmem:[%s1 + $0x450] sm:$0xff]
    %v165 = vld [vmem:[%s1 + $0x458] sm:$0xff]
    %v166 = vld [vmem:[%s1 + $0x460] sm:$0xff]
    %v167 = vld [vmem:[%s1 + $0x468] sm:$0xff]
    %v168 = vld [vmem:[%s1 + $0x470] sm:$0xff]
    %v169 = vld [vmem:[%s1 + $0x478] sm:$0xff]
    %v170 = vld [vmem:[%s1 + $0x480] sm:$0xff]
    %v171 = vld [vmem:[%s1 + $0x488] sm:$0xff]
    %v172 = vld [vmem:[%s1 + $0x490] sm:$0xff]
    %v173 = vld [vmem:[%s1 + $0x498] sm:$0xff]
    %v174 = vld [vmem:[%s1 + $0x4a0] sm:$0xff]
    %v175 = vld [vmem:[%s1 + $0x4a8] sm:$0xff]
    %v176 = vld [vmem:[%s1 + $0x4b0] sm:$0xff]
    %v177 = vld [vmem:[%s1 + $0x4b8] sm:$0xff]
    %v178 = vld [vmem:[%s1 + $0x4c0] sm:$0xff]
    %v179 = vld [vmem:[%s1 + $0x4c8] sm:$0xff]
    %v180 = vld [vmem:[%s1 + $0x4d0] sm:$0xff]
    %v181 = vld [vmem:[%s1 + $0x4d8] sm:$0xff]
    %v182 = vld [vmem:[%s1 + $0x4e0] sm:$0xff]
    %v183 = vld [vmem:[%s1 + $0x4e8] sm:$0xff]
    %v184 = vld [vmem:[%s1 + $0x4f0] sm:$0xff]
    %v185 = vld [vmem:[%s1 + $0x4f8] sm:$0xff]
    %v186 = vld [vmem:[%s1 + $0x500] sm:$0xff]
    %v187 = vld [vmem:[%s1 + $0x508] sm:$0xff]
    %v188 = vld [vmem:[%s1 + $0x510] sm:$0xff]
    %v189 = vld [vmem:[%s1 + $0x518] sm:$0xff]
    %v190 = vld [vmem:[%s1 + $0x520] sm:$0xff]
    %v191 = vld [vmem:[%s1 + $0x528] sm:$0xff]
    %v192 = vld [vmem:[%s1 + $0x530] sm:$0xff]
    %v193 = vld [vmem:[%s1 + $0x538] sm:$0xff]
    %v194 = vld [vmem:[%s1 + $0x540] sm:$0xff]
    %v195 = vld [vmem:[%s1 + $0x548] sm:$0xff]
    %v196 = vld [vmem:[%s1 + $0x550] sm:$0xff]
    %v197 = vld [vmem:[%s1 + $0x558] sm:$0xff]
    %v198 = vld [vmem:[%s1 + $0x560] sm:$0xff]
    %v199 = vld [vmem:[%s1 + $0x568] sm:$0xff]
    %v200 = vld [vmem:[%s1 + $0x570] sm:$0xff]
    %v201 = vld [vmem:[%s1 + $0x578] sm:$0xff]
    %v202 = vld [vmem:[%s1 + $0x580] sm:$0xff]
    %v203 = vld [vmem:[%s1 + $0x588] sm:$0xff]
    %v204 = vld [vmem:[%s1 + $0x590] sm:$0xff]
    %v205 = vld [vmem:[%s1 + $0x598] sm:$0xff]
    %v206 = vld [vmem:[%s1 + $0x5a0] sm:$0xff]
    %v207 = vld [vmem:[%s1 + $0x5a8] sm:$0xff]
    %v208 = vld [vmem:[%s1 + $0x5b0] sm:$0xff]
    %v209 = vld [vmem:[%s1 + $0x5b8] sm:$0xff]
    %v210 = vld [vmem:[%s1 + $0x5c0] sm:$0xff]
    %v211 = vld [vmem:[%s1 + $0x5c8] sm:$0xff]
    %v212 = vld [vmem:[%s1 + $0x5d0] sm:$0xff]
    %v213 = vld [vmem:[%s1 + $0x5d8] sm:$0xff]
    %v214 = vld [vmem:[%s1 + $0x5e0] sm:$0xff]
    %v215 = vld [vmem:[%s1 + $0x5e8] sm:$0xff]
    %v216 = vld [vmem:[%s1 + $0x5f0] sm:$0xff]
    %v217 = vld [vmem:[%s1 + $0x5f8] sm:$0xff]
    %v218 = vld [vmem:[%s1 + $0x600] sm:$0xff]
    %v219 = vld [vmem:[%s1 + $0x608] sm:$0xff]
    %v220 = vld [vmem:[%s1 + $0x610] sm:$0xff]
    %v221 = vld [vmem:[%s1 + $0x618] sm:$0xff]
    %v222 = vld [vmem:[%s1 + $0x620] sm:$0xff]
    %v223 = vld [vmem:[%s1 + $0x628] sm:$0xff]
    %v224 = vld [vmem:[%s1 + $0x630] sm:$0xff]
    %v225 = vld [vmem:[%s1 + $0x638] sm:$0xff]
    %v226 = vld [vmem:[%s1 + $0x640] sm:$0xff]
    %v227 = vld [vmem:[%s1 + $0x648] sm:$0xff]
    %v228 = vld [vmem:[%s1 + $0x650] sm:$0xff]
    %v229 = vld [vmem:[%s1 + $0x658] sm:$0xff]
    %v230 = vld [vmem:[%s1 + $0x660] sm:$0xff]
    %v231 = vld [vmem:[%s1 + $0x668] sm:$0xff]
    %v232 = vld [vmem:[%s1 + $0x670] sm:$0xff]
    %v233 = vld [vmem:[%s1 + $0x678] sm:$0xff]
    %v234 = vld [vmem:[%s1 + $0x680] sm:$0xff]
    %v235 = vld [vmem:[%s1 + $0x688] sm:$0xff]
    %v236 = vld [vmem:[%s1 + $0x690] sm:$0xff]
    %v237 = vld [vmem:[%s1 + $0x698] sm:$0xff]
    %v238 = vld [vmem:[%s1 + $0x6a0] sm:$0xff]
    %v239 = vld [vmem:[%s1 + $0x6a8] sm:$0xff]
    %v240 = vld [vmem:[%s1 + $0x6b0] sm:$0xff]
    %v241 = vld [vmem:[%s1 + $0x6b8] sm:$0xff]
    %v242 = vld [vmem:[%s1 + $0x6c0] sm:$0xff]
    %v243 = vld [vmem:[%s1 + $0x6c8] sm:$0xff]
    %v244 = vld [vmem:[%s1 + $0x6d0] sm:$0xff]
    %v245 = vld [vmem:[%s1 + $0x6d8] sm:$0xff]
    %v246 = vld [vmem:[%s1 + $0x6e0] sm:$0xff]
    %v247 = vld [vmem:[%s1 + $0x6e8] sm:$0xff]
    %v248 = vld [vmem:[%s1 + $0x6f0] sm:$0xff]
    %v249 = vld [vmem:[%s1 + $0x6f8] sm:$0xff]
    %v250 = vld [vmem:[%s1 + $0x700] sm:$0xff]
    %v251 = vld [vmem:[%s1 + $0x708] sm:$0xff]
    %v252 = vld [vmem:[%s1 + $0x710] sm:$0xff]
    %v253 = vld [vmem:[%s1 + $0x718] sm:$0xff]
    %v254 = vld [vmem:[%s1 + $0x720] sm:$0xff]
    %v255 = vld [vmem:[%s1 + $0x728] sm:$0xff]
    %v256 = vld [vmem:[%s1 + $0x730] sm:$0xff]
    %v257 = vld [vmem:[%s1 + $0x738] sm:$0xff]
    %v258 = vld [vmem:[%s1 + $0x740] sm:$0xff]
    %v259 = vld [vmem:[%s1 + $0x748] sm:$0xff]
    %v260 = vld [vmem:[%s1 + $0x750] sm:$0xff]
    %v261 = vld [vmem:[%s1 + $0x758] sm:$0xff]
    %v262 = vld [vmem:[%s1 + $0x760] sm:$0xff]
    %v263 = vld [vmem:[%s1 + $0x768] sm:$0xff]
    %v264 = vld [vmem:[%s1 + $0x770] sm:$0xff]
    %v265 = vld [vmem:[%s1 + $0x778] sm:$0xff]
    %v266 = vld [vmem:[%s1 + $0x780] sm:$0xff]
    %v267 = vld [vmem:[%s1 + $0x788] sm:$0xff]
    %v268 = vld [vmem:[%s1 + $0x790] sm:$0xff]
    %v269 = vld [vmem:[%s1 + $0x798] sm:$0xff]
    %v270 = vld [vmem:[%s1 + $0x7a0] sm:$0xff]
    %v271 = vld [vmem:[%s1 + $0x7a8] sm:$0xff]
    %v272 = vld [vmem:[%s1 + $0x7b0] sm:$0xff]
    %v273 = vld [vmem:[%s1 + $0x7b8] sm:$0xff]
    %v274 = vld [vmem:[%s1 + $0x7c0] sm:$0xff]
    %v275 = vld [vmem:[%s1 + $0x7c8] sm:$0xff]
    %v276 = vld [vmem:[%s1 + $0x7d0] sm:$0xff]
    %v277 = vld [vmem:[%s1 + $0x7d8] sm:$0xff]
    %v278 = vld [vmem:[%s1 + $0x7e0] sm:$0xff]
    %v279 = vld [vmem:[%s1 + $0x7e8] sm:$0xff]
    %v280 = vld [vmem:[%s1 + $0x7f0] sm:$0xff]
    %v281 = vld [vmem:[%s1 + $0x7f8] sm:$0xff]
    %v282 = vld [vmem:[%s1 + $0x800] sm:$0xff]
    %v283 = vld [vmem:[%s1 + $0x808] sm:$0xff]
    %v284 = vld [vmem:[%s1 + $0x810] sm:$0xff]
    %v285 = vld [vmem:[%s1 + $0x818] sm:$0xff]
    %v286 = vld [vmem:[%s1 + $0x820] sm:$0xff]
    %v287 = vld [vmem:[%s1 + $0x828] sm:$0xff]
    %v288 = vld [vmem:[%s1 + $0x830] sm:$0xff]
    %v289 = vld [vmem:[%s1 + $0x838] sm:$0xff]
    %v290 = vld [vmem:[%s1 + $0x840] sm:$0xff]
    %v291 = vld [vmem:[%s1 + $0x848] sm:$0xff]
    %v292 = vld [vmem:[%s1 + $0x850] sm:$0xff]
    %v293 = vld [vmem:[%s1 + $0x858] sm:$0xff]
    %v294 = vld [vmem:[%s1 + $0x860] sm:$0xff]
    %v295 = vld [vmem:[%s1 + $0x868] sm:$0xff]
    %v296 = vld [vmem:[%s1 + $0x870] sm:$0xff]
    %v297 = vld [vmem:[%s1 + $0x878] sm:$0xff]
    %v298 = vld [vmem:[%s1 + $0x880] sm:$0xff]
    %v299 = vld [vmem:[%s1 + $0x888] sm:$0xff]
    %v300 = vld [vmem:[%s1 + $0x890] sm:$0xff]
    %v301 = vld [vmem:[%s1 + $0x898] sm:$0xff]
    %v302 = vld [vmem:[%s1 + $0x8a0] sm:$0xff]
    %v303 = vld [vmem:[%s1 + $0x8a8] sm:$0xff]
    %v304 = vld [vmem:[%s1 + $0x8b0] sm:$0xff]
    %v305 = vld [vmem:[%s1 + $0x8b8] sm:$0xff]
    %v306 = vld [vmem:[%s1 + $0x8c0] sm:$0xff]
    %v307 = vld [vmem:[%s1 + $0x8c8] sm:$0xff]
    %v308 = vld [vmem:[%s1 + $0x8d0] sm:$0xff]
    %v309 = vld [vmem:[%s1 + $0x8d8] sm:$0xff]
    %v310 = vld [vmem:[%s1 + $0x8e0] sm:$0xff]
    %v311 = vld [vmem:[%s1 + $0x8e8] sm:$0xff]
    %v312 = vld [vmem:[%s1 + $0x8f0] sm:$0xff]
    %v313 = vld [vmem:[%s1 + $0x8f8] sm:$0xff]
    %v314 = vld [vmem:[%s1 + $0x900] sm:$0xff]
    %v315 = vld [vmem:[%s1 + $0x908] sm:$0xff]
    %v316 = vld [vmem:[%s1 + $0x910] sm:$0xff]
    %v317 = vld [vmem:[%s1 + $0x918] sm:$0xff]
    %v318 = vld [vmem:[%s1 + $0x920] sm:$0xff]
    %v319 = vld [vmem:[%s1 + $0x928] sm:$0xff]
    %v320 = vld [vmem:[%s1 + $0x930] sm:$0xff]
    %v321 = vld [vmem:[%s1 + $0x938] sm:$0xff]
    %v322 = vld [vmem:[%s1 + $0x940] sm:$0xff]
    %v323 = vld [vmem:[%s1 + $0x948] sm:$0xff]
    %v324 = vld [vmem:[%s1 + $0x950] sm:$0xff]
    %v325 = vld [vmem:[%s1 + $0x958] sm:$0xff]
    %v326 = vld [vmem:[%s1 + $0x960] sm:$0xff]
    %v327 = vld [vmem:[%s1 + $0x968] sm:$0xff]
    %v328 = vld [vmem:[%s1 + $0x970] sm:$0xff]
    %v329 = vld [vmem:[%s1 + $0x978] sm:$0xff]
    %v330 = vld [vmem:[%s1 + $0x980] sm:$0xff]
    %v331 = vld [vmem:[%s1 + $0x988] sm:$0xff]
    %v332 = vld [vmem:[%s1 + $0x990] sm:$0xff]
    %v333 = vld [vmem:[%s1 + $0x998] sm:$0xff]
    %v334 = vld [vmem:[%s1 + $0x9a0] sm:$0xff]
    %v335 = vld [vmem:[%s1 + $0x9a8] sm:$0xff]
    %v336 = vld [vmem:[%s1 + $0x9b0] sm:$0xff]
    %v337 = vld [vmem:[%s1 + $0x9b8] sm:$0xff]
    %v338 = vld [vmem:[%s1 + $0x9c0] sm:$0xff]
    %v339 = vld [vmem:[%s1 + $0x9c8] sm:$0xff]
    %v340 = vld [vmem:[%s1 + $0x9d0] sm:$0xff]
    %v341 = vld [vmem:[%s1 + $0x9d8] sm:$0xff]
    %v342 = vld [vmem:[%s1 + $0x9e0] sm:$0xff]
    %v343 = vld [vmem:[%s1 + $0x9e8] sm:$0xff]
    %v344 = vld [vmem:[%s1 + $0x9f0] sm:$0xff]
    %v345 = vld [vmem:[%s1 + $0x9f8] sm:$0xff]
    %v346 = vld [vmem:[%s1 + $0xa00] sm:$0xff]
    %v347 = vld [vmem:[%s1 + $0xa08] sm:$0xff]
    %v348 = vld [vmem:[%s1 + $0xa10] sm:$0xff]
    %v349 = vld [vmem:[%s1 + $0xa18] sm:$0xff]
    %v350 = vld [vmem:[%s1 + $0xa20] sm:$0xff]
    %v351 = vld [vmem:[%s1 + $0xa28] sm:$0xff]
    %v352 = vld [vmem:[%s1 + $0xa30] sm:$0xff]
    %v353 = vld [vmem:[%s1 + $0xa38] sm:$0xff]
    %v354 = vld [vmem:[%s1 + $0xa40] sm:$0xff]
    %v355 = vld [vmem:[%s1 + $0xa48] sm:$0xff]
    %v356 = vld [vmem:[%s1 + $0xa50] sm:$0xff]
    %v357 = vld [vmem:[%s1 + $0xa58] sm:$0xff]
    %v358 = vld [vmem:[%s1 + $0xa60] sm:$0xff]
    %v359 = vld [vmem:[%s1 + $0xa68] sm:$0xff]
    %v360 = vld [vmem:[%s1 + $0xa70] sm:$0xff]
    %v361 = vld [vmem:[%s1 + $0xa78] sm:$0xff]
    %v362 = vld [vmem:[%s1 + $0xa80] sm:$0xff]
    %v363 = vld [vmem:[%s1 + $0xa88] sm:$0xff]
    %v364 = vld [vmem:[%s1 + $0xa90] sm:$0xff]
    %v365 = vld [vmem:[%s1 + $0xa98] sm:$0xff]
    %v366 = vld [vmem:[%s1 + $0xaa0] sm:$0xff]
    %v367 = vld [vmem:[%s1 + $0xaa8] sm:$0xff]
    %v368 = vld [vmem:[%s1 + $0xab0] sm:$0xff]
    %v369 = vld [vmem:[%s1 + $0xab8] sm:$0xff]
    %v370 = vld [vmem:[%s1 + $0xac0] sm:$0xff]
    %v371 = vld [vmem:[%s1 + $0xac8] sm:$0xff]
    %v372 = vld [vmem:[%s1 + $0xad0] sm:$0xff]
    %v373 = vld [vmem:[%s1 + $0xad8] sm:$0xff]
    %v374 = vld [vmem:[%s1 + $0xae0] sm:$0xff]
    %v375 = vld [vmem:[%s1 + $0xae8] sm:$0xff]
    %v376 = vld [vmem:[%s1 + $0xaf0] sm:$0xff]
    %v377 = vld [vmem:[%s1 + $0xaf8] sm:$0xff]
    %v378 = vld [vmem:[%s1 + $0xb00] sm:$0xff]
    %v379 = vld [vmem:[%s1 + $0xb08] sm:$0xff]
    %v380 = vld [vmem:[%s1 + $0xb10] sm:$0xff]
    %v381 = vld [vmem:[%s1 + $0xb18] sm:$0xff]
    %v382 = vld [vmem:[%s1 + $0xb20] sm:$0xff]
    %v383 = vld [vmem:[%s1 + $0xb28] sm:$0xff]
    %v384 = vld [vmem:[%s1 + $0xb30] sm:$0xff]
    %v385 = vld [vmem:[%s1 + $0xb38] sm:$0xff]
    %v386 = vld [vmem:[%s1 + $0xb40] sm:$0xff]
    %v387 = vld [vmem:[%s1 + $0xb48] sm:$0xff]
    %v388 = vld [vmem:[%s1 + $0xb50] sm:$0xff]
    %v389 = vld [vmem:[%s1 + $0xb58] sm:$0xff]
    %v390 = vld [vmem:[%s1 + $0xb60] sm:$0xff]
    %v391 = vld [vmem:[%s1 + $0xb68] sm:$0xff]
    %v392 = vld [vmem:[%s1 + $0xb70] sm:$0xff]
    %v393 = vld [vmem:[%s1 + $0xb78] sm:$0xff]
    %v394 = vld [vmem:[%s1 + $0xb80] sm:$0xff]
    %v395 = vld [vmem:[%s1 + $0xb88] sm:$0xff]
    %v396 = vld [vmem:[%s1 + $0xb90] sm:$0xff]
    %v397 = vld [vmem:[%s1 + $0xb98] sm:$0xff]
    %v398 = vld [vmem:[%s1 + $0xba0] sm:$0xff]
    %v399 = vld [vmem:[%s1 + $0xba8] sm:$0xff]
    %v400 = vld [vmem:[%s1 + $0xbb0] sm:$0xff]
    %v401 = vld [vmem:[%s1 + $0xbb8] sm:$0xff]
    %v402 = vld [vmem:[%s1 + $0xbc0] sm:$0xff]
    %v403 = vld [vmem:[%s1 + $0xbc8] sm:$0xff]
    %v404 = vld [vmem:[%s1 + $0xbd0] sm:$0xff]
    %v405 = vld [vmem:[%s1 + $0xbd8] sm:$0xff]
    %v406 = vld [vmem:[%s1 + $0xbe0] sm:$0xff]
    %v407 = vld [vmem:[%s1 + $0xbe8] sm:$0xff]
    %v408 = vld [vmem:[%s1 + $0xbf0] sm:$0xff]
    %v409 = vld [vmem:[%s1 + $0xbf8] sm:$0xff]
    %v410 = vld [vmem:[%s1 + $0xc00] sm:$0xff]
    %v411 = vld [vmem:[%s1 + $0xc08] sm:$0xff]
    %v412 = vld [vmem:[%s1 + $0xc10] sm:$0xff]
    %v413 = vld [vmem:[%s1 + $0xc18] sm:$0xff]
    %v414 = vld [vmem:[%s1 + $0xc20] sm:$0xff]
    %v415 = vld [vmem:[%s1 + $0xc28] sm:$0xff]
    %v416 = vld [vmem:[%s1 + $0xc30] sm:$0xff]
    %v417 = vld [vmem:[%s1 + $0xc38] sm:$0xff]
    %v418 = vld [vmem:[%s1 + $0xc40] sm:$0xff]
    %v419 = vld [vmem:[%s1 + $0xc48] sm:$0xff]
    %v420 = vld [vmem:[%s1 + $0xc50] sm:$0xff]
    %v421 = vld [vmem:[%s1 + $0xc58] sm:$0xff]
    %v422 = vld [vmem:[%s1 + $0xc60] sm:$0xff]
    %v423 = vld [vmem:[%s1 + $0xc68] sm:$0xff]
    %v424 = vld [vmem:[%s1 + $0xc70] sm:$0xff]
    %v425 = vld [vmem:[%s1 + $0xc78] sm:$0xff]
    %v426 = vld [vmem:[%s1 + $0xc80] sm:$0xff]
    %v427 = vld [vmem:[%s1 + $0xc88] sm:$0xff]
    %v428 = vld [vmem:[%s1 + $0xc90] sm:$0xff]
    %v429 = vld [vmem:[%s1 + $0xc98] sm:$0xff]
    %v430 = vld [vmem:[%s1 + $0xca0] sm:$0xff]
    %v431 = vld [vmem:[%s1 + $0xca8] sm:$0xff]
    %v432 = vld [vmem:[%s1 + $0xcb0] sm:$0xff]
    %v433 = vld [vmem:[%s1 + $0xcb8] sm:$0xff]
    %v434 = vld [vmem:[%s1 + $0xcc0] sm:$0xff]
    %v435 = vld [vmem:[%s1 + $0xcc8] sm:$0xff]
    %v436 = vld [vmem:[%s1 + $0xcd0] sm:$0xff]
    %v437 = vld [vmem:[%s1 + $0xcd8] sm:$0xff]
    %v438 = vld [vmem:[%s1 + $0xce0] sm:$0xff]
    %v439 = vld [vmem:[%s1 + $0xce8] sm:$0xff]
    %v440 = vld [vmem:[%s1 + $0xcf0] sm:$0xff]
    %v441 = vld [vmem:[%s1 + $0xcf8] sm:$0xff]
    %v442 = vld [vmem:[%s1 + $0xd00] sm:$0xff]
    %v443 = vld [vmem:[%s1 + $0xd08] sm:$0xff]
    %v444 = vld [vmem:[%s1 + $0xd10] sm:$0xff]
    %v445 = vld [vmem:[%s1 + $0xd18] sm:$0xff]
    %v446 = vld [vmem:[%s1 + $0xd20] sm:$0xff]
    %v447 = vld [vmem:[%s1 + $0xd28] sm:$0xff]
    %v448 = vld [vmem:[%s1 + $0xd30] sm:$0xff]
    %v449 = vld [vmem:[%s1 + $0xd38] sm:$0xff]
    %v450 = vld [vmem:[%s1 + $0xd40] sm:$0xff]
    %v451 = vld [vmem:[%s1 + $0xd48] sm:$0xff]
    %v452 = vld [vmem:[%s1 + $0xd50] sm:$0xff]
    %v453 = vld [vmem:[%s1 + $0xd58] sm:$0xff]
    %v454 = vld [vmem:[%s1 + $0xd60] sm:$0xff]
    %v455 = vld [vmem:[%s1 + $0xd68] sm:$0xff]
    %v456 = vld [vmem:[%s1 + $0xd70] sm:$0xff]
    %v457 = vld [vmem:[%s1 + $0xd78] sm:$0xff]
    %v458 = vld [vmem:[%s1 + $0xd80] sm:$0xff]
    %v459 = vld [vmem:[%s1 + $0xd88] sm:$0xff]
    %v460 = vld [vmem:[%s1 + $0xd90] sm:$0xff]
    %v461 = vld [vmem:[%s1 + $0xd98] sm:$0xff]
    %v462 = vld [vmem:[%s1 + $0xda0] sm:$0xff]
    %v463 = vld [vmem:[%s1 + $0xda8] sm:$0xff]
    %v464 = vld [vmem:[%s1 + $0xdb0] sm:$0xff]
    %v465 = vld [vmem:[%s1 + $0xdb8] sm:$0xff]
    %v466 = vld [vmem:[%s1 + $0xdc0] sm:$0xff]
    %v467 = vld [vmem:[%s1 + $0xdc8] sm:$0xff]
    %v468 = vld [vmem:[%s1 + $0xdd0] sm:$0xff]
    %v469 = vld [vmem:[%s1 + $0xdd8] sm:$0xff]
    %v470 = vld [vmem:[%s1 + $0xde0] sm:$0xff]
    %v471 = vld [vmem:[%s1 + $0xde8] sm:$0xff]
    %v472 = vld [vmem:[%s1 + $0xdf0] sm:$0xff]
    %v473 = vld [vmem:[%s1 + $0xdf8] sm:$0xff]
    %v474 = vld [vmem:[%s1 + $0xe00] sm:$0xff]
    %v475 = vld [vmem:[%s1 + $0xe08] sm:$0xff]
    %v476 = vld [vmem:[%s1 + $0xe10] sm:$0xff]
    %v477 = vld [vmem:[%s1 + $0xe18] sm:$0xff]
    %v478 = vld [vmem:[%s1 + $0xe20] sm:$0xff]
    %v479 = vld [vmem:[%s1 + $0xe28] sm:$0xff]
    %v480 = vld [vmem:[%s1 + $0xe30] sm:$0xff]
    %v481 = vld [vmem:[%s1 + $0xe38] sm:$0xff]
    %v482 = vld [vmem:[%s1 + $0xe40] sm:$0xff]
    %v483 = vld [vmem:[%s1 + $0xe48] sm:$0xff]
    %v484 = vld [vmem:[%s1 + $0xe50] sm:$0xff]
    %v485 = vld [vmem:[%s1 + $0xe58] sm:$0xff]
    %v486 = vld [vmem:[%s1 + $0xe60] sm:$0xff]
    %v487 = vld [vmem:[%s1 + $0xe68] sm:$0xff]
    %v488 = vld [vmem:[%s1 + $0xe70] sm:$0xff]
    %v489 = vld [vmem:[%s1 + $0xe78] sm:$0xff]
    %v490 = vld [vmem:[%s1 + $0xe80] sm:$0xff]
    %v491 = vld [vmem:[%s1 + $0xe88] sm:$0xff]
    %v492 = vld [vmem:[%s1 + $0xe90] sm:$0xff]
    %v493 = vld [vmem:[%s1 + $0xe98] sm:$0xff]
    %v494 = vld [vmem:[%s1 + $0xea0] sm:$0xff]
    %v495 = vld [vmem:[%s1 + $0xea8] sm:$0xff]
    %v496 = vld [vmem:[%s1 + $0xeb0] sm:$0xff]
    %v497 = vld [vmem:[%s1 + $0xeb8] sm:$0xff]
    %v498 = vld [vmem:[%s1 + $0xec0] sm:$0xff]
    %v499 = vld [vmem:[%s1 + $0xec8] sm:$0xff]
    %v500 = vld [vmem:[%s1 + $0xed0] sm:$0xff]
    %v501 = vld [vmem:[%s1 + $0xed8] sm:$0xff]
    %v502 = vld [vmem:[%s1 + $0xee0] sm:$0xff]
    %v503 = vld [vmem:[%s1 + $0xee8] sm:$0xff]
    %v504 = vld [vmem:[%s1 + $0xef0] sm:$0xff]
    %v505 = vld [vmem:[%s1 + $0xef8] sm:$0xff]
    %v506 = vld [vmem:[%s1 + $0xf00] sm:$0xff]
    %v507 = vld [vmem:[%s1 + $0xf08] sm:$0xff]
    %v508 = vld [vmem:[%s1 + $0xf10] sm:$0xff]
    %v509 = vld [vmem:[%s1 + $0xf18] sm:$0xff]
    %v510 = vld [vmem:[%s1 + $0xf20] sm:$0xff]
    %v511 = vld [vmem:[%s1 + $0xf28] sm:$0xff]
    %v512 = vld [vmem:[%s1 + $0xf30] sm:$0xff]
    %v513 = vld [vmem:[%s1 + $0xf38] sm:$0xff]
    %v514 = vld [vmem:[%s1 + $0xf40] sm:$0xff]
    %v515 = vld [vmem:[%s1 + $0xf48] sm:$0xff]
    %v516 = vld [vmem:[%s1 + $0xf50] sm:$0xff]
    %v517 = vld [vmem:[%s1 + $0xf58] sm:$0xff]
    %v518 = vld [vmem:[%s1 + $0xf60] sm:$0xff]
    %v519 = vld [vmem:[%s1 + $0xf68] sm:$0xff]
    %v520 = vld [vmem:[%s1 + $0xf70] sm:$0xff]
    %v521 = vld [vmem:[%s1 + $0xf78] sm:$0xff]
    %v522 = vld [vmem:[%s1 + $0xf80] sm:$0xff]
    %v523 = vld [vmem:[%s1 + $0xf88] sm:$0xff]
    %v524 = vld [vmem:[%s1 + $0xf90] sm:$0xff]
    %v525 = vld [vmem:[%s1 + $0xf98] sm:$0xff]
    %v526 = vld [vmem:[%s1 + $0xfa0] sm:$0xff]
    %v527 = vld [vmem:[%s1 + $0xfa8] sm:$0xff]
    %v528 = vld [vmem:[%s1 + $0xfb0] sm:$0xff]
    %v529 = vld [vmem:[%s1 + $0xfb8] sm:$0xff]
    %v530 = vld [vmem:[%s1 + $0xfc0] sm:$0xff]
    %v531 = vld [vmem:[%s1 + $0xfc8] sm:$0xff]
    %v532 = vld [vmem:[%s1 + $0xfd0] sm:$0xff]
    %v533 = vld [vmem:[%s1 + $0xfd8] sm:$0xff]
    %v534 = vld [vmem:[%s1 + $0xfe0] sm:$0xff]
    %v535 = vld [vmem:[%s1 + $0xfe8] sm:$0xff]
    %v536 = vld [vmem:[%s1 + $0xff0] sm:$0xff]
    %v537 = vld [vmem:[%s1 + $0xff8] sm:$0xff]
    %v538 = vld [vmem:[%s1 + $0x1000] sm:$0xff]
    %v539 = vld [vmem:[%s1 + $0x1008] sm:$0xff]
    %v540 = vld [vmem:[%s1 + $0x1010] sm:$0xff]
    %v541 = vld [vmem:[%s1 + $0x1018] sm:$0xff]
    %v542 = vld [vmem:[%s1 + $0x1020] sm:$0xff]
    %v543 = vld [vmem:[%s1 + $0x1028] sm:$0xff]
    %v544 = vld [vmem:[%s1 + $0x1030] sm:$0xff]
    %v545 = vld [vmem:[%s1 + $0x1038] sm:$0xff]
    %v546 = vld [vmem:[%s1 + $0x1040] sm:$0xff]
    %v547 = vld [vmem:[%s1 + $0x1048] sm:$0xff]
    %v548 = vld [vmem:[%s1 + $0x1050] sm:$0xff]
    %v549 = vld [vmem:[%s1 + $0x1058] sm:$0xff]
    %v550 = vld [vmem:[%s1 + $0x1060] sm:$0xff]
    %v551 = vld [vmem:[%s1 + $0x1068] sm:$0xff]
    %v552 = vld [vmem:[%s1 + $0x1070] sm:$0xff]
    %v553 = vld [vmem:[%s1 + $0x1078] sm:$0xff]
    %v554 = vld [vmem:[%s1 + $0x1080] sm:$0xff]
    %v555 = vld [vmem:[%s1 + $0x1088] sm:$0xff]
    %v556 = vld [vmem:[%s1 + $0x1090] sm:$0xff]
    %v557 = vld [vmem:[%s1 + $0x1098] sm:$0xff]
    %v558 = vld [vmem:[%s1 + $0x10a0] sm:$0xff]
    %v559 = vld [vmem:[%s1 + $0x10a8] sm:$0xff]
    %v560 = vld [vmem:[%s1 + $0x10b0] sm:$0xff]
    %v561 = vld [vmem:[%s1 + $0x10b8] sm:$0xff]
    %v562 = vld [vmem:[%s1 + $0x10c0] sm:$0xff]
    %v563 = vld [vmem:[%s1 + $0x10c8] sm:$0xff]
    %v564 = vld [vmem:[%s1 + $0x10d0] sm:$0xff]
    %v565 = vld [vmem:[%s1 + $0x10d8] sm:$0xff]
    %v566 = vld [vmem:[%s1 + $0x10e0] sm:$0xff]
    %v567 = vld [vmem:[%s1 + $0x10e8] sm:$0xff]
    %v568 = vld [vmem:[%s1 + $0x10f0] sm:$0xff]
    %v569 = vld [vmem:[%s1 + $0x10f8] sm:$0xff]
    %v570 = vld [vmem:[%s1 + $0x1100] sm:$0xff]
    %v571 = vld [vmem:[%s1 + $0x1108] sm:$0xff]
    %v572 = vld [vmem:[%s1 + $0x1110] sm:$0xff]
    %v573 = vld [vmem:[%s1 + $0x1118] sm:$0xff]
    %v574 = vld [vmem:[%s1 + $0x1120] sm:$0xff]
    %v575 = vld [vmem:[%s1 + $0x1128] sm:$0xff]
    %v576 = vld [vmem:[%s1 + $0x1130] sm:$0xff]
    %v577 = vld [vmem:[%s1 + $0x1138] sm:$0xff]
    %v578 = vld [vmem:[%s1 + $0x1140] sm:$0xff]
    %v579 = vld [vmem:[%s1 + $0x1148] sm:$0xff]
    %v580 = vld [vmem:[%s1 + $0x1150] sm:$0xff]
    %v581 = vld [vmem:[%s1 + $0x1158] sm:$0xff]
    %v582 = vld [vmem:[%s1 + $0x1160] sm:$0xff]
    %v583 = vld [vmem:[%s1 + $0x1168] sm:$0xff]
    %v584 = vld [vmem:[%s1 + $0x1170] sm:$0xff]
    %v585 = vld [vmem:[%s1 + $0x1178] sm:$0xff]
    %v586 = vld [vmem:[%s1 + $0x1180] sm:$0xff]
    %v587 = vld [vmem:[%s1 + $0x1188] sm:$0xff]
    %v588 = vld [vmem:[%s1 + $0x1190] sm:$0xff]
    %v589 = vld [vmem:[%s1 + $0x1198] sm:$0xff]
    %v590 = vld [vmem:[%s1 + $0x11a0] sm:$0xff]
    %v591 = vld [vmem:[%s1 + $0x11a8] sm:$0xff]
    %v592 = vld [vmem:[%s1 + $0x11b0] sm:$0xff]
    %v593 = vld [vmem:[%s1 + $0x11b8] sm:$0xff]
    %v594 = vld [vmem:[%s1 + $0x11c0] sm:$0xff]
    %v595 = vld [vmem:[%s1 + $0x11c8] sm:$0xff]
    %v596 = vld [vmem:[%s1 + $0x11d0] sm:$0xff]
    %v597 = vld [vmem:[%s1 + $0x11d8] sm:$0xff]
    %v598 = vld [vmem:[%s1 + $0x11e0] sm:$0xff]
    %v599 = vld [vmem:[%s1 + $0x11e8] sm:$0xff]
    %v600 = vld [vmem:[%s1 + $0x11f0] sm:$0xff]
    %v601 = vld [vmem:[%s1 + $0x11f8] sm:$0xff]
    %v602 = vld [vmem:[%s1 + $0x1200] sm:$0xff]
    %v603 = vld [vmem:[%s1 + $0x1208] sm:$0xff]
    %v604 = vld [vmem:[%s1 + $0x1210] sm:$0xff]
    %v605 = vld [vmem:[%s1 + $0x1218] sm:$0xff]
    %v606 = vld [vmem:[%s1 + $0x1220] sm:$0xff]
    %v607 = vld [vmem:[%s1 + $0x1228] sm:$0xff]
    %v608 = vld [vmem:[%s1 + $0x1230] sm:$0xff]
    %v609 = vld [vmem:[%s1 + $0x1238] sm:$0xff]
    %v610 = vld [vmem:[%s1 + $0x1240] sm:$0xff]
    %v611 = vld [vmem:[%s1 + $0x1248] sm:$0xff]
    %v612 = vld [vmem:[%s1 + $0x1250] sm:$0xff]
    %v613 = vld [vmem:[%s1 + $0x1258] sm:$0xff]
    %v614 = vld [vmem:[%s1 + $0x1260] sm:$0xff]
    %v615 = vld [vmem:[%s1 + $0x1268] sm:$0xff]
    %v616 = vld [vmem:[%s1 + $0x1270] sm:$0xff]
    %v617 = vld [vmem:[%s1 + $0x1278] sm:$0xff]
    %v618 = vld [vmem:[%s1 + $0x1280] sm:$0xff]
    %v619 = vld [vmem:[%s1 + $0x1288] sm:$0xff]
    %v620 = vld [vmem:[%s1 + $0x1290] sm:$0xff]
    %v621 = vld [vmem:[%s1 + $0x1298] sm:$0xff]
    %v622 = vld [vmem:[%s1 + $0x12a0] sm:$0xff]
    %v623 = vld [vmem:[%s1 + $0x12a8] sm:$0xff]
    %v624 = vld [vmem:[%s1 + $0x12b0] sm:$0xff]
    %v625 = vld [vmem:[%s1 + $0x12b8] sm:$0xff]
    %v626 = vld [vmem:[%s1 + $0x12c0] sm:$0xff]
    %v627 = vld [vmem:[%s1 + $0x12c8] sm:$0xff]
    %v628 = vld [vmem:[%s1 + $0x12d0] sm:$0xff]
    %v629 = vld [vmem:[%s1 + $0x12d8] sm:$0xff]
    %v630 = vld [vmem:[%s1 + $0x12e0] sm:$0xff]
    %v631 = vld [vmem:[%s1 + $0x12e8] sm:$0xff]
    %v632 = vld [vmem:[%s1 + $0x12f0] sm:$0xff]
    %v633 = vld [vmem:[%s1 + $0x12f8] sm:$0xff]
    %v634 = vld [vmem:[%s1 + $0x1300] sm:$0xff]
    %v635 = vld [vmem:[%s1 + $0x1308] sm:$0xff]
    %v636 = vld [vmem:[%s1 + $0x1310] sm:$0xff]
    %v637 = vld [vmem:[%s1 + $0x1318] sm:$0xff]
    %v638 = vld [vmem:[%s1 + $0x1320] sm:$0xff]
    %v639 = vld [vmem:[%s1 + $0x1328] sm:$0xff]
    %v640 = vld [vmem:[%s1 + $0x1330] sm:$0xff]
    %v641 = vld [vmem:[%s1 + $0x1338] sm:$0xff]
    %v642 = vld [vmem:[%s1 + $0x1340] sm:$0xff]
    %v643 = vld [vmem:[%s1 + $0x1348] sm:$0xff]
    %v644 = vld [vmem:[%s1 + $0x1350] sm:$0xff]
    %v645 = vld [vmem:[%s1 + $0x1358] sm:$0xff]
    %v646 = vld [vmem:[%s1 + $0x1360] sm:$0xff]
    %v647 = vld [vmem:[%s1 + $0x1368] sm:$0xff]
    %v648 = vld [vmem:[%s1 + $0x1370] sm:$0xff]
    %v649 = vld [vmem:[%s1 + $0x1378] sm:$0xff]
    %v650 = vld [vmem:[%s1 + $0x1380] sm:$0xff]
    %v651 = vld [vmem:[%s1 + $0x1388] sm:$0xff]
    %v652 = vld [vmem:[%s1 + $0x1390] sm:$0xff]
    %v653 = vld [vmem:[%s1 + $0x1398] sm:$0xff]
    %v654 = vld [vmem:[%s1 + $0x13a0] sm:$0xff]
    %v655 = vld [vmem:[%s1 + $0x13a8] sm:$0xff]
    %v656 = vld [vmem:[%s1 + $0x13b0] sm:$0xff]
    %v657 = vld [vmem:[%s1 + $0x13b8] sm:$0xff]
    %v658 = vld [vmem:[%s1 + $0x13c0] sm:$0xff]
    %v659 = vld [vmem:[%s1 + $0x13c8] sm:$0xff]
    %v660 = vld [vmem:[%s1 + $0x13d0] sm:$0xff]
    %v661 = vld [vmem:[%s1 + $0x13d8] sm:$0xff]
    %v662 = vld [vmem:[%s1 + $0x13e0] sm:$0xff]
    %v663 = vld [vmem:[%s1 + $0x13e8] sm:$0xff]
    %v664 = vld [vmem:[%s1 + $0x13f0] sm:$0xff]
    %v665 = vld [vmem:[%s1 + $0x13f8] sm:$0xff]
    %v666 = vld [vmem:[%s1 + $0x1400] sm:$0xff]
    %v667 = vld [vmem:[%s1 + $0x1408] sm:$0xff]
    %v668 = vld [vmem:[%s1 + $0x1410] sm:$0xff]
    %v669 = vld [vmem:[%s1 + $0x1418] sm:$0xff]
    %v670 = vld [vmem:[%s1 + $0x1420] sm:$0xff]
    %v671 = vld [vmem:[%s1 + $0x1428] sm:$0xff]
    %v672 = vld [vmem:[%s1 + $0x1430] sm:$0xff]
    %v673 = vld [vmem:[%s1 + $0x1438] sm:$0xff]
    %v674 = vld [vmem:[%s1 + $0x1440] sm:$0xff]
    %v675 = vld [vmem:[%s1 + $0x1448] sm:$0xff]
    %v676 = vld [vmem:[%s1 + $0x1450] sm:$0xff]
    %v677 = vld [vmem:[%s1 + $0x1458] sm:$0xff]
    %v678 = vld [vmem:[%s1 + $0x1460] sm:$0xff]
    %v679 = vld [vmem:[%s1 + $0x1468] sm:$0xff]
    %v680 = vld [vmem:[%s1 + $0x1470] sm:$0xff]
    %v681 = vld [vmem:[%s1 + $0x1478] sm:$0xff]
    %v682 = vld [vmem:[%s1 + $0x1480] sm:$0xff]
    %v683 = vld [vmem:[%s1 + $0x1488] sm:$0xff]
    %v684 = vld [vmem:[%s1 + $0x1490] sm:$0xff]
    %v685 = vld [vmem:[%s1 + $0x1498] sm:$0xff]
    %v686 = vld [vmem:[%s1 + $0x14a0] sm:$0xff]
    %v687 = vld [vmem:[%s1 + $0x14a8] sm:$0xff]
    %v688 = vld [vmem:[%s1 + $0x14b0] sm:$0xff]
    %v689 = vld [vmem:[%s1 + $0x14b8] sm:$0xff]
    %v690 = vld [vmem:[%s1 + $0x14c0] sm:$0xff]
    %v691 = vld [vmem:[%s1 + $0x14c8] sm:$0xff]
    %v692 = vld [vmem:[%s1 + $0x14d0] sm:$0xff]
    %v693 = vld [vmem:[%s1 + $0x14d8] sm:$0xff]
    %v694 = vld [vmem:[%s1 + $0x14e0] sm:$0xff]
    %v695 = vld [vmem:[%s1 + $0x14e8] sm:$0xff]
    %v696 = vld [vmem:[%s1 + $0x14f0] sm:$0xff]
    %v697 = vld [vmem:[%s1 + $0x14f8] sm:$0xff]
    %v698 = vld [vmem:[%s1 + $0x1500] sm:$0xff]
    %v699 = vld [vmem:[%s1 + $0x1508] sm:$0xff]
    %v700 = vld [vmem:[%s1 + $0x1510] sm:$0xff]
    %v701 = vld [vmem:[%s1 + $0x1518] sm:$0xff]
    %v702 = vld [vmem:[%s1 + $0x1520] sm:$0xff]
    %v703 = vld [vmem:[%s1 + $0x1528] sm:$0xff]
    %v704 = vld [vmem:[%s1 + $0x1530] sm:$0xff]
    %v705 = vld [vmem:[%s1 + $0x1538] sm:$0xff]
    %v706 = vld [vmem:[%s1 + $0x1540] sm:$0xff]
    %v707 = vld [vmem:[%s1 + $0x1548] sm:$0xff]
    %v708 = vld [vmem:[%s1 + $0x1550] sm:$0xff]
    %v709 = vld [vmem:[%s1 + $0x1558] sm:$0xff]
    %v710 = vld [vmem:[%s1 + $0x1560] sm:$0xff]
    %v711 = vld [vmem:[%s1 + $0x1568] sm:$0xff]
    %v712 = vld [vmem:[%s1 + $0x1570] sm:$0xff]
    %v713 = vld [vmem:[%s1 + $0x1578] sm:$0xff]
    %v714 = vld [vmem:[%s1 + $0x1580] sm:$0xff]
    %v715 = vld [vmem:[%s1 + $0x1588] sm:$0xff]
    %v716 = vld [vmem:[%s1 + $0x1590] sm:$0xff]
    %v717 = vld [vmem:[%s1 + $0x1598] sm:$0xff]
    %v718 = vld [vmem:[%s1 + $0x15a0] sm:$0xff]
    %v719 = vld [vmem:[%s1 + $0x15a8] sm:$0xff]
    %v720 = vld [vmem:[%s1 + $0x15b0] sm:$0xff]
    %v721 = vld [vmem:[%s1 + $0x15b8] sm:$0xff]
    %v722 = vld [vmem:[%s1 + $0x15c0] sm:$0xff]
    %v723 = vld [vmem:[%s1 + $0x15c8] sm:$0xff]
    %v724 = vld [vmem:[%s1 + $0x15d0] sm:$0xff]
    %v725 = vld [vmem:[%s1 + $0x15d8] sm:$0xff]
    %v726 = vld [vmem:[%s1 + $0x15e0] sm:$0xff]
    %v727 = vld [vmem:[%s1 + $0x15e8] sm:$0xff]
    %v728 = vld [vmem:[%s1 + $0x15f0] sm:$0xff]
    %v729 = vld [vmem:[%s1 + $0x15f8] sm:$0xff]
    %v730 = vld [vmem:[%s1 + $0x1600] sm:$0xff]
    %v731 = vld [vmem:[%s1 + $0x1608] sm:$0xff]
    %v732 = vld [vmem:[%s1 + $0x1610] sm:$0xff]
    %v733 = vld [vmem:[%s1 + $0x1618] sm:$0xff]
    %v734 = vld [vmem:[%s1 + $0x1620] sm:$0xff]
    %v735 = vld [vmem:[%s1 + $0x1628] sm:$0xff]
    %v736 = vld [vmem:[%s1 + $0x1630] sm:$0xff]
    %v737 = vld [vmem:[%s1 + $0x1638] sm:$0xff]
    %v738 = vld [vmem:[%s1 + $0x1640] sm:$0xff]
    %v739 = vld [vmem:[%s1 + $0x1648] sm:$0xff]
    %v740 = vld [vmem:[%s1 + $0x1650] sm:$0xff]
    %v741 = vld [vmem:[%s1 + $0x1658] sm:$0xff]
    %v742 = vld [vmem:[%s1 + $0x1660] sm:$0xff]
    %v743 = vld [vmem:[%s1 + $0x1668] sm:$0xff]
    %v744 = vld [vmem:[%s1 + $0x1670] sm:$0xff]
    %v745 = vld [vmem:[%s1 + $0x1678] sm:$0xff]
    %v746 = vld [vmem:[%s1 + $0x1680] sm:$0xff]
    %v747 = vld [vmem:[%s1 + $0x1688] sm:$0xff]
    %v748 = vld [vmem:[%s1 + $0x1690] sm:$0xff]
    %v749 = vld [vmem:[%s1 + $0x1698] sm:$0xff]
    %v750 = vld [vmem:[%s1 + $0x16a0] sm:$0xff]
    %v751 = vld [vmem:[%s1 + $0x16a8] sm:$0xff]
    %v752 = vld [vmem:[%s1 + $0x16b0] sm:$0xff]
    %v753 = vld [vmem:[%s1 + $0x16b8] sm:$0xff]
    %v754 = vld [vmem:[%s1 + $0x16c0] sm:$0xff]
    %v755 = vld [vmem:[%s1 + $0x16c8] sm:$0xff]
    %v756 = vld [vmem:[%s1 + $0x16d0] sm:$0xff]
    %v757 = vld [vmem:[%s1 + $0x16d8] sm:$0xff]
    %v758 = vld [vmem:[%s1 + $0x16e0] sm:$0xff]
    %v759 = vld [vmem:[%s1 + $0x16e8] sm:$0xff]
    %v760 = vld [vmem:[%s1 + $0x16f0] sm:$0xff]
    %v761 = vld [vmem:[%s1 + $0x16f8] sm:$0xff]
    %v762 = vld [vmem:[%s1 + $0x1700] sm:$0xff]
    %v763 = vld [vmem:[%s1 + $0x1708] sm:$0xff]
    %v764 = vld [vmem:[%s1 + $0x1710] sm:$0xff]
    %v765 = vld [vmem:[%s1 + $0x1718] sm:$0xff]
    %v766 = vld [vmem:[%s1 + $0x1720] sm:$0xff]
    %v767 = vld [vmem:[%s1 + $0x1728] sm:$0xff]
    %v768 = vld [vmem:[%s1 + $0x1730] sm:$0xff]
    %v769 = vld [vmem:[%s1 + $0x1738] sm:$0xff]
    %v770 = vld [vmem:[%s1 + $0x1740] sm:$0xff]
    %v771 = vld [vmem:[%s1 + $0x1748] sm:$0xff]
    %v772 = vld [vmem:[%s1 + $0x1750] sm:$0xff]
    %v773 = vld [vmem:[%s1 + $0x1758] sm:$0xff]
    %v774 = vld [vmem:[%s1 + $0x1760] sm:$0xff]
    %v775 = vld [vmem:[%s1 + $0x1768] sm:$0xff]
    %v776 = vld [vmem:[%s1 + $0x1770] sm:$0xff]
    %v777 = vld [vmem:[%s1 + $0x1778] sm:$0xff]
    %v778 = vld [vmem:[%s1 + $0x1780] sm:$0xff]
    %v779 = vld [vmem:[%s1 + $0x1788] sm:$0xff]
    %v780 = vld [vmem:[%s1 + $0x1790] sm:$0xff]
    %v781 = vld [vmem:[%s1 + $0x1798] sm:$0xff]
    %v782 = vld [vmem:[%s1 + $0x17a0] sm:$0xff]
    %v783 = vld [vmem:[%s1 + $0x17a8] sm:$0xff]
    %v784 = vld [vmem:[%s1 + $0x17b0] sm:$0xff]
    %v785 = vld [vmem:[%s1 + $0x17b8] sm:$0xff]
    %v786 = vld [vmem:[%s1 + $0x17c0] sm:$0xff]
    %v787 = vld [vmem:[%s1 + $0x17c8] sm:$0xff]
    %v788 = vld [vmem:[%s1 + $0x17d0] sm:$0xff]
    %v789 = vld [vmem:[%s1 + $0x17d8] sm:$0xff]
    %v790 = vld [vmem:[%s1 + $0x17e0] sm:$0xff]
    %v791 = vld [vmem:[%s1 + $0x17e8] sm:$0xff]
    %v792 = vld [vmem:[%s1 + $0x17f0] sm:$0xff]
    %v793 = vld [vmem:[%s1 + $0x17f8] sm:$0xff]
    %v794 = vld [vmem:[%s1 + $0x1800] sm:$0xff]
    %v795 = vld [vmem:[%s1 + $0x1808] sm:$0xff]
    %v796 = vld [vmem:[%s1 + $0x1810] sm:$0xff]
    %v797 = vld [vmem:[%s1 + $0x1818] sm:$0xff]
    %v798 = vld [vmem:[%s1 + $0x1820] sm:$0xff]
    %v799 = vld [vmem:[%s1 + $0x1828] sm:$0xff]
    %v800 = vld [vmem:[%s1 + $0x1830] sm:$0xff]
    %v801 = vld [vmem:[%s1 + $0x1838] sm:$0xff]
    %v802 = vld [vmem:[%s1 + $0x1840] sm:$0xff]
    %v803 = vld [vmem:[%s1 + $0x1848] sm:$0xff]
    %v804 = vld [vmem:[%s1 + $0x1850] sm:$0xff]
    %v805 = vld [vmem:[%s1 + $0x1858] sm:$0xff]
    %v806 = vld [vmem:[%s1 + $0x1860] sm:$0xff]
    %v807 = vld [vmem:[%s1 + $0x1868] sm:$0xff]
    %v808 = vld [vmem:[%s1 + $0x1870] sm:$0xff]
    %v809 = vld [vmem:[%s1 + $0x1878] sm:$0xff]
    %v810 = vld [vmem:[%s2] sm:$0xf]
    %v812 = vperm.slane %v810, 0
    %v813 = vperm.slane %v810, 1
    %v814 = vperm.slane %v810, 2
    %v815 = vperm.slane %v810, 3
    %821 = vst [vmem:[#allocation1] ss:$9 sm:$0xff] %v22
    %v822 = vld [vmem:[#allocation1] sm:$0xff]
    %v823 = vld [vmem:[#allocation1 + $0x9] sm:$0xff]
    %v824 = vld [vmem:[#allocation1 + $0x12] sm:$0xff]
    %v825 = vld [vmem:[#allocation1 + $0x1b] sm:$0xff]
    %v826 = vld [vmem:[#allocation1 + $0x24] sm:$0xff]
    %v827 = vld [vmem:[#allocation1 + $0x2d] sm:$0xff]
    %v828 = vld [vmem:[#allocation1 + $0x36] sm:$0xff]
    %v829 = vld [vmem:[#allocation1 + $0x3f] sm:$0xff]
    %831 = vst [vmem:[#allocation1] ss:$9 sm:$0xff] %v23
    %v832 = vld [vmem:[#allocation1] sm:$0xff]
    %v833 = vld [vmem:[#allocation1 + $0x9] sm:$0xff]
    %v834 = vld [vmem:[#allocation1 + $0x12] sm:$0xff]
    %v835 = vld [vmem:[#allocation1 + $0x1b] sm:$0xff]
    %v836 = vld [vmem:[#allocation1 + $0x24] sm:$0xff]
    %v837 = vld [vmem:[#allocation1 + $0x2d] sm:$0xff]
    %v838 = vld [vmem:[#allocation1 + $0x36] sm:$0xff]
    %v839 = vld [vmem:[#allocation1 + $0x3f] sm:$0xff]
    %841 = vst [vmem:[#allocation1] ss:$9 sm:$0xff] %v24
    %v842 = vld [vmem:[#allocation1] sm:$0xff]
    %v843 = vld [vmem:[#allocation1 + $0x9] sm:$0xff]
    %v844 = vld [vmem:[#allocation1 + $0x12] sm:$0xff]
    %v845 = vld [vmem:[#allocation1 + $0x1b] sm:$0xff]
    %v846 = vld [vmem:[#allocation1 + $0x24] sm:$0xff]
    %v847 = vld [vmem:[#allocation1 + $0x2d] sm:$0xff]
    %v848 = vld [vmem:[#allocation1 + $0x36] sm:$0xff]
    %v849 = vld [vmem:[#allocation1 + $0x3f] sm:$0xff]
    %851 = vst [vmem:[#allocation1] ss:$9 sm:$0xff] %v25
    %v852 = vld [vmem:[#allocation1] sm:$0xff]
    %v1661 = vunpack.c.l.b16 %v26
    %v1662 = vunpack.c.h.b16 %v26
    %v1663 = vunpack.c.l.b16 %v27
    %v1664 = vunpack.c.h.b16 %v27
    %v1665 = vunpack.c.l.b16 %v28
    %v1666 = vunpack.c.h.b16 %v28
    %v1667 = vunpack.c.l.b16 %v29
    %v1668 = vunpack.c.h.b16 %v29
    %v1669 = vunpack.c.l.b16 %v30
    %v1670 = vunpack.c.h.b16 %v30
    %v1671 = vunpack.c.l.b16 %v31
    %v1672 = vunpack.c.h.b16 %v31
    %v1673 = vunpack.c.l.b16 %v32
    %v1674 = vunpack.c.h.b16 %v32
    %v1675 = vunpack.c.l.b16 %v33
    %v1676 = vunpack.c.h.b16 %v33
    %v1677 = vunpack.c.l.b16 %v34
    %v1678 = vunpack.c.h.b16 %v34
    %v1679 = vunpack.c.l.b16 %v35
    %v1680 = vunpack.c.h.b16 %v35
    %v1681 = vunpack.c.l.b16 %v36
    %v1682 = vunpack.c.h.b16 %v36
    %v1683 = vunpack.c.l.b16 %v37
    %v1684 = vunpack.c.h.b16 %v37
    %v1685 = vunpack.c.l.b16 %v38
    %v1686 = vunpack.c.h.b16 %v38
    %v1687 = vunpack.c.l.b16 %v39
    %v1688 = vunpack.c.h.b16 %v39
    %v1689 = vunpack.c.l.b16 %v40
    %v1690 = vunpack.c.h.b16 %v40
    %v1691 = vunpack.c.l.b16 %v41
    %v1692 = vunpack.c.h.b16 %v41
    %v1693 = vunpack.c.l.b16 %v42
    %v1694 = vunpack.c.h.b16 %v42
    %v1695 = vunpack.c.l.b16 %v43
    %v1696 = vunpack.c.h.b16 %v43
    %v1697 = vunpack.c.l.b16 %v44
    %v1698 = vunpack.c.h.b16 %v44
    %v1699 = vunpack.c.l.b16 %v45
    %v1700 = vunpack.c.h.b16 %v45
    %v1701 = vunpack.c.l.b16 %v46
    %v1702 = vunpack.c.h.b16 %v46
    %v1703 = vunpack.c.l.b16 %v47
    %v1704 = vunpack.c.h.b16 %v47
    %v1705 = vunpack.c.l.b16 %v48
    %v1706 = vunpack.c.h.b16 %v48
    %v1707 = vunpack.c.l.b16 %v49
    %v1708 = vunpack.c.h.b16 %v49
    %v1709 = vunpack.c.l.b16 %v50
    %v1710 = vunpack.c.h.b16 %v50
    %v1711 = vunpack.c.l.b16 %v51
    %v1712 = vunpack.c.h.b16 %v51
    %v1713 = vunpack.c.l.b16 %v52
    %v1714 = vunpack.c.h.b16 %v52
    %v1715 = vunpack.c.l.b16 %v53
    %v1716 = vunpack.c.h.b16 %v53
    %v1717 = vunpack.c.l.b16 %v54
    %v1718 = vunpack.c.h.b16 %v54
    %v1719 = vunpack.c.l.b16 %v55
    %v1720 = vunpack.c.h.b16 %v55
    %v1721 = vunpack.c.l.b16 %v56
    %v1722 = vunpack.c.h.b16 %v56
    %v1723 = vunpack.c.l.b16 %v57
    %v1724 = vunpack.c.h.b16 %v57
    %v1725 = vunpack.c.l.b16 %v58
    %v1726 = vunpack.c.h.b16 %v58
    %v1727 = vunpack.c.l.b16 %v59
    %v1728 = vunpack.c.h.b16 %v59
    %v1729 = vunpack.c.l.b16 %v60
    %v1730 = vunpack.c.h.b16 %v60
    %v1731 = vunpack.c.l.b16 %v61
    %v1732 = vunpack.c.h.b16 %v61
    %v1733 = vunpack.c.l.b16 %v62
    %v1734 = vunpack.c.h.b16 %v62
    %v1735 = vunpack.c.l.b16 %v63
    %v1736 = vunpack.c.h.b16 %v63
    %v1737 = vunpack.c.l.b16 %v64
    %v1738 = vunpack.c.h.b16 %v64
    %v1739 = vunpack.c.l.b16 %v65
    %v1740 = vunpack.c.h.b16 %v65
    %v1741 = vunpack.c.l.b16 %v66
    %v1742 = vunpack.c.h.b16 %v66
    %v1743 = vunpack.c.l.b16 %v67
    %v1744 = vunpack.c.h.b16 %v67
    %v1745 = vunpack.c.l.b16 %v68
    %v1746 = vunpack.c.h.b16 %v68
    %v1747 = vunpack.c.l.b16 %v69
    %v1748 = vunpack.c.h.b16 %v69
    %v1749 = vunpack.c.l.b16 %v70
    %v1750 = vunpack.c.h.b16 %v70
    %v1751 = vunpack.c.l.b16 %v71
    %v1752 = vunpack.c.h.b16 %v71
    %v1753 = vunpack.c.l.b16 %v72
    %v1754 = vunpack.c.h.b16 %v72
    %v1755 = vunpack.c.l.b16 %v73
    %v1756 = vunpack.c.h.b16 %v73
    %v1757 = vunpack.c.l.b16 %v74
    %v1758 = vunpack.c.h.b16 %v74
    %v1759 = vunpack.c.l.b16 %v75
    %v1760 = vunpack.c.h.b16 %v75
    %v1761 = vunpack.c.l.b16 %v76
    %v1762 = vunpack.c.h.b16 %v76
    %v1763 = vunpack.c.l.b16 %v77
    %v1764 = vunpack.c.h.b16 %v77
    %v1765 = vunpack.c.l.b16 %v78
    %v1766 = vunpack.c.h.b16 %v78
    %v1767 = vunpack.c.l.b16 %v79
    %v1768 = vunpack.c.h.b16 %v79
    %v1769 = vunpack.c.l.b16 %v80
    %v1770 = vunpack.c.h.b16 %v80
    %v1771 = vunpack.c.l.b16 %v81
    %v1772 = vunpack.c.h.b16 %v81
    %v1773 = vunpack.c.l.b16 %v82
    %v1774 = vunpack.c.h.b16 %v82
    %v1775 = vunpack.c.l.b16 %v83
    %v1776 = vunpack.c.h.b16 %v83
    %v1777 = vunpack.c.l.b16 %v84
    %v1778 = vunpack.c.h.b16 %v84
    %v1779 = vunpack.c.l.b16 %v85
    %v1780 = vunpack.c.h.b16 %v85
    %v1781 = vunpack.c.l.b16 %v86
    %v1782 = vunpack.c.h.b16 %v86
    %v1783 = vunpack.c.l.b16 %v87
    %v1784 = vunpack.c.h.b16 %v87
    %v1785 = vunpack.c.l.b16 %v88
    %v1786 = vunpack.c.h.b16 %v88
    %v1787 = vunpack.c.l.b16 %v89
    %v1788 = vunpack.c.h.b16 %v89
    %v1789 = vunpack.c.l.b16 %v90
    %v1790 = vunpack.c.h.b16 %v90
    %v1791 = vunpack.c.l.b16 %v91
    %v1792 = vunpack.c.h.b16 %v91
    %v1793 = vunpack.c.l.b16 %v92
    %v1794 = vunpack.c.h.b16 %v92
    %v1795 = vunpack.c.l.b16 %v93
    %v1796 = vunpack.c.h.b16 %v93
    %v1797 = vunpack.c.l.b16 %v94
    %v1798 = vunpack.c.h.b16 %v94
    %v1799 = vunpack.c.l.b16 %v95
    %v1800 = vunpack.c.h.b16 %v95
    %v1801 = vunpack.c.l.b16 %v96
    %v1802 = vunpack.c.h.b16 %v96
    %v1803 = vunpack.c.l.b16 %v97
    %v1804 = vunpack.c.h.b16 %v97
    %v1805 = vunpack.c.l.b16 %v98
    %v1806 = vunpack.c.h.b16 %v98
    %v1807 = vunpack.c.l.b16 %v99
    %v1808 = vunpack.c.h.b16 %v99
    %v1809 = vunpack.c.l.b16 %v100
    %v1810 = vunpack.c.h.b16 %v100
    %v1811 = vunpack.c.l.b16 %v101
    %v1812 = vunpack.c.h.b16 %v101
    %v1813 = vunpack.c.l.b16 %v102
    %v1814 = vunpack.c.h.b16 %v102
    %v1815 = vunpack.c.l.b16 %v103
    %v1816 = vunpack.c.h.b16 %v103
    %v1817 = vunpack.c.l.b16 %v104
    %v1818 = vunpack.c.h.b16 %v104
    %v1819 = vunpack.c.l.b16 %v105
    %v1820 = vunpack.c.h.b16 %v105
    %v1821 = vunpack.c.l.b16 %v106
    %v1822 = vunpack.c.h.b16 %v106
    %v1823 = vunpack.c.l.b16 %v107
    %v1824 = vunpack.c.h.b16 %v107
    %v1825 = vunpack.c.l.b16 %v108
    %v1826 = vunpack.c.h.b16 %v108
    %v1827 = vunpack.c.l.b16 %v109
    %v1828 = vunpack.c.h.b16 %v109
    %v1829 = vunpack.c.l.b16 %v110
    %v1830 = vunpack.c.h.b16 %v110
    %v1831 = vunpack.c.l.b16 %v111
    %v1832 = vunpack.c.h.b16 %v111
    %v1833 = vunpack.c.l.b16 %v112
    %v1834 = vunpack.c.h.b16 %v112
    %v1835 = vunpack.c.l.b16 %v113
    %v1836 = vunpack.c.h.b16 %v113
    %v1837 = vunpack.c.l.b16 %v114
    %v1838 = vunpack.c.h.b16 %v114
    %v1839 = vunpack.c.l.b16 %v115
    %v1840 = vunpack.c.h.b16 %v115
    %v1841 = vunpack.c.l.b16 %v116
    %v1842 = vunpack.c.h.b16 %v116
    %v1843 = vunpack.c.l.b16 %v117
    %v1844 = vunpack.c.h.b16 %v117
    %v1845 = vunpack.c.l.b16 %v118
    %v1846 = vunpack.c.h.b16 %v118
    %v1847 = vunpack.c.l.b16 %v119
    %v1848 = vunpack.c.h.b16 %v119
    %v1849 = vunpack.c.l.b16 %v120
    %v1850 = vunpack.c.h.b16 %v120
    %v1851 = vunpack.c.l.b16 %v121
    %v1852 = vunpack.c.h.b16 %v121
    %v1853 = vunpack.c.l.b16 %v122
    %v1854 = vunpack.c.h.b16 %v122
    %v1855 = vunpack.c.l.b16 %v123
    %v1856 = vunpack.c.h.b16 %v123
    %v1857 = vunpack.c.l.b16 %v124
    %v1858 = vunpack.c.h.b16 %v124
    %v1859 = vunpack.c.l.b16 %v125
    %v1860 = vunpack.c.h.b16 %v125
    %v1861 = vunpack.c.l.b16 %v126
    %v1862 = vunpack.c.h.b16 %v126
    %v1863 = vunpack.c.l.b16 %v127
    %v1864 = vunpack.c.h.b16 %v127
    %v1865 = vunpack.c.l.b16 %v128
    %v1866 = vunpack.c.h.b16 %v128
    %v1867 = vunpack.c.l.b16 %v129
    %v1868 = vunpack.c.h.b16 %v129
    %v1869 = vunpack.c.l.b16 %v130
    %v1870 = vunpack.c.h.b16 %v130
    %v1871 = vunpack.c.l.b16 %v131
    %v1872 = vunpack.c.h.b16 %v131
    %v1873 = vunpack.c.l.b16 %v132
    %v1874 = vunpack.c.h.b16 %v132
    %v1875 = vunpack.c.l.b16 %v133
    %v1876 = vunpack.c.h.b16 %v133
    %v1877 = vunpack.c.l.b16 %v134
    %v1878 = vunpack.c.h.b16 %v134
    %v1879 = vunpack.c.l.b16 %v135
    %v1880 = vunpack.c.h.b16 %v135
    %v1881 = vunpack.c.l.b16 %v136
    %v1882 = vunpack.c.h.b16 %v136
    %v1883 = vunpack.c.l.b16 %v137
    %v1884 = vunpack.c.h.b16 %v137
    %v1885 = vunpack.c.l.b16 %v138
    %v1886 = vunpack.c.h.b16 %v138
    %v1887 = vunpack.c.l.b16 %v139
    %v1888 = vunpack.c.h.b16 %v139
    %v1889 = vunpack.c.l.b16 %v140
    %v1890 = vunpack.c.h.b16 %v140
    %v1891 = vunpack.c.l.b16 %v141
    %v1892 = vunpack.c.h.b16 %v141
    %v1893 = vunpack.c.l.b16 %v142
    %v1894 = vunpack.c.h.b16 %v142
    %v1895 = vunpack.c.l.b16 %v143
    %v1896 = vunpack.c.h.b16 %v143
    %v1897 = vunpack.c.l.b16 %v144
    %v1898 = vunpack.c.h.b16 %v144
    %v1899 = vunpack.c.l.b16 %v145
    %v1900 = vunpack.c.h.b16 %v145
    %v1901 = vunpack.c.l.b16 %v146
    %v1902 = vunpack.c.h.b16 %v146
    %v1903 = vunpack.c.l.b16 %v147
    %v1904 = vunpack.c.h.b16 %v147
    %v1905 = vunpack.c.l.b16 %v148
    %v1906 = vunpack.c.h.b16 %v148
    %v1907 = vunpack.c.l.b16 %v149
    %v1908 = vunpack.c.h.b16 %v149
    %v1909 = vunpack.c.l.b16 %v150
    %v1910 = vunpack.c.h.b16 %v150
    %v1911 = vunpack.c.l.b16 %v151
    %v1912 = vunpack.c.h.b16 %v151
    %v1913 = vunpack.c.l.b16 %v152
    %v1914 = vunpack.c.h.b16 %v152
    %v1915 = vunpack.c.l.b16 %v153
    %v1916 = vunpack.c.h.b16 %v153
    %v1917 = vunpack.c.l.b16 %v154
    %v1918 = vunpack.c.h.b16 %v154
    %v1919 = vunpack.c.l.b16 %v155
    %v1920 = vunpack.c.h.b16 %v155
    %v1921 = vunpack.c.l.b16 %v156
    %v1922 = vunpack.c.h.b16 %v156
    %v1923 = vunpack.c.l.b16 %v157
    %v1924 = vunpack.c.h.b16 %v157
    %v1925 = vunpack.c.l.b16 %v158
    %v1926 = vunpack.c.h.b16 %v158
    %v1927 = vunpack.c.l.b16 %v159
    %v1928 = vunpack.c.h.b16 %v159
    %v1929 = vunpack.c.l.b16 %v160
    %v1930 = vunpack.c.h.b16 %v160
    %v1931 = vunpack.c.l.b16 %v161
    %v1932 = vunpack.c.h.b16 %v161
    %v1933 = vunpack.c.l.b16 %v162
    %v1934 = vunpack.c.h.b16 %v162
    %v1935 = vunpack.c.l.b16 %v163
    %v1936 = vunpack.c.h.b16 %v163
    %v1937 = vunpack.c.l.b16 %v164
    %v1938 = vunpack.c.h.b16 %v164
    %v1939 = vunpack.c.l.b16 %v165
    %v1940 = vunpack.c.h.b16 %v165
    %v1941 = vunpack.c.l.b16 %v166
    %v1942 = vunpack.c.h.b16 %v166
    %v1943 = vunpack.c.l.b16 %v167
    %v1944 = vunpack.c.h.b16 %v167
    %v1945 = vunpack.c.l.b16 %v168
    %v1946 = vunpack.c.h.b16 %v168
    %v1947 = vunpack.c.l.b16 %v169
    %v1948 = vunpack.c.h.b16 %v169
    %v1949 = vunpack.c.l.b16 %v170
    %v1950 = vunpack.c.h.b16 %v170
    %v1951 = vunpack.c.l.b16 %v171
    %v1952 = vunpack.c.h.b16 %v171
    %v1953 = vunpack.c.l.b16 %v172
    %v1954 = vunpack.c.h.b16 %v172
    %v1955 = vunpack.c.l.b16 %v173
    %v1956 = vunpack.c.h.b16 %v173
    %v1957 = vunpack.c.l.b16 %v174
    %v1958 = vunpack.c.h.b16 %v174
    %v1959 = vunpack.c.l.b16 %v175
    %v1960 = vunpack.c.h.b16 %v175
    %v1961 = vunpack.c.l.b16 %v176
    %v1962 = vunpack.c.h.b16 %v176
    %v1963 = vunpack.c.l.b16 %v177
    %v1964 = vunpack.c.h.b16 %v177
    %v1965 = vunpack.c.l.b16 %v178
    %v1966 = vunpack.c.h.b16 %v178
    %v1967 = vunpack.c.l.b16 %v179
    %v1968 = vunpack.c.h.b16 %v179
    %v1969 = vunpack.c.l.b16 %v180
    %v1970 = vunpack.c.h.b16 %v180
    %v1971 = vunpack.c.l.b16 %v181
    %v1972 = vunpack.c.h.b16 %v181
    %v1973 = vunpack.c.l.b16 %v182
    %v1974 = vunpack.c.h.b16 %v182
    %v1975 = vunpack.c.l.b16 %v183
    %v1976 = vunpack.c.h.b16 %v183
    %v1977 = vunpack.c.l.b16 %v184
    %v1978 = vunpack.c.h.b16 %v184
    %v1979 = vunpack.c.l.b16 %v185
    %v1980 = vunpack.c.h.b16 %v185
    %v1981 = vunpack.c.l.b16 %v186
    %v1982 = vunpack.c.h.b16 %v186
    %v1983 = vunpack.c.l.b16 %v187
    %v1984 = vunpack.c.h.b16 %v187
    %v1985 = vunpack.c.l.b16 %v188
    %v1986 = vunpack.c.h.b16 %v188
    %v1987 = vunpack.c.l.b16 %v189
    %v1988 = vunpack.c.h.b16 %v189
    %v1989 = vunpack.c.l.b16 %v190
    %v1990 = vunpack.c.h.b16 %v190
    %v1991 = vunpack.c.l.b16 %v191
    %v1992 = vunpack.c.h.b16 %v191
    %v1993 = vunpack.c.l.b16 %v192
    %v1994 = vunpack.c.h.b16 %v192
    %v1995 = vunpack.c.l.b16 %v193
    %v1996 = vunpack.c.h.b16 %v193
    %v1997 = vunpack.c.l.b16 %v194
    %v1998 = vunpack.c.h.b16 %v194
    %v1999 = vunpack.c.l.b16 %v195
    %v2000 = vunpack.c.h.b16 %v195
    %v2001 = vunpack.c.l.b16 %v196
    %v2002 = vunpack.c.h.b16 %v196
    %v2003 = vunpack.c.l.b16 %v197
    %v2004 = vunpack.c.h.b16 %v197
    %v2005 = vunpack.c.l.b16 %v198
    %v2006 = vunpack.c.h.b16 %v198
    %v2007 = vunpack.c.l.b16 %v199
    %v2008 = vunpack.c.h.b16 %v199
    %v2009 = vunpack.c.l.b16 %v200
    %v2010 = vunpack.c.h.b16 %v200
    %v2011 = vunpack.c.l.b16 %v201
    %v2012 = vunpack.c.h.b16 %v201
    %v2013 = vunpack.c.l.b16 %v202
    %v2014 = vunpack.c.h.b16 %v202
    %v2015 = vunpack.c.l.b16 %v203
    %v2016 = vunpack.c.h.b16 %v203
    %v2017 = vunpack.c.l.b16 %v204
    %v2018 = vunpack.c.h.b16 %v204
    %v2019 = vunpack.c.l.b16 %v205
    %v2020 = vunpack.c.h.b16 %v205
    %v2021 = vunpack.c.l.b16 %v206
    %v2022 = vunpack.c.h.b16 %v206
    %v2023 = vunpack.c.l.b16 %v207
    %v2024 = vunpack.c.h.b16 %v207
    %v2025 = vunpack.c.l.b16 %v208
    %v2026 = vunpack.c.h.b16 %v208
    %v2027 = vunpack.c.l.b16 %v209
    %v2028 = vunpack.c.h.b16 %v209
    %v2029 = vunpack.c.l.b16 %v210
    %v2030 = vunpack.c.h.b16 %v210
    %v2031 = vunpack.c.l.b16 %v211
    %v2032 = vunpack.c.h.b16 %v211
    %v2033 = vunpack.c.l.b16 %v212
    %v2034 = vunpack.c.h.b16 %v212
    %v2035 = vunpack.c.l.b16 %v213
    %v2036 = vunpack.c.h.b16 %v213
    %v2037 = vunpack.c.l.b16 %v214
    %v2038 = vunpack.c.h.b16 %v214
    %v2039 = vunpack.c.l.b16 %v215
    %v2040 = vunpack.c.h.b16 %v215
    %v2041 = vunpack.c.l.b16 %v216
    %v2042 = vunpack.c.h.b16 %v216
    %v2043 = vunpack.c.l.b16 %v217
    %v2044 = vunpack.c.h.b16 %v217
    %v2045 = vunpack.c.l.b16 %v218
    %v2046 = vunpack.c.h.b16 %v218
    %v2047 = vunpack.c.l.b16 %v219
    %v2048 = vunpack.c.h.b16 %v219
    %v2049 = vunpack.c.l.b16 %v220
    %v2050 = vunpack.c.h.b16 %v220
    %v2051 = vunpack.c.l.b16 %v221
    %v2052 = vunpack.c.h.b16 %v221
    %v2053 = vunpack.c.l.b16 %v222
    %v2054 = vunpack.c.h.b16 %v222
    %v2055 = vunpack.c.l.b16 %v223
    %v2056 = vunpack.c.h.b16 %v223
    %v2057 = vunpack.c.l.b16 %v224
    %v2058 = vunpack.c.h.b16 %v224
    %v2059 = vunpack.c.l.b16 %v225
    %v2060 = vunpack.c.h.b16 %v225
    %v2061 = vunpack.c.l.b16 %v226
    %v2062 = vunpack.c.h.b16 %v226
    %v2063 = vunpack.c.l.b16 %v227
    %v2064 = vunpack.c.h.b16 %v227
    %v2065 = vunpack.c.l.b16 %v228
    %v2066 = vunpack.c.h.b16 %v228
    %v2067 = vunpack.c.l.b16 %v229
    %v2068 = vunpack.c.h.b16 %v229
    %v2069 = vunpack.c.l.b16 %v230
    %v2070 = vunpack.c.h.b16 %v230
    %v2071 = vunpack.c.l.b16 %v231
    %v2072 = vunpack.c.h.b16 %v231
    %v2073 = vunpack.c.l.b16 %v232
    %v2074 = vunpack.c.h.b16 %v232
    %v2075 = vunpack.c.l.b16 %v233
    %v2076 = vunpack.c.h.b16 %v233
    %v2077 = vunpack.c.l.b16 %v234
    %v2078 = vunpack.c.h.b16 %v234
    %v2079 = vunpack.c.l.b16 %v235
    %v2080 = vunpack.c.h.b16 %v235
    %v2081 = vunpack.c.l.b16 %v236
    %v2082 = vunpack.c.h.b16 %v236
    %v2083 = vunpack.c.l.b16 %v237
    %v2084 = vunpack.c.h.b16 %v237
    %v2085 = vunpack.c.l.b16 %v238
    %v2086 = vunpack.c.h.b16 %v238
    %v2087 = vunpack.c.l.b16 %v239
    %v2088 = vunpack.c.h.b16 %v239
    %v2089 = vunpack.c.l.b16 %v240
    %v2090 = vunpack.c.h.b16 %v240
    %v2091 = vunpack.c.l.b16 %v241
    %v2092 = vunpack.c.h.b16 %v241
    %v2093 = vunpack.c.l.b16 %v242
    %v2094 = vunpack.c.h.b16 %v242
    %v2095 = vunpack.c.l.b16 %v243
    %v2096 = vunpack.c.h.b16 %v243
    %v2097 = vunpack.c.l.b16 %v244
    %v2098 = vunpack.c.h.b16 %v244
    %v2099 = vunpack.c.l.b16 %v245
    %v2100 = vunpack.c.h.b16 %v245
    %v2101 = vunpack.c.l.b16 %v246
    %v2102 = vunpack.c.h.b16 %v246
    %v2103 = vunpack.c.l.b16 %v247
    %v2104 = vunpack.c.h.b16 %v247
    %v2105 = vunpack.c.l.b16 %v248
    %v2106 = vunpack.c.h.b16 %v248
    %v2107 = vunpack.c.l.b16 %v249
    %v2108 = vunpack.c.h.b16 %v249
    %v2109 = vunpack.c.l.b16 %v250
    %v2110 = vunpack.c.h.b16 %v250
    %v2111 = vunpack.c.l.b16 %v251
    %v2112 = vunpack.c.h.b16 %v251
    %v2113 = vunpack.c.l.b16 %v252
    %v2114 = vunpack.c.h.b16 %v252
    %v2115 = vunpack.c.l.b16 %v253
    %v2116 = vunpack.c.h.b16 %v253
    %v2117 = vunpack.c.l.b16 %v254
    %v2118 = vunpack.c.h.b16 %v254
    %v2119 = vunpack.c.l.b16 %v255
    %v2120 = vunpack.c.h.b16 %v255
    %v2121 = vunpack.c.l.b16 %v256
    %v2122 = vunpack.c.h.b16 %v256
    %v2123 = vunpack.c.l.b16 %v257
    %v2124 = vunpack.c.h.b16 %v257
    %v2125 = vunpack.c.l.b16 %v258
    %v2126 = vunpack.c.h.b16 %v258
    %v2127 = vunpack.c.l.b16 %v259
    %v2128 = vunpack.c.h.b16 %v259
    %v2129 = vunpack.c.l.b16 %v260
    %v2130 = vunpack.c.h.b16 %v260
    %v2131 = vunpack.c.l.b16 %v261
    %v2132 = vunpack.c.h.b16 %v261
    %v2133 = vunpack.c.l.b16 %v262
    %v2134 = vunpack.c.h.b16 %v262
    %v2135 = vunpack.c.l.b16 %v263
    %v2136 = vunpack.c.h.b16 %v263
    %v2137 = vunpack.c.l.b16 %v264
    %v2138 = vunpack.c.h.b16 %v264
    %v2139 = vunpack.c.l.b16 %v265
    %v2140 = vunpack.c.h.b16 %v265
    %v2141 = vunpack.c.l.b16 %v266
    %v2142 = vunpack.c.h.b16 %v266
    %v2143 = vunpack.c.l.b16 %v267
    %v2144 = vunpack.c.h.b16 %v267
    %v2145 = vunpack.c.l.b16 %v268
    %v2146 = vunpack.c.h.b16 %v268
    %v2147 = vunpack.c.l.b16 %v269
    %v2148 = vunpack.c.h.b16 %v269
    %v2149 = vunpack.c.l.b16 %v270
    %v2150 = vunpack.c.h.b16 %v270
    %v2151 = vunpack.c.l.b16 %v271
    %v2152 = vunpack.c.h.b16 %v271
    %v2153 = vunpack.c.l.b16 %v272
    %v2154 = vunpack.c.h.b16 %v272
    %v2155 = vunpack.c.l.b16 %v273
    %v2156 = vunpack.c.h.b16 %v273
    %v2157 = vunpack.c.l.b16 %v274
    %v2158 = vunpack.c.h.b16 %v274
    %v2159 = vunpack.c.l.b16 %v275
    %v2160 = vunpack.c.h.b16 %v275
    %v2161 = vunpack.c.l.b16 %v276
    %v2162 = vunpack.c.h.b16 %v276
    %v2163 = vunpack.c.l.b16 %v277
    %v2164 = vunpack.c.h.b16 %v277
    %v2165 = vunpack.c.l.b16 %v278
    %v2166 = vunpack.c.h.b16 %v278
    %v2167 = vunpack.c.l.b16 %v279
    %v2168 = vunpack.c.h.b16 %v279
    %v2169 = vunpack.c.l.b16 %v280
    %v2170 = vunpack.c.h.b16 %v280
    %v2171 = vunpack.c.l.b16 %v281
    %v2172 = vunpack.c.h.b16 %v281
    %v2173 = vunpack.c.l.b16 %v282
    %v2174 = vunpack.c.h.b16 %v282
    %v2175 = vunpack.c.l.b16 %v283
    %v2176 = vunpack.c.h.b16 %v283
    %v2177 = vunpack.c.l.b16 %v284
    %v2178 = vunpack.c.h.b16 %v284
    %v2179 = vunpack.c.l.b16 %v285
    %v2180 = vunpack.c.h.b16 %v285
    %v2181 = vunpack.c.l.b16 %v286
    %v2182 = vunpack.c.h.b16 %v286
    %v2183 = vunpack.c.l.b16 %v287
    %v2184 = vunpack.c.h.b16 %v287
    %v2185 = vunpack.c.l.b16 %v288
    %v2186 = vunpack.c.h.b16 %v288
    %v2187 = vunpack.c.l.b16 %v289
    %v2188 = vunpack.c.h.b16 %v289
    %v2189 = vunpack.c.l.b16 %v290
    %v2190 = vunpack.c.h.b16 %v290
    %v2191 = vunpack.c.l.b16 %v291
    %v2192 = vunpack.c.h.b16 %v291
    %v2193 = vunpack.c.l.b16 %v292
    %v2194 = vunpack.c.h.b16 %v292
    %v2195 = vunpack.c.l.b16 %v293
    %v2196 = vunpack.c.h.b16 %v293
    %v2197 = vunpack.c.l.b16 %v294
    %v2198 = vunpack.c.h.b16 %v294
    %v2199 = vunpack.c.l.b16 %v295
    %v2200 = vunpack.c.h.b16 %v295
    %v2201 = vunpack.c.l.b16 %v296
    %v2202 = vunpack.c.h.b16 %v296
    %v2203 = vunpack.c.l.b16 %v297
    %v2204 = vunpack.c.h.b16 %v297
    %v2205 = vunpack.c.l.b16 %v298
    %v2206 = vunpack.c.h.b16 %v298
    %v2207 = vunpack.c.l.b16 %v299
    %v2208 = vunpack.c.h.b16 %v299
    %v2209 = vunpack.c.l.b16 %v300
    %v2210 = vunpack.c.h.b16 %v300
    %v2211 = vunpack.c.l.b16 %v301
    %v2212 = vunpack.c.h.b16 %v301
    %v2213 = vunpack.c.l.b16 %v302
    %v2214 = vunpack.c.h.b16 %v302
    %v2215 = vunpack.c.l.b16 %v303
    %v2216 = vunpack.c.h.b16 %v303
    %v2217 = vunpack.c.l.b16 %v304
    %v2218 = vunpack.c.h.b16 %v304
    %v2219 = vunpack.c.l.b16 %v305
    %v2220 = vunpack.c.h.b16 %v305
    %v2221 = vunpack.c.l.b16 %v306
    %v2222 = vunpack.c.h.b16 %v306
    %v2223 = vunpack.c.l.b16 %v307
    %v2224 = vunpack.c.h.b16 %v307
    %v2225 = vunpack.c.l.b16 %v308
    %v2226 = vunpack.c.h.b16 %v308
    %v2227 = vunpack.c.l.b16 %v309
    %v2228 = vunpack.c.h.b16 %v309
    %v2229 = vunpack.c.l.b16 %v310
    %v2230 = vunpack.c.h.b16 %v310
    %v2231 = vunpack.c.l.b16 %v311
    %v2232 = vunpack.c.h.b16 %v311
    %v2233 = vunpack.c.l.b16 %v312
    %v2234 = vunpack.c.h.b16 %v312
    %v2235 = vunpack.c.l.b16 %v313
    %v2236 = vunpack.c.h.b16 %v313
    %v2237 = vunpack.c.l.b16 %v314
    %v2238 = vunpack.c.h.b16 %v314
    %v2239 = vunpack.c.l.b16 %v315
    %v2240 = vunpack.c.h.b16 %v315
    %v2241 = vunpack.c.l.b16 %v316
    %v2242 = vunpack.c.h.b16 %v316
    %v2243 = vunpack.c.l.b16 %v317
    %v2244 = vunpack.c.h.b16 %v317
    %v2245 = vunpack.c.l.b16 %v318
    %v2246 = vunpack.c.h.b16 %v318
    %v2247 = vunpack.c.l.b16 %v319
    %v2248 = vunpack.c.h.b16 %v319
    %v2249 = vunpack.c.l.b16 %v320
    %v2250 = vunpack.c.h.b16 %v320
    %v2251 = vunpack.c.l.b16 %v321
    %v2252 = vunpack.c.h.b16 %v321
    %v2253 = vunpack.c.l.b16 %v322
    %v2254 = vunpack.c.h.b16 %v322
    %v2255 = vunpack.c.l.b16 %v323
    %v2256 = vunpack.c.h.b16 %v323
    %v2257 = vunpack.c.l.b16 %v324
    %v2258 = vunpack.c.h.b16 %v324
    %v2259 = vunpack.c.l.b16 %v325
    %v2260 = vunpack.c.h.b16 %v325
    %v2261 = vunpack.c.l.b16 %v326
    %v2262 = vunpack.c.h.b16 %v326
    %v2263 = vunpack.c.l.b16 %v327
    %v2264 = vunpack.c.h.b16 %v327
    %v2265 = vunpack.c.l.b16 %v328
    %v2266 = vunpack.c.h.b16 %v328
    %v2267 = vunpack.c.l.b16 %v329
    %v2268 = vunpack.c.h.b16 %v329
    %v2269 = vunpack.c.l.b16 %v330
    %v2270 = vunpack.c.h.b16 %v330
    %v2271 = vunpack.c.l.b16 %v331
    %v2272 = vunpack.c.h.b16 %v331
    %v2273 = vunpack.c.l.b16 %v332
    %v2274 = vunpack.c.h.b16 %v332
    %v2275 = vunpack.c.l.b16 %v333
    %v2276 = vunpack.c.h.b16 %v333
    %v2277 = vunpack.c.l.b16 %v334
    %v2278 = vunpack.c.h.b16 %v334
    %v2279 = vunpack.c.l.b16 %v335
    %v2280 = vunpack.c.h.b16 %v335
    %v2281 = vunpack.c.l.b16 %v336
    %v2282 = vunpack.c.h.b16 %v336
    %v2283 = vunpack.c.l.b16 %v337
    %v2284 = vunpack.c.h.b16 %v337
    %v2285 = vunpack.c.l.b16 %v338
    %v2286 = vunpack.c.h.b16 %v338
    %v2287 = vunpack.c.l.b16 %v339
    %v2288 = vunpack.c.h.b16 %v339
    %v2289 = vunpack.c.l.b16 %v340
    %v2290 = vunpack.c.h.b16 %v340
    %v2291 = vunpack.c.l.b16 %v341
    %v2292 = vunpack.c.h.b16 %v341
    %v2293 = vunpack.c.l.b16 %v342
    %v2294 = vunpack.c.h.b16 %v342
    %v2295 = vunpack.c.l.b16 %v343
    %v2296 = vunpack.c.h.b16 %v343
    %v2297 = vunpack.c.l.b16 %v344
    %v2298 = vunpack.c.h.b16 %v344
    %v2299 = vunpack.c.l.b16 %v345
    %v2300 = vunpack.c.h.b16 %v345
    %v2301 = vunpack.c.l.b16 %v346
    %v2302 = vunpack.c.h.b16 %v346
    %v2303 = vunpack.c.l.b16 %v347
    %v2304 = vunpack.c.h.b16 %v347
    %v2305 = vunpack.c.l.b16 %v348
    %v2306 = vunpack.c.h.b16 %v348
    %v2307 = vunpack.c.l.b16 %v349
    %v2308 = vunpack.c.h.b16 %v349
    %v2309 = vunpack.c.l.b16 %v350
    %v2310 = vunpack.c.h.b16 %v350
    %v2311 = vunpack.c.l.b16 %v351
    %v2312 = vunpack.c.h.b16 %v351
    %v2313 = vunpack.c.l.b16 %v352
    %v2314 = vunpack.c.h.b16 %v352
    %v2315 = vunpack.c.l.b16 %v353
    %v2316 = vunpack.c.h.b16 %v353
    %v2317 = vunpack.c.l.b16 %v354
    %v2318 = vunpack.c.h.b16 %v354
    %v2319 = vunpack.c.l.b16 %v355
    %v2320 = vunpack.c.h.b16 %v355
    %v2321 = vunpack.c.l.b16 %v356
    %v2322 = vunpack.c.h.b16 %v356
    %v2323 = vunpack.c.l.b16 %v357
    %v2324 = vunpack.c.h.b16 %v357
    %v2325 = vunpack.c.l.b16 %v358
    %v2326 = vunpack.c.h.b16 %v358
    %v2327 = vunpack.c.l.b16 %v359
    %v2328 = vunpack.c.h.b16 %v359
    %v2329 = vunpack.c.l.b16 %v360
    %v2330 = vunpack.c.h.b16 %v360
    %v2331 = vunpack.c.l.b16 %v361
    %v2332 = vunpack.c.h.b16 %v361
    %v2333 = vunpack.c.l.b16 %v362
    %v2334 = vunpack.c.h.b16 %v362
    %v2335 = vunpack.c.l.b16 %v363
    %v2336 = vunpack.c.h.b16 %v363
    %v2337 = vunpack.c.l.b16 %v364
    %v2338 = vunpack.c.h.b16 %v364
    %v2339 = vunpack.c.l.b16 %v365
    %v2340 = vunpack.c.h.b16 %v365
    %v2341 = vunpack.c.l.b16 %v366
    %v2342 = vunpack.c.h.b16 %v366
    %v2343 = vunpack.c.l.b16 %v367
    %v2344 = vunpack.c.h.b16 %v367
    %v2345 = vunpack.c.l.b16 %v368
    %v2346 = vunpack.c.h.b16 %v368
    %v2347 = vunpack.c.l.b16 %v369
    %v2348 = vunpack.c.h.b16 %v369
    %v2349 = vunpack.c.l.b16 %v370
    %v2350 = vunpack.c.h.b16 %v370
    %v2351 = vunpack.c.l.b16 %v371
    %v2352 = vunpack.c.h.b16 %v371
    %v2353 = vunpack.c.l.b16 %v372
    %v2354 = vunpack.c.h.b16 %v372
    %v2355 = vunpack.c.l.b16 %v373
    %v2356 = vunpack.c.h.b16 %v373
    %v2357 = vunpack.c.l.b16 %v374
    %v2358 = vunpack.c.h.b16 %v374
    %v2359 = vunpack.c.l.b16 %v375
    %v2360 = vunpack.c.h.b16 %v375
    %v2361 = vunpack.c.l.b16 %v376
    %v2362 = vunpack.c.h.b16 %v376
    %v2363 = vunpack.c.l.b16 %v377
    %v2364 = vunpack.c.h.b16 %v377
    %v2365 = vunpack.c.l.b16 %v378
    %v2366 = vunpack.c.h.b16 %v378
    %v2367 = vunpack.c.l.b16 %v379
    %v2368 = vunpack.c.h.b16 %v379
    %v2369 = vunpack.c.l.b16 %v380
    %v2370 = vunpack.c.h.b16 %v380
    %v2371 = vunpack.c.l.b16 %v381
    %v2372 = vunpack.c.h.b16 %v381
    %v2373 = vunpack.c.l.b16 %v382
    %v2374 = vunpack.c.h.b16 %v382
    %v2375 = vunpack.c.l.b16 %v383
    %v2376 = vunpack.c.h.b16 %v383
    %v2377 = vunpack.c.l.b16 %v384
    %v2378 = vunpack.c.h.b16 %v384
    %v2379 = vunpack.c.l.b16 %v385
    %v2380 = vunpack.c.h.b16 %v385
    %v2381 = vunpack.c.l.b16 %v386
    %v2382 = vunpack.c.h.b16 %v386
    %v2383 = vunpack.c.l.b16 %v387
    %v2384 = vunpack.c.h.b16 %v387
    %v2385 = vunpack.c.l.b16 %v388
    %v2386 = vunpack.c.h.b16 %v388
    %v2387 = vunpack.c.l.b16 %v389
    %v2388 = vunpack.c.h.b16 %v389
    %v2389 = vunpack.c.l.b16 %v390
    %v2390 = vunpack.c.h.b16 %v390
    %v2391 = vunpack.c.l.b16 %v391
    %v2392 = vunpack.c.h.b16 %v391
    %v2393 = vunpack.c.l.b16 %v392
    %v2394 = vunpack.c.h.b16 %v392
    %v2395 = vunpack.c.l.b16 %v393
    %v2396 = vunpack.c.h.b16 %v393
    %v2397 = vunpack.c.l.b16 %v394
    %v2398 = vunpack.c.h.b16 %v394
    %v2399 = vunpack.c.l.b16 %v395
    %v2400 = vunpack.c.h.b16 %v395
    %v2401 = vunpack.c.l.b16 %v396
    %v2402 = vunpack.c.h.b16 %v396
    %v2403 = vunpack.c.l.b16 %v397
    %v2404 = vunpack.c.h.b16 %v397
    %v2405 = vunpack.c.l.b16 %v398
    %v2406 = vunpack.c.h.b16 %v398
    %v2407 = vunpack.c.l.b16 %v399
    %v2408 = vunpack.c.h.b16 %v399
    %v2409 = vunpack.c.l.b16 %v400
    %v2410 = vunpack.c.h.b16 %v400
    %v2411 = vunpack.c.l.b16 %v401
    %v2412 = vunpack.c.h.b16 %v401
    %v2413 = vunpack.c.l.b16 %v402
    %v2414 = vunpack.c.h.b16 %v402
    %v2415 = vunpack.c.l.b16 %v403
    %v2416 = vunpack.c.h.b16 %v403
    %v2417 = vunpack.c.l.b16 %v404
    %v2418 = vunpack.c.h.b16 %v404
    %v2419 = vunpack.c.l.b16 %v405
    %v2420 = vunpack.c.h.b16 %v405
    %v2421 = vunpack.c.l.b16 %v406
    %v2422 = vunpack.c.h.b16 %v406
    %v2423 = vunpack.c.l.b16 %v407
    %v2424 = vunpack.c.h.b16 %v407
    %v2425 = vunpack.c.l.b16 %v408
    %v2426 = vunpack.c.h.b16 %v408
    %v2427 = vunpack.c.l.b16 %v409
    %v2428 = vunpack.c.h.b16 %v409
    %v2429 = vunpack.c.l.b16 %v410
    %v2430 = vunpack.c.h.b16 %v410
    %v2431 = vunpack.c.l.b16 %v411
    %v2432 = vunpack.c.h.b16 %v411
    %v2433 = vunpack.c.l.b16 %v412
    %v2434 = vunpack.c.h.b16 %v412
    %v2435 = vunpack.c.l.b16 %v413
    %v2436 = vunpack.c.h.b16 %v413
    %v2437 = vunpack.c.l.b16 %v414
    %v2438 = vunpack.c.h.b16 %v414
    %v2439 = vunpack.c.l.b16 %v415
    %v2440 = vunpack.c.h.b16 %v415
    %v2441 = vunpack.c.l.b16 %v416
    %v2442 = vunpack.c.h.b16 %v416
    %v2443 = vunpack.c.l.b16 %v417
    %v2444 = vunpack.c.h.b16 %v417
    %v2445 = vunpack.c.l.b16 %v418
    %v2446 = vunpack.c.h.b16 %v418
    %v2447 = vunpack.c.l.b16 %v419
    %v2448 = vunpack.c.h.b16 %v419
    %v2449 = vunpack.c.l.b16 %v420
    %v2450 = vunpack.c.h.b16 %v420
    %v2451 = vunpack.c.l.b16 %v421
    %v2452 = vunpack.c.h.b16 %v421
    %v2453 = vunpack.c.l.b16 %v422
    %v2454 = vunpack.c.h.b16 %v422
    %v2455 = vunpack.c.l.b16 %v423
    %v2456 = vunpack.c.h.b16 %v423
    %v2457 = vunpack.c.l.b16 %v424
    %v2458 = vunpack.c.h.b16 %v424
    %v2459 = vunpack.c.l.b16 %v425
    %v2460 = vunpack.c.h.b16 %v425
    %v2461 = vunpack.c.l.b16 %v426
    %v2462 = vunpack.c.h.b16 %v426
    %v2463 = vunpack.c.l.b16 %v427
    %v2464 = vunpack.c.h.b16 %v427
    %v2465 = vunpack.c.l.b16 %v428
    %v2466 = vunpack.c.h.b16 %v428
    %v2467 = vunpack.c.l.b16 %v429
    %v2468 = vunpack.c.h.b16 %v429
    %v2469 = vunpack.c.l.b16 %v430
    %v2470 = vunpack.c.h.b16 %v430
    %v2471 = vunpack.c.l.b16 %v431
    %v2472 = vunpack.c.h.b16 %v431
    %v2473 = vunpack.c.l.b16 %v432
    %v2474 = vunpack.c.h.b16 %v432
    %v2475 = vunpack.c.l.b16 %v433
    %v2476 = vunpack.c.h.b16 %v433
    %v2477 = vunpack.c.l.b16 %v434
    %v2478 = vunpack.c.h.b16 %v434
    %v2479 = vunpack.c.l.b16 %v435
    %v2480 = vunpack.c.h.b16 %v435
    %v2481 = vunpack.c.l.b16 %v436
    %v2482 = vunpack.c.h.b16 %v436
    %v2483 = vunpack.c.l.b16 %v437
    %v2484 = vunpack.c.h.b16 %v437
    %v2485 = vunpack.c.l.b16 %v438
    %v2486 = vunpack.c.h.b16 %v438
    %v2487 = vunpack.c.l.b16 %v439
    %v2488 = vunpack.c.h.b16 %v439
    %v2489 = vunpack.c.l.b16 %v440
    %v2490 = vunpack.c.h.b16 %v440
    %v2491 = vunpack.c.l.b16 %v441
    %v2492 = vunpack.c.h.b16 %v441
    %v2493 = vunpack.c.l.b16 %v442
    %v2494 = vunpack.c.h.b16 %v442
    %v2495 = vunpack.c.l.b16 %v443
    %v2496 = vunpack.c.h.b16 %v443
    %v2497 = vunpack.c.l.b16 %v444
    %v2498 = vunpack.c.h.b16 %v444
    %v2499 = vunpack.c.l.b16 %v445
    %v2500 = vunpack.c.h.b16 %v445
    %v2501 = vunpack.c.l.b16 %v446
    %v2502 = vunpack.c.h.b16 %v446
    %v2503 = vunpack.c.l.b16 %v447
    %v2504 = vunpack.c.h.b16 %v447
    %v2505 = vunpack.c.l.b16 %v448
    %v2506 = vunpack.c.h.b16 %v448
    %v2507 = vunpack.c.l.b16 %v449
    %v2508 = vunpack.c.h.b16 %v449
    %v2509 = vunpack.c.l.b16 %v450
    %v2510 = vunpack.c.h.b16 %v450
    %v2511 = vunpack.c.l.b16 %v451
    %v2512 = vunpack.c.h.b16 %v451
    %v2513 = vunpack.c.l.b16 %v452
    %v2514 = vunpack.c.h.b16 %v452
    %v2515 = vunpack.c.l.b16 %v453
    %v2516 = vunpack.c.h.b16 %v453
    %v2517 = vunpack.c.l.b16 %v454
    %v2518 = vunpack.c.h.b16 %v454
    %v2519 = vunpack.c.l.b16 %v455
    %v2520 = vunpack.c.h.b16 %v455
    %v2521 = vunpack.c.l.b16 %v456
    %v2522 = vunpack.c.h.b16 %v456
    %v2523 = vunpack.c.l.b16 %v457
    %v2524 = vunpack.c.h.b16 %v457
    %v2525 = vunpack.c.l.b16 %v458
    %v2526 = vunpack.c.h.b16 %v458
    %v2527 = vunpack.c.l.b16 %v459
    %v2528 = vunpack.c.h.b16 %v459
    %v2529 = vunpack.c.l.b16 %v460
    %v2530 = vunpack.c.h.b16 %v460
    %v2531 = vunpack.c.l.b16 %v461
    %v2532 = vunpack.c.h.b16 %v461
    %v2533 = vunpack.c.l.b16 %v462
    %v2534 = vunpack.c.h.b16 %v462
    %v2535 = vunpack.c.l.b16 %v463
    %v2536 = vunpack.c.h.b16 %v463
    %v2537 = vunpack.c.l.b16 %v464
    %v2538 = vunpack.c.h.b16 %v464
    %v2539 = vunpack.c.l.b16 %v465
    %v2540 = vunpack.c.h.b16 %v465
    %v2541 = vunpack.c.l.b16 %v466
    %v2542 = vunpack.c.h.b16 %v466
    %v2543 = vunpack.c.l.b16 %v467
    %v2544 = vunpack.c.h.b16 %v467
    %v2545 = vunpack.c.l.b16 %v468
    %v2546 = vunpack.c.h.b16 %v468
    %v2547 = vunpack.c.l.b16 %v469
    %v2548 = vunpack.c.h.b16 %v469
    %v2549 = vunpack.c.l.b16 %v470
    %v2550 = vunpack.c.h.b16 %v470
    %v2551 = vunpack.c.l.b16 %v471
    %v2552 = vunpack.c.h.b16 %v471
    %v2553 = vunpack.c.l.b16 %v472
    %v2554 = vunpack.c.h.b16 %v472
    %v2555 = vunpack.c.l.b16 %v473
    %v2556 = vunpack.c.h.b16 %v473
    %v2557 = vunpack.c.l.b16 %v474
    %v2558 = vunpack.c.h.b16 %v474
    %v2559 = vunpack.c.l.b16 %v475
    %v2560 = vunpack.c.h.b16 %v475
    %v2561 = vunpack.c.l.b16 %v476
    %v2562 = vunpack.c.h.b16 %v476
    %v2563 = vunpack.c.l.b16 %v477
    %v2564 = vunpack.c.h.b16 %v477
    %v2565 = vunpack.c.l.b16 %v478
    %v2566 = vunpack.c.h.b16 %v478
    %v2567 = vunpack.c.l.b16 %v479
    %v2568 = vunpack.c.h.b16 %v479
    %v2569 = vunpack.c.l.b16 %v480
    %v2570 = vunpack.c.h.b16 %v480
    %v2571 = vunpack.c.l.b16 %v481
    %v2572 = vunpack.c.h.b16 %v481
    %v2573 = vunpack.c.l.b16 %v482
    %v2574 = vunpack.c.h.b16 %v482
    %v2575 = vunpack.c.l.b16 %v483
    %v2576 = vunpack.c.h.b16 %v483
    %v2577 = vunpack.c.l.b16 %v484
    %v2578 = vunpack.c.h.b16 %v484
    %v2579 = vunpack.c.l.b16 %v485
    %v2580 = vunpack.c.h.b16 %v485
    %v2581 = vunpack.c.l.b16 %v486
    %v2582 = vunpack.c.h.b16 %v486
    %v2583 = vunpack.c.l.b16 %v487
    %v2584 = vunpack.c.h.b16 %v487
    %v2585 = vunpack.c.l.b16 %v488
    %v2586 = vunpack.c.h.b16 %v488
    %v2587 = vunpack.c.l.b16 %v489
    %v2588 = vunpack.c.h.b16 %v489
    %v2589 = vunpack.c.l.b16 %v490
    %v2590 = vunpack.c.h.b16 %v490
    %v2591 = vunpack.c.l.b16 %v491
    %v2592 = vunpack.c.h.b16 %v491
    %v2593 = vunpack.c.l.b16 %v492
    %v2594 = vunpack.c.h.b16 %v492
    %v2595 = vunpack.c.l.b16 %v493
    %v2596 = vunpack.c.h.b16 %v493
    %v2597 = vunpack.c.l.b16 %v494
    %v2598 = vunpack.c.h.b16 %v494
    %v2599 = vunpack.c.l.b16 %v495
    %v2600 = vunpack.c.h.b16 %v495
    %v2601 = vunpack.c.l.b16 %v496
    %v2602 = vunpack.c.h.b16 %v496
    %v2603 = vunpack.c.l.b16 %v497
    %v2604 = vunpack.c.h.b16 %v497
    %v2605 = vunpack.c.l.b16 %v498
    %v2606 = vunpack.c.h.b16 %v498
    %v2607 = vunpack.c.l.b16 %v499
    %v2608 = vunpack.c.h.b16 %v499
    %v2609 = vunpack.c.l.b16 %v500
    %v2610 = vunpack.c.h.b16 %v500
    %v2611 = vunpack.c.l.b16 %v501
    %v2612 = vunpack.c.h.b16 %v501
    %v2613 = vunpack.c.l.b16 %v502
    %v2614 = vunpack.c.h.b16 %v502
    %v2615 = vunpack.c.l.b16 %v503
    %v2616 = vunpack.c.h.b16 %v503
    %v2617 = vunpack.c.l.b16 %v504
    %v2618 = vunpack.c.h.b16 %v504
    %v2619 = vunpack.c.l.b16 %v505
    %v2620 = vunpack.c.h.b16 %v505
    %v2621 = vunpack.c.l.b16 %v506
    %v2622 = vunpack.c.h.b16 %v506
    %v2623 = vunpack.c.l.b16 %v507
    %v2624 = vunpack.c.h.b16 %v507
    %v2625 = vunpack.c.l.b16 %v508
    %v2626 = vunpack.c.h.b16 %v508
    %v2627 = vunpack.c.l.b16 %v509
    %v2628 = vunpack.c.h.b16 %v509
    %v2629 = vunpack.c.l.b16 %v510
    %v2630 = vunpack.c.h.b16 %v510
    %v2631 = vunpack.c.l.b16 %v511
    %v2632 = vunpack.c.h.b16 %v511
    %v2633 = vunpack.c.l.b16 %v512
    %v2634 = vunpack.c.h.b16 %v512
    %v2635 = vunpack.c.l.b16 %v513
    %v2636 = vunpack.c.h.b16 %v513
    %v2637 = vunpack.c.l.b16 %v514
    %v2638 = vunpack.c.h.b16 %v514
    %v2639 = vunpack.c.l.b16 %v515
    %v2640 = vunpack.c.h.b16 %v515
    %v2641 = vunpack.c.l.b16 %v516
    %v2642 = vunpack.c.h.b16 %v516
    %v2643 = vunpack.c.l.b16 %v517
    %v2644 = vunpack.c.h.b16 %v517
    %v2645 = vunpack.c.l.b16 %v518
    %v2646 = vunpack.c.h.b16 %v518
    %v2647 = vunpack.c.l.b16 %v519
    %v2648 = vunpack.c.h.b16 %v519
    %v2649 = vunpack.c.l.b16 %v520
    %v2650 = vunpack.c.h.b16 %v520
    %v2651 = vunpack.c.l.b16 %v521
    %v2652 = vunpack.c.h.b16 %v521
    %v2653 = vunpack.c.l.b16 %v522
    %v2654 = vunpack.c.h.b16 %v522
    %v2655 = vunpack.c.l.b16 %v523
    %v2656 = vunpack.c.h.b16 %v523
    %v2657 = vunpack.c.l.b16 %v524
    %v2658 = vunpack.c.h.b16 %v524
    %v2659 = vunpack.c.l.b16 %v525
    %v2660 = vunpack.c.h.b16 %v525
    %v2661 = vunpack.c.l.b16 %v526
    %v2662 = vunpack.c.h.b16 %v526
    %v2663 = vunpack.c.l.b16 %v527
    %v2664 = vunpack.c.h.b16 %v527
    %v2665 = vunpack.c.l.b16 %v528
    %v2666 = vunpack.c.h.b16 %v528
    %v2667 = vunpack.c.l.b16 %v529
    %v2668 = vunpack.c.h.b16 %v529
    %v2669 = vunpack.c.l.b16 %v530
    %v2670 = vunpack.c.h.b16 %v530
    %v2671 = vunpack.c.l.b16 %v531
    %v2672 = vunpack.c.h.b16 %v531
    %v2673 = vunpack.c.l.b16 %v532
    %v2674 = vunpack.c.h.b16 %v532
    %v2675 = vunpack.c.l.b16 %v533
    %v2676 = vunpack.c.h.b16 %v533
    %v2677 = vunpack.c.l.b16 %v534
    %v2678 = vunpack.c.h.b16 %v534
    %v2679 = vunpack.c.l.b16 %v535
    %v2680 = vunpack.c.h.b16 %v535
    %v2681 = vunpack.c.l.b16 %v536
    %v2682 = vunpack.c.h.b16 %v536
    %v2683 = vunpack.c.l.b16 %v537
    %v2684 = vunpack.c.h.b16 %v537
    %v2685 = vunpack.c.l.b16 %v538
    %v2686 = vunpack.c.h.b16 %v538
    %v2687 = vunpack.c.l.b16 %v539
    %v2688 = vunpack.c.h.b16 %v539
    %v2689 = vunpack.c.l.b16 %v540
    %v2690 = vunpack.c.h.b16 %v540
    %v2691 = vunpack.c.l.b16 %v541
    %v2692 = vunpack.c.h.b16 %v541
    %v2693 = vunpack.c.l.b16 %v542
    %v2694 = vunpack.c.h.b16 %v542
    %v2695 = vunpack.c.l.b16 %v543
    %v2696 = vunpack.c.h.b16 %v543
    %v2697 = vunpack.c.l.b16 %v544
    %v2698 = vunpack.c.h.b16 %v544
    %v2699 = vunpack.c.l.b16 %v545
    %v2700 = vunpack.c.h.b16 %v545
    %v2701 = vunpack.c.l.b16 %v546
    %v2702 = vunpack.c.h.b16 %v546
    %v2703 = vunpack.c.l.b16 %v547
    %v2704 = vunpack.c.h.b16 %v547
    %v2705 = vunpack.c.l.b16 %v548
    %v2706 = vunpack.c.h.b16 %v548
    %v2707 = vunpack.c.l.b16 %v549
    %v2708 = vunpack.c.h.b16 %v549
    %v2709 = vunpack.c.l.b16 %v550
    %v2710 = vunpack.c.h.b16 %v550
    %v2711 = vunpack.c.l.b16 %v551
    %v2712 = vunpack.c.h.b16 %v551
    %v2713 = vunpack.c.l.b16 %v552
    %v2714 = vunpack.c.h.b16 %v552
    %v2715 = vunpack.c.l.b16 %v553
    %v2716 = vunpack.c.h.b16 %v553
    %v2717 = vunpack.c.l.b16 %v554
    %v2718 = vunpack.c.h.b16 %v554
    %v2719 = vunpack.c.l.b16 %v555
    %v2720 = vunpack.c.h.b16 %v555
    %v2721 = vunpack.c.l.b16 %v556
    %v2722 = vunpack.c.h.b16 %v556
    %v2723 = vunpack.c.l.b16 %v557
    %v2724 = vunpack.c.h.b16 %v557
    %v2725 = vunpack.c.l.b16 %v558
    %v2726 = vunpack.c.h.b16 %v558
    %v2727 = vunpack.c.l.b16 %v559
    %v2728 = vunpack.c.h.b16 %v559
    %v2729 = vunpack.c.l.b16 %v560
    %v2730 = vunpack.c.h.b16 %v560
    %v2731 = vunpack.c.l.b16 %v561
    %v2732 = vunpack.c.h.b16 %v561
    %v2733 = vunpack.c.l.b16 %v562
    %v2734 = vunpack.c.h.b16 %v562
    %v2735 = vunpack.c.l.b16 %v563
    %v2736 = vunpack.c.h.b16 %v563
    %v2737 = vunpack.c.l.b16 %v564
    %v2738 = vunpack.c.h.b16 %v564
    %v2739 = vunpack.c.l.b16 %v565
    %v2740 = vunpack.c.h.b16 %v565
    %v2741 = vunpack.c.l.b16 %v566
    %v2742 = vunpack.c.h.b16 %v566
    %v2743 = vunpack.c.l.b16 %v567
    %v2744 = vunpack.c.h.b16 %v567
    %v2745 = vunpack.c.l.b16 %v568
    %v2746 = vunpack.c.h.b16 %v568
    %v2747 = vunpack.c.l.b16 %v569
    %v2748 = vunpack.c.h.b16 %v569
    %v2749 = vunpack.c.l.b16 %v570
    %v2750 = vunpack.c.h.b16 %v570
    %v2751 = vunpack.c.l.b16 %v571
    %v2752 = vunpack.c.h.b16 %v571
    %v2753 = vunpack.c.l.b16 %v572
    %v2754 = vunpack.c.h.b16 %v572
    %v2755 = vunpack.c.l.b16 %v573
    %v2756 = vunpack.c.h.b16 %v573
    %v2757 = vunpack.c.l.b16 %v574
    %v2758 = vunpack.c.h.b16 %v574
    %v2759 = vunpack.c.l.b16 %v575
    %v2760 = vunpack.c.h.b16 %v575
    %v2761 = vunpack.c.l.b16 %v576
    %v2762 = vunpack.c.h.b16 %v576
    %v2763 = vunpack.c.l.b16 %v577
    %v2764 = vunpack.c.h.b16 %v577
    %v2765 = vunpack.c.l.b16 %v578
    %v2766 = vunpack.c.h.b16 %v578
    %v2767 = vunpack.c.l.b16 %v579
    %v2768 = vunpack.c.h.b16 %v579
    %v2769 = vunpack.c.l.b16 %v580
    %v2770 = vunpack.c.h.b16 %v580
    %v2771 = vunpack.c.l.b16 %v581
    %v2772 = vunpack.c.h.b16 %v581
    %v2773 = vunpack.c.l.b16 %v582
    %v2774 = vunpack.c.h.b16 %v582
    %v2775 = vunpack.c.l.b16 %v583
    %v2776 = vunpack.c.h.b16 %v583
    %v2777 = vunpack.c.l.b16 %v584
    %v2778 = vunpack.c.h.b16 %v584
    %v2779 = vunpack.c.l.b16 %v585
    %v2780 = vunpack.c.h.b16 %v585
    %v2781 = vunpack.c.l.b16 %v586
    %v2782 = vunpack.c.h.b16 %v586
    %v2783 = vunpack.c.l.b16 %v587
    %v2784 = vunpack.c.h.b16 %v587
    %v2785 = vunpack.c.l.b16 %v588
    %v2786 = vunpack.c.h.b16 %v588
    %v2787 = vunpack.c.l.b16 %v589
    %v2788 = vunpack.c.h.b16 %v589
    %v2789 = vunpack.c.l.b16 %v590
    %v2790 = vunpack.c.h.b16 %v590
    %v2791 = vunpack.c.l.b16 %v591
    %v2792 = vunpack.c.h.b16 %v591
    %v2793 = vunpack.c.l.b16 %v592
    %v2794 = vunpack.c.h.b16 %v592
    %v2795 = vunpack.c.l.b16 %v593
    %v2796 = vunpack.c.h.b16 %v593
    %v2797 = vunpack.c.l.b16 %v594
    %v2798 = vunpack.c.h.b16 %v594
    %v2799 = vunpack.c.l.b16 %v595
    %v2800 = vunpack.c.h.b16 %v595
    %v2801 = vunpack.c.l.b16 %v596
    %v2802 = vunpack.c.h.b16 %v596
    %v2803 = vunpack.c.l.b16 %v597
    %v2804 = vunpack.c.h.b16 %v597
    %v2805 = vunpack.c.l.b16 %v598
    %v2806 = vunpack.c.h.b16 %v598
    %v2807 = vunpack.c.l.b16 %v599
    %v2808 = vunpack.c.h.b16 %v599
    %v2809 = vunpack.c.l.b16 %v600
    %v2810 = vunpack.c.h.b16 %v600
    %v2811 = vunpack.c.l.b16 %v601
    %v2812 = vunpack.c.h.b16 %v601
    %v2813 = vunpack.c.l.b16 %v602
    %v2814 = vunpack.c.h.b16 %v602
    %v2815 = vunpack.c.l.b16 %v603
    %v2816 = vunpack.c.h.b16 %v603
    %v2817 = vunpack.c.l.b16 %v604
    %v2818 = vunpack.c.h.b16 %v604
    %v2819 = vunpack.c.l.b16 %v605
    %v2820 = vunpack.c.h.b16 %v605
    %v2821 = vunpack.c.l.b16 %v606
    %v2822 = vunpack.c.h.b16 %v606
    %v2823 = vunpack.c.l.b16 %v607
    %v2824 = vunpack.c.h.b16 %v607
    %v2825 = vunpack.c.l.b16 %v608
    %v2826 = vunpack.c.h.b16 %v608
    %v2827 = vunpack.c.l.b16 %v609
    %v2828 = vunpack.c.h.b16 %v609
    %v2829 = vunpack.c.l.b16 %v610
    %v2830 = vunpack.c.h.b16 %v610
    %v2831 = vunpack.c.l.b16 %v611
    %v2832 = vunpack.c.h.b16 %v611
    %v2833 = vunpack.c.l.b16 %v612
    %v2834 = vunpack.c.h.b16 %v612
    %v2835 = vunpack.c.l.b16 %v613
    %v2836 = vunpack.c.h.b16 %v613
    %v2837 = vunpack.c.l.b16 %v614
    %v2838 = vunpack.c.h.b16 %v614
    %v2839 = vunpack.c.l.b16 %v615
    %v2840 = vunpack.c.h.b16 %v615
    %v2841 = vunpack.c.l.b16 %v616
    %v2842 = vunpack.c.h.b16 %v616
    %v2843 = vunpack.c.l.b16 %v617
    %v2844 = vunpack.c.h.b16 %v617
    %v2845 = vunpack.c.l.b16 %v618
    %v2846 = vunpack.c.h.b16 %v618
    %v2847 = vunpack.c.l.b16 %v619
    %v2848 = vunpack.c.h.b16 %v619
    %v2849 = vunpack.c.l.b16 %v620
    %v2850 = vunpack.c.h.b16 %v620
    %v2851 = vunpack.c.l.b16 %v621
    %v2852 = vunpack.c.h.b16 %v621
    %v2853 = vunpack.c.l.b16 %v622
    %v2854 = vunpack.c.h.b16 %v622
    %v2855 = vunpack.c.l.b16 %v623
    %v2856 = vunpack.c.h.b16 %v623
    %v2857 = vunpack.c.l.b16 %v624
    %v2858 = vunpack.c.h.b16 %v624
    %v2859 = vunpack.c.l.b16 %v625
    %v2860 = vunpack.c.h.b16 %v625
    %v2861 = vunpack.c.l.b16 %v626
    %v2862 = vunpack.c.h.b16 %v626
    %v2863 = vunpack.c.l.b16 %v627
    %v2864 = vunpack.c.h.b16 %v627
    %v2865 = vunpack.c.l.b16 %v628
    %v2866 = vunpack.c.h.b16 %v628
    %v2867 = vunpack.c.l.b16 %v629
    %v2868 = vunpack.c.h.b16 %v629
    %v2869 = vunpack.c.l.b16 %v630
    %v2870 = vunpack.c.h.b16 %v630
    %v2871 = vunpack.c.l.b16 %v631
    %v2872 = vunpack.c.h.b16 %v631
    %v2873 = vunpack.c.l.b16 %v632
    %v2874 = vunpack.c.h.b16 %v632
    %v2875 = vunpack.c.l.b16 %v633
    %v2876 = vunpack.c.h.b16 %v633
    %v2877 = vunpack.c.l.b16 %v634
    %v2878 = vunpack.c.h.b16 %v634
    %v2879 = vunpack.c.l.b16 %v635
    %v2880 = vunpack.c.h.b16 %v635
    %v2881 = vunpack.c.l.b16 %v636
    %v2882 = vunpack.c.h.b16 %v636
    %v2883 = vunpack.c.l.b16 %v637
    %v2884 = vunpack.c.h.b16 %v637
    %v2885 = vunpack.c.l.b16 %v638
    %v2886 = vunpack.c.h.b16 %v638
    %v2887 = vunpack.c.l.b16 %v639
    %v2888 = vunpack.c.h.b16 %v639
    %v2889 = vunpack.c.l.b16 %v640
    %v2890 = vunpack.c.h.b16 %v640
    %v2891 = vunpack.c.l.b16 %v641
    %v2892 = vunpack.c.h.b16 %v641
    %v2893 = vunpack.c.l.b16 %v642
    %v2894 = vunpack.c.h.b16 %v642
    %v2895 = vunpack.c.l.b16 %v643
    %v2896 = vunpack.c.h.b16 %v643
    %v2897 = vunpack.c.l.b16 %v644
    %v2898 = vunpack.c.h.b16 %v644
    %v2899 = vunpack.c.l.b16 %v645
    %v2900 = vunpack.c.h.b16 %v645
    %v2901 = vunpack.c.l.b16 %v646
    %v2902 = vunpack.c.h.b16 %v646
    %v2903 = vunpack.c.l.b16 %v647
    %v2904 = vunpack.c.h.b16 %v647
    %v2905 = vunpack.c.l.b16 %v648
    %v2906 = vunpack.c.h.b16 %v648
    %v2907 = vunpack.c.l.b16 %v649
    %v2908 = vunpack.c.h.b16 %v649
    %v2909 = vunpack.c.l.b16 %v650
    %v2910 = vunpack.c.h.b16 %v650
    %v2911 = vunpack.c.l.b16 %v651
    %v2912 = vunpack.c.h.b16 %v651
    %v2913 = vunpack.c.l.b16 %v652
    %v2914 = vunpack.c.h.b16 %v652
    %v2915 = vunpack.c.l.b16 %v653
    %v2916 = vunpack.c.h.b16 %v653
    %v2917 = vunpack.c.l.b16 %v654
    %v2918 = vunpack.c.h.b16 %v654
    %v2919 = vunpack.c.l.b16 %v655
    %v2920 = vunpack.c.h.b16 %v655
    %v2921 = vunpack.c.l.b16 %v656
    %v2922 = vunpack.c.h.b16 %v656
    %v2923 = vunpack.c.l.b16 %v657
    %v2924 = vunpack.c.h.b16 %v657
    %v2925 = vunpack.c.l.b16 %v658
    %v2926 = vunpack.c.h.b16 %v658
    %v2927 = vunpack.c.l.b16 %v659
    %v2928 = vunpack.c.h.b16 %v659
    %v2929 = vunpack.c.l.b16 %v660
    %v2930 = vunpack.c.h.b16 %v660
    %v2931 = vunpack.c.l.b16 %v661
    %v2932 = vunpack.c.h.b16 %v661
    %v2933 = vunpack.c.l.b16 %v662
    %v2934 = vunpack.c.h.b16 %v662
    %v2935 = vunpack.c.l.b16 %v663
    %v2936 = vunpack.c.h.b16 %v663
    %v2937 = vunpack.c.l.b16 %v664
    %v2938 = vunpack.c.h.b16 %v664
    %v2939 = vunpack.c.l.b16 %v665
    %v2940 = vunpack.c.h.b16 %v665
    %v2941 = vunpack.c.l.b16 %v666
    %v2942 = vunpack.c.h.b16 %v666
    %v2943 = vunpack.c.l.b16 %v667
    %v2944 = vunpack.c.h.b16 %v667
    %v2945 = vunpack.c.l.b16 %v668
    %v2946 = vunpack.c.h.b16 %v668
    %v2947 = vunpack.c.l.b16 %v669
    %v2948 = vunpack.c.h.b16 %v669
    %v2949 = vunpack.c.l.b16 %v670
    %v2950 = vunpack.c.h.b16 %v670
    %v2951 = vunpack.c.l.b16 %v671
    %v2952 = vunpack.c.h.b16 %v671
    %v2953 = vunpack.c.l.b16 %v672
    %v2954 = vunpack.c.h.b16 %v672
    %v2955 = vunpack.c.l.b16 %v673
    %v2956 = vunpack.c.h.b16 %v673
    %v2957 = vunpack.c.l.b16 %v674
    %v2958 = vunpack.c.h.b16 %v674
    %v2959 = vunpack.c.l.b16 %v675
    %v2960 = vunpack.c.h.b16 %v675
    %v2961 = vunpack.c.l.b16 %v676
    %v2962 = vunpack.c.h.b16 %v676
    %v2963 = vunpack.c.l.b16 %v677
    %v2964 = vunpack.c.h.b16 %v677
    %v2965 = vunpack.c.l.b16 %v678
    %v2966 = vunpack.c.h.b16 %v678
    %v2967 = vunpack.c.l.b16 %v679
    %v2968 = vunpack.c.h.b16 %v679
    %v2969 = vunpack.c.l.b16 %v680
    %v2970 = vunpack.c.h.b16 %v680
    %v2971 = vunpack.c.l.b16 %v681
    %v2972 = vunpack.c.h.b16 %v681
    %v2973 = vunpack.c.l.b16 %v682
    %v2974 = vunpack.c.h.b16 %v682
    %v2975 = vunpack.c.l.b16 %v683
    %v2976 = vunpack.c.h.b16 %v683
    %v2977 = vunpack.c.l.b16 %v684
    %v2978 = vunpack.c.h.b16 %v684
    %v2979 = vunpack.c.l.b16 %v685
    %v2980 = vunpack.c.h.b16 %v685
    %v2981 = vunpack.c.l.b16 %v686
    %v2982 = vunpack.c.h.b16 %v686
    %v2983 = vunpack.c.l.b16 %v687
    %v2984 = vunpack.c.h.b16 %v687
    %v2985 = vunpack.c.l.b16 %v688
    %v2986 = vunpack.c.h.b16 %v688
    %v2987 = vunpack.c.l.b16 %v689
    %v2988 = vunpack.c.h.b16 %v689
    %v2989 = vunpack.c.l.b16 %v690
    %v2990 = vunpack.c.h.b16 %v690
    %v2991 = vunpack.c.l.b16 %v691
    %v2992 = vunpack.c.h.b16 %v691
    %v2993 = vunpack.c.l.b16 %v692
    %v2994 = vunpack.c.h.b16 %v692
    %v2995 = vunpack.c.l.b16 %v693
    %v2996 = vunpack.c.h.b16 %v693
    %v2997 = vunpack.c.l.b16 %v694
    %v2998 = vunpack.c.h.b16 %v694
    %v2999 = vunpack.c.l.b16 %v695
    %v3000 = vunpack.c.h.b16 %v695
    %v3001 = vunpack.c.l.b16 %v696
    %v3002 = vunpack.c.h.b16 %v696
    %v3003 = vunpack.c.l.b16 %v697
    %v3004 = vunpack.c.h.b16 %v697
    %v3005 = vunpack.c.l.b16 %v698
    %v3006 = vunpack.c.h.b16 %v698
    %v3007 = vunpack.c.l.b16 %v699
    %v3008 = vunpack.c.h.b16 %v699
    %v3009 = vunpack.c.l.b16 %v700
    %v3010 = vunpack.c.h.b16 %v700
    %v3011 = vunpack.c.l.b16 %v701
    %v3012 = vunpack.c.h.b16 %v701
    %v3013 = vunpack.c.l.b16 %v702
    %v3014 = vunpack.c.h.b16 %v702
    %v3015 = vunpack.c.l.b16 %v703
    %v3016 = vunpack.c.h.b16 %v703
    %v3017 = vunpack.c.l.b16 %v704
    %v3018 = vunpack.c.h.b16 %v704
    %v3019 = vunpack.c.l.b16 %v705
    %v3020 = vunpack.c.h.b16 %v705
    %v3021 = vunpack.c.l.b16 %v706
    %v3022 = vunpack.c.h.b16 %v706
    %v3023 = vunpack.c.l.b16 %v707
    %v3024 = vunpack.c.h.b16 %v707
    %v3025 = vunpack.c.l.b16 %v708
    %v3026 = vunpack.c.h.b16 %v708
    %v3027 = vunpack.c.l.b16 %v709
    %v3028 = vunpack.c.h.b16 %v709
    %v3029 = vunpack.c.l.b16 %v710
    %v3030 = vunpack.c.h.b16 %v710
    %v3031 = vunpack.c.l.b16 %v711
    %v3032 = vunpack.c.h.b16 %v711
    %v3033 = vunpack.c.l.b16 %v712
    %v3034 = vunpack.c.h.b16 %v712
    %v3035 = vunpack.c.l.b16 %v713
    %v3036 = vunpack.c.h.b16 %v713
    %v3037 = vunpack.c.l.b16 %v714
    %v3038 = vunpack.c.h.b16 %v714
    %v3039 = vunpack.c.l.b16 %v715
    %v3040 = vunpack.c.h.b16 %v715
    %v3041 = vunpack.c.l.b16 %v716
    %v3042 = vunpack.c.h.b16 %v716
    %v3043 = vunpack.c.l.b16 %v717
    %v3044 = vunpack.c.h.b16 %v717
    %v3045 = vunpack.c.l.b16 %v718
    %v3046 = vunpack.c.h.b16 %v718
    %v3047 = vunpack.c.l.b16 %v719
    %v3048 = vunpack.c.h.b16 %v719
    %v3049 = vunpack.c.l.b16 %v720
    %v3050 = vunpack.c.h.b16 %v720
    %v3051 = vunpack.c.l.b16 %v721
    %v3052 = vunpack.c.h.b16 %v721
    %v3053 = vunpack.c.l.b16 %v722
    %v3054 = vunpack.c.h.b16 %v722
    %v3055 = vunpack.c.l.b16 %v723
    %v3056 = vunpack.c.h.b16 %v723
    %v3057 = vunpack.c.l.b16 %v724
    %v3058 = vunpack.c.h.b16 %v724
    %v3059 = vunpack.c.l.b16 %v725
    %v3060 = vunpack.c.h.b16 %v725
    %v3061 = vunpack.c.l.b16 %v726
    %v3062 = vunpack.c.h.b16 %v726
    %v3063 = vunpack.c.l.b16 %v727
    %v3064 = vunpack.c.h.b16 %v727
    %v3065 = vunpack.c.l.b16 %v728
    %v3066 = vunpack.c.h.b16 %v728
    %v3067 = vunpack.c.l.b16 %v729
    %v3068 = vunpack.c.h.b16 %v729
    %v3069 = vunpack.c.l.b16 %v730
    %v3070 = vunpack.c.h.b16 %v730
    %v3071 = vunpack.c.l.b16 %v731
    %v3072 = vunpack.c.h.b16 %v731
    %v3073 = vunpack.c.l.b16 %v732
    %v3074 = vunpack.c.h.b16 %v732
    %v3075 = vunpack.c.l.b16 %v733
    %v3076 = vunpack.c.h.b16 %v733
    %v3077 = vunpack.c.l.b16 %v734
    %v3078 = vunpack.c.h.b16 %v734
    %v3079 = vunpack.c.l.b16 %v735
    %v3080 = vunpack.c.h.b16 %v735
    %v3081 = vunpack.c.l.b16 %v736
    %v3082 = vunpack.c.h.b16 %v736
    %v3083 = vunpack.c.l.b16 %v737
    %v3084 = vunpack.c.h.b16 %v737
    %v3085 = vunpack.c.l.b16 %v738
    %v3086 = vunpack.c.h.b16 %v738
    %v3087 = vunpack.c.l.b16 %v739
    %v3088 = vunpack.c.h.b16 %v739
    %v3089 = vunpack.c.l.b16 %v740
    %v3090 = vunpack.c.h.b16 %v740
    %v3091 = vunpack.c.l.b16 %v741
    %v3092 = vunpack.c.h.b16 %v741
    %v3093 = vunpack.c.l.b16 %v742
    %v3094 = vunpack.c.h.b16 %v742
    %v3095 = vunpack.c.l.b16 %v743
    %v3096 = vunpack.c.h.b16 %v743
    %v3097 = vunpack.c.l.b16 %v744
    %v3098 = vunpack.c.h.b16 %v744
    %v3099 = vunpack.c.l.b16 %v745
    %v3100 = vunpack.c.h.b16 %v745
    %v3101 = vunpack.c.l.b16 %v746
    %v3102 = vunpack.c.h.b16 %v746
    %v3103 = vunpack.c.l.b16 %v747
    %v3104 = vunpack.c.h.b16 %v747
    %v3105 = vunpack.c.l.b16 %v748
    %v3106 = vunpack.c.h.b16 %v748
    %v3107 = vunpack.c.l.b16 %v749
    %v3108 = vunpack.c.h.b16 %v749
    %v3109 = vunpack.c.l.b16 %v750
    %v3110 = vunpack.c.h.b16 %v750
    %v3111 = vunpack.c.l.b16 %v751
    %v3112 = vunpack.c.h.b16 %v751
    %v3113 = vunpack.c.l.b16 %v752
    %v3114 = vunpack.c.h.b16 %v752
    %v3115 = vunpack.c.l.b16 %v753
    %v3116 = vunpack.c.h.b16 %v753
    %v3117 = vunpack.c.l.b16 %v754
    %v3118 = vunpack.c.h.b16 %v754
    %v3119 = vunpack.c.l.b16 %v755
    %v3120 = vunpack.c.h.b16 %v755
    %v3121 = vunpack.c.l.b16 %v756
    %v3122 = vunpack.c.h.b16 %v756
    %v3123 = vunpack.c.l.b16 %v757
    %v3124 = vunpack.c.h.b16 %v757
    %v3125 = vunpack.c.l.b16 %v758
    %v3126 = vunpack.c.h.b16 %v758
    %v3127 = vunpack.c.l.b16 %v759
    %v3128 = vunpack.c.h.b16 %v759
    %v3129 = vunpack.c.l.b16 %v760
    %v3130 = vunpack.c.h.b16 %v760
    %v3131 = vunpack.c.l.b16 %v761
    %v3132 = vunpack.c.h.b16 %v761
    %v3133 = vunpack.c.l.b16 %v762
    %v3134 = vunpack.c.h.b16 %v762
    %v3135 = vunpack.c.l.b16 %v763
    %v3136 = vunpack.c.h.b16 %v763
    %v3137 = vunpack.c.l.b16 %v764
    %v3138 = vunpack.c.h.b16 %v764
    %v3139 = vunpack.c.l.b16 %v765
    %v3140 = vunpack.c.h.b16 %v765
    %v3141 = vunpack.c.l.b16 %v766
    %v3142 = vunpack.c.h.b16 %v766
    %v3143 = vunpack.c.l.b16 %v767
    %v3144 = vunpack.c.h.b16 %v767
    %v3145 = vunpack.c.l.b16 %v768
    %v3146 = vunpack.c.h.b16 %v768
    %v3147 = vunpack.c.l.b16 %v769
    %v3148 = vunpack.c.h.b16 %v769
    %v3149 = vunpack.c.l.b16 %v770
    %v3150 = vunpack.c.h.b16 %v770
    %v3151 = vunpack.c.l.b16 %v771
    %v3152 = vunpack.c.h.b16 %v771
    %v3153 = vunpack.c.l.b16 %v772
    %v3154 = vunpack.c.h.b16 %v772
    %v3155 = vunpack.c.l.b16 %v773
    %v3156 = vunpack.c.h.b16 %v773
    %v3157 = vunpack.c.l.b16 %v774
    %v3158 = vunpack.c.h.b16 %v774
    %v3159 = vunpack.c.l.b16 %v775
    %v3160 = vunpack.c.h.b16 %v775
    %v3161 = vunpack.c.l.b16 %v776
    %v3162 = vunpack.c.h.b16 %v776
    %v3163 = vunpack.c.l.b16 %v777
    %v3164 = vunpack.c.h.b16 %v777
    %v3165 = vunpack.c.l.b16 %v778
    %v3166 = vunpack.c.h.b16 %v778
    %v3167 = vunpack.c.l.b16 %v779
    %v3168 = vunpack.c.h.b16 %v779
    %v3169 = vunpack.c.l.b16 %v780
    %v3170 = vunpack.c.h.b16 %v780
    %v3171 = vunpack.c.l.b16 %v781
    %v3172 = vunpack.c.h.b16 %v781
    %v3173 = vunpack.c.l.b16 %v782
    %v3174 = vunpack.c.h.b16 %v782
    %v3175 = vunpack.c.l.b16 %v783
    %v3176 = vunpack.c.h.b16 %v783
    %v3177 = vunpack.c.l.b16 %v784
    %v3178 = vunpack.c.h.b16 %v784
    %v3179 = vunpack.c.l.b16 %v785
    %v3180 = vunpack.c.h.b16 %v785
    %v3181 = vunpack.c.l.b16 %v786
    %v3182 = vunpack.c.h.b16 %v786
    %v3183 = vunpack.c.l.b16 %v787
    %v3184 = vunpack.c.h.b16 %v787
    %v3185 = vunpack.c.l.b16 %v788
    %v3186 = vunpack.c.h.b16 %v788
    %v3187 = vunpack.c.l.b16 %v789
    %v3188 = vunpack.c.h.b16 %v789
    %v3189 = vunpack.c.l.b16 %v790
    %v3190 = vunpack.c.h.b16 %v790
    %v3191 = vunpack.c.l.b16 %v791
    %v3192 = vunpack.c.h.b16 %v791
    %v3193 = vunpack.c.l.b16 %v792
    %v3194 = vunpack.c.h.b16 %v792
    %v3195 = vunpack.c.l.b16 %v793
    %v3196 = vunpack.c.h.b16 %v793
    %v3197 = vunpack.c.l.b16 %v794
    %v3198 = vunpack.c.h.b16 %v794
    %v3199 = vunpack.c.l.b16 %v795
    %v3200 = vunpack.c.h.b16 %v795
    %v3201 = vunpack.c.l.b16 %v796
    %v3202 = vunpack.c.h.b16 %v796
    %v3203 = vunpack.c.l.b16 %v797
    %v3204 = vunpack.c.h.b16 %v797
    %v3205 = vunpack.c.l.b16 %v798
    %v3206 = vunpack.c.h.b16 %v798
    %v3207 = vunpack.c.l.b16 %v799
    %v3208 = vunpack.c.h.b16 %v799
    %v3209 = vunpack.c.l.b16 %v800
    %v3210 = vunpack.c.h.b16 %v800
    %v3211 = vunpack.c.l.b16 %v801
    %v3212 = vunpack.c.h.b16 %v801
    %v3213 = vunpack.c.l.b16 %v802
    %v3214 = vunpack.c.h.b16 %v802
    %v3215 = vunpack.c.l.b16 %v803
    %v3216 = vunpack.c.h.b16 %v803
    %v3217 = vunpack.c.l.b16 %v804
    %v3218 = vunpack.c.h.b16 %v804
    %v3219 = vunpack.c.l.b16 %v805
    %v3220 = vunpack.c.h.b16 %v805
    %v3221 = vunpack.c.l.b16 %v806
    %v3222 = vunpack.c.h.b16 %v806
    %v3223 = vunpack.c.l.b16 %v807
    %v3224 = vunpack.c.h.b16 %v807
    %v3225 = vunpack.c.l.b16 %v808
    %v3226 = vunpack.c.h.b16 %v808
    %v3227 = vunpack.c.l.b16 %v809
    %v3228 = vunpack.c.h.b16 %v809
    %v3229 = vpack.c.b16 %v1665, %v1661
    %v3230 = vpack.c.b16 %v1666, %v1662
    %v3231 = vpack.c.b16 %v1667, %v1663
    %v3232 = vpack.c.b16 %v1668, %v1664
    %v3233 = vpack.c.b16 %v1673, %v1669
    %v3234 = vpack.c.b16 %v1674, %v1670
    %v3235 = vpack.c.b16 %v1675, %v1671
    %v3236 = vpack.c.b16 %v1676, %v1672
    %v3237 = vpack.c.b16 %v1681, %v1677
    %v3238 = vpack.c.b16 %v1682, %v1678
    %v3239 = vpack.c.b16 %v1683, %v1679
    %v3240 = vpack.c.b16 %v1684, %v1680
    %v3241 = vpack.c.b16 %v1689, %v1685
    %v3242 = vpack.c.b16 %v1690, %v1686
    %v3243 = vpack.c.b16 %v1691, %v1687
    %v3244 = vpack.c.b16 %v1692, %v1688
    %v3245 = vpack.c.b16 %v1697, %v1693
    %v3246 = vpack.c.b16 %v1698, %v1694
    %v3247 = vpack.c.b16 %v1699, %v1695
    %v3248 = vpack.c.b16 %v1700, %v1696
    %v3249 = vpack.c.b16 %v1705, %v1701
    %v3250 = vpack.c.b16 %v1706, %v1702
    %v3251 = vpack.c.b16 %v1707, %v1703
    %v3252 = vpack.c.b16 %v1708, %v1704
    %v3253 = vpack.c.b16 %v1713, %v1709
    %v3254 = vpack.c.b16 %v1714, %v1710
    %v3255 = vpack.c.b16 %v1715, %v1711
    %v3256 = vpack.c.b16 %v1716, %v1712
    %v3257 = vpack.c.b16 %v1721, %v1717
    %v3258 = vpack.c.b16 %v1722, %v1718
    %v3259 = vpack.c.b16 %v1723, %v1719
    %v3260 = vpack.c.b16 %v1724, %v1720
    %v3261 = vpack.c.b16 %v1729, %v1725
    %v3262 = vpack.c.b16 %v1730, %v1726
    %v3263 = vpack.c.b16 %v1731, %v1727
    %v3264 = vpack.c.b16 %v1732, %v1728
    %v3265 = vpack.c.b16 %v1737, %v1733
    %v3266 = vpack.c.b16 %v1738, %v1734
    %v3267 = vpack.c.b16 %v1739, %v1735
    %v3268 = vpack.c.b16 %v1740, %v1736
    %v3269 = vpack.c.b16 %v1745, %v1741
    %v3270 = vpack.c.b16 %v1746, %v1742
    %v3271 = vpack.c.b16 %v1747, %v1743
    %v3272 = vpack.c.b16 %v1748, %v1744
    %v3273 = vpack.c.b16 %v1753, %v1749
    %v3274 = vpack.c.b16 %v1754, %v1750
    %v3275 = vpack.c.b16 %v1755, %v1751
    %v3276 = vpack.c.b16 %v1756, %v1752
    %v3277 = vpack.c.b16 %v1761, %v1757
    %v3278 = vpack.c.b16 %v1762, %v1758
    %v3279 = vpack.c.b16 %v1763, %v1759
    %v3280 = vpack.c.b16 %v1764, %v1760
    %v3281 = vpack.c.b16 %v1769, %v1765
    %v3282 = vpack.c.b16 %v1770, %v1766
    %v3283 = vpack.c.b16 %v1771, %v1767
    %v3284 = vpack.c.b16 %v1772, %v1768
    %v3285 = vpack.c.b16 %v1777, %v1773
    %v3286 = vpack.c.b16 %v1778, %v1774
    %v3287 = vpack.c.b16 %v1779, %v1775
    %v3288 = vpack.c.b16 %v1780, %v1776
    %v3289 = vpack.c.b16 %v1785, %v1781
    %v3290 = vpack.c.b16 %v1786, %v1782
    %v3291 = vpack.c.b16 %v1787, %v1783
    %v3292 = vpack.c.b16 %v1788, %v1784
    %v3293 = vpack.c.b16 %v1793, %v1789
    %v3294 = vpack.c.b16 %v1794, %v1790
    %v3295 = vpack.c.b16 %v1795, %v1791
    %v3296 = vpack.c.b16 %v1796, %v1792
    %v3297 = vpack.c.b16 %v1801, %v1797
    %v3298 = vpack.c.b16 %v1802, %v1798
    %v3299 = vpack.c.b16 %v1803, %v1799
    %v3300 = vpack.c.b16 %v1804, %v1800
    %v3301 = vpack.c.b16 %v1809, %v1805
    %v3302 = vpack.c.b16 %v1810, %v1806
    %v3303 = vpack.c.b16 %v1811, %v1807
    %v3304 = vpack.c.b16 %v1812, %v1808
    %v3305 = vpack.c.b16 %v1817, %v1813
    %v3306 = vpack.c.b16 %v1818, %v1814
    %v3307 = vpack.c.b16 %v1819, %v1815
    %v3308 = vpack.c.b16 %v1820, %v1816
    %v3309 = vpack.c.b16 %v1825, %v1821
    %v3310 = vpack.c.b16 %v1826, %v1822
    %v3311 = vpack.c.b16 %v1827, %v1823
    %v3312 = vpack.c.b16 %v1828, %v1824
    %v3313 = vpack.c.b16 %v1833, %v1829
    %v3314 = vpack.c.b16 %v1834, %v1830
    %v3315 = vpack.c.b16 %v1835, %v1831
    %v3316 = vpack.c.b16 %v1836, %v1832
    %v3317 = vpack.c.b16 %v1841, %v1837
    %v3318 = vpack.c.b16 %v1842, %v1838
    %v3319 = vpack.c.b16 %v1843, %v1839
    %v3320 = vpack.c.b16 %v1844, %v1840
    %v3321 = vpack.c.b16 %v1849, %v1845
    %v3322 = vpack.c.b16 %v1850, %v1846
    %v3323 = vpack.c.b16 %v1851, %v1847
    %v3324 = vpack.c.b16 %v1852, %v1848
    %v3325 = vpack.c.b16 %v1857, %v1853
    %v3326 = vpack.c.b16 %v1858, %v1854
    %v3327 = vpack.c.b16 %v1859, %v1855
    %v3328 = vpack.c.b16 %v1860, %v1856
    %v3329 = vpack.c.b16 %v1865, %v1861
    %v3330 = vpack.c.b16 %v1866, %v1862
    %v3331 = vpack.c.b16 %v1867, %v1863
    %v3332 = vpack.c.b16 %v1868, %v1864
    %v3333 = vpack.c.b16 %v1873, %v1869
    %v3334 = vpack.c.b16 %v1874, %v1870
    %v3335 = vpack.c.b16 %v1875, %v1871
    %v3336 = vpack.c.b16 %v1876, %v1872
    %v3337 = vpack.c.b16 %v1881, %v1877
    %v3338 = vpack.c.b16 %v1882, %v1878
    %v3339 = vpack.c.b16 %v1883, %v1879
    %v3340 = vpack.c.b16 %v1884, %v1880
    %v3341 = vpack.c.b16 %v1889, %v1885
    %v3342 = vpack.c.b16 %v1890, %v1886
    %v3343 = vpack.c.b16 %v1891, %v1887
    %v3344 = vpack.c.b16 %v1892, %v1888
    %v3345 = vpack.c.b16 %v1897, %v1893
    %v3346 = vpack.c.b16 %v1898, %v1894
    %v3347 = vpack.c.b16 %v1899, %v1895
    %v3348 = vpack.c.b16 %v1900, %v1896
    %v3349 = vpack.c.b16 %v1905, %v1901
    %v3350 = vpack.c.b16 %v1906, %v1902
    %v3351 = vpack.c.b16 %v1907, %v1903
    %v3352 = vpack.c.b16 %v1908, %v1904
    %v3353 = vpack.c.b16 %v1913, %v1909
    %v3354 = vpack.c.b16 %v1914, %v1910
    %v3355 = vpack.c.b16 %v1915, %v1911
    %v3356 = vpack.c.b16 %v1916, %v1912
    %v3357 = vpack.c.b16 %v1921, %v1917
    %v3358 = vpack.c.b16 %v1922, %v1918
    %v3359 = vpack.c.b16 %v1923, %v1919
    %v3360 = vpack.c.b16 %v1924, %v1920
    %v3361 = vpack.c.b16 %v1929, %v1925
    %v3362 = vpack.c.b16 %v1930, %v1926
    %v3363 = vpack.c.b16 %v1931, %v1927
    %v3364 = vpack.c.b16 %v1932, %v1928
    %v3365 = vpack.c.b16 %v1937, %v1933
    %v3366 = vpack.c.b16 %v1938, %v1934
    %v3367 = vpack.c.b16 %v1939, %v1935
    %v3368 = vpack.c.b16 %v1940, %v1936
    %v3369 = vpack.c.b16 %v1945, %v1941
    %v3370 = vpack.c.b16 %v1946, %v1942
    %v3371 = vpack.c.b16 %v1947, %v1943
    %v3372 = vpack.c.b16 %v1948, %v1944
    %v3373 = vpack.c.b16 %v1953, %v1949
    %v3374 = vpack.c.b16 %v1954, %v1950
    %v3375 = vpack.c.b16 %v1955, %v1951
    %v3376 = vpack.c.b16 %v1956, %v1952
    %v3377 = vpack.c.b16 %v1961, %v1957
    %v3378 = vpack.c.b16 %v1962, %v1958
    %v3379 = vpack.c.b16 %v1963, %v1959
    %v3380 = vpack.c.b16 %v1964, %v1960
    %v3381 = vpack.c.b16 %v1969, %v1965
    %v3382 = vpack.c.b16 %v1970, %v1966
    %v3383 = vpack.c.b16 %v1971, %v1967
    %v3384 = vpack.c.b16 %v1972, %v1968
    %v3385 = vpack.c.b16 %v1977, %v1973
    %v3386 = vpack.c.b16 %v1978, %v1974
    %v3387 = vpack.c.b16 %v1979, %v1975
    %v3388 = vpack.c.b16 %v1980, %v1976
    %v3389 = vpack.c.b16 %v1985, %v1981
    %v3390 = vpack.c.b16 %v1986, %v1982
    %v3391 = vpack.c.b16 %v1987, %v1983
    %v3392 = vpack.c.b16 %v1988, %v1984
    %v3393 = vpack.c.b16 %v1993, %v1989
    %v3394 = vpack.c.b16 %v1994, %v1990
    %v3395 = vpack.c.b16 %v1995, %v1991
    %v3396 = vpack.c.b16 %v1996, %v1992
    %v3397 = vpack.c.b16 %v2001, %v1997
    %v3398 = vpack.c.b16 %v2002, %v1998
    %v3399 = vpack.c.b16 %v2003, %v1999
    %v3400 = vpack.c.b16 %v2004, %v2000
    %v3401 = vpack.c.b16 %v2009, %v2005
    %v3402 = vpack.c.b16 %v2010, %v2006
    %v3403 = vpack.c.b16 %v2011, %v2007
    %v3404 = vpack.c.b16 %v2012, %v2008
    %v3405 = vpack.c.b16 %v2017, %v2013
    %v3406 = vpack.c.b16 %v2018, %v2014
    %v3407 = vpack.c.b16 %v2019, %v2015
    %v3408 = vpack.c.b16 %v2020, %v2016
    %v3409 = vpack.c.b16 %v2025, %v2021
    %v3410 = vpack.c.b16 %v2026, %v2022
    %v3411 = vpack.c.b16 %v2027, %v2023
    %v3412 = vpack.c.b16 %v2028, %v2024
    %v3413 = vpack.c.b16 %v2033, %v2029
    %v3414 = vpack.c.b16 %v2034, %v2030
    %v3415 = vpack.c.b16 %v2035, %v2031
    %v3416 = vpack.c.b16 %v2036, %v2032
    %v3417 = vpack.c.b16 %v2041, %v2037
    %v3418 = vpack.c.b16 %v2042, %v2038
    %v3419 = vpack.c.b16 %v2043, %v2039
    %v3420 = vpack.c.b16 %v2044, %v2040
    %v3421 = vpack.c.b16 %v2049, %v2045
    %v3422 = vpack.c.b16 %v2050, %v2046
    %v3423 = vpack.c.b16 %v2051, %v2047
    %v3424 = vpack.c.b16 %v2052, %v2048
    %v3425 = vpack.c.b16 %v2057, %v2053
    %v3426 = vpack.c.b16 %v2058, %v2054
    %v3427 = vpack.c.b16 %v2059, %v2055
    %v3428 = vpack.c.b16 %v2060, %v2056
    %v3429 = vpack.c.b16 %v2065, %v2061
    %v3430 = vpack.c.b16 %v2066, %v2062
    %v3431 = vpack.c.b16 %v2067, %v2063
    %v3432 = vpack.c.b16 %v2068, %v2064
    %v3433 = vpack.c.b16 %v2073, %v2069
    %v3434 = vpack.c.b16 %v2074, %v2070
    %v3435 = vpack.c.b16 %v2075, %v2071
    %v3436 = vpack.c.b16 %v2076, %v2072
    %v3437 = vpack.c.b16 %v2081, %v2077
    %v3438 = vpack.c.b16 %v2082, %v2078
    %v3439 = vpack.c.b16 %v2083, %v2079
    %v3440 = vpack.c.b16 %v2084, %v2080
    %v3441 = vpack.c.b16 %v2089, %v2085
    %v3442 = vpack.c.b16 %v2090, %v2086
    %v3443 = vpack.c.b16 %v2091, %v2087
    %v3444 = vpack.c.b16 %v2092, %v2088
    %v3445 = vpack.c.b16 %v2097, %v2093
    %v3446 = vpack.c.b16 %v2098, %v2094
    %v3447 = vpack.c.b16 %v2099, %v2095
    %v3448 = vpack.c.b16 %v2100, %v2096
    %v3449 = vpack.c.b16 %v2105, %v2101
    %v3450 = vpack.c.b16 %v2106, %v2102
    %v3451 = vpack.c.b16 %v2107, %v2103
    %v3452 = vpack.c.b16 %v2108, %v2104
    %v3453 = vpack.c.b16 %v2113, %v2109
    %v3454 = vpack.c.b16 %v2114, %v2110
    %v3455 = vpack.c.b16 %v2115, %v2111
    %v3456 = vpack.c.b16 %v2116, %v2112
    %v3457 = vpack.c.b16 %v2121, %v2117
    %v3458 = vpack.c.b16 %v2122, %v2118
    %v3459 = vpack.c.b16 %v2123, %v2119
    %v3460 = vpack.c.b16 %v2124, %v2120
    %v3461 = vpack.c.b16 %v2129, %v2125
    %v3462 = vpack.c.b16 %v2130, %v2126
    %v3463 = vpack.c.b16 %v2131, %v2127
    %v3464 = vpack.c.b16 %v2132, %v2128
    %v3465 = vpack.c.b16 %v2137, %v2133
    %v3466 = vpack.c.b16 %v2138, %v2134
    %v3467 = vpack.c.b16 %v2139, %v2135
    %v3468 = vpack.c.b16 %v2140, %v2136
    %v3469 = vpack.c.b16 %v2145, %v2141
    %v3470 = vpack.c.b16 %v2146, %v2142
    %v3471 = vpack.c.b16 %v2147, %v2143
    %v3472 = vpack.c.b16 %v2148, %v2144
    %v3473 = vpack.c.b16 %v2153, %v2149
    %v3474 = vpack.c.b16 %v2154, %v2150
    %v3475 = vpack.c.b16 %v2155, %v2151
    %v3476 = vpack.c.b16 %v2156, %v2152
    %v3477 = vpack.c.b16 %v2161, %v2157
    %v3478 = vpack.c.b16 %v2162, %v2158
    %v3479 = vpack.c.b16 %v2163, %v2159
    %v3480 = vpack.c.b16 %v2164, %v2160
    %v3481 = vpack.c.b16 %v2169, %v2165
    %v3482 = vpack.c.b16 %v2170, %v2166
    %v3483 = vpack.c.b16 %v2171, %v2167
    %v3484 = vpack.c.b16 %v2172, %v2168
    %v3485 = vpack.c.b16 %v2177, %v2173
    %v3486 = vpack.c.b16 %v2178, %v2174
    %v3487 = vpack.c.b16 %v2179, %v2175
    %v3488 = vpack.c.b16 %v2180, %v2176
    %v3489 = vpack.c.b16 %v2185, %v2181
    %v3490 = vpack.c.b16 %v2186, %v2182
    %v3491 = vpack.c.b16 %v2187, %v2183
    %v3492 = vpack.c.b16 %v2188, %v2184
    %v3493 = vpack.c.b16 %v2193, %v2189
    %v3494 = vpack.c.b16 %v2194, %v2190
    %v3495 = vpack.c.b16 %v2195, %v2191
    %v3496 = vpack.c.b16 %v2196, %v2192
    %v3497 = vpack.c.b16 %v2201, %v2197
    %v3498 = vpack.c.b16 %v2202, %v2198
    %v3499 = vpack.c.b16 %v2203, %v2199
    %v3500 = vpack.c.b16 %v2204, %v2200
    %v3501 = vpack.c.b16 %v2209, %v2205
    %v3502 = vpack.c.b16 %v2210, %v2206
    %v3503 = vpack.c.b16 %v2211, %v2207
    %v3504 = vpack.c.b16 %v2212, %v2208
    %v3505 = vpack.c.b16 %v2217, %v2213
    %v3506 = vpack.c.b16 %v2218, %v2214
    %v3507 = vpack.c.b16 %v2219, %v2215
    %v3508 = vpack.c.b16 %v2220, %v2216
    %v3509 = vpack.c.b16 %v2225, %v2221
    %v3510 = vpack.c.b16 %v2226, %v2222
    %v3511 = vpack.c.b16 %v2227, %v2223
    %v3512 = vpack.c.b16 %v2228, %v2224
    %v3513 = vpack.c.b16 %v2233, %v2229
    %v3514 = vpack.c.b16 %v2234, %v2230
    %v3515 = vpack.c.b16 %v2235, %v2231
    %v3516 = vpack.c.b16 %v2236, %v2232
    %v3517 = vpack.c.b16 %v2241, %v2237
    %v3518 = vpack.c.b16 %v2242, %v2238
    %v3519 = vpack.c.b16 %v2243, %v2239
    %v3520 = vpack.c.b16 %v2244, %v2240
    %v3521 = vpack.c.b16 %v2249, %v2245
    %v3522 = vpack.c.b16 %v2250, %v2246
    %v3523 = vpack.c.b16 %v2251, %v2247
    %v3524 = vpack.c.b16 %v2252, %v2248
    %v3525 = vpack.c.b16 %v2257, %v2253
    %v3526 = vpack.c.b16 %v2258, %v2254
    %v3527 = vpack.c.b16 %v2259, %v2255
    %v3528 = vpack.c.b16 %v2260, %v2256
    %v3529 = vpack.c.b16 %v2265, %v2261
    %v3530 = vpack.c.b16 %v2266, %v2262
    %v3531 = vpack.c.b16 %v2267, %v2263
    %v3532 = vpack.c.b16 %v2268, %v2264
    %v3533 = vpack.c.b16 %v2273, %v2269
    %v3534 = vpack.c.b16 %v2274, %v2270
    %v3535 = vpack.c.b16 %v2275, %v2271
    %v3536 = vpack.c.b16 %v2276, %v2272
    %v3537 = vpack.c.b16 %v2281, %v2277
    %v3538 = vpack.c.b16 %v2282, %v2278
    %v3539 = vpack.c.b16 %v2283, %v2279
    %v3540 = vpack.c.b16 %v2284, %v2280
    %v3541 = vpack.c.b16 %v2289, %v2285
    %v3542 = vpack.c.b16 %v2290, %v2286
    %v3543 = vpack.c.b16 %v2291, %v2287
    %v3544 = vpack.c.b16 %v2292, %v2288
    %v3545 = vpack.c.b16 %v2297, %v2293
    %v3546 = vpack.c.b16 %v2298, %v2294
    %v3547 = vpack.c.b16 %v2299, %v2295
    %v3548 = vpack.c.b16 %v2300, %v2296
    %v3549 = vpack.c.b16 %v2305, %v2301
    %v3550 = vpack.c.b16 %v2306, %v2302
    %v3551 = vpack.c.b16 %v2307, %v2303
    %v3552 = vpack.c.b16 %v2308, %v2304
    %v3553 = vpack.c.b16 %v2313, %v2309
    %v3554 = vpack.c.b16 %v2314, %v2310
    %v3555 = vpack.c.b16 %v2315, %v2311
    %v3556 = vpack.c.b16 %v2316, %v2312
    %v3557 = vpack.c.b16 %v2321, %v2317
    %v3558 = vpack.c.b16 %v2322, %v2318
    %v3559 = vpack.c.b16 %v2323, %v2319
    %v3560 = vpack.c.b16 %v2324, %v2320
    %v3561 = vpack.c.b16 %v2329, %v2325
    %v3562 = vpack.c.b16 %v2330, %v2326
    %v3563 = vpack.c.b16 %v2331, %v2327
    %v3564 = vpack.c.b16 %v2332, %v2328
    %v3565 = vpack.c.b16 %v2337, %v2333
    %v3566 = vpack.c.b16 %v2338, %v2334
    %v3567 = vpack.c.b16 %v2339, %v2335
    %v3568 = vpack.c.b16 %v2340, %v2336
    %v3569 = vpack.c.b16 %v2345, %v2341
    %v3570 = vpack.c.b16 %v2346, %v2342
    %v3571 = vpack.c.b16 %v2347, %v2343
    %v3572 = vpack.c.b16 %v2348, %v2344
    %v3573 = vpack.c.b16 %v2353, %v2349
    %v3574 = vpack.c.b16 %v2354, %v2350
    %v3575 = vpack.c.b16 %v2355, %v2351
    %v3576 = vpack.c.b16 %v2356, %v2352
    %v3577 = vpack.c.b16 %v2361, %v2357
    %v3578 = vpack.c.b16 %v2362, %v2358
    %v3579 = vpack.c.b16 %v2363, %v2359
    %v3580 = vpack.c.b16 %v2364, %v2360
    %v3581 = vpack.c.b16 %v2369, %v2365
    %v3582 = vpack.c.b16 %v2370, %v2366
    %v3583 = vpack.c.b16 %v2371, %v2367
    %v3584 = vpack.c.b16 %v2372, %v2368
    %v3585 = vpack.c.b16 %v2377, %v2373
    %v3586 = vpack.c.b16 %v2378, %v2374
    %v3587 = vpack.c.b16 %v2379, %v2375
    %v3588 = vpack.c.b16 %v2380, %v2376
    %v3589 = vpack.c.b16 %v2385, %v2381
    %v3590 = vpack.c.b16 %v2386, %v2382
    %v3591 = vpack.c.b16 %v2387, %v2383
    %v3592 = vpack.c.b16 %v2388, %v2384
    %v3593 = vpack.c.b16 %v2393, %v2389
    %v3594 = vpack.c.b16 %v2394, %v2390
    %v3595 = vpack.c.b16 %v2395, %v2391
    %v3596 = vpack.c.b16 %v2396, %v2392
    %v3597 = vpack.c.b16 %v2401, %v2397
    %v3598 = vpack.c.b16 %v2402, %v2398
    %v3599 = vpack.c.b16 %v2403, %v2399
    %v3600 = vpack.c.b16 %v2404, %v2400
    %v3601 = vpack.c.b16 %v2409, %v2405
    %v3602 = vpack.c.b16 %v2410, %v2406
    %v3603 = vpack.c.b16 %v2411, %v2407
    %v3604 = vpack.c.b16 %v2412, %v2408
    %v3605 = vpack.c.b16 %v2417, %v2413
    %v3606 = vpack.c.b16 %v2418, %v2414
    %v3607 = vpack.c.b16 %v2419, %v2415
    %v3608 = vpack.c.b16 %v2420, %v2416
    %v3609 = vpack.c.b16 %v2425, %v2421
    %v3610 = vpack.c.b16 %v2426, %v2422
    %v3611 = vpack.c.b16 %v2427, %v2423
    %v3612 = vpack.c.b16 %v2428, %v2424
    %v3613 = vpack.c.b16 %v2433, %v2429
    %v3614 = vpack.c.b16 %v2434, %v2430
    %v3615 = vpack.c.b16 %v2435, %v2431
    %v3616 = vpack.c.b16 %v2436, %v2432
    %v3617 = vpack.c.b16 %v2441, %v2437
    %v3618 = vpack.c.b16 %v2442, %v2438
    %v3619 = vpack.c.b16 %v2443, %v2439
    %v3620 = vpack.c.b16 %v2444, %v2440
    %v3621 = vpack.c.b16 %v2449, %v2445
    %v3622 = vpack.c.b16 %v2450, %v2446
    %v3623 = vpack.c.b16 %v2451, %v2447
    %v3624 = vpack.c.b16 %v2452, %v2448
    %v3625 = vpack.c.b16 %v2457, %v2453
    %v3626 = vpack.c.b16 %v2458, %v2454
    %v3627 = vpack.c.b16 %v2459, %v2455
    %v3628 = vpack.c.b16 %v2460, %v2456
    %v3629 = vpack.c.b16 %v2465, %v2461
    %v3630 = vpack.c.b16 %v2466, %v2462
    %v3631 = vpack.c.b16 %v2467, %v2463
    %v3632 = vpack.c.b16 %v2468, %v2464
    %v3633 = vpack.c.b16 %v2473, %v2469
    %v3634 = vpack.c.b16 %v2474, %v2470
    %v3635 = vpack.c.b16 %v2475, %v2471
    %v3636 = vpack.c.b16 %v2476, %v2472
    %v3637 = vpack.c.b16 %v2481, %v2477
    %v3638 = vpack.c.b16 %v2482, %v2478
    %v3639 = vpack.c.b16 %v2483, %v2479
    %v3640 = vpack.c.b16 %v2484, %v2480
    %v3641 = vpack.c.b16 %v2489, %v2485
    %v3642 = vpack.c.b16 %v2490, %v2486
    %v3643 = vpack.c.b16 %v2491, %v2487
    %v3644 = vpack.c.b16 %v2492, %v2488
    %v3645 = vpack.c.b16 %v2497, %v2493
    %v3646 = vpack.c.b16 %v2498, %v2494
    %v3647 = vpack.c.b16 %v2499, %v2495
    %v3648 = vpack.c.b16 %v2500, %v2496
    %v3649 = vpack.c.b16 %v2505, %v2501
    %v3650 = vpack.c.b16 %v2506, %v2502
    %v3651 = vpack.c.b16 %v2507, %v2503
    %v3652 = vpack.c.b16 %v2508, %v2504
    %v3653 = vpack.c.b16 %v2513, %v2509
    %v3654 = vpack.c.b16 %v2514, %v2510
    %v3655 = vpack.c.b16 %v2515, %v2511
    %v3656 = vpack.c.b16 %v2516, %v2512
    %v3657 = vpack.c.b16 %v2521, %v2517
    %v3658 = vpack.c.b16 %v2522, %v2518
    %v3659 = vpack.c.b16 %v2523, %v2519
    %v3660 = vpack.c.b16 %v2524, %v2520
    %v3661 = vpack.c.b16 %v2529, %v2525
    %v3662 = vpack.c.b16 %v2530, %v2526
    %v3663 = vpack.c.b16 %v2531, %v2527
    %v3664 = vpack.c.b16 %v2532, %v2528
    %v3665 = vpack.c.b16 %v2537, %v2533
    %v3666 = vpack.c.b16 %v2538, %v2534
    %v3667 = vpack.c.b16 %v2539, %v2535
    %v3668 = vpack.c.b16 %v2540, %v2536
    %v3669 = vpack.c.b16 %v2545, %v2541
    %v3670 = vpack.c.b16 %v2546, %v2542
    %v3671 = vpack.c.b16 %v2547, %v2543
    %v3672 = vpack.c.b16 %v2548, %v2544
    %v3673 = vpack.c.b16 %v2553, %v2549
    %v3674 = vpack.c.b16 %v2554, %v2550
    %v3675 = vpack.c.b16 %v2555, %v2551
    %v3676 = vpack.c.b16 %v2556, %v2552
    %v3677 = vpack.c.b16 %v2561, %v2557
    %v3678 = vpack.c.b16 %v2562, %v2558
    %v3679 = vpack.c.b16 %v2563, %v2559
    %v3680 = vpack.c.b16 %v2564, %v2560
    %v3681 = vpack.c.b16 %v2569, %v2565
    %v3682 = vpack.c.b16 %v2570, %v2566
    %v3683 = vpack.c.b16 %v2571, %v2567
    %v3684 = vpack.c.b16 %v2572, %v2568
    %v3685 = vpack.c.b16 %v2577, %v2573
    %v3686 = vpack.c.b16 %v2578, %v2574
    %v3687 = vpack.c.b16 %v2579, %v2575
    %v3688 = vpack.c.b16 %v2580, %v2576
    %v3689 = vpack.c.b16 %v2585, %v2581
    %v3690 = vpack.c.b16 %v2586, %v2582
    %v3691 = vpack.c.b16 %v2587, %v2583
    %v3692 = vpack.c.b16 %v2588, %v2584
    %v3693 = vpack.c.b16 %v2593, %v2589
    %v3694 = vpack.c.b16 %v2594, %v2590
    %v3695 = vpack.c.b16 %v2595, %v2591
    %v3696 = vpack.c.b16 %v2596, %v2592
    %v3697 = vpack.c.b16 %v2601, %v2597
    %v3698 = vpack.c.b16 %v2602, %v2598
    %v3699 = vpack.c.b16 %v2603, %v2599
    %v3700 = vpack.c.b16 %v2604, %v2600
    %v3701 = vpack.c.b16 %v2609, %v2605
    %v3702 = vpack.c.b16 %v2610, %v2606
    %v3703 = vpack.c.b16 %v2611, %v2607
    %v3704 = vpack.c.b16 %v2612, %v2608
    %v3705 = vpack.c.b16 %v2617, %v2613
    %v3706 = vpack.c.b16 %v2618, %v2614
    %v3707 = vpack.c.b16 %v2619, %v2615
    %v3708 = vpack.c.b16 %v2620, %v2616
    %v3709 = vpack.c.b16 %v2625, %v2621
    %v3710 = vpack.c.b16 %v2626, %v2622
    %v3711 = vpack.c.b16 %v2627, %v2623
    %v3712 = vpack.c.b16 %v2628, %v2624
    %v3713 = vpack.c.b16 %v2633, %v2629
    %v3714 = vpack.c.b16 %v2634, %v2630
    %v3715 = vpack.c.b16 %v2635, %v2631
    %v3716 = vpack.c.b16 %v2636, %v2632
    %v3717 = vpack.c.b16 %v2641, %v2637
    %v3718 = vpack.c.b16 %v2642, %v2638
    %v3719 = vpack.c.b16 %v2643, %v2639
    %v3720 = vpack.c.b16 %v2644, %v2640
    %v3721 = vpack.c.b16 %v2649, %v2645
    %v3722 = vpack.c.b16 %v2650, %v2646
    %v3723 = vpack.c.b16 %v2651, %v2647
    %v3724 = vpack.c.b16 %v2652, %v2648
    %v3725 = vpack.c.b16 %v2657, %v2653
    %v3726 = vpack.c.b16 %v2658, %v2654
    %v3727 = vpack.c.b16 %v2659, %v2655
    %v3728 = vpack.c.b16 %v2660, %v2656
    %v3729 = vpack.c.b16 %v2665, %v2661
    %v3730 = vpack.c.b16 %v2666, %v2662
    %v3731 = vpack.c.b16 %v2667, %v2663
    %v3732 = vpack.c.b16 %v2668, %v2664
    %v3733 = vpack.c.b16 %v2673, %v2669
    %v3734 = vpack.c.b16 %v2674, %v2670
    %v3735 = vpack.c.b16 %v2675, %v2671
    %v3736 = vpack.c.b16 %v2676, %v2672
    %v3737 = vpack.c.b16 %v2681, %v2677
    %v3738 = vpack.c.b16 %v2682, %v2678
    %v3739 = vpack.c.b16 %v2683, %v2679
    %v3740 = vpack.c.b16 %v2684, %v2680
    %v3741 = vpack.c.b16 %v2689, %v2685
    %v3742 = vpack.c.b16 %v2690, %v2686
    %v3743 = vpack.c.b16 %v2691, %v2687
    %v3744 = vpack.c.b16 %v2692, %v2688
    %v3745 = vpack.c.b16 %v2697, %v2693
    %v3746 = vpack.c.b16 %v2698, %v2694
    %v3747 = vpack.c.b16 %v2699, %v2695
    %v3748 = vpack.c.b16 %v2700, %v2696
    %v3749 = vpack.c.b16 %v2705, %v2701
    %v3750 = vpack.c.b16 %v2706, %v2702
    %v3751 = vpack.c.b16 %v2707, %v2703
    %v3752 = vpack.c.b16 %v2708, %v2704
    %v3753 = vpack.c.b16 %v2713, %v2709
    %v3754 = vpack.c.b16 %v2714, %v2710
    %v3755 = vpack.c.b16 %v2715, %v2711
    %v3756 = vpack.c.b16 %v2716, %v2712
    %v3757 = vpack.c.b16 %v2721, %v2717
    %v3758 = vpack.c.b16 %v2722, %v2718
    %v3759 = vpack.c.b16 %v2723, %v2719
    %v3760 = vpack.c.b16 %v2724, %v2720
    %v3761 = vpack.c.b16 %v2729, %v2725
    %v3762 = vpack.c.b16 %v2730, %v2726
    %v3763 = vpack.c.b16 %v2731, %v2727
    %v3764 = vpack.c.b16 %v2732, %v2728
    %v3765 = vpack.c.b16 %v2737, %v2733
    %v3766 = vpack.c.b16 %v2738, %v2734
    %v3767 = vpack.c.b16 %v2739, %v2735
    %v3768 = vpack.c.b16 %v2740, %v2736
    %v3769 = vpack.c.b16 %v2745, %v2741
    %v3770 = vpack.c.b16 %v2746, %v2742
    %v3771 = vpack.c.b16 %v2747, %v2743
    %v3772 = vpack.c.b16 %v2748, %v2744
    %v3773 = vpack.c.b16 %v2753, %v2749
    %v3774 = vpack.c.b16 %v2754, %v2750
    %v3775 = vpack.c.b16 %v2755, %v2751
    %v3776 = vpack.c.b16 %v2756, %v2752
    %v3777 = vpack.c.b16 %v2761, %v2757
    %v3778 = vpack.c.b16 %v2762, %v2758
    %v3779 = vpack.c.b16 %v2763, %v2759
    %v3780 = vpack.c.b16 %v2764, %v2760
    %v3781 = vpack.c.b16 %v2769, %v2765
    %v3782 = vpack.c.b16 %v2770, %v2766
    %v3783 = vpack.c.b16 %v2771, %v2767
    %v3784 = vpack.c.b16 %v2772, %v2768
    %v3785 = vpack.c.b16 %v2777, %v2773
    %v3786 = vpack.c.b16 %v2778, %v2774
    %v3787 = vpack.c.b16 %v2779, %v2775
    %v3788 = vpack.c.b16 %v2780, %v2776
    %v3789 = vpack.c.b16 %v2785, %v2781
    %v3790 = vpack.c.b16 %v2786, %v2782
    %v3791 = vpack.c.b16 %v2787, %v2783
    %v3792 = vpack.c.b16 %v2788, %v2784
    %v3793 = vpack.c.b16 %v2793, %v2789
    %v3794 = vpack.c.b16 %v2794, %v2790
    %v3795 = vpack.c.b16 %v2795, %v2791
    %v3796 = vpack.c.b16 %v2796, %v2792
    %v3797 = vpack.c.b16 %v2801, %v2797
    %v3798 = vpack.c.b16 %v2802, %v2798
    %v3799 = vpack.c.b16 %v2803, %v2799
    %v3800 = vpack.c.b16 %v2804, %v2800
    %v3801 = vpack.c.b16 %v2809, %v2805
    %v3802 = vpack.c.b16 %v2810, %v2806
    %v3803 = vpack.c.b16 %v2811, %v2807
    %v3804 = vpack.c.b16 %v2812, %v2808
    %v3805 = vpack.c.b16 %v2817, %v2813
    %v3806 = vpack.c.b16 %v2818, %v2814
    %v3807 = vpack.c.b16 %v2819, %v2815
    %v3808 = vpack.c.b16 %v2820, %v2816
    %v3809 = vpack.c.b16 %v2825, %v2821
    %v3810 = vpack.c.b16 %v2826, %v2822
    %v3811 = vpack.c.b16 %v2827, %v2823
    %v3812 = vpack.c.b16 %v2828, %v2824
    %v3813 = vpack.c.b16 %v2833, %v2829
    %v3814 = vpack.c.b16 %v2834, %v2830
    %v3815 = vpack.c.b16 %v2835, %v2831
    %v3816 = vpack.c.b16 %v2836, %v2832
    %v3817 = vpack.c.b16 %v2841, %v2837
    %v3818 = vpack.c.b16 %v2842, %v2838
    %v3819 = vpack.c.b16 %v2843, %v2839
    %v3820 = vpack.c.b16 %v2844, %v2840
    %v3821 = vpack.c.b16 %v2849, %v2845
    %v3822 = vpack.c.b16 %v2850, %v2846
    %v3823 = vpack.c.b16 %v2851, %v2847
    %v3824 = vpack.c.b16 %v2852, %v2848
    %v3825 = vpack.c.b16 %v2857, %v2853
    %v3826 = vpack.c.b16 %v2858, %v2854
    %v3827 = vpack.c.b16 %v2859, %v2855
    %v3828 = vpack.c.b16 %v2860, %v2856
    %v3829 = vpack.c.b16 %v2865, %v2861
    %v3830 = vpack.c.b16 %v2866, %v2862
    %v3831 = vpack.c.b16 %v2867, %v2863
    %v3832 = vpack.c.b16 %v2868, %v2864
    %v3833 = vpack.c.b16 %v2873, %v2869
    %v3834 = vpack.c.b16 %v2874, %v2870
    %v3835 = vpack.c.b16 %v2875, %v2871
    %v3836 = vpack.c.b16 %v2876, %v2872
    %v3837 = vpack.c.b16 %v2881, %v2877
    %v3838 = vpack.c.b16 %v2882, %v2878
    %v3839 = vpack.c.b16 %v2883, %v2879
    %v3840 = vpack.c.b16 %v2884, %v2880
    %v3841 = vpack.c.b16 %v2889, %v2885
    %v3842 = vpack.c.b16 %v2890, %v2886
    %v3843 = vpack.c.b16 %v2891, %v2887
    %v3844 = vpack.c.b16 %v2892, %v2888
    %v3845 = vpack.c.b16 %v2897, %v2893
    %v3846 = vpack.c.b16 %v2898, %v2894
    %v3847 = vpack.c.b16 %v2899, %v2895
    %v3848 = vpack.c.b16 %v2900, %v2896
    %v3849 = vpack.c.b16 %v2905, %v2901
    %v3850 = vpack.c.b16 %v2906, %v2902
    %v3851 = vpack.c.b16 %v2907, %v2903
    %v3852 = vpack.c.b16 %v2908, %v2904
    %v3853 = vpack.c.b16 %v2913, %v2909
    %v3854 = vpack.c.b16 %v2914, %v2910
    %v3855 = vpack.c.b16 %v2915, %v2911
    %v3856 = vpack.c.b16 %v2916, %v2912
    %v3857 = vpack.c.b16 %v2921, %v2917
    %v3858 = vpack.c.b16 %v2922, %v2918
    %v3859 = vpack.c.b16 %v2923, %v2919
    %v3860 = vpack.c.b16 %v2924, %v2920
    %v3861 = vpack.c.b16 %v2929, %v2925
    %v3862 = vpack.c.b16 %v2930, %v2926
    %v3863 = vpack.c.b16 %v2931, %v2927
    %v3864 = vpack.c.b16 %v2932, %v2928
    %v3865 = vpack.c.b16 %v2937, %v2933
    %v3866 = vpack.c.b16 %v2938, %v2934
    %v3867 = vpack.c.b16 %v2939, %v2935
    %v3868 = vpack.c.b16 %v2940, %v2936
    %v3869 = vpack.c.b16 %v2945, %v2941
    %v3870 = vpack.c.b16 %v2946, %v2942
    %v3871 = vpack.c.b16 %v2947, %v2943
    %v3872 = vpack.c.b16 %v2948, %v2944
    %v3873 = vpack.c.b16 %v2953, %v2949
    %v3874 = vpack.c.b16 %v2954, %v2950
    %v3875 = vpack.c.b16 %v2955, %v2951
    %v3876 = vpack.c.b16 %v2956, %v2952
    %v3877 = vpack.c.b16 %v2961, %v2957
    %v3878 = vpack.c.b16 %v2962, %v2958
    %v3879 = vpack.c.b16 %v2963, %v2959
    %v3880 = vpack.c.b16 %v2964, %v2960
    %v3881 = vpack.c.b16 %v2969, %v2965
    %v3882 = vpack.c.b16 %v2970, %v2966
    %v3883 = vpack.c.b16 %v2971, %v2967
    %v3884 = vpack.c.b16 %v2972, %v2968
    %v3885 = vpack.c.b16 %v2977, %v2973
    %v3886 = vpack.c.b16 %v2978, %v2974
    %v3887 = vpack.c.b16 %v2979, %v2975
    %v3888 = vpack.c.b16 %v2980, %v2976
    %v3889 = vpack.c.b16 %v2985, %v2981
    %v3890 = vpack.c.b16 %v2986, %v2982
    %v3891 = vpack.c.b16 %v2987, %v2983
    %v3892 = vpack.c.b16 %v2988, %v2984
    %v3893 = vpack.c.b16 %v2993, %v2989
    %v3894 = vpack.c.b16 %v2994, %v2990
    %v3895 = vpack.c.b16 %v2995, %v2991
    %v3896 = vpack.c.b16 %v2996, %v2992
    %v3897 = vpack.c.b16 %v3001, %v2997
    %v3898 = vpack.c.b16 %v3002, %v2998
    %v3899 = vpack.c.b16 %v3003, %v2999
    %v3900 = vpack.c.b16 %v3004, %v3000
    %v3901 = vpack.c.b16 %v3009, %v3005
    %v3902 = vpack.c.b16 %v3010, %v3006
    %v3903 = vpack.c.b16 %v3011, %v3007
    %v3904 = vpack.c.b16 %v3012, %v3008
    %v3905 = vpack.c.b16 %v3017, %v3013
    %v3906 = vpack.c.b16 %v3018, %v3014
    %v3907 = vpack.c.b16 %v3019, %v3015
    %v3908 = vpack.c.b16 %v3020, %v3016
    %v3909 = vpack.c.b16 %v3025, %v3021
    %v3910 = vpack.c.b16 %v3026, %v3022
    %v3911 = vpack.c.b16 %v3027, %v3023
    %v3912 = vpack.c.b16 %v3028, %v3024
    %v3913 = vpack.c.b16 %v3033, %v3029
    %v3914 = vpack.c.b16 %v3034, %v3030
    %v3915 = vpack.c.b16 %v3035, %v3031
    %v3916 = vpack.c.b16 %v3036, %v3032
    %v3917 = vpack.c.b16 %v3041, %v3037
    %v3918 = vpack.c.b16 %v3042, %v3038
    %v3919 = vpack.c.b16 %v3043, %v3039
    %v3920 = vpack.c.b16 %v3044, %v3040
    %v3921 = vpack.c.b16 %v3049, %v3045
    %v3922 = vpack.c.b16 %v3050, %v3046
    %v3923 = vpack.c.b16 %v3051, %v3047
    %v3924 = vpack.c.b16 %v3052, %v3048
    %v3925 = vpack.c.b16 %v3057, %v3053
    %v3926 = vpack.c.b16 %v3058, %v3054
    %v3927 = vpack.c.b16 %v3059, %v3055
    %v3928 = vpack.c.b16 %v3060, %v3056
    %v3929 = vpack.c.b16 %v3065, %v3061
    %v3930 = vpack.c.b16 %v3066, %v3062
    %v3931 = vpack.c.b16 %v3067, %v3063
    %v3932 = vpack.c.b16 %v3068, %v3064
    %v3933 = vpack.c.b16 %v3073, %v3069
    %v3934 = vpack.c.b16 %v3074, %v3070
    %v3935 = vpack.c.b16 %v3075, %v3071
    %v3936 = vpack.c.b16 %v3076, %v3072
    %v3937 = vpack.c.b16 %v3081, %v3077
    %v3938 = vpack.c.b16 %v3082, %v3078
    %v3939 = vpack.c.b16 %v3083, %v3079
    %v3940 = vpack.c.b16 %v3084, %v3080
    %v3941 = vpack.c.b16 %v3089, %v3085
    %v3942 = vpack.c.b16 %v3090, %v3086
    %v3943 = vpack.c.b16 %v3091, %v3087
    %v3944 = vpack.c.b16 %v3092, %v3088
    %v3945 = vpack.c.b16 %v3097, %v3093
    %v3946 = vpack.c.b16 %v3098, %v3094
    %v3947 = vpack.c.b16 %v3099, %v3095
    %v3948 = vpack.c.b16 %v3100, %v3096
    %v3949 = vpack.c.b16 %v3105, %v3101
    %v3950 = vpack.c.b16 %v3106, %v3102
    %v3951 = vpack.c.b16 %v3107, %v3103
    %v3952 = vpack.c.b16 %v3108, %v3104
    %v3953 = vpack.c.b16 %v3113, %v3109
    %v3954 = vpack.c.b16 %v3114, %v3110
    %v3955 = vpack.c.b16 %v3115, %v3111
    %v3956 = vpack.c.b16 %v3116, %v3112
    %v3957 = vpack.c.b16 %v3121, %v3117
    %v3958 = vpack.c.b16 %v3122, %v3118
    %v3959 = vpack.c.b16 %v3123, %v3119
    %v3960 = vpack.c.b16 %v3124, %v3120
    %v3961 = vpack.c.b16 %v3129, %v3125
    %v3962 = vpack.c.b16 %v3130, %v3126
    %v3963 = vpack.c.b16 %v3131, %v3127
    %v3964 = vpack.c.b16 %v3132, %v3128
    %v3965 = vpack.c.b16 %v3137, %v3133
    %v3966 = vpack.c.b16 %v3138, %v3134
    %v3967 = vpack.c.b16 %v3139, %v3135
    %v3968 = vpack.c.b16 %v3140, %v3136
    %v3969 = vpack.c.b16 %v3145, %v3141
    %v3970 = vpack.c.b16 %v3146, %v3142
    %v3971 = vpack.c.b16 %v3147, %v3143
    %v3972 = vpack.c.b16 %v3148, %v3144
    %v3973 = vpack.c.b16 %v3153, %v3149
    %v3974 = vpack.c.b16 %v3154, %v3150
    %v3975 = vpack.c.b16 %v3155, %v3151
    %v3976 = vpack.c.b16 %v3156, %v3152
    %v3977 = vpack.c.b16 %v3161, %v3157
    %v3978 = vpack.c.b16 %v3162, %v3158
    %v3979 = vpack.c.b16 %v3163, %v3159
    %v3980 = vpack.c.b16 %v3164, %v3160
    %v3981 = vpack.c.b16 %v3169, %v3165
    %v3982 = vpack.c.b16 %v3170, %v3166
    %v3983 = vpack.c.b16 %v3171, %v3167
    %v3984 = vpack.c.b16 %v3172, %v3168
    %v3985 = vpack.c.b16 %v3177, %v3173
    %v3986 = vpack.c.b16 %v3178, %v3174
    %v3987 = vpack.c.b16 %v3179, %v3175
    %v3988 = vpack.c.b16 %v3180, %v3176
    %v3989 = vpack.c.b16 %v3185, %v3181
    %v3990 = vpack.c.b16 %v3186, %v3182
    %v3991 = vpack.c.b16 %v3187, %v3183
    %v3992 = vpack.c.b16 %v3188, %v3184
    %v3993 = vpack.c.b16 %v3193, %v3189
    %v3994 = vpack.c.b16 %v3194, %v3190
    %v3995 = vpack.c.b16 %v3195, %v3191
    %v3996 = vpack.c.b16 %v3196, %v3192
    %v3997 = vpack.c.b16 %v3201, %v3197
    %v3998 = vpack.c.b16 %v3202, %v3198
    %v3999 = vpack.c.b16 %v3203, %v3199
    %v4000 = vpack.c.b16 %v3204, %v3200
    %v4001 = vpack.c.b16 %v3209, %v3205
    %v4002 = vpack.c.b16 %v3210, %v3206
    %v4003 = vpack.c.b16 %v3211, %v3207
    %v4004 = vpack.c.b16 %v3212, %v3208
    %v4005 = vpack.c.b16 %v3217, %v3213
    %v4006 = vpack.c.b16 %v3218, %v3214
    %v4007 = vpack.c.b16 %v3219, %v3215
    %v4008 = vpack.c.b16 %v3220, %v3216
    %v4009 = vpack.c.b16 %v3225, %v3221
    %v4010 = vpack.c.b16 %v3226, %v3222
    %v4011 = vpack.c.b16 %v3227, %v3223
    %v4012 = vpack.c.b16 %v3228, %v3224
    %vm4797 = vcmask 523264
    %v4798 = vsel %vm4797, %v852, 0
    %4800 = vmatpush.bf16.msra.mxu0 %v3257
    %4801 = vmatpush.bf16.msra.mxu0 %v3253
    %4802 = vmatpush.bf16.msra.mxu0 %v3249
    %4803 = vmatpush.bf16.msra.mxu0 %v3245
    %4804 = vmatpush.bf16.msra.mxu0 %v3241
    %4805 = vmatpush.bf16.msra.mxu0 %v3237
    %4806 = vmatpush.bf16.msra.mxu0 %v3233
    %4807 = vmatpush.bf16.msra.mxu0 %v3229
    %4808 = vmatmul.bf16.gmra.mxu0 %v822
    %v4809 = vpop.f32.mrf.mxu0
    %v4810 = vadd.f32 %v812, %v4809
    %v4811 = vpop.f32.mrf.mxu0
    %4812 = vdwg.mxu0
    %4813 = vmatpush.bf16.msra.mxu0 %v3289
    %4814 = vmatpush.bf16.msra.mxu0 %v3285
    %4815 = vmatpush.bf16.msra.mxu0 %v3281
    %4816 = vmatpush.bf16.msra.mxu0 %v3277
    %4817 = vmatpush.bf16.msra.mxu0 %v3273
    %4818 = vmatpush.bf16.msra.mxu0 %v3269
    %4819 = vmatpush.bf16.msra.mxu0 %v3265
    %4820 = vmatpush.bf16.msra.mxu0 %v3261
    %4821 = vmatmul.bf16.gmra.mxu0 %v823
    %v4822 = vpop.f32.mrf.mxu0
    %v4823 = vadd.f32 %v4810, %v4822
    %v4824 = vpop.f32.mrf.mxu0
    %4825 = vdwg.mxu0
    %4826 = vmatpush.bf16.msra.mxu0 %v3321
    %4827 = vmatpush.bf16.msra.mxu0 %v3317
    %4828 = vmatpush.bf16.msra.mxu0 %v3313
    %4829 = vmatpush.bf16.msra.mxu0 %v3309
    %4830 = vmatpush.bf16.msra.mxu0 %v3305
    %4831 = vmatpush.bf16.msra.mxu0 %v3301
    %4832 = vmatpush.bf16.msra.mxu0 %v3297
    %4833 = vmatpush.bf16.msra.mxu0 %v3293
    %4834 = vmatmul.bf16.gmra.mxu0 %v824
    %v4835 = vpop.f32.mrf.mxu0
    %v4836 = vadd.f32 %v4823, %v4835
    %v4837 = vpop.f32.mrf.mxu0
    %4838 = vdwg.mxu0
    %4839 = vmatpush.bf16.msra.mxu0 %v3353
    %4840 = vmatpush.bf16.msra.mxu0 %v3349
    %4841 = vmatpush.bf16.msra.mxu0 %v3345
    %4842 = vmatpush.bf16.msra.mxu0 %v3341
    %4843 = vmatpush.bf16.msra.mxu0 %v3337
    %4844 = vmatpush.bf16.msra.mxu0 %v3333
    %4845 = vmatpush.bf16.msra.mxu0 %v3329
    %4846 = vmatpush.bf16.msra.mxu0 %v3325
    %4847 = vmatmul.bf16.gmra.mxu0 %v825
    %v4848 = vpop.f32.mrf.mxu0
    %v4849 = vadd.f32 %v4836, %v4848
    %v4850 = vpop.f32.mrf.mxu0
    %4851 = vdwg.mxu0
    %4852 = vmatpush.bf16.msra.mxu0 %v3385
    %4853 = vmatpush.bf16.msra.mxu0 %v3381
    %4854 = vmatpush.bf16.msra.mxu0 %v3377
    %4855 = vmatpush.bf16.msra.mxu0 %v3373
    %4856 = vmatpush.bf16.msra.mxu0 %v3369
    %4857 = vmatpush.bf16.msra.mxu0 %v3365
    %4858 = vmatpush.bf16.msra.mxu0 %v3361
    %4859 = vmatpush.bf16.msra.mxu0 %v3357
    %4860 = vmatmul.bf16.gmra.mxu0 %v826
    %v4861 = vpop.f32.mrf.mxu0
    %v4862 = vadd.f32 %v4849, %v4861
    %v4863 = vpop.f32.mrf.mxu0
    %4864 = vdwg.mxu0
    %4865 = vmatpush.bf16.msra.mxu0 %v3417
    %4866 = vmatpush.bf16.msra.mxu0 %v3413
    %4867 = vmatpush.bf16.msra.mxu0 %v3409
    %4868 = vmatpush.bf16.msra.mxu0 %v3405
    %4869 = vmatpush.bf16.msra.mxu0 %v3401
    %4870 = vmatpush.bf16.msra.mxu0 %v3397
    %4871 = vmatpush.bf16.msra.mxu0 %v3393
    %4872 = vmatpush.bf16.msra.mxu0 %v3389
    %4873 = vmatmul.bf16.gmra.mxu0 %v827
    %v4874 = vpop.f32.mrf.mxu0
    %v4875 = vadd.f32 %v4862, %v4874
    %v4876 = vpop.f32.mrf.mxu0
    %4877 = vdwg.mxu0
    %4878 = vmatpush.bf16.msra.mxu0 %v3449
    %4879 = vmatpush.bf16.msra.mxu0 %v3445
    %4880 = vmatpush.bf16.msra.mxu0 %v3441
    %4881 = vmatpush.bf16.msra.mxu0 %v3437
    %4882 = vmatpush.bf16.msra.mxu0 %v3433
    %4883 = vmatpush.bf16.msra.mxu0 %v3429
    %4884 = vmatpush.bf16.msra.mxu0 %v3425
    %4885 = vmatpush.bf16.msra.mxu0 %v3421
    %4886 = vmatmul.bf16.gmra.mxu0 %v828
    %v4887 = vpop.f32.mrf.mxu0
    %v4888 = vadd.f32 %v4875, %v4887
    %v4889 = vpop.f32.mrf.mxu0
    %4890 = vdwg.mxu0
    %4891 = vmatpush.bf16.msra.mxu0 %v3481
    %4892 = vmatpush.bf16.msra.mxu0 %v3477
    %4893 = vmatpush.bf16.msra.mxu0 %v3473
    %4894 = vmatpush.bf16.msra.mxu0 %v3469
    %4895 = vmatpush.bf16.msra.mxu0 %v3465
    %4896 = vmatpush.bf16.msra.mxu0 %v3461
    %4897 = vmatpush.bf16.msra.mxu0 %v3457
    %4898 = vmatpush.bf16.msra.mxu0 %v3453
    %4899 = vmatmul.bf16.gmra.mxu0 %v829
    %v4900 = vpop.f32.mrf.mxu0
    %v4901 = vadd.f32 %v4888, %v4900
    %v4902 = vpop.f32.mrf.mxu0
    %4903 = vdwg.mxu0
    %4904 = vmatpush.bf16.msra.mxu0 %v3513
    %4905 = vmatpush.bf16.msra.mxu0 %v3509
    %4906 = vmatpush.bf16.msra.mxu0 %v3505
    %4907 = vmatpush.bf16.msra.mxu0 %v3501
    %4908 = vmatpush.bf16.msra.mxu0 %v3497
    %4909 = vmatpush.bf16.msra.mxu0 %v3493
    %4910 = vmatpush.bf16.msra.mxu0 %v3489
    %4911 = vmatpush.bf16.msra.mxu0 %v3485
    %4912 = vmatmul.bf16.gmra.mxu0 %v832
    %v4913 = vpop.f32.mrf.mxu0
    %v4914 = vadd.f32 %v4901, %v4913
    %v4915 = vpop.f32.mrf.mxu0
    %4916 = vdwg.mxu0
    %4917 = vmatpush.bf16.msra.mxu0 %v3545
    %4918 = vmatpush.bf16.msra.mxu0 %v3541
    %4919 = vmatpush.bf16.msra.mxu0 %v3537
    %4920 = vmatpush.bf16.msra.mxu0 %v3533
    %4921 = vmatpush.bf16.msra.mxu0 %v3529
    %4922 = vmatpush.bf16.msra.mxu0 %v3525
    %4923 = vmatpush.bf16.msra.mxu0 %v3521
    %4924 = vmatpush.bf16.msra.mxu0 %v3517
    %4925 = vmatmul.bf16.gmra.mxu0 %v833
    %v4926 = vpop.f32.mrf.mxu0
    %v4927 = vadd.f32 %v4914, %v4926
    %v4928 = vpop.f32.mrf.mxu0
    %4929 = vdwg.mxu0
    %4930 = vmatpush.bf16.msra.mxu0 %v3577
    %4931 = vmatpush.bf16.msra.mxu0 %v3573
    %4932 = vmatpush.bf16.msra.mxu0 %v3569
    %4933 = vmatpush.bf16.msra.mxu0 %v3565
    %4934 = vmatpush.bf16.msra.mxu0 %v3561
    %4935 = vmatpush.bf16.msra.mxu0 %v3557
    %4936 = vmatpush.bf16.msra.mxu0 %v3553
    %4937 = vmatpush.bf16.msra.mxu0 %v3549
    %4938 = vmatmul.bf16.gmra.mxu0 %v834
    %v4939 = vpop.f32.mrf.mxu0
    %v4940 = vadd.f32 %v4927, %v4939
    %v4941 = vpop.f32.mrf.mxu0
    %4942 = vdwg.mxu0
    %4943 = vmatpush.bf16.msra.mxu0 %v3609
    %4944 = vmatpush.bf16.msra.mxu0 %v3605
    %4945 = vmatpush.bf16.msra.mxu0 %v3601
    %4946 = vmatpush.bf16.msra.mxu0 %v3597
    %4947 = vmatpush.bf16.msra.mxu0 %v3593
    %4948 = vmatpush.bf16.msra.mxu0 %v3589
    %4949 = vmatpush.bf16.msra.mxu0 %v3585
    %4950 = vmatpush.bf16.msra.mxu0 %v3581
    %4951 = vmatmul.bf16.gmra.mxu0 %v835
    %v4952 = vpop.f32.mrf.mxu0
    %v4953 = vadd.f32 %v4940, %v4952
    %v4954 = vpop.f32.mrf.mxu0
    %4955 = vdwg.mxu0
    %4956 = vmatpush.bf16.msra.mxu0 %v3641
    %4957 = vmatpush.bf16.msra.mxu0 %v3637
    %4958 = vmatpush.bf16.msra.mxu0 %v3633
    %4959 = vmatpush.bf16.msra.mxu0 %v3629
    %4960 = vmatpush.bf16.msra.mxu0 %v3625
    %4961 = vmatpush.bf16.msra.mxu0 %v3621
    %4962 = vmatpush.bf16.msra.mxu0 %v3617
    %4963 = vmatpush.bf16.msra.mxu0 %v3613
    %4964 = vmatmul.bf16.gmra.mxu0 %v836
    %v4965 = vpop.f32.mrf.mxu0
    %v4966 = vadd.f32 %v4953, %v4965
    %v4967 = vpop.f32.mrf.mxu0
    %4968 = vdwg.mxu0
    %4969 = vmatpush.bf16.msra.mxu0 %v3673
    %4970 = vmatpush.bf16.msra.mxu0 %v3669
    %4971 = vmatpush.bf16.msra.mxu0 %v3665
    %4972 = vmatpush.bf16.msra.mxu0 %v3661
    %4973 = vmatpush.bf16.msra.mxu0 %v3657
    %4974 = vmatpush.bf16.msra.mxu0 %v3653
    %4975 = vmatpush.bf16.msra.mxu0 %v3649
    %4976 = vmatpush.bf16.msra.mxu0 %v3645
    %4977 = vmatmul.bf16.gmra.mxu0 %v837
    %v4978 = vpop.f32.mrf.mxu0
    %v4979 = vadd.f32 %v4966, %v4978
    %v4980 = vpop.f32.mrf.mxu0
    %4981 = vdwg.mxu0
    %4982 = vmatpush.bf16.msra.mxu0 %v3705
    %4983 = vmatpush.bf16.msra.mxu0 %v3701
    %4984 = vmatpush.bf16.msra.mxu0 %v3697
    %4985 = vmatpush.bf16.msra.mxu0 %v3693
    %4986 = vmatpush.bf16.msra.mxu0 %v3689
    %4987 = vmatpush.bf16.msra.mxu0 %v3685
    %4988 = vmatpush.bf16.msra.mxu0 %v3681
    %4989 = vmatpush.bf16.msra.mxu0 %v3677
    %4990 = vmatmul.bf16.gmra.mxu0 %v838
    %v4991 = vpop.f32.mrf.mxu0
    %v4992 = vadd.f32 %v4979, %v4991
    %v4993 = vpop.f32.mrf.mxu0
    %4994 = vdwg.mxu0
    %4995 = vmatpush.bf16.msra.mxu0 %v3737
    %4996 = vmatpush.bf16.msra.mxu0 %v3733
    %4997 = vmatpush.bf16.msra.mxu0 %v3729
    %4998 = vmatpush.bf16.msra.mxu0 %v3725
    %4999 = vmatpush.bf16.msra.mxu0 %v3721
    %5000 = vmatpush.bf16.msra.mxu0 %v3717
    %5001 = vmatpush.bf16.msra.mxu0 %v3713
    %5002 = vmatpush.bf16.msra.mxu0 %v3709
    %5003 = vmatmul.bf16.gmra.mxu0 %v839
    %v5004 = vpop.f32.mrf.mxu0
    %v5005 = vadd.f32 %v4992, %v5004
    %v5006 = vpop.f32.mrf.mxu0
    %5007 = vdwg.mxu0
    %5008 = vmatpush.bf16.msra.mxu0 %v3769
    %5009 = vmatpush.bf16.msra.mxu0 %v3765
    %5010 = vmatpush.bf16.msra.mxu0 %v3761
    %5011 = vmatpush.bf16.msra.mxu0 %v3757
    %5012 = vmatpush.bf16.msra.mxu0 %v3753
    %5013 = vmatpush.bf16.msra.mxu0 %v3749
    %5014 = vmatpush.bf16.msra.mxu0 %v3745
    %5015 = vmatpush.bf16.msra.mxu0 %v3741
    %5016 = vmatmul.bf16.gmra.mxu0 %v842
    %v5017 = vpop.f32.mrf.mxu0
    %v5018 = vadd.f32 %v5005, %v5017
    %v5019 = vpop.f32.mrf.mxu0
    %5020 = vdwg.mxu0
    %5021 = vmatpush.bf16.msra.mxu0 %v3801
    %5022 = vmatpush.bf16.msra.mxu0 %v3797
    %5023 = vmatpush.bf16.msra.mxu0 %v3793
    %5024 = vmatpush.bf16.msra.mxu0 %v3789
    %5025 = vmatpush.bf16.msra.mxu0 %v3785
    %5026 = vmatpush.bf16.msra.mxu0 %v3781
    %5027 = vmatpush.bf16.msra.mxu0 %v3777
    %5028 = vmatpush.bf16.msra.mxu0 %v3773
    %5029 = vmatmul.bf16.gmra.mxu0 %v843
    %v5030 = vpop.f32.mrf.mxu0
    %v5031 = vadd.f32 %v5018, %v5030
    %v5032 = vpop.f32.mrf.mxu0
    %5033 = vdwg.mxu0
    %5034 = vmatpush.bf16.msra.mxu0 %v3833
    %5035 = vmatpush.bf16.msra.mxu0 %v3829
    %5036 = vmatpush.bf16.msra.mxu0 %v3825
    %5037 = vmatpush.bf16.msra.mxu0 %v3821
    %5038 = vmatpush.bf16.msra.mxu0 %v3817
    %5039 = vmatpush.bf16.msra.mxu0 %v3813
    %5040 = vmatpush.bf16.msra.mxu0 %v3809
    %5041 = vmatpush.bf16.msra.mxu0 %v3805
    %5042 = vmatmul.bf16.gmra.mxu0 %v844
    %v5043 = vpop.f32.mrf.mxu0
    %v5044 = vadd.f32 %v5031, %v5043
    %v5045 = vpop.f32.mrf.mxu0
    %5046 = vdwg.mxu0
    %5047 = vmatpush.bf16.msra.mxu0 %v3865
    %5048 = vmatpush.bf16.msra.mxu0 %v3861
    %5049 = vmatpush.bf16.msra.mxu0 %v3857
    %5050 = vmatpush.bf16.msra.mxu0 %v3853
    %5051 = vmatpush.bf16.msra.mxu0 %v3849
    %5052 = vmatpush.bf16.msra.mxu0 %v3845
    %5053 = vmatpush.bf16.msra.mxu0 %v3841
    %5054 = vmatpush.bf16.msra.mxu0 %v3837
    %5055 = vmatmul.bf16.gmra.mxu0 %v845
    %v5056 = vpop.f32.mrf.mxu0
    %v5057 = vadd.f32 %v5044, %v5056
    %v5058 = vpop.f32.mrf.mxu0
    %5059 = vdwg.mxu0
    %5060 = vmatpush.bf16.msra.mxu0 %v3897
    %5061 = vmatpush.bf16.msra.mxu0 %v3893
    %5062 = vmatpush.bf16.msra.mxu0 %v3889
    %5063 = vmatpush.bf16.msra.mxu0 %v3885
    %5064 = vmatpush.bf16.msra.mxu0 %v3881
    %5065 = vmatpush.bf16.msra.mxu0 %v3877
    %5066 = vmatpush.bf16.msra.mxu0 %v3873
    %5067 = vmatpush.bf16.msra.mxu0 %v3869
    %5068 = vmatmul.bf16.gmra.mxu0 %v846
    %v5069 = vpop.f32.mrf.mxu0
    %v5070 = vadd.f32 %v5057, %v5069
    %v5071 = vpop.f32.mrf.mxu0
    %5072 = vdwg.mxu0
    %5073 = vmatpush.bf16.msra.mxu0 %v3929
    %5074 = vmatpush.bf16.msra.mxu0 %v3925
    %5075 = vmatpush.bf16.msra.mxu0 %v3921
    %5076 = vmatpush.bf16.msra.mxu0 %v3917
    %5077 = vmatpush.bf16.msra.mxu0 %v3913
    %5078 = vmatpush.bf16.msra.mxu0 %v3909
    %5079 = vmatpush.bf16.msra.mxu0 %v3905
    %5080 = vmatpush.bf16.msra.mxu0 %v3901
    %5081 = vmatmul.bf16.gmra.mxu0 %v847
    %v5082 = vpop.f32.mrf.mxu0
    %v5083 = vadd.f32 %v5070, %v5082
    %v5084 = vpop.f32.mrf.mxu0
    %5085 = vdwg.mxu0
    %5086 = vmatpush.bf16.msra.mxu0 %v3961
    %5087 = vmatpush.bf16.msra.mxu0 %v3957
    %5088 = vmatpush.bf16.msra.mxu0 %v3953
    %5089 = vmatpush.bf16.msra.mxu0 %v3949
    %5090 = vmatpush.bf16.msra.mxu0 %v3945
    %5091 = vmatpush.bf16.msra.mxu0 %v3941
    %5092 = vmatpush.bf16.msra.mxu0 %v3937
    %5093 = vmatpush.bf16.msra.mxu0 %v3933
    %5094 = vmatmul.bf16.gmra.mxu0 %v848
    %v5095 = vpop.f32.mrf.mxu0
    %v5096 = vadd.f32 %v5083, %v5095
    %v5097 = vpop.f32.mrf.mxu0
    %5098 = vdwg.mxu0
    %5099 = vmatpush.bf16.msra.mxu0 %v3993
    %5100 = vmatpush.bf16.msra.mxu0 %v3989
    %5101 = vmatpush.bf16.msra.mxu0 %v3985
    %5102 = vmatpush.bf16.msra.mxu0 %v3981
    %5103 = vmatpush.bf16.msra.mxu0 %v3977
    %5104 = vmatpush.bf16.msra.mxu0 %v3973
    %5105 = vmatpush.bf16.msra.mxu0 %v3969
    %5106 = vmatpush.bf16.msra.mxu0 %v3965
    %5107 = vmatmul.bf16.gmra.mxu0 %v849
    %v5108 = vpop.f32.mrf.mxu0
    %v5109 = vadd.f32 %v5096, %v5108
    %v5110 = vpop.f32.mrf.mxu0
    %5111 = vdwg.mxu0
    %5112 = vmatpush.bf16.msra.mxu0 0
    %5113 = vmatpush.bf16.msra.mxu0 0
    %5114 = vmatpush.bf16.msra.mxu0 0
    %5115 = vmatpush.bf16.msra.mxu0 0
    %5116 = vmatpush.bf16.msra.mxu0 %v4009
    %5117 = vmatpush.bf16.msra.mxu0 %v4005
    %5118 = vmatpush.bf16.msra.mxu0 %v4001
    %5119 = vmatpush.bf16.msra.mxu0 %v3997
    %5120 = vmatmul.bf16.gmra.mxu0 %v4798
    %v5121 = vpop.f32.mrf.mxu0
    %v5122 = vadd.f32 %v5109, %v5121
    %v5123 = vpop.f32.mrf.mxu0
    %5124 = vdwg.mxu0
    %5125 = vmatpush.bf16.msra.mxu0 %v3258
    %5126 = vmatpush.bf16.msra.mxu0 %v3254
    %5127 = vmatpush.bf16.msra.mxu0 %v3250
    %5128 = vmatpush.bf16.msra.mxu0 %v3246
    %5129 = vmatpush.bf16.msra.mxu0 %v3242
    %5130 = vmatpush.bf16.msra.mxu0 %v3238
    %5131 = vmatpush.bf16.msra.mxu0 %v3234
    %5132 = vmatpush.bf16.msra.mxu0 %v3230
    %5133 = vmatmul.bf16.gmra.mxu0 %v822
    %v5134 = vpop.f32.mrf.mxu0
    %v5135 = vadd.f32 %v813, %v5134
    %v5136 = vpop.f32.mrf.mxu0
    %5137 = vdwg.mxu0
    %5138 = vmatpush.bf16.msra.mxu0 %v3290
    %5139 = vmatpush.bf16.msra.mxu0 %v3286
    %5140 = vmatpush.bf16.msra.mxu0 %v3282
    %5141 = vmatpush.bf16.msra.mxu0 %v3278
    %5142 = vmatpush.bf16.msra.mxu0 %v3274
    %5143 = vmatpush.bf16.msra.mxu0 %v3270
    %5144 = vmatpush.bf16.msra.mxu0 %v3266
    %5145 = vmatpush.bf16.msra.mxu0 %v3262
    %5146 = vmatmul.bf16.gmra.mxu0 %v823
    %v5147 = vpop.f32.mrf.mxu0
    %v5148 = vadd.f32 %v5135, %v5147
    %v5149 = vpop.f32.mrf.mxu0
    %5150 = vdwg.mxu0
    %5151 = vmatpush.bf16.msra.mxu0 %v3322
    %5152 = vmatpush.bf16.msra.mxu0 %v3318
    %5153 = vmatpush.bf16.msra.mxu0 %v3314
    %5154 = vmatpush.bf16.msra.mxu0 %v3310
    %5155 = vmatpush.bf16.msra.mxu0 %v3306
    %5156 = vmatpush.bf16.msra.mxu0 %v3302
    %5157 = vmatpush.bf16.msra.mxu0 %v3298
    %5158 = vmatpush.bf16.msra.mxu0 %v3294
    %5159 = vmatmul.bf16.gmra.mxu0 %v824
    %v5160 = vpop.f32.mrf.mxu0
    %v5161 = vadd.f32 %v5148, %v5160
    %v5162 = vpop.f32.mrf.mxu0
    %5163 = vdwg.mxu0
    %5164 = vmatpush.bf16.msra.mxu0 %v3354
    %5165 = vmatpush.bf16.msra.mxu0 %v3350
    %5166 = vmatpush.bf16.msra.mxu0 %v3346
    %5167 = vmatpush.bf16.msra.mxu0 %v3342
    %5168 = vmatpush.bf16.msra.mxu0 %v3338
    %5169 = vmatpush.bf16.msra.mxu0 %v3334
    %5170 = vmatpush.bf16.msra.mxu0 %v3330
    %5171 = vmatpush.bf16.msra.mxu0 %v3326
    %5172 = vmatmul.bf16.gmra.mxu0 %v825
    %v5173 = vpop.f32.mrf.mxu0
    %v5174 = vadd.f32 %v5161, %v5173
    %v5175 = vpop.f32.mrf.mxu0
    %5176 = vdwg.mxu0
    %5177 = vmatpush.bf16.msra.mxu0 %v3386
    %5178 = vmatpush.bf16.msra.mxu0 %v3382
    %5179 = vmatpush.bf16.msra.mxu0 %v3378
    %5180 = vmatpush.bf16.msra.mxu0 %v3374
    %5181 = vmatpush.bf16.msra.mxu0 %v3370
    %5182 = vmatpush.bf16.msra.mxu0 %v3366
    %5183 = vmatpush.bf16.msra.mxu0 %v3362
    %5184 = vmatpush.bf16.msra.mxu0 %v3358
    %5185 = vmatmul.bf16.gmra.mxu0 %v826
    %v5186 = vpop.f32.mrf.mxu0
    %v5187 = vadd.f32 %v5174, %v5186
    %v5188 = vpop.f32.mrf.mxu0
    %5189 = vdwg.mxu0
    %5190 = vmatpush.bf16.msra.mxu0 %v3418
    %5191 = vmatpush.bf16.msra.mxu0 %v3414
    %5192 = vmatpush.bf16.msra.mxu0 %v3410
    %5193 = vmatpush.bf16.msra.mxu0 %v3406
    %5194 = vmatpush.bf16.msra.mxu0 %v3402
    %5195 = vmatpush.bf16.msra.mxu0 %v3398
    %5196 = vmatpush.bf16.msra.mxu0 %v3394
    %5197 = vmatpush.bf16.msra.mxu0 %v3390
    %5198 = vmatmul.bf16.gmra.mxu0 %v827
    %v5199 = vpop.f32.mrf.mxu0
    %v5200 = vadd.f32 %v5187, %v5199
    %v5201 = vpop.f32.mrf.mxu0
    %5202 = vdwg.mxu0
    %5203 = vmatpush.bf16.msra.mxu0 %v3450
    %5204 = vmatpush.bf16.msra.mxu0 %v3446
    %5205 = vmatpush.bf16.msra.mxu0 %v3442
    %5206 = vmatpush.bf16.msra.mxu0 %v3438
    %5207 = vmatpush.bf16.msra.mxu0 %v3434
    %5208 = vmatpush.bf16.msra.mxu0 %v3430
    %5209 = vmatpush.bf16.msra.mxu0 %v3426
    %5210 = vmatpush.bf16.msra.mxu0 %v3422
    %5211 = vmatmul.bf16.gmra.mxu0 %v828
    %v5212 = vpop.f32.mrf.mxu0
    %v5213 = vadd.f32 %v5200, %v5212
    %v5214 = vpop.f32.mrf.mxu0
    %5215 = vdwg.mxu0
    %5216 = vmatpush.bf16.msra.mxu0 %v3482
    %5217 = vmatpush.bf16.msra.mxu0 %v3478
    %5218 = vmatpush.bf16.msra.mxu0 %v3474
    %5219 = vmatpush.bf16.msra.mxu0 %v3470
    %5220 = vmatpush.bf16.msra.mxu0 %v3466
    %5221 = vmatpush.bf16.msra.mxu0 %v3462
    %5222 = vmatpush.bf16.msra.mxu0 %v3458
    %5223 = vmatpush.bf16.msra.mxu0 %v3454
    %5224 = vmatmul.bf16.gmra.mxu0 %v829
    %v5225 = vpop.f32.mrf.mxu0
    %v5226 = vadd.f32 %v5213, %v5225
    %v5227 = vpop.f32.mrf.mxu0
    %5228 = vdwg.mxu0
    %5229 = vmatpush.bf16.msra.mxu0 %v3514
    %5230 = vmatpush.bf16.msra.mxu0 %v3510
    %5231 = vmatpush.bf16.msra.mxu0 %v3506
    %5232 = vmatpush.bf16.msra.mxu0 %v3502
    %5233 = vmatpush.bf16.msra.mxu0 %v3498
    %5234 = vmatpush.bf16.msra.mxu0 %v3494
    %5235 = vmatpush.bf16.msra.mxu0 %v3490
    %5236 = vmatpush.bf16.msra.mxu0 %v3486
    %5237 = vmatmul.bf16.gmra.mxu0 %v832
    %v5238 = vpop.f32.mrf.mxu0
    %v5239 = vadd.f32 %v5226, %v5238
    %v5240 = vpop.f32.mrf.mxu0
    %5241 = vdwg.mxu0
    %5242 = vmatpush.bf16.msra.mxu0 %v3546
    %5243 = vmatpush.bf16.msra.mxu0 %v3542
    %5244 = vmatpush.bf16.msra.mxu0 %v3538
    %5245 = vmatpush.bf16.msra.mxu0 %v3534
    %5246 = vmatpush.bf16.msra.mxu0 %v3530
    %5247 = vmatpush.bf16.msra.mxu0 %v3526
    %5248 = vmatpush.bf16.msra.mxu0 %v3522
    %5249 = vmatpush.bf16.msra.mxu0 %v3518
    %5250 = vmatmul.bf16.gmra.mxu0 %v833
    %v5251 = vpop.f32.mrf.mxu0
    %v5252 = vadd.f32 %v5239, %v5251
    %v5253 = vpop.f32.mrf.mxu0
    %5254 = vdwg.mxu0
    %5255 = vmatpush.bf16.msra.mxu0 %v3578
    %5256 = vmatpush.bf16.msra.mxu0 %v3574
    %5257 = vmatpush.bf16.msra.mxu0 %v3570
    %5258 = vmatpush.bf16.msra.mxu0 %v3566
    %5259 = vmatpush.bf16.msra.mxu0 %v3562
    %5260 = vmatpush.bf16.msra.mxu0 %v3558
    %5261 = vmatpush.bf16.msra.mxu0 %v3554
    %5262 = vmatpush.bf16.msra.mxu0 %v3550
    %5263 = vmatmul.bf16.gmra.mxu0 %v834
    %v5264 = vpop.f32.mrf.mxu0
    %v5265 = vadd.f32 %v5252, %v5264
    %v5266 = vpop.f32.mrf.mxu0
    %5267 = vdwg.mxu0
    %5268 = vmatpush.bf16.msra.mxu0 %v3610
    %5269 = vmatpush.bf16.msra.mxu0 %v3606
    %5270 = vmatpush.bf16.msra.mxu0 %v3602
    %5271 = vmatpush.bf16.msra.mxu0 %v3598
    %5272 = vmatpush.bf16.msra.mxu0 %v3594
    %5273 = vmatpush.bf16.msra.mxu0 %v3590
    %5274 = vmatpush.bf16.msra.mxu0 %v3586
    %5275 = vmatpush.bf16.msra.mxu0 %v3582
    %5276 = vmatmul.bf16.gmra.mxu0 %v835
    %v5277 = vpop.f32.mrf.mxu0
    %v5278 = vadd.f32 %v5265, %v5277
    %v5279 = vpop.f32.mrf.mxu0
    %5280 = vdwg.mxu0
    %5281 = vmatpush.bf16.msra.mxu0 %v3642
    %5282 = vmatpush.bf16.msra.mxu0 %v3638
    %5283 = vmatpush.bf16.msra.mxu0 %v3634
    %5284 = vmatpush.bf16.msra.mxu0 %v3630
    %5285 = vmatpush.bf16.msra.mxu0 %v3626
    %5286 = vmatpush.bf16.msra.mxu0 %v3622
    %5287 = vmatpush.bf16.msra.mxu0 %v3618
    %5288 = vmatpush.bf16.msra.mxu0 %v3614
    %5289 = vmatmul.bf16.gmra.mxu0 %v836
    %v5290 = vpop.f32.mrf.mxu0
    %v5291 = vadd.f32 %v5278, %v5290
    %v5292 = vpop.f32.mrf.mxu0
    %5293 = vdwg.mxu0
    %5294 = vmatpush.bf16.msra.mxu0 %v3674
    %5295 = vmatpush.bf16.msra.mxu0 %v3670
    %5296 = vmatpush.bf16.msra.mxu0 %v3666
    %5297 = vmatpush.bf16.msra.mxu0 %v3662
    %5298 = vmatpush.bf16.msra.mxu0 %v3658
    %5299 = vmatpush.bf16.msra.mxu0 %v3654
    %5300 = vmatpush.bf16.msra.mxu0 %v3650
    %5301 = vmatpush.bf16.msra.mxu0 %v3646
    %5302 = vmatmul.bf16.gmra.mxu0 %v837
    %v5303 = vpop.f32.mrf.mxu0
    %v5304 = vadd.f32 %v5291, %v5303
    %v5305 = vpop.f32.mrf.mxu0
    %5306 = vdwg.mxu0
    %5307 = vmatpush.bf16.msra.mxu0 %v3706
    %5308 = vmatpush.bf16.msra.mxu0 %v3702
    %5309 = vmatpush.bf16.msra.mxu0 %v3698
    %5310 = vmatpush.bf16.msra.mxu0 %v3694
    %5311 = vmatpush.bf16.msra.mxu0 %v3690
    %5312 = vmatpush.bf16.msra.mxu0 %v3686
    %5313 = vmatpush.bf16.msra.mxu0 %v3682
    %5314 = vmatpush.bf16.msra.mxu0 %v3678
    %5315 = vmatmul.bf16.gmra.mxu0 %v838
    %v5316 = vpop.f32.mrf.mxu0
    %v5317 = vadd.f32 %v5304, %v5316
    %v5318 = vpop.f32.mrf.mxu0
    %5319 = vdwg.mxu0
    %5320 = vmatpush.bf16.msra.mxu0 %v3738
    %5321 = vmatpush.bf16.msra.mxu0 %v3734
    %5322 = vmatpush.bf16.msra.mxu0 %v3730
    %5323 = vmatpush.bf16.msra.mxu0 %v3726
    %5324 = vmatpush.bf16.msra.mxu0 %v3722
    %5325 = vmatpush.bf16.msra.mxu0 %v3718
    %5326 = vmatpush.bf16.msra.mxu0 %v3714
    %5327 = vmatpush.bf16.msra.mxu0 %v3710
    %5328 = vmatmul.bf16.gmra.mxu0 %v839
    %v5329 = vpop.f32.mrf.mxu0
    %v5330 = vadd.f32 %v5317, %v5329
    %v5331 = vpop.f32.mrf.mxu0
    %5332 = vdwg.mxu0
    %5333 = vmatpush.bf16.msra.mxu0 %v3770
    %5334 = vmatpush.bf16.msra.mxu0 %v3766
    %5335 = vmatpush.bf16.msra.mxu0 %v3762
    %5336 = vmatpush.bf16.msra.mxu0 %v3758
    %5337 = vmatpush.bf16.msra.mxu0 %v3754
    %5338 = vmatpush.bf16.msra.mxu0 %v3750
    %5339 = vmatpush.bf16.msra.mxu0 %v3746
    %5340 = vmatpush.bf16.msra.mxu0 %v3742
    %5341 = vmatmul.bf16.gmra.mxu0 %v842
    %v5342 = vpop.f32.mrf.mxu0
    %v5343 = vadd.f32 %v5330, %v5342
    %v5344 = vpop.f32.mrf.mxu0
    %5345 = vdwg.mxu0
    %5346 = vmatpush.bf16.msra.mxu0 %v3802
    %5347 = vmatpush.bf16.msra.mxu0 %v3798
    %5348 = vmatpush.bf16.msra.mxu0 %v3794
    %5349 = vmatpush.bf16.msra.mxu0 %v3790
    %5350 = vmatpush.bf16.msra.mxu0 %v3786
    %5351 = vmatpush.bf16.msra.mxu0 %v3782
    %5352 = vmatpush.bf16.msra.mxu0 %v3778
    %5353 = vmatpush.bf16.msra.mxu0 %v3774
    %5354 = vmatmul.bf16.gmra.mxu0 %v843
    %v5355 = vpop.f32.mrf.mxu0
    %v5356 = vadd.f32 %v5343, %v5355
    %v5357 = vpop.f32.mrf.mxu0
    %5358 = vdwg.mxu0
    %5359 = vmatpush.bf16.msra.mxu0 %v3834
    %5360 = vmatpush.bf16.msra.mxu0 %v3830
    %5361 = vmatpush.bf16.msra.mxu0 %v3826
    %5362 = vmatpush.bf16.msra.mxu0 %v3822
    %5363 = vmatpush.bf16.msra.mxu0 %v3818
    %5364 = vmatpush.bf16.msra.mxu0 %v3814
    %5365 = vmatpush.bf16.msra.mxu0 %v3810
    %5366 = vmatpush.bf16.msra.mxu0 %v3806
    %5367 = vmatmul.bf16.gmra.mxu0 %v844
    %v5368 = vpop.f32.mrf.mxu0
    %v5369 = vadd.f32 %v5356, %v5368
    %v5370 = vpop.f32.mrf.mxu0
    %5371 = vdwg.mxu0
    %5372 = vmatpush.bf16.msra.mxu0 %v3866
    %5373 = vmatpush.bf16.msra.mxu0 %v3862
    %5374 = vmatpush.bf16.msra.mxu0 %v3858
    %5375 = vmatpush.bf16.msra.mxu0 %v3854
    %5376 = vmatpush.bf16.msra.mxu0 %v3850
    %5377 = vmatpush.bf16.msra.mxu0 %v3846
    %5378 = vmatpush.bf16.msra.mxu0 %v3842
    %5379 = vmatpush.bf16.msra.mxu0 %v3838
    %5380 = vmatmul.bf16.gmra.mxu0 %v845
    %v5381 = vpop.f32.mrf.mxu0
    %v5382 = vadd.f32 %v5369, %v5381
    %v5383 = vpop.f32.mrf.mxu0
    %5384 = vdwg.mxu0
    %5385 = vmatpush.bf16.msra.mxu0 %v3898
    %5386 = vmatpush.bf16.msra.mxu0 %v3894
    %5387 = vmatpush.bf16.msra.mxu0 %v3890
    %5388 = vmatpush.bf16.msra.mxu0 %v3886
    %5389 = vmatpush.bf16.msra.mxu0 %v3882
    %5390 = vmatpush.bf16.msra.mxu0 %v3878
    %5391 = vmatpush.bf16.msra.mxu0 %v3874
    %5392 = vmatpush.bf16.msra.mxu0 %v3870
    %5393 = vmatmul.bf16.gmra.mxu0 %v846
    %v5394 = vpop.f32.mrf.mxu0
    %v5395 = vadd.f32 %v5382, %v5394
    %v5396 = vpop.f32.mrf.mxu0
    %5397 = vdwg.mxu0
    %5398 = vmatpush.bf16.msra.mxu0 %v3930
    %5399 = vmatpush.bf16.msra.mxu0 %v3926
    %5400 = vmatpush.bf16.msra.mxu0 %v3922
    %5401 = vmatpush.bf16.msra.mxu0 %v3918
    %5402 = vmatpush.bf16.msra.mxu0 %v3914
    %5403 = vmatpush.bf16.msra.mxu0 %v3910
    %5404 = vmatpush.bf16.msra.mxu0 %v3906
    %5405 = vmatpush.bf16.msra.mxu0 %v3902
    %5406 = vmatmul.bf16.gmra.mxu0 %v847
    %v5407 = vpop.f32.mrf.mxu0
    %v5408 = vadd.f32 %v5395, %v5407
    %v5409 = vpop.f32.mrf.mxu0
    %5410 = vdwg.mxu0
    %5411 = vmatpush.bf16.msra.mxu0 %v3962
    %5412 = vmatpush.bf16.msra.mxu0 %v3958
    %5413 = vmatpush.bf16.msra.mxu0 %v3954
    %5414 = vmatpush.bf16.msra.mxu0 %v3950
    %5415 = vmatpush.bf16.msra.mxu0 %v3946
    %5416 = vmatpush.bf16.msra.mxu0 %v3942
    %5417 = vmatpush.bf16.msra.mxu0 %v3938
    %5418 = vmatpush.bf16.msra.mxu0 %v3934
    %5419 = vmatmul.bf16.gmra.mxu0 %v848
    %v5420 = vpop.f32.mrf.mxu0
    %v5421 = vadd.f32 %v5408, %v5420
    %v5422 = vpop.f32.mrf.mxu0
    %5423 = vdwg.mxu0
    %5424 = vmatpush.bf16.msra.mxu0 %v3994
    %5425 = vmatpush.bf16.msra.mxu0 %v3990
    %5426 = vmatpush.bf16.msra.mxu0 %v3986
    %5427 = vmatpush.bf16.msra.mxu0 %v3982
    %5428 = vmatpush.bf16.msra.mxu0 %v3978
    %5429 = vmatpush.bf16.msra.mxu0 %v3974
    %5430 = vmatpush.bf16.msra.mxu0 %v3970
    %5431 = vmatpush.bf16.msra.mxu0 %v3966
    %5432 = vmatmul.bf16.gmra.mxu0 %v849
    %v5433 = vpop.f32.mrf.mxu0
    %v5434 = vadd.f32 %v5421, %v5433
    %v5435 = vpop.f32.mrf.mxu0
    %5436 = vdwg.mxu0
    %5437 = vmatpush.bf16.msra.mxu0 0
    %5438 = vmatpush.bf16.msra.mxu0 0
    %5439 = vmatpush.bf16.msra.mxu0 0
    %5440 = vmatpush.bf16.msra.mxu0 0
    %5441 = vmatpush.bf16.msra.mxu0 %v4010
    %5442 = vmatpush.bf16.msra.mxu0 %v4006
    %5443 = vmatpush.bf16.msra.mxu0 %v4002
    %5444 = vmatpush.bf16.msra.mxu0 %v3998
    %5445 = vmatmul.bf16.gmra.mxu0 %v4798
    %v5446 = vpop.f32.mrf.mxu0
    %v5447 = vadd.f32 %v5434, %v5446
    %v5448 = vpop.f32.mrf.mxu0
    %5449 = vdwg.mxu0
    %5450 = vmatpush.bf16.msra.mxu0 %v3259
    %5451 = vmatpush.bf16.msra.mxu0 %v3255
    %5452 = vmatpush.bf16.msra.mxu0 %v3251
    %5453 = vmatpush.bf16.msra.mxu0 %v3247
    %5454 = vmatpush.bf16.msra.mxu0 %v3243
    %5455 = vmatpush.bf16.msra.mxu0 %v3239
    %5456 = vmatpush.bf16.msra.mxu0 %v3235
    %5457 = vmatpush.bf16.msra.mxu0 %v3231
    %5458 = vmatmul.bf16.gmra.mxu0 %v822
    %v5459 = vpop.f32.mrf.mxu0
    %v5460 = vadd.f32 %v814, %v5459
    %v5461 = vpop.f32.mrf.mxu0
    %5462 = vdwg.mxu0
    %5463 = vmatpush.bf16.msra.mxu0 %v3291
    %5464 = vmatpush.bf16.msra.mxu0 %v3287
    %5465 = vmatpush.bf16.msra.mxu0 %v3283
    %5466 = vmatpush.bf16.msra.mxu0 %v3279
    %5467 = vmatpush.bf16.msra.mxu0 %v3275
    %5468 = vmatpush.bf16.msra.mxu0 %v3271
    %5469 = vmatpush.bf16.msra.mxu0 %v3267
    %5470 = vmatpush.bf16.msra.mxu0 %v3263
    %5471 = vmatmul.bf16.gmra.mxu0 %v823
    %v5472 = vpop.f32.mrf.mxu0
    %v5473 = vadd.f32 %v5460, %v5472
    %v5474 = vpop.f32.mrf.mxu0
    %5475 = vdwg.mxu0
    %5476 = vmatpush.bf16.msra.mxu0 %v3323
    %5477 = vmatpush.bf16.msra.mxu0 %v3319
    %5478 = vmatpush.bf16.msra.mxu0 %v3315
    %5479 = vmatpush.bf16.msra.mxu0 %v3311
    %5480 = vmatpush.bf16.msra.mxu0 %v3307
    %5481 = vmatpush.bf16.msra.mxu0 %v3303
    %5482 = vmatpush.bf16.msra.mxu0 %v3299
    %5483 = vmatpush.bf16.msra.mxu0 %v3295
    %5484 = vmatmul.bf16.gmra.mxu0 %v824
    %v5485 = vpop.f32.mrf.mxu0
    %v5486 = vadd.f32 %v5473, %v5485
    %v5487 = vpop.f32.mrf.mxu0
    %5488 = vdwg.mxu0
    %5489 = vmatpush.bf16.msra.mxu0 %v3355
    %5490 = vmatpush.bf16.msra.mxu0 %v3351
    %5491 = vmatpush.bf16.msra.mxu0 %v3347
    %5492 = vmatpush.bf16.msra.mxu0 %v3343
    %5493 = vmatpush.bf16.msra.mxu0 %v3339
    %5494 = vmatpush.bf16.msra.mxu0 %v3335
    %5495 = vmatpush.bf16.msra.mxu0 %v3331
    %5496 = vmatpush.bf16.msra.mxu0 %v3327
    %5497 = vmatmul.bf16.gmra.mxu0 %v825
    %v5498 = vpop.f32.mrf.mxu0
    %v5499 = vadd.f32 %v5486, %v5498
    %v5500 = vpop.f32.mrf.mxu0
    %5501 = vdwg.mxu0
    %5502 = vmatpush.bf16.msra.mxu0 %v3387
    %5503 = vmatpush.bf16.msra.mxu0 %v3383
    %5504 = vmatpush.bf16.msra.mxu0 %v3379
    %5505 = vmatpush.bf16.msra.mxu0 %v3375
    %5506 = vmatpush.bf16.msra.mxu0 %v3371
    %5507 = vmatpush.bf16.msra.mxu0 %v3367
    %5508 = vmatpush.bf16.msra.mxu0 %v3363
    %5509 = vmatpush.bf16.msra.mxu0 %v3359
    %5510 = vmatmul.bf16.gmra.mxu0 %v826
    %v5511 = vpop.f32.mrf.mxu0
    %v5512 = vadd.f32 %v5499, %v5511
    %v5513 = vpop.f32.mrf.mxu0
    %5514 = vdwg.mxu0
    %5515 = vmatpush.bf16.msra.mxu0 %v3419
    %5516 = vmatpush.bf16.msra.mxu0 %v3415
    %5517 = vmatpush.bf16.msra.mxu0 %v3411
    %5518 = vmatpush.bf16.msra.mxu0 %v3407
    %5519 = vmatpush.bf16.msra.mxu0 %v3403
    %5520 = vmatpush.bf16.msra.mxu0 %v3399
    %5521 = vmatpush.bf16.msra.mxu0 %v3395
    %5522 = vmatpush.bf16.msra.mxu0 %v3391
    %5523 = vmatmul.bf16.gmra.mxu0 %v827
    %v5524 = vpop.f32.mrf.mxu0
    %v5525 = vadd.f32 %v5512, %v5524
    %v5526 = vpop.f32.mrf.mxu0
    %5527 = vdwg.mxu0
    %5528 = vmatpush.bf16.msra.mxu0 %v3451
    %5529 = vmatpush.bf16.msra.mxu0 %v3447
    %5530 = vmatpush.bf16.msra.mxu0 %v3443
    %5531 = vmatpush.bf16.msra.mxu0 %v3439
    %5532 = vmatpush.bf16.msra.mxu0 %v3435
    %5533 = vmatpush.bf16.msra.mxu0 %v3431
    %5534 = vmatpush.bf16.msra.mxu0 %v3427
    %5535 = vmatpush.bf16.msra.mxu0 %v3423
    %5536 = vmatmul.bf16.gmra.mxu0 %v828
    %v5537 = vpop.f32.mrf.mxu0
    %v5538 = vadd.f32 %v5525, %v5537
    %v5539 = vpop.f32.mrf.mxu0
    %5540 = vdwg.mxu0
    %5541 = vmatpush.bf16.msra.mxu0 %v3483
    %5542 = vmatpush.bf16.msra.mxu0 %v3479
    %5543 = vmatpush.bf16.msra.mxu0 %v3475
    %5544 = vmatpush.bf16.msra.mxu0 %v3471
    %5545 = vmatpush.bf16.msra.mxu0 %v3467
    %5546 = vmatpush.bf16.msra.mxu0 %v3463
    %5547 = vmatpush.bf16.msra.mxu0 %v3459
    %5548 = vmatpush.bf16.msra.mxu0 %v3455
    %5549 = vmatmul.bf16.gmra.mxu0 %v829
    %v5550 = vpop.f32.mrf.mxu0
    %v5551 = vadd.f32 %v5538, %v5550
    %v5552 = vpop.f32.mrf.mxu0
    %5553 = vdwg.mxu0
    %5554 = vmatpush.bf16.msra.mxu0 %v3515
    %5555 = vmatpush.bf16.msra.mxu0 %v3511
    %5556 = vmatpush.bf16.msra.mxu0 %v3507
    %5557 = vmatpush.bf16.msra.mxu0 %v3503
    %5558 = vmatpush.bf16.msra.mxu0 %v3499
    %5559 = vmatpush.bf16.msra.mxu0 %v3495
    %5560 = vmatpush.bf16.msra.mxu0 %v3491
    %5561 = vmatpush.bf16.msra.mxu0 %v3487
    %5562 = vmatmul.bf16.gmra.mxu0 %v832
    %v5563 = vpop.f32.mrf.mxu0
    %v5564 = vadd.f32 %v5551, %v5563
    %v5565 = vpop.f32.mrf.mxu0
    %5566 = vdwg.mxu0
    %5567 = vmatpush.bf16.msra.mxu0 %v3547
    %5568 = vmatpush.bf16.msra.mxu0 %v3543
    %5569 = vmatpush.bf16.msra.mxu0 %v3539
    %5570 = vmatpush.bf16.msra.mxu0 %v3535
    %5571 = vmatpush.bf16.msra.mxu0 %v3531
    %5572 = vmatpush.bf16.msra.mxu0 %v3527
    %5573 = vmatpush.bf16.msra.mxu0 %v3523
    %5574 = vmatpush.bf16.msra.mxu0 %v3519
    %5575 = vmatmul.bf16.gmra.mxu0 %v833
    %v5576 = vpop.f32.mrf.mxu0
    %v5577 = vadd.f32 %v5564, %v5576
    %v5578 = vpop.f32.mrf.mxu0
    %5579 = vdwg.mxu0
    %5580 = vmatpush.bf16.msra.mxu0 %v3579
    %5581 = vmatpush.bf16.msra.mxu0 %v3575
    %5582 = vmatpush.bf16.msra.mxu0 %v3571
    %5583 = vmatpush.bf16.msra.mxu0 %v3567
    %5584 = vmatpush.bf16.msra.mxu0 %v3563
    %5585 = vmatpush.bf16.msra.mxu0 %v3559
    %5586 = vmatpush.bf16.msra.mxu0 %v3555
    %5587 = vmatpush.bf16.msra.mxu0 %v3551
    %5588 = vmatmul.bf16.gmra.mxu0 %v834
    %v5589 = vpop.f32.mrf.mxu0
    %v5590 = vadd.f32 %v5577, %v5589
    %v5591 = vpop.f32.mrf.mxu0
    %5592 = vdwg.mxu0
    %5593 = vmatpush.bf16.msra.mxu0 %v3611
    %5594 = vmatpush.bf16.msra.mxu0 %v3607
    %5595 = vmatpush.bf16.msra.mxu0 %v3603
    %5596 = vmatpush.bf16.msra.mxu0 %v3599
    %5597 = vmatpush.bf16.msra.mxu0 %v3595
    %5598 = vmatpush.bf16.msra.mxu0 %v3591
    %5599 = vmatpush.bf16.msra.mxu0 %v3587
    %5600 = vmatpush.bf16.msra.mxu0 %v3583
    %5601 = vmatmul.bf16.gmra.mxu0 %v835
    %v5602 = vpop.f32.mrf.mxu0
    %v5603 = vadd.f32 %v5590, %v5602
    %v5604 = vpop.f32.mrf.mxu0
    %5605 = vdwg.mxu0
    %5606 = vmatpush.bf16.msra.mxu0 %v3643
    %5607 = vmatpush.bf16.msra.mxu0 %v3639
    %5608 = vmatpush.bf16.msra.mxu0 %v3635
    %5609 = vmatpush.bf16.msra.mxu0 %v3631
    %5610 = vmatpush.bf16.msra.mxu0 %v3627
    %5611 = vmatpush.bf16.msra.mxu0 %v3623
    %5612 = vmatpush.bf16.msra.mxu0 %v3619
    %5613 = vmatpush.bf16.msra.mxu0 %v3615
    %5614 = vmatmul.bf16.gmra.mxu0 %v836
    %v5615 = vpop.f32.mrf.mxu0
    %v5616 = vadd.f32 %v5603, %v5615
    %v5617 = vpop.f32.mrf.mxu0
    %5618 = vdwg.mxu0
    %5619 = vmatpush.bf16.msra.mxu0 %v3675
    %5620 = vmatpush.bf16.msra.mxu0 %v3671
    %5621 = vmatpush.bf16.msra.mxu0 %v3667
    %5622 = vmatpush.bf16.msra.mxu0 %v3663
    %5623 = vmatpush.bf16.msra.mxu0 %v3659
    %5624 = vmatpush.bf16.msra.mxu0 %v3655
    %5625 = vmatpush.bf16.msra.mxu0 %v3651
    %5626 = vmatpush.bf16.msra.mxu0 %v3647
    %5627 = vmatmul.bf16.gmra.mxu0 %v837
    %v5628 = vpop.f32.mrf.mxu0
    %v5629 = vadd.f32 %v5616, %v5628
    %v5630 = vpop.f32.mrf.mxu0
    %5631 = vdwg.mxu0
    %5632 = vmatpush.bf16.msra.mxu0 %v3707
    %5633 = vmatpush.bf16.msra.mxu0 %v3703
    %5634 = vmatpush.bf16.msra.mxu0 %v3699
    %5635 = vmatpush.bf16.msra.mxu0 %v3695
    %5636 = vmatpush.bf16.msra.mxu0 %v3691
    %5637 = vmatpush.bf16.msra.mxu0 %v3687
    %5638 = vmatpush.bf16.msra.mxu0 %v3683
    %5639 = vmatpush.bf16.msra.mxu0 %v3679
    %5640 = vmatmul.bf16.gmra.mxu0 %v838
    %v5641 = vpop.f32.mrf.mxu0
    %v5642 = vadd.f32 %v5629, %v5641
    %v5643 = vpop.f32.mrf.mxu0
    %5644 = vdwg.mxu0
    %5645 = vmatpush.bf16.msra.mxu0 %v3739
    %5646 = vmatpush.bf16.msra.mxu0 %v3735
    %5647 = vmatpush.bf16.msra.mxu0 %v3731
    %5648 = vmatpush.bf16.msra.mxu0 %v3727
    %5649 = vmatpush.bf16.msra.mxu0 %v3723
    %5650 = vmatpush.bf16.msra.mxu0 %v3719
    %5651 = vmatpush.bf16.msra.mxu0 %v3715
    %5652 = vmatpush.bf16.msra.mxu0 %v3711
    %5653 = vmatmul.bf16.gmra.mxu0 %v839
    %v5654 = vpop.f32.mrf.mxu0
    %v5655 = vadd.f32 %v5642, %v5654
    %v5656 = vpop.f32.mrf.mxu0
    %5657 = vdwg.mxu0
    %5658 = vmatpush.bf16.msra.mxu0 %v3771
    %5659 = vmatpush.bf16.msra.mxu0 %v3767
    %5660 = vmatpush.bf16.msra.mxu0 %v3763
    %5661 = vmatpush.bf16.msra.mxu0 %v3759
    %5662 = vmatpush.bf16.msra.mxu0 %v3755
    %5663 = vmatpush.bf16.msra.mxu0 %v3751
    %5664 = vmatpush.bf16.msra.mxu0 %v3747
    %5665 = vmatpush.bf16.msra.mxu0 %v3743
    %5666 = vmatmul.bf16.gmra.mxu0 %v842
    %v5667 = vpop.f32.mrf.mxu0
    %v5668 = vadd.f32 %v5655, %v5667
    %v5669 = vpop.f32.mrf.mxu0
    %5670 = vdwg.mxu0
    %5671 = vmatpush.bf16.msra.mxu0 %v3803
    %5672 = vmatpush.bf16.msra.mxu0 %v3799
    %5673 = vmatpush.bf16.msra.mxu0 %v3795
    %5674 = vmatpush.bf16.msra.mxu0 %v3791
    %5675 = vmatpush.bf16.msra.mxu0 %v3787
    %5676 = vmatpush.bf16.msra.mxu0 %v3783
    %5677 = vmatpush.bf16.msra.mxu0 %v3779
    %5678 = vmatpush.bf16.msra.mxu0 %v3775
    %5679 = vmatmul.bf16.gmra.mxu0 %v843
    %v5680 = vpop.f32.mrf.mxu0
    %v5681 = vadd.f32 %v5668, %v5680
    %v5682 = vpop.f32.mrf.mxu0
    %5683 = vdwg.mxu0
    %5684 = vmatpush.bf16.msra.mxu0 %v3835
    %5685 = vmatpush.bf16.msra.mxu0 %v3831
    %5686 = vmatpush.bf16.msra.mxu0 %v3827
    %5687 = vmatpush.bf16.msra.mxu0 %v3823
    %5688 = vmatpush.bf16.msra.mxu0 %v3819
    %5689 = vmatpush.bf16.msra.mxu0 %v3815
    %5690 = vmatpush.bf16.msra.mxu0 %v3811
    %5691 = vmatpush.bf16.msra.mxu0 %v3807
    %5692 = vmatmul.bf16.gmra.mxu0 %v844
    %v5693 = vpop.f32.mrf.mxu0
    %v5694 = vadd.f32 %v5681, %v5693
    %v5695 = vpop.f32.mrf.mxu0
    %5696 = vdwg.mxu0
    %5697 = vmatpush.bf16.msra.mxu0 %v3867
    %5698 = vmatpush.bf16.msra.mxu0 %v3863
    %5699 = vmatpush.bf16.msra.mxu0 %v3859
    %5700 = vmatpush.bf16.msra.mxu0 %v3855
    %5701 = vmatpush.bf16.msra.mxu0 %v3851
    %5702 = vmatpush.bf16.msra.mxu0 %v3847
    %5703 = vmatpush.bf16.msra.mxu0 %v3843
    %5704 = vmatpush.bf16.msra.mxu0 %v3839
    %5705 = vmatmul.bf16.gmra.mxu0 %v845
    %v5706 = vpop.f32.mrf.mxu0
    %v5707 = vadd.f32 %v5694, %v5706
    %v5708 = vpop.f32.mrf.mxu0
    %5709 = vdwg.mxu0
    %5710 = vmatpush.bf16.msra.mxu0 %v3899
    %5711 = vmatpush.bf16.msra.mxu0 %v3895
    %5712 = vmatpush.bf16.msra.mxu0 %v3891
    %5713 = vmatpush.bf16.msra.mxu0 %v3887
    %5714 = vmatpush.bf16.msra.mxu0 %v3883
    %5715 = vmatpush.bf16.msra.mxu0 %v3879
    %5716 = vmatpush.bf16.msra.mxu0 %v3875
    %5717 = vmatpush.bf16.msra.mxu0 %v3871
    %5718 = vmatmul.bf16.gmra.mxu0 %v846
    %v5719 = vpop.f32.mrf.mxu0
    %v5720 = vadd.f32 %v5707, %v5719
    %v5721 = vpop.f32.mrf.mxu0
    %5722 = vdwg.mxu0
    %5723 = vmatpush.bf16.msra.mxu0 %v3931
    %5724 = vmatpush.bf16.msra.mxu0 %v3927
    %5725 = vmatpush.bf16.msra.mxu0 %v3923
    %5726 = vmatpush.bf16.msra.mxu0 %v3919
    %5727 = vmatpush.bf16.msra.mxu0 %v3915
    %5728 = vmatpush.bf16.msra.mxu0 %v3911
    %5729 = vmatpush.bf16.msra.mxu0 %v3907
    %5730 = vmatpush.bf16.msra.mxu0 %v3903
    %5731 = vmatmul.bf16.gmra.mxu0 %v847
    %v5732 = vpop.f32.mrf.mxu0
    %v5733 = vadd.f32 %v5720, %v5732
    %v5734 = vpop.f32.mrf.mxu0
    %5735 = vdwg.mxu0
    %5736 = vmatpush.bf16.msra.mxu0 %v3963
    %5737 = vmatpush.bf16.msra.mxu0 %v3959
    %5738 = vmatpush.bf16.msra.mxu0 %v3955
    %5739 = vmatpush.bf16.msra.mxu0 %v3951
    %5740 = vmatpush.bf16.msra.mxu0 %v3947
    %5741 = vmatpush.bf16.msra.mxu0 %v3943
    %5742 = vmatpush.bf16.msra.mxu0 %v3939
    %5743 = vmatpush.bf16.msra.mxu0 %v3935
    %5744 = vmatmul.bf16.gmra.mxu0 %v848
    %v5745 = vpop.f32.mrf.mxu0
    %v5746 = vadd.f32 %v5733, %v5745
    %v5747 = vpop.f32.mrf.mxu0
    %5748 = vdwg.mxu0
    %5749 = vmatpush.bf16.msra.mxu0 %v3995
    %5750 = vmatpush.bf16.msra.mxu0 %v3991
    %5751 = vmatpush.bf16.msra.mxu0 %v3987
    %5752 = vmatpush.bf16.msra.mxu0 %v3983
    %5753 = vmatpush.bf16.msra.mxu0 %v3979
    %5754 = vmatpush.bf16.msra.mxu0 %v3975
    %5755 = vmatpush.bf16.msra.mxu0 %v3971
    %5756 = vmatpush.bf16.msra.mxu0 %v3967
    %5757 = vmatmul.bf16.gmra.mxu0 %v849
    %v5758 = vpop.f32.mrf.mxu0
    %v5759 = vadd.f32 %v5746, %v5758
    %v5760 = vpop.f32.mrf.mxu0
    %5761 = vdwg.mxu0
    %5762 = vmatpush.bf16.msra.mxu0 0
    %5763 = vmatpush.bf16.msra.mxu0 0
    %5764 = vmatpush.bf16.msra.mxu0 0
    %5765 = vmatpush.bf16.msra.mxu0 0
    %5766 = vmatpush.bf16.msra.mxu0 %v4011
    %5767 = vmatpush.bf16.msra.mxu0 %v4007
    %5768 = vmatpush.bf16.msra.mxu0 %v4003
    %5769 = vmatpush.bf16.msra.mxu0 %v3999
    %5770 = vmatmul.bf16.gmra.mxu0 %v4798
    %v5771 = vpop.f32.mrf.mxu0
    %v5772 = vadd.f32 %v5759, %v5771
    %v5773 = vpop.f32.mrf.mxu0
    %5774 = vdwg.mxu0
    %5775 = vmatpush.bf16.msra.mxu0 %v3260
    %5776 = vmatpush.bf16.msra.mxu0 %v3256
    %5777 = vmatpush.bf16.msra.mxu0 %v3252
    %5778 = vmatpush.bf16.msra.mxu0 %v3248
    %5779 = vmatpush.bf16.msra.mxu0 %v3244
    %5780 = vmatpush.bf16.msra.mxu0 %v3240
    %5781 = vmatpush.bf16.msra.mxu0 %v3236
    %5782 = vmatpush.bf16.msra.mxu0 %v3232
    %5783 = vmatmul.bf16.gmra.mxu0 %v822
    %v5784 = vpop.f32.mrf.mxu0
    %v5785 = vadd.f32 %v815, %v5784
    %v5786 = vpop.f32.mrf.mxu0
    %5787 = vdwg.mxu0
    %5788 = vmatpush.bf16.msra.mxu0 %v3292
    %5789 = vmatpush.bf16.msra.mxu0 %v3288
    %5790 = vmatpush.bf16.msra.mxu0 %v3284
    %5791 = vmatpush.bf16.msra.mxu0 %v3280
    %5792 = vmatpush.bf16.msra.mxu0 %v3276
    %5793 = vmatpush.bf16.msra.mxu0 %v3272
    %5794 = vmatpush.bf16.msra.mxu0 %v3268
    %5795 = vmatpush.bf16.msra.mxu0 %v3264
    %5796 = vmatmul.bf16.gmra.mxu0 %v823
    %v5797 = vpop.f32.mrf.mxu0
    %v5798 = vadd.f32 %v5785, %v5797
    %v5799 = vpop.f32.mrf.mxu0
    %5800 = vdwg.mxu0
    %5801 = vmatpush.bf16.msra.mxu0 %v3324
    %5802 = vmatpush.bf16.msra.mxu0 %v3320
    %5803 = vmatpush.bf16.msra.mxu0 %v3316
    %5804 = vmatpush.bf16.msra.mxu0 %v3312
    %5805 = vmatpush.bf16.msra.mxu0 %v3308
    %5806 = vmatpush.bf16.msra.mxu0 %v3304
    %5807 = vmatpush.bf16.msra.mxu0 %v3300
    %5808 = vmatpush.bf16.msra.mxu0 %v3296
    %5809 = vmatmul.bf16.gmra.mxu0 %v824
    %v5810 = vpop.f32.mrf.mxu0
    %v5811 = vadd.f32 %v5798, %v5810
    %v5812 = vpop.f32.mrf.mxu0
    %5813 = vdwg.mxu0
    %5814 = vmatpush.bf16.msra.mxu0 %v3356
    %5815 = vmatpush.bf16.msra.mxu0 %v3352
    %5816 = vmatpush.bf16.msra.mxu0 %v3348
    %5817 = vmatpush.bf16.msra.mxu0 %v3344
    %5818 = vmatpush.bf16.msra.mxu0 %v3340
    %5819 = vmatpush.bf16.msra.mxu0 %v3336
    %5820 = vmatpush.bf16.msra.mxu0 %v3332
    %5821 = vmatpush.bf16.msra.mxu0 %v3328
    %5822 = vmatmul.bf16.gmra.mxu0 %v825
    %v5823 = vpop.f32.mrf.mxu0
    %v5824 = vadd.f32 %v5811, %v5823
    %v5825 = vpop.f32.mrf.mxu0
    %5826 = vdwg.mxu0
    %5827 = vmatpush.bf16.msra.mxu0 %v3388
    %5828 = vmatpush.bf16.msra.mxu0 %v3384
    %5829 = vmatpush.bf16.msra.mxu0 %v3380
    %5830 = vmatpush.bf16.msra.mxu0 %v3376
    %5831 = vmatpush.bf16.msra.mxu0 %v3372
    %5832 = vmatpush.bf16.msra.mxu0 %v3368
    %5833 = vmatpush.bf16.msra.mxu0 %v3364
    %5834 = vmatpush.bf16.msra.mxu0 %v3360
    %5835 = vmatmul.bf16.gmra.mxu0 %v826
    %v5836 = vpop.f32.mrf.mxu0
    %v5837 = vadd.f32 %v5824, %v5836
    %v5838 = vpop.f32.mrf.mxu0
    %5839 = vdwg.mxu0
    %5840 = vmatpush.bf16.msra.mxu0 %v3420
    %5841 = vmatpush.bf16.msra.mxu0 %v3416
    %5842 = vmatpush.bf16.msra.mxu0 %v3412
    %5843 = vmatpush.bf16.msra.mxu0 %v3408
    %5844 = vmatpush.bf16.msra.mxu0 %v3404
    %5845 = vmatpush.bf16.msra.mxu0 %v3400
    %5846 = vmatpush.bf16.msra.mxu0 %v3396
    %5847 = vmatpush.bf16.msra.mxu0 %v3392
    %5848 = vmatmul.bf16.gmra.mxu0 %v827
    %v5849 = vpop.f32.mrf.mxu0
    %v5850 = vadd.f32 %v5837, %v5849
    %v5851 = vpop.f32.mrf.mxu0
    %5852 = vdwg.mxu0
    %5853 = vmatpush.bf16.msra.mxu0 %v3452
    %5854 = vmatpush.bf16.msra.mxu0 %v3448
    %5855 = vmatpush.bf16.msra.mxu0 %v3444
    %5856 = vmatpush.bf16.msra.mxu0 %v3440
    %5857 = vmatpush.bf16.msra.mxu0 %v3436
    %5858 = vmatpush.bf16.msra.mxu0 %v3432
    %5859 = vmatpush.bf16.msra.mxu0 %v3428
    %5860 = vmatpush.bf16.msra.mxu0 %v3424
    %5861 = vmatmul.bf16.gmra.mxu0 %v828
    %v5862 = vpop.f32.mrf.mxu0
    %v5863 = vadd.f32 %v5850, %v5862
    %v5864 = vpop.f32.mrf.mxu0
    %5865 = vdwg.mxu0
    %5866 = vmatpush.bf16.msra.mxu0 %v3484
    %5867 = vmatpush.bf16.msra.mxu0 %v3480
    %5868 = vmatpush.bf16.msra.mxu0 %v3476
    %5869 = vmatpush.bf16.msra.mxu0 %v3472
    %5870 = vmatpush.bf16.msra.mxu0 %v3468
    %5871 = vmatpush.bf16.msra.mxu0 %v3464
    %5872 = vmatpush.bf16.msra.mxu0 %v3460
    %5873 = vmatpush.bf16.msra.mxu0 %v3456
    %5874 = vmatmul.bf16.gmra.mxu0 %v829
    %v5875 = vpop.f32.mrf.mxu0
    %v5876 = vadd.f32 %v5863, %v5875
    %v5877 = vpop.f32.mrf.mxu0
    %5878 = vdwg.mxu0
    %5879 = vmatpush.bf16.msra.mxu0 %v3516
    %5880 = vmatpush.bf16.msra.mxu0 %v3512
    %5881 = vmatpush.bf16.msra.mxu0 %v3508
    %5882 = vmatpush.bf16.msra.mxu0 %v3504
    %5883 = vmatpush.bf16.msra.mxu0 %v3500
    %5884 = vmatpush.bf16.msra.mxu0 %v3496
    %5885 = vmatpush.bf16.msra.mxu0 %v3492
    %5886 = vmatpush.bf16.msra.mxu0 %v3488
    %5887 = vmatmul.bf16.gmra.mxu0 %v832
    %v5888 = vpop.f32.mrf.mxu0
    %v5889 = vadd.f32 %v5876, %v5888
    %v5890 = vpop.f32.mrf.mxu0
    %5891 = vdwg.mxu0
    %5892 = vmatpush.bf16.msra.mxu0 %v3548
    %5893 = vmatpush.bf16.msra.mxu0 %v3544
    %5894 = vmatpush.bf16.msra.mxu0 %v3540
    %5895 = vmatpush.bf16.msra.mxu0 %v3536
    %5896 = vmatpush.bf16.msra.mxu0 %v3532
    %5897 = vmatpush.bf16.msra.mxu0 %v3528
    %5898 = vmatpush.bf16.msra.mxu0 %v3524
    %5899 = vmatpush.bf16.msra.mxu0 %v3520
    %5900 = vmatmul.bf16.gmra.mxu0 %v833
    %v5901 = vpop.f32.mrf.mxu0
    %v5902 = vadd.f32 %v5889, %v5901
    %v5903 = vpop.f32.mrf.mxu0
    %5904 = vdwg.mxu0
    %5905 = vmatpush.bf16.msra.mxu0 %v3580
    %5906 = vmatpush.bf16.msra.mxu0 %v3576
    %5907 = vmatpush.bf16.msra.mxu0 %v3572
    %5908 = vmatpush.bf16.msra.mxu0 %v3568
    %5909 = vmatpush.bf16.msra.mxu0 %v3564
    %5910 = vmatpush.bf16.msra.mxu0 %v3560
    %5911 = vmatpush.bf16.msra.mxu0 %v3556
    %5912 = vmatpush.bf16.msra.mxu0 %v3552
    %5913 = vmatmul.bf16.gmra.mxu0 %v834
    %v5914 = vpop.f32.mrf.mxu0
    %v5915 = vadd.f32 %v5902, %v5914
    %v5916 = vpop.f32.mrf.mxu0
    %5917 = vdwg.mxu0
    %5918 = vmatpush.bf16.msra.mxu0 %v3612
    %5919 = vmatpush.bf16.msra.mxu0 %v3608
    %5920 = vmatpush.bf16.msra.mxu0 %v3604
    %5921 = vmatpush.bf16.msra.mxu0 %v3600
    %5922 = vmatpush.bf16.msra.mxu0 %v3596
    %5923 = vmatpush.bf16.msra.mxu0 %v3592
    %5924 = vmatpush.bf16.msra.mxu0 %v3588
    %5925 = vmatpush.bf16.msra.mxu0 %v3584
    %5926 = vmatmul.bf16.gmra.mxu0 %v835
    %v5927 = vpop.f32.mrf.mxu0
    %v5928 = vadd.f32 %v5915, %v5927
    %v5929 = vpop.f32.mrf.mxu0
    %5930 = vdwg.mxu0
    %5931 = vmatpush.bf16.msra.mxu0 %v3644
    %5932 = vmatpush.bf16.msra.mxu0 %v3640
    %5933 = vmatpush.bf16.msra.mxu0 %v3636
    %5934 = vmatpush.bf16.msra.mxu0 %v3632
    %5935 = vmatpush.bf16.msra.mxu0 %v3628
    %5936 = vmatpush.bf16.msra.mxu0 %v3624
    %5937 = vmatpush.bf16.msra.mxu0 %v3620
    %5938 = vmatpush.bf16.msra.mxu0 %v3616
    %5939 = vmatmul.bf16.gmra.mxu0 %v836
    %v5940 = vpop.f32.mrf.mxu0
    %v5941 = vadd.f32 %v5928, %v5940
    %v5942 = vpop.f32.mrf.mxu0
    %5943 = vdwg.mxu0
    %5944 = vmatpush.bf16.msra.mxu0 %v3676
    %5945 = vmatpush.bf16.msra.mxu0 %v3672
    %5946 = vmatpush.bf16.msra.mxu0 %v3668
    %5947 = vmatpush.bf16.msra.mxu0 %v3664
    %5948 = vmatpush.bf16.msra.mxu0 %v3660
    %5949 = vmatpush.bf16.msra.mxu0 %v3656
    %5950 = vmatpush.bf16.msra.mxu0 %v3652
    %5951 = vmatpush.bf16.msra.mxu0 %v3648
    %5952 = vmatmul.bf16.gmra.mxu0 %v837
    %v5953 = vpop.f32.mrf.mxu0
    %v5954 = vadd.f32 %v5941, %v5953
    %v5955 = vpop.f32.mrf.mxu0
    %5956 = vdwg.mxu0
    %5957 = vmatpush.bf16.msra.mxu0 %v3708
    %5958 = vmatpush.bf16.msra.mxu0 %v3704
    %5959 = vmatpush.bf16.msra.mxu0 %v3700
    %5960 = vmatpush.bf16.msra.mxu0 %v3696
    %5961 = vmatpush.bf16.msra.mxu0 %v3692
    %5962 = vmatpush.bf16.msra.mxu0 %v3688
    %5963 = vmatpush.bf16.msra.mxu0 %v3684
    %5964 = vmatpush.bf16.msra.mxu0 %v3680
    %5965 = vmatmul.bf16.gmra.mxu0 %v838
    %v5966 = vpop.f32.mrf.mxu0
    %v5967 = vadd.f32 %v5954, %v5966
    %v5968 = vpop.f32.mrf.mxu0
    %5969 = vdwg.mxu0
    %5970 = vmatpush.bf16.msra.mxu0 %v3740
    %5971 = vmatpush.bf16.msra.mxu0 %v3736
    %5972 = vmatpush.bf16.msra.mxu0 %v3732
    %5973 = vmatpush.bf16.msra.mxu0 %v3728
    %5974 = vmatpush.bf16.msra.mxu0 %v3724
    %5975 = vmatpush.bf16.msra.mxu0 %v3720
    %5976 = vmatpush.bf16.msra.mxu0 %v3716
    %5977 = vmatpush.bf16.msra.mxu0 %v3712
    %5978 = vmatmul.bf16.gmra.mxu0 %v839
    %v5979 = vpop.f32.mrf.mxu0
    %v5980 = vadd.f32 %v5967, %v5979
    %v5981 = vpop.f32.mrf.mxu0
    %5982 = vdwg.mxu0
    %5983 = vmatpush.bf16.msra.mxu0 %v3772
    %5984 = vmatpush.bf16.msra.mxu0 %v3768
    %5985 = vmatpush.bf16.msra.mxu0 %v3764
    %5986 = vmatpush.bf16.msra.mxu0 %v3760
    %5987 = vmatpush.bf16.msra.mxu0 %v3756
    %5988 = vmatpush.bf16.msra.mxu0 %v3752
    %5989 = vmatpush.bf16.msra.mxu0 %v3748
    %5990 = vmatpush.bf16.msra.mxu0 %v3744
    %5991 = vmatmul.bf16.gmra.mxu0 %v842
    %v5992 = vpop.f32.mrf.mxu0
    %v5993 = vadd.f32 %v5980, %v5992
    %v5994 = vpop.f32.mrf.mxu0
    %5995 = vdwg.mxu0
    %5996 = vmatpush.bf16.msra.mxu0 %v3804
    %5997 = vmatpush.bf16.msra.mxu0 %v3800
    %5998 = vmatpush.bf16.msra.mxu0 %v3796
    %5999 = vmatpush.bf16.msra.mxu0 %v3792
    %6000 = vmatpush.bf16.msra.mxu0 %v3788
    %6001 = vmatpush.bf16.msra.mxu0 %v3784
    %6002 = vmatpush.bf16.msra.mxu0 %v3780
    %6003 = vmatpush.bf16.msra.mxu0 %v3776
    %6004 = vmatmul.bf16.gmra.mxu0 %v843
    %v6005 = vpop.f32.mrf.mxu0
    %v6006 = vadd.f32 %v5993, %v6005
    %v6007 = vpop.f32.mrf.mxu0
    %6008 = vdwg.mxu0
    %6009 = vmatpush.bf16.msra.mxu0 %v3836
    %6010 = vmatpush.bf16.msra.mxu0 %v3832
    %6011 = vmatpush.bf16.msra.mxu0 %v3828
    %6012 = vmatpush.bf16.msra.mxu0 %v3824
    %6013 = vmatpush.bf16.msra.mxu0 %v3820
    %6014 = vmatpush.bf16.msra.mxu0 %v3816
    %6015 = vmatpush.bf16.msra.mxu0 %v3812
    %6016 = vmatpush.bf16.msra.mxu0 %v3808
    %6017 = vmatmul.bf16.gmra.mxu0 %v844
    %v6018 = vpop.f32.mrf.mxu0
    %v6019 = vadd.f32 %v6006, %v6018
    %v6020 = vpop.f32.mrf.mxu0
    %6021 = vdwg.mxu0
    %6022 = vmatpush.bf16.msra.mxu0 %v3868
    %6023 = vmatpush.bf16.msra.mxu0 %v3864
    %6024 = vmatpush.bf16.msra.mxu0 %v3860
    %6025 = vmatpush.bf16.msra.mxu0 %v3856
    %6026 = vmatpush.bf16.msra.mxu0 %v3852
    %6027 = vmatpush.bf16.msra.mxu0 %v3848
    %6028 = vmatpush.bf16.msra.mxu0 %v3844
    %6029 = vmatpush.bf16.msra.mxu0 %v3840
    %6030 = vmatmul.bf16.gmra.mxu0 %v845
    %v6031 = vpop.f32.mrf.mxu0
    %v6032 = vadd.f32 %v6019, %v6031
    %v6033 = vpop.f32.mrf.mxu0
    %6034 = vdwg.mxu0
    %6035 = vmatpush.bf16.msra.mxu0 %v3900
    %6036 = vmatpush.bf16.msra.mxu0 %v3896
    %6037 = vmatpush.bf16.msra.mxu0 %v3892
    %6038 = vmatpush.bf16.msra.mxu0 %v3888
    %6039 = vmatpush.bf16.msra.mxu0 %v3884
    %6040 = vmatpush.bf16.msra.mxu0 %v3880
    %6041 = vmatpush.bf16.msra.mxu0 %v3876
    %6042 = vmatpush.bf16.msra.mxu0 %v3872
    %6043 = vmatmul.bf16.gmra.mxu0 %v846
    %v6044 = vpop.f32.mrf.mxu0
    %v6045 = vadd.f32 %v6032, %v6044
    %v6046 = vpop.f32.mrf.mxu0
    %6047 = vdwg.mxu0
    %6048 = vmatpush.bf16.msra.mxu0 %v3932
    %6049 = vmatpush.bf16.msra.mxu0 %v3928
    %6050 = vmatpush.bf16.msra.mxu0 %v3924
    %6051 = vmatpush.bf16.msra.mxu0 %v3920
    %6052 = vmatpush.bf16.msra.mxu0 %v3916
    %6053 = vmatpush.bf16.msra.mxu0 %v3912
    %6054 = vmatpush.bf16.msra.mxu0 %v3908
    %6055 = vmatpush.bf16.msra.mxu0 %v3904
    %6056 = vmatmul.bf16.gmra.mxu0 %v847
    %v6057 = vpop.f32.mrf.mxu0
    %v6058 = vadd.f32 %v6045, %v6057
    %v6059 = vpop.f32.mrf.mxu0
    %6060 = vdwg.mxu0
    %6061 = vmatpush.bf16.msra.mxu0 %v3964
    %6062 = vmatpush.bf16.msra.mxu0 %v3960
    %6063 = vmatpush.bf16.msra.mxu0 %v3956
    %6064 = vmatpush.bf16.msra.mxu0 %v3952
    %6065 = vmatpush.bf16.msra.mxu0 %v3948
    %6066 = vmatpush.bf16.msra.mxu0 %v3944
    %6067 = vmatpush.bf16.msra.mxu0 %v3940
    %6068 = vmatpush.bf16.msra.mxu0 %v3936
    %6069 = vmatmul.bf16.gmra.mxu0 %v848
    %v6070 = vpop.f32.mrf.mxu0
    %v6071 = vadd.f32 %v6058, %v6070
    %v6072 = vpop.f32.mrf.mxu0
    %6073 = vdwg.mxu0
    %6074 = vmatpush.bf16.msra.mxu0 %v3996
    %6075 = vmatpush.bf16.msra.mxu0 %v3992
    %6076 = vmatpush.bf16.msra.mxu0 %v3988
    %6077 = vmatpush.bf16.msra.mxu0 %v3984
    %6078 = vmatpush.bf16.msra.mxu0 %v3980
    %6079 = vmatpush.bf16.msra.mxu0 %v3976
    %6080 = vmatpush.bf16.msra.mxu0 %v3972
    %6081 = vmatpush.bf16.msra.mxu0 %v3968
    %6082 = vmatmul.bf16.gmra.mxu0 %v849
    %v6083 = vpop.f32.mrf.mxu0
    %v6084 = vadd.f32 %v6071, %v6083
    %v6085 = vpop.f32.mrf.mxu0
    %6086 = vdwg.mxu0
    %6087 = vmatpush.bf16.msra.mxu0 0
    %6088 = vmatpush.bf16.msra.mxu0 0
    %6089 = vmatpush.bf16.msra.mxu0 0
    %6090 = vmatpush.bf16.msra.mxu0 0
    %6091 = vmatpush.bf16.msra.mxu0 %v4012
    %6092 = vmatpush.bf16.msra.mxu0 %v4008
    %6093 = vmatpush.bf16.msra.mxu0 %v4004
    %6094 = vmatpush.bf16.msra.mxu0 %v4000
    %6095 = vmatmul.bf16.gmra.mxu0 %v4798
    %v6096 = vpop.f32.mrf.mxu0
    %v6097 = vadd.f32 %v6084, %v6096
    %v6098 = vpop.f32.mrf.mxu0
    %6099 = vdwg.mxu0
    %v6100 = vmax.f32 %v5122, 0.0
    %v6101 = vmax.f32 %v5447, 0.0
    %v6102 = vmax.f32 %v5772, 0.0
    %v6103 = vmax.f32 %v6097, 0.0
    %v6104 = vpack.c.bf16 %v6100, %v6100
    %v6105 = vpack.c.bf16 %v6101, %v6101
    %v6106 = vpack.c.bf16 %v6102, %v6102
    %v6107 = vpack.c.bf16 %v6103, %v6103
    %v6108 = vld [vmem:[%s3] sm:$0xf]
    %v6109 = vld [vmem:[%s3 + $0x4] sm:$0xf]
    %v6110 = vld [vmem:[%s3 + $0x8] sm:$0xf]
    %v6111 = vld [vmem:[%s3 + $0xc] sm:$0xf]
    %v6112 = vld [vmem:[%s3 + $0x10] sm:$0xf]
    %v6113 = vld [vmem:[%s3 + $0x14] sm:$0xf]
    %v6114 = vld [vmem:[%s3 + $0x18] sm:$0xf]
    %v6115 = vld [vmem:[%s3 + $0x1c] sm:$0xf]
    %v6116 = vld [vmem:[%s3 + $0x20] sm:$0xf]
    %v6117 = vld [vmem:[%s3 + $0x24] sm:$0xf]
    %v6118 = vld [vmem:[%s3 + $0x28] sm:$0xf]
    %v6119 = vld [vmem:[%s3 + $0x2c] sm:$0xf]
    %v6120 = vld [vmem:[%s3 + $0x30] sm:$0xf]
    %v6121 = vld [vmem:[%s3 + $0x34] sm:$0xf]
    %v6122 = vld [vmem:[%s3 + $0x38] sm:$0xf]
    %v6123 = vld [vmem:[%s3 + $0x3c] sm:$0xf]
    %v6124 = vld [vmem:[%s3 + $0x40] sm:$0xf]
    %v6125 = vld [vmem:[%s3 + $0x44] sm:$0xf]
    %v6126 = vld [vmem:[%s3 + $0x48] sm:$0xf]
    %v6127 = vld [vmem:[%s3 + $0x4c] sm:$0xf]
    %v6128 = vld [vmem:[%s3 + $0x50] sm:$0xf]
    %v6129 = vld [vmem:[%s3 + $0x54] sm:$0xf]
    %v6130 = vld [vmem:[%s3 + $0x58] sm:$0xf]
    %v6131 = vld [vmem:[%s3 + $0x5c] sm:$0xf]
    %v6132 = vld [vmem:[%s3 + $0x60] sm:$0xf]
    %v6133 = vld [vmem:[%s3 + $0x64] sm:$0xf]
    %v6134 = vld [vmem:[%s3 + $0x68] sm:$0xf]
    %v6135 = vld [vmem:[%s3 + $0x6c] sm:$0xf]
    %v6136 = vld [vmem:[%s3 + $0x70] sm:$0xf]
    %v6137 = vld [vmem:[%s3 + $0x74] sm:$0xf]
    %v6138 = vld [vmem:[%s3 + $0x78] sm:$0xf]
    %v6139 = vld [vmem:[%s3 + $0x7c] sm:$0xf]
    %v6140 = vld [vmem:[%s3 + $0x80] sm:$0xf]
    %v6141 = vld [vmem:[%s3 + $0x84] sm:$0xf]
    %v6142 = vld [vmem:[%s3 + $0x88] sm:$0xf]
    %v6143 = vld [vmem:[%s3 + $0x8c] sm:$0xf]
    %v6144 = vld [vmem:[%s3 + $0x90] sm:$0xf]
    %v6145 = vld [vmem:[%s3 + $0x94] sm:$0xf]
    %v6146 = vld [vmem:[%s3 + $0x98] sm:$0xf]
    %v6147 = vld [vmem:[%s3 + $0x9c] sm:$0xf]
    %v6148 = vld [vmem:[%s3 + $0xa0] sm:$0xf]
    %v6149 = vld [vmem:[%s3 + $0xa4] sm:$0xf]
    %v6150 = vld [vmem:[%s3 + $0xa8] sm:$0xf]
    %v6151 = vld [vmem:[%s3 + $0xac] sm:$0xf]
    %v6152 = vld [vmem:[%s3 + $0xb0] sm:$0xf]
    %v6153 = vld [vmem:[%s3 + $0xb4] sm:$0xf]
    %v6154 = vld [vmem:[%s3 + $0xb8] sm:$0xf]
    %v6155 = vld [vmem:[%s3 + $0xbc] sm:$0xf]
    %v6156 = vld [vmem:[%s3 + $0xc0] sm:$0xf]
    %v6157 = vld [vmem:[%s3 + $0xc4] sm:$0xf]
    %v6158 = vld [vmem:[%s3 + $0xc8] sm:$0xf]
    %v6159 = vld [vmem:[%s3 + $0xcc] sm:$0xf]
    %v6160 = vld [vmem:[%s3 + $0xd0] sm:$0xf]
    %v6161 = vld [vmem:[%s3 + $0xd4] sm:$0xf]
    %v6162 = vld [vmem:[%s3 + $0xd8] sm:$0xf]
    %v6163 = vld [vmem:[%s3 + $0xdc] sm:$0xf]
    %v6164 = vld [vmem:[%s3 + $0xe0] sm:$0xf]
    %v6165 = vld [vmem:[%s3 + $0xe4] sm:$0xf]
    %v6166 = vld [vmem:[%s3 + $0xe8] sm:$0xf]
    %v6167 = vld [vmem:[%s3 + $0xec] sm:$0xf]
    %v6168 = vld [vmem:[%s3 + $0xf0] sm:$0xf]
    %v6169 = vld [vmem:[%s3 + $0xf4] sm:$0xf]
    %v6170 = vld [vmem:[%s3 + $0xf8] sm:$0xf]
    %v6171 = vld [vmem:[%s3 + $0xfc] sm:$0xf]
    %v6172 = vld [vmem:[%s4] sm:$0x1]
    %v6174 = vperm.slane %v6172, 0
    %v6240 = vunpack.c.l.b16 %v6108
    %v6241 = vunpack.c.l.b16 %v6109
    %v6242 = vunpack.c.l.b16 %v6110
    %v6243 = vunpack.c.l.b16 %v6111
    %v6244 = vunpack.c.l.b16 %v6112
    %v6245 = vunpack.c.l.b16 %v6113
    %v6246 = vunpack.c.l.b16 %v6114
    %v6247 = vunpack.c.l.b16 %v6115
    %v6248 = vunpack.c.l.b16 %v6116
    %v6249 = vunpack.c.l.b16 %v6117
    %v6250 = vunpack.c.l.b16 %v6118
    %v6251 = vunpack.c.l.b16 %v6119
    %v6252 = vunpack.c.l.b16 %v6120
    %v6253 = vunpack.c.l.b16 %v6121
    %v6254 = vunpack.c.l.b16 %v6122
    %v6255 = vunpack.c.l.b16 %v6123
    %v6256 = vunpack.c.l.b16 %v6124
    %v6257 = vunpack.c.l.b16 %v6125
    %v6258 = vunpack.c.l.b16 %v6126
    %v6259 = vunpack.c.l.b16 %v6127
    %v6260 = vunpack.c.l.b16 %v6128
    %v6261 = vunpack.c.l.b16 %v6129
    %v6262 = vunpack.c.l.b16 %v6130
    %v6263 = vunpack.c.l.b16 %v6131
    %v6264 = vunpack.c.l.b16 %v6132
    %v6265 = vunpack.c.l.b16 %v6133
    %v6266 = vunpack.c.l.b16 %v6134
    %v6267 = vunpack.c.l.b16 %v6135
    %v6268 = vunpack.c.l.b16 %v6136
    %v6269 = vunpack.c.l.b16 %v6137
    %v6270 = vunpack.c.l.b16 %v6138
    %v6271 = vunpack.c.l.b16 %v6139
    %v6272 = vunpack.c.l.b16 %v6140
    %v6273 = vunpack.c.l.b16 %v6141
    %v6274 = vunpack.c.l.b16 %v6142
    %v6275 = vunpack.c.l.b16 %v6143
    %v6276 = vunpack.c.l.b16 %v6144
    %v6277 = vunpack.c.l.b16 %v6145
    %v6278 = vunpack.c.l.b16 %v6146
    %v6279 = vunpack.c.l.b16 %v6147
    %v6280 = vunpack.c.l.b16 %v6148
    %v6281 = vunpack.c.l.b16 %v6149
    %v6282 = vunpack.c.l.b16 %v6150
    %v6283 = vunpack.c.l.b16 %v6151
    %v6284 = vunpack.c.l.b16 %v6152
    %v6285 = vunpack.c.l.b16 %v6153
    %v6286 = vunpack.c.l.b16 %v6154
    %v6287 = vunpack.c.l.b16 %v6155
    %v6288 = vunpack.c.l.b16 %v6156
    %v6289 = vunpack.c.l.b16 %v6157
    %v6290 = vunpack.c.l.b16 %v6158
    %v6291 = vunpack.c.l.b16 %v6159
    %v6292 = vunpack.c.l.b16 %v6160
    %v6293 = vunpack.c.l.b16 %v6161
    %v6294 = vunpack.c.l.b16 %v6162
    %v6295 = vunpack.c.l.b16 %v6163
    %v6296 = vunpack.c.l.b16 %v6164
    %v6297 = vunpack.c.l.b16 %v6165
    %v6298 = vunpack.c.l.b16 %v6166
    %v6299 = vunpack.c.l.b16 %v6167
    %v6300 = vunpack.c.l.b16 %v6168
    %v6301 = vunpack.c.l.b16 %v6169
    %v6302 = vunpack.c.l.b16 %v6170
    %v6303 = vunpack.c.l.b16 %v6171
    %v6304 = vpack.c.b16 %v6241, %v6240
    %v6305 = vpack.c.b16 %v6243, %v6242
    %v6306 = vpack.c.b16 %v6245, %v6244
    %v6307 = vpack.c.b16 %v6247, %v6246
    %v6308 = vpack.c.b16 %v6249, %v6248
    %v6309 = vpack.c.b16 %v6251, %v6250
    %v6310 = vpack.c.b16 %v6253, %v6252
    %v6311 = vpack.c.b16 %v6255, %v6254
    %v6312 = vpack.c.b16 %v6257, %v6256
    %v6313 = vpack.c.b16 %v6259, %v6258
    %v6314 = vpack.c.b16 %v6261, %v6260
    %v6315 = vpack.c.b16 %v6263, %v6262
    %v6316 = vpack.c.b16 %v6265, %v6264
    %v6317 = vpack.c.b16 %v6267, %v6266
    %v6318 = vpack.c.b16 %v6269, %v6268
    %v6319 = vpack.c.b16 %v6271, %v6270
    %v6320 = vpack.c.b16 %v6273, %v6272
    %v6321 = vpack.c.b16 %v6275, %v6274
    %v6322 = vpack.c.b16 %v6277, %v6276
    %v6323 = vpack.c.b16 %v6279, %v6278
    %v6324 = vpack.c.b16 %v6281, %v6280
    %v6325 = vpack.c.b16 %v6283, %v6282
    %v6326 = vpack.c.b16 %v6285, %v6284
    %v6327 = vpack.c.b16 %v6287, %v6286
    %v6328 = vpack.c.b16 %v6289, %v6288
    %v6329 = vpack.c.b16 %v6291, %v6290
    %v6330 = vpack.c.b16 %v6293, %v6292
    %v6331 = vpack.c.b16 %v6295, %v6294
    %v6332 = vpack.c.b16 %v6297, %v6296
    %v6333 = vpack.c.b16 %v6299, %v6298
    %v6334 = vpack.c.b16 %v6301, %v6300
    %v6335 = vpack.c.b16 %v6303, %v6302
    %6368 = vmatpush.bf16.msra.mxu0 %v6311
    %6369 = vmatpush.bf16.msra.mxu0 %v6310
    %6370 = vmatpush.bf16.msra.mxu0 %v6309
    %6371 = vmatpush.bf16.msra.mxu0 %v6308
    %6372 = vmatpush.bf16.msra.mxu0 %v6307
    %6373 = vmatpush.bf16.msra.mxu0 %v6306
    %6374 = vmatpush.bf16.msra.mxu0 %v6305
    %6375 = vmatpush.bf16.msra.mxu0 %v6304
    %6376 = vmatmul.bf16.gmra.mxu0 %v6104
    %v6377 = vpop.f32.mrf.mxu0
    %v6378 = vadd.f32 %v6174, %v6377
    %v6379 = vpop.f32.mrf.mxu0
    %6380 = vdwg.mxu0
    %6381 = vmatpush.bf16.msra.mxu0 %v6319
    %6382 = vmatpush.bf16.msra.mxu0 %v6318
    %6383 = vmatpush.bf16.msra.mxu0 %v6317
    %6384 = vmatpush.bf16.msra.mxu0 %v6316
    %6385 = vmatpush.bf16.msra.mxu0 %v6315
    %6386 = vmatpush.bf16.msra.mxu0 %v6314
    %6387 = vmatpush.bf16.msra.mxu0 %v6313
    %6388 = vmatpush.bf16.msra.mxu0 %v6312
    %6389 = vmatmul.bf16.gmra.mxu0 %v6105
    %v6390 = vpop.f32.mrf.mxu0
    %v6391 = vadd.f32 %v6378, %v6390
    %v6392 = vpop.f32.mrf.mxu0
    %6393 = vdwg.mxu0
    %6394 = vmatpush.bf16.msra.mxu0 %v6327
    %6395 = vmatpush.bf16.msra.mxu0 %v6326
    %6396 = vmatpush.bf16.msra.mxu0 %v6325
    %6397 = vmatpush.bf16.msra.mxu0 %v6324
    %6398 = vmatpush.bf16.msra.mxu0 %v6323
    %6399 = vmatpush.bf16.msra.mxu0 %v6322
    %6400 = vmatpush.bf16.msra.mxu0 %v6321
    %6401 = vmatpush.bf16.msra.mxu0 %v6320
    %6402 = vmatmul.bf16.gmra.mxu0 %v6106
    %v6403 = vpop.f32.mrf.mxu0
    %v6404 = vadd.f32 %v6391, %v6403
    %v6405 = vpop.f32.mrf.mxu0
    %6406 = vdwg.mxu0
    %6407 = vmatpush.bf16.msra.mxu0 %v6335
    %6408 = vmatpush.bf16.msra.mxu0 %v6334
    %6409 = vmatpush.bf16.msra.mxu0 %v6333
    %6410 = vmatpush.bf16.msra.mxu0 %v6332
    %6411 = vmatpush.bf16.msra.mxu0 %v6331
    %6412 = vmatpush.bf16.msra.mxu0 %v6330
    %6413 = vmatpush.bf16.msra.mxu0 %v6329
    %6414 = vmatpush.bf16.msra.mxu0 %v6328
    %6415 = vmatmul.bf16.gmra.mxu0 %v6107
    %v6416 = vpop.f32.mrf.mxu0
    %v6417 = vadd.f32 %v6404, %v6416
    %v6418 = vpop.f32.mrf.mxu0
    %6419 = vdwg.mxu0
    %6420 = vst [vmem:[#allocation2] sm:$0x3] %v6417
    // Predicated region
    $region22: #{dqn_forward.7} parent=1 // pred_check
      _
    $region23: #{dqn_forward.7} parent=1 // pred_check_branch
      %6422 = sbr.rel (0) target = $region25
    $region24: #{dqn_forward.7} parent=1 // pred_region
      %6424 = vsyncadd [#allocation3], 0
      %s6426 = sshll.u32 [#allocation2], 4
      %s6427 = int_to_ptr.vmem [resolvable:$true] %s6426
      %s6428 = sshll.u32 %s5, 4
      %s6429 = int_to_ptr.hbm [resolvable:$true] %s6428
      %6431 = dma.vmem_to_hbm [thread:$0]  %s6427, 32, %s6429, [#allocation3]
    $region25: #{dqn_forward.7} parent=1 // pred_fallthru
      _
    // Predicated region
    $region26: #{dqn_forward.7} parent=1 // pred_check
      _
    $region27: #{dqn_forward.7} parent=1 // pred_check_branch
      %6433 = sbr.rel (0) target = $region29
    $region28: #{dqn_forward.7} parent=1 // pred_region
      %6435 = dma.done [#allocation3], 32
    $region29: #{dqn_forward.7} parent=1 // pred_fallthru
      _
    %6436 = vsyncpa [#allocation3], 1

</llo_original>
